<compile_context>
chip_gen: v6e
topology: v6e:2x2x1
jax: 0.10.0
libtpu: 0.0.40
codegen_flags: <defaults>
</compile_context>

<pallas_src>
from functools import partial
import math

import jax
import jax.numpy as jnp
from jax.experimental import pallas as pl
from jax.experimental.pallas import tpu as pltpu

LN_EPS = 1e-5
_VMEM_LIMIT_BYTES = 32 * 1024 * 1024   # explicit scoped-VMEM budget (fits v5e/v6e/v7x)


# ----------------------------------------------------------------------------
# Fused kernel: 3x(LN -> attention -> proj -> residual) -> LN -> MLP -> residual
# ----------------------------------------------------------------------------
def _fused_shr_kernel(x1_ref, x2_ref, x3_ref,
                      ln1g_ref, ln1b_ref, wqkv_ref, wproj_ref, bproj_ref,
                      ln2g_ref, ln2b_ref, w1_ref, b1_ref, w2_ref, b2_ref,
                      o1_ref, o2_ref, o3_ref,
                      *, num_heads, bblk, n_tok):
    x_refs = (x1_ref, x2_ref, x3_ref)
    o_refs = (o1_ref, o2_ref, o3_ref)
    C = x1_ref.shape[-1]
    hd = C // num_heads
    R = bblk * n_tok                       # rows processed per grid step

    ln1g = ln1g_ref[...].astype(jnp.float32)    # (3, C)
    ln1b = ln1b_ref[...].astype(jnp.float32)    # (3, C)
    bproj = bproj_ref[...].astype(jnp.float32)  # (3, C)

    inv_C = 1.0 / C

    # ---- three attention branches, all Bblk*N rows at once ----
    res = []
    for i in range(3):                      # static unroll over the 3 branches
        x = x_refs[i][...].astype(jnp.float32).reshape(R, C)

        mu = jnp.sum(x, axis=-1, keepdims=True) * inv_C
        xc = x - mu
        var = jnp.sum(xc * xc, axis=-1, keepdims=True) * inv_C
        xn = xc * jax.lax.rsqrt(var + LN_EPS) * ln1g[i:i + 1, :] + ln1b[i:i + 1, :]

        # qkv = xn @ Wqkv^T  (qkv_bias=False in the module defaults; the qk
        # scale is already folded into the Wq columns by the wrapper)
        qkv = jnp.dot(xn, wqkv_ref[i].astype(jnp.float32),
                      preferred_element_type=jnp.float32)        # (R, 3C)

        wproj = wproj_ref[i].astype(jnp.float32)                 # (C, C)
        proj = jnp.zeros((R, C), jnp.float32)
        for h in range(num_heads):
            lo = h * hd
            q = qkv[:, lo:lo + hd].reshape(bblk, n_tok, hd)
            k = qkv[:, C + lo:C + lo + hd].reshape(bblk, n_tok, hd)
            v = qkv[:, 2 * C + lo:2 * C + lo + hd].reshape(bblk, n_tok, hd)
            s = jnp.einsum("bnd,bmd->bnm", q, k,
                           preferred_element_type=jnp.float32)
            s = s - jnp.max(s, axis=-1, keepdims=True)
            p = jnp.exp(s)
            p = p * pl.reciprocal(jnp.sum(p, axis=-1, keepdims=True), approx=True)
            oh = jnp.einsum("bnm,bmd->bnd", p, v,
                            preferred_element_type=jnp.float32).reshape(R, hd)
            # concat(head_outs) @ Wproj^T == sum_h out_h @ Wproj^T[h*hd:(h+1)*hd, :]
            proj = proj + jnp.dot(oh, wproj[lo:lo + hd, :],
                                  preferred_element_type=jnp.float32)
        res.append(x + proj + bproj[i:i + 1, :])

    # ---- norm2 over the (virtual) channel concat + MLP + residual ----
    # single pass: accumulate sum and sum-of-squares across the three branches
    C3 = 3 * C
    inv_C3 = 1.0 / C3
    s1 = jnp.zeros((R, 1), jnp.float32)
    s2 = jnp.zeros((R, 1), jnp.float32)
    for i in range(3):
        s1 = s1 + jnp.sum(res[i], axis=-1, keepdims=True)
        s2 = s2 + jnp.sum(res[i] * res[i], axis=-1, keepdims=True)
    mu2 = s1 * inv_C3
    var2 = jnp.maximum(s2 * inv_C3 - mu2 * mu2, 0.0)
    rstd2 = jax.lax.rsqrt(var2 + LN_EPS)

    ln2g = ln2g_ref[...].astype(jnp.float32)    # (3, C)
    ln2b = ln2b_ref[...].astype(jnp.float32)    # (3, C)
    b1 = b1_ref[...].astype(jnp.float32)        # (1, Hm)

    Hm = w1_ref.shape[-1]
    h_acc = jnp.zeros((R, Hm), jnp.float32)
    for i in range(3):
        xni = (res[i] - mu2) * rstd2 * ln2g[i:i + 1, :] + ln2b[i:i + 1, :]
        h_acc = h_acc + jnp.dot(xni, w1_ref[i].astype(jnp.float32),
                                preferred_element_type=jnp.float32)
    h = h_acc + b1
    # exact GELU (PyTorch nn.GELU default): 0.5*x*(1+erf(x/sqrt(2)))
    act = 0.5 * h * (1.0 + jax.lax.erf(h * (1.0 / math.sqrt(2.0))))

    b2 = b2_ref[...].astype(jnp.float32)        # (3, C)
    for i in range(3):
        yi = jnp.dot(act, w2_ref[i].astype(jnp.float32),
                     preferred_element_type=jnp.float32) + b2[i:i + 1, :]
        o_refs[i][...] = (res[i] + yi).reshape(bblk, n_tok, C).astype(o_refs[i].dtype)


# ----------------------------------------------------------------------------
# Wrapper
# ----------------------------------------------------------------------------
def _pick_batch_block(B, N, target_rows=512):
    """Largest divisor of B whose packed row count Bblk*N stays near target."""
    best = 1
    for cand in range(1, B + 1):
        if B % cand == 0 and cand * N <= max(target_rows, N):
            best = cand
    return best


def _xmap(b):
    return (b, 0, 0)


def _c2(b):
    return (0, 0)


def _c3(b):
    return (0, 0, 0)


def shr_block_forward(x_1, x_2, x_3, params, num_heads):
    """Pallas implementation of _SHR_Block.forward (drop/drop_path == 0)."""
    B, N, C = x_1.shape
    Hm = params["mlp"]["w1_t"].shape[1]
    scale = (C // num_heads) ** -0.5
    bblk = _pick_batch_block(B, N)
    grid = (B // bblk,)

    # Stack per-branch weights along a leading axis of 3 and pre-split the MLP
    # weights per branch so the kernel never lane-slices weights.  The qk
    # scale is folded into the Wq columns (weight-side constant fold).
    bkeys = ("b1", "b2", "b3")
    ln1_g = jnp.stack([params[k]["ln_g"].reshape(C) for k in bkeys])        # (3, C)
    ln1_b = jnp.stack([params[k]["ln_b"].reshape(C) for k in bkeys])        # (3, C)
    wqkv = jnp.stack([params[k]["wqkv_t"] for k in bkeys])                  # (3, C, 3C)
    wqkv = wqkv.at[:, :, :C].multiply(scale)                                # fold scale into Wq
    wproj = jnp.stack([params[k]["wproj_t"] for k in bkeys])                # (3, C, C)
    bproj = jnp.stack([params[k]["bproj"].reshape(C) for k in bkeys])       # (3, C)

    m = params["mlp"]
    ln2_g = m["ln_g"].reshape(3, C)
    ln2_b = m["ln_b"].reshape(3, C)
    w1s = m["w1_t"].reshape(3, C, Hm)                                       # (3, C, Hm)
    b1 = m["b1"].reshape(1, Hm)
    w2s = m["w2_t"].reshape(Hm, 3, C).transpose(1, 0, 2)                    # (3, Hm, C)
    b2s = m["b2"].reshape(3, C)

    kern = partial(_fused_shr_kernel, num_heads=num_heads, bblk=bblk, n_tok=N)

    x_spec = pl.BlockSpec((bblk, N, C), _xmap)
    out_shape = tuple(jax.ShapeDtypeStruct((B, N, C), x_1.dtype) for _ in range(3))
    out_specs = [pl.BlockSpec((bblk, N, C), _xmap) for _ in range(3)]

    return pl.pallas_call(
        kern,
        out_shape=out_shape,
        grid=grid,
        in_specs=[
            x_spec, x_spec, x_spec,
            pl.BlockSpec((3, C), _c2),            # ln1 gamma
            pl.BlockSpec((3, C), _c2),            # ln1 beta
            pl.BlockSpec((3, C, 3 * C), _c3),     # Wqkv^T (stacked, q cols pre-scaled)
            pl.BlockSpec((3, C, C), _c3),         # Wproj^T (stacked)
            pl.BlockSpec((3, C), _c2),            # proj bias (stacked)
            pl.BlockSpec((3, C), _c2),            # ln2 gamma (per-branch slice)
            pl.BlockSpec((3, C), _c2),            # ln2 beta
            pl.BlockSpec((3, C, Hm), _c3),        # W1^T split by branch rows
            pl.BlockSpec((1, Hm), _c2),           # b1
            pl.BlockSpec((3, Hm, C), _c3),        # W2^T split by branch cols
            pl.BlockSpec((3, C), _c2),            # b2 (per-branch slice)
        ],
        out_specs=out_specs,
        compiler_params=pltpu.CompilerParams(
            dimension_semantics=("parallel",),
            vmem_limit_bytes=_VMEM_LIMIT_BYTES),
    )(x_1, x_2, x_3,
      ln1_g, ln1_b, wqkv, wproj, bproj,
      ln2_g, ln2_b, w1s, b1, w2s, b2s)


# ----------------------------------------------------------------------------
# Pure-JAX reference (correctness sanity check)
# ----------------------------------------------------------------------------
def _ref_attn(x, p, num_heads):
    B, N, C = x.shape
    hd = C // num_heads
    scale = hd ** -0.5
    mu = jnp.mean(x, axis=-1, keepdims=True)
    var = jnp.mean((x - mu) ** 2, axis=-1, keepdims=True)
    xn = (x - mu) / jnp.sqrt(var + LN_EPS) * p["ln_g"] + p["ln_b"]
    qkv = xn @ p["wqkv_t"]
    qkv = qkv.reshape(B, N, 3, num_heads, hd).transpose(2, 0, 3, 1, 4)
    q, k, v = qkv[0], qkv[1], qkv[2]
    s = jnp.einsum("bhnd,bhmd->bhnm", q, k) * scale
    a = jax.nn.softmax(s, axis=-1)
    o = jnp.einsum("bhnm,bhmd->bhnd", a, v).transpose(0, 2, 1, 3).reshape(B, N, C)
    return x + (o @ p["wproj_t"] + p["bproj"])


def _ref_mlp(x, m):
    mu = jnp.mean(x, axis=-1, keepdims=True)
    var = jnp.mean((x - mu) ** 2, axis=-1, keepdims=True)
    xn = (x - mu) / jnp.sqrt(var + LN_EPS) * m["ln_g"] + m["ln_b"]
    h = jax.nn.gelu(xn @ m["w1_t"] + m["b1"], approximate=False)
    return x + (h @ m["w2_t"] + m["b2"])


def _ref_forward(x_1, x_2, x_3, params, num_heads):
    xs = [_ref_attn(xi, p, num_heads)
          for xi, p in zip((x_1, x_2, x_3), (params["b1"], params["b2"], params["b3"]))]
    x = jnp.concatenate(xs, axis=2)
    x = _ref_mlp(x, params["mlp"])
    C = x.shape[2] // 3
    return x[:, :, :C], x[:, :, C:2 * C], x[:, :, 2 * C:]


# ----------------------------------------------------------------------------
# Parameter init (deterministic, synthetic)
# ----------------------------------------------------------------------------
def make_params(key, dim, mlp_hidden_dim):
    def branch(k):
        k1, k2, k3 = jax.random.split(k, 3)
        return {
            "ln_g": jnp.ones((1, dim), jnp.float32),
            "ln_b": jnp.zeros((1, dim), jnp.float32),
            # stored transposed so the kernel does x @ W^T directly
            "wqkv_t": 0.05 * jax.random.normal(k1, (dim, 3 * dim), jnp.float32),
            "wproj_t": 0.05 * jax.random.normal(k2, (dim, dim), jnp.float32),
            "bproj": 0.01 * jax.random.normal(k3, (1, dim), jnp.float32),
        }

    kb1, kb2, kb3, km1, km2, km3, km4 = jax.random.split(key, 7)
    return {
        "b1": branch(kb1),
        "b2": branch(kb2),
        "b3": branch(kb3),
        "mlp": {
            "ln_g": jnp.ones((1, 3 * dim), jnp.float32),
            "ln_b": jnp.zeros((1, 3 * dim), jnp.float32),
            "w1_t": 0.05 * jax.random.normal(km1, (3 * dim, mlp_hidden_dim), jnp.float32),
            "b1": 0.01 * jax.random.normal(km2, (1, mlp_hidden_dim), jnp.float32),
            "w2_t": 0.05 * jax.random.normal(km3, (mlp_hidden_dim, 3 * dim), jnp.float32),
            "b2": 0.01 * jax.random.normal(km4, (1, 3 * dim), jnp.float32),
        },
    }


# ----------------------------------------------------------------------------
# Main
# ----------------------------------------------------------------------------
if __name__ == "__main__":
    B, N, DIM = 2, 8, 32
    NUM_HEADS = 4
    MLP_HIDDEN = 64

    key = jax.random.PRNGKey(0)
    kx1, kx2, kx3, kp = jax.random.split(key, 4)
    x_1 = jax.random.normal(kx1, (B, N, DIM), jnp.float32)
    x_2 = jax.random.normal(kx2, (B, N, DIM), jnp.float32)
    x_3 = jax.random.normal(kx3, (B, N, DIM), jnp.float32)
    params = make_params(kp, DIM, MLP_HIDDEN)

    y1, y2, y3 = shr_block_forward(x_1, x_2, x_3, params, NUM_HEADS)
    jax.block_until_ready((y1, y2, y3))

    # sanity check against pure-JAX reference (tolerance accounts for the
    # EUP approx-reciprocal used in the softmax normalization)
    r1, r2, r3 = _ref_forward(x_1, x_2, x_3, params, NUM_HEADS)
    for a, b in ((y1, r1), (y2, r2), (y3, r3)):
        assert jnp.allclose(a, b, atol=5e-3, rtol=5e-3), "mismatch vs reference"

    print("KERNEL_OK")
</pallas_src>

<mosaic_0001>
module attributes {stable_mosaic.version = 11 : i64} {
  func.func @_fused_shr_kernel(%arg0: i32, %arg1: memref<2x8x32xf32, #tpu.memory_space<vmem>>, %arg2: memref<2x8x32xf32, #tpu.memory_space<vmem>>, %arg3: memref<2x8x32xf32, #tpu.memory_space<vmem>>, %arg4: memref<3x32xf32, #tpu.memory_space<vmem>>, %arg5: memref<3x32xf32, #tpu.memory_space<vmem>>, %arg6: memref<3x32x96xf32, #tpu.memory_space<vmem>>, %arg7: memref<3x32x32xf32, #tpu.memory_space<vmem>>, %arg8: memref<3x32xf32, #tpu.memory_space<vmem>>, %arg9: memref<3x32xf32, #tpu.memory_space<vmem>>, %arg10: memref<3x32xf32, #tpu.memory_space<vmem>>, %arg11: memref<3x32x64xf32, #tpu.memory_space<vmem>>, %arg12: memref<1x64xf32, #tpu.memory_space<vmem>>, %arg13: memref<3x64x32xf32, #tpu.memory_space<vmem>>, %arg14: memref<3x32xf32, #tpu.memory_space<vmem>>, %arg15: memref<2x8x32xf32, #tpu.memory_space<vmem>>, %arg16: memref<2x8x32xf32, #tpu.memory_space<vmem>>, %arg17: memref<2x8x32xf32, #tpu.memory_space<vmem>>) attributes {dimension_semantics = [#tpu.dimension_semantics<parallel>], iteration_bounds = array<i64: 1>, scalar_prefetch = 0 : i64, scratch_operands = 0 : i64, tpu.core_type = #tpu.core_type<tc>, window_params = [{transform_indices = @transform_0, window_bounds = array<i64: 2, 8, 32>}, {transform_indices = @transform_1, window_bounds = array<i64: 2, 8, 32>}, {transform_indices = @transform_2, window_bounds = array<i64: 2, 8, 32>}, {pipeline_mode = #tpu.pipeline_mode<synchronous>, transform_indices = @transform_3, window_bounds = array<i64: 3, 32>}, {pipeline_mode = #tpu.pipeline_mode<synchronous>, transform_indices = @transform_4, window_bounds = array<i64: 3, 32>}, {pipeline_mode = #tpu.pipeline_mode<synchronous>, transform_indices = @transform_5, window_bounds = array<i64: 3, 32, 96>}, {pipeline_mode = #tpu.pipeline_mode<synchronous>, transform_indices = @transform_6, window_bounds = array<i64: 3, 32, 32>}, {pipeline_mode = #tpu.pipeline_mode<synchronous>, transform_indices = @transform_7, window_bounds = array<i64: 3, 32>}, {pipeline_mode = #tpu.pipeline_mode<synchronous>, transform_indices = @transform_8, window_bounds = array<i64: 3, 32>}, {pipeline_mode = #tpu.pipeline_mode<synchronous>, transform_indices = @transform_9, window_bounds = array<i64: 3, 32>}, {pipeline_mode = #tpu.pipeline_mode<synchronous>, transform_indices = @transform_10, window_bounds = array<i64: 3, 32, 64>}, {pipeline_mode = #tpu.pipeline_mode<synchronous>, transform_indices = @transform_11, window_bounds = array<i64: 1, 64>}, {pipeline_mode = #tpu.pipeline_mode<synchronous>, transform_indices = @transform_12, window_bounds = array<i64: 3, 64, 32>}, {pipeline_mode = #tpu.pipeline_mode<synchronous>, transform_indices = @transform_13, window_bounds = array<i64: 3, 32>}, {transform_indices = @transform_14, window_bounds = array<i64: 2, 8, 32>}, {transform_indices = @transform_15, window_bounds = array<i64: 2, 8, 32>}, {transform_indices = @transform_16, window_bounds = array<i64: 2, 8, 32>}]} {
    %c0 = arith.constant 0 : index
    %c0_0 = arith.constant 0 : index
    %0 = vector.load %arg4[%c0, %c0_0] : memref<3x32xf32, #tpu.memory_space<vmem>>, vector<3x32xf32>
    %c0_1 = arith.constant 0 : index
    %c0_2 = arith.constant 0 : index
    %1 = vector.load %arg5[%c0_1, %c0_2] : memref<3x32xf32, #tpu.memory_space<vmem>>, vector<3x32xf32>
    %c0_3 = arith.constant 0 : index
    %c0_4 = arith.constant 0 : index
    %2 = vector.load %arg8[%c0_3, %c0_4] : memref<3x32xf32, #tpu.memory_space<vmem>>, vector<3x32xf32>
    %c0_5 = arith.constant 0 : index
    %c0_6 = arith.constant 0 : index
    %c0_7 = arith.constant 0 : index
    %3 = vector.load %arg1[%c0_5, %c0_6, %c0_7] : memref<2x8x32xf32, #tpu.memory_space<vmem>>, vector<2x8x32xf32>
    %4 = vector.shape_cast %3 : vector<2x8x32xf32> to vector<16x32xf32>
    %cst = arith.constant dense<0.000000e+00> : vector<16xf32>
    %5 = vector.multi_reduction <add>, %4, %cst [1] : vector<16x32xf32> to vector<16xf32>
    %6 = vector.shape_cast %5 : vector<16xf32> to vector<16x1xf32>
    %cst_8 = arith.constant 3.125000e-02 : f32
    %7 = vector.broadcast %cst_8 : f32 to vector<16x1xf32>
    %8 = arith.mulf %6, %7 : vector<16x1xf32>
    %9 = vector.broadcast %8 : vector<16x1xf32> to vector<16x32xf32>
    %10 = arith.subf %4, %9 : vector<16x32xf32>
    %11 = arith.mulf %10, %10 : vector<16x32xf32>
    %cst_9 = arith.constant dense<0.000000e+00> : vector<16xf32>
    %12 = vector.multi_reduction <add>, %11, %cst_9 [1] : vector<16x32xf32> to vector<16xf32>
    %13 = vector.shape_cast %12 : vector<16xf32> to vector<16x1xf32>
    %cst_10 = arith.constant 3.125000e-02 : f32
    %14 = vector.broadcast %cst_10 : f32 to vector<16x1xf32>
    %15 = arith.mulf %13, %14 : vector<16x1xf32>
    %cst_11 = arith.constant 9.99999974E-6 : f32
    %16 = vector.broadcast %cst_11 : f32 to vector<16x1xf32>
    %17 = arith.addf %15, %16 : vector<16x1xf32>
    %18 = math.rsqrt %17 : vector<16x1xf32>
    %19 = vector.broadcast %18 : vector<16x1xf32> to vector<16x32xf32>
    %20 = arith.mulf %10, %19 : vector<16x32xf32>
    %21 = vector.extract_strided_slice %0 {offsets = [0, 0], sizes = [1, 32], strides = [1, 1]} : vector<3x32xf32> to vector<1x32xf32>
    %22 = vector.broadcast %21 : vector<1x32xf32> to vector<16x32xf32>
    %23 = arith.mulf %20, %22 : vector<16x32xf32>
    %24 = vector.extract_strided_slice %1 {offsets = [0, 0], sizes = [1, 32], strides = [1, 1]} : vector<3x32xf32> to vector<1x32xf32>
    %25 = vector.broadcast %24 : vector<1x32xf32> to vector<16x32xf32>
    %26 = arith.addf %23, %25 : vector<16x32xf32>
    %c0_12 = arith.constant 0 : index
    %c0_13 = arith.constant 0 : index
    %c0_14 = arith.constant 0 : index
    %27 = vector.load %arg6[%c0_12, %c0_13, %c0_14] : memref<3x32x96xf32, #tpu.memory_space<vmem>>, vector<1x32x96xf32>
    %28 = vector.shape_cast %27 : vector<1x32x96xf32> to vector<32x96xf32>
    %cst_15 = arith.constant dense<0.000000e+00> : vector<16x96xf32>
    %29 = tpu.matmul %26, %28, %cst_15 {dimension_numbers = #tpu.dot_dimension_numbers<[1], [0], [0], [1], [0, 0, 1, 1], [], []>} : vector<16x32xf32>, vector<32x96xf32>, vector<16x96xf32> -> vector<16x96xf32>
    %c0_16 = arith.constant 0 : index
    %c0_17 = arith.constant 0 : index
    %c0_18 = arith.constant 0 : index
    %30 = vector.load %arg7[%c0_16, %c0_17, %c0_18] : memref<3x32x32xf32, #tpu.memory_space<vmem>>, vector<1x32x32xf32>
    %31 = vector.shape_cast %30 : vector<1x32x32xf32> to vector<32x32xf32>
    %cst_19 = arith.constant 0.000000e+00 : f32
    %32 = vector.broadcast %cst_19 : f32 to vector<16x32xf32>
    %33 = vector.extract_strided_slice %29 {offsets = [0, 0], sizes = [16, 8], strides = [1, 1]} : vector<16x96xf32> to vector<16x8xf32>
    %34 = vector.shape_cast %33 : vector<16x8xf32> to vector<2x8x8xf32>
    %35 = vector.extract_strided_slice %29 {offsets = [0, 32], sizes = [16, 8], strides = [1, 1]} : vector<16x96xf32> to vector<16x8xf32>
    %36 = vector.shape_cast %35 : vector<16x8xf32> to vector<2x8x8xf32>
    %37 = vector.extract_strided_slice %29 {offsets = [0, 64], sizes = [16, 8], strides = [1, 1]} : vector<16x96xf32> to vector<16x8xf32>
    %38 = vector.shape_cast %37 : vector<16x8xf32> to vector<2x8x8xf32>
    "tpu.trace_start"() <{level = 10 : i32, message = "bnd,bmd->bnm"}> : () -> ()
    %cst_20 = arith.constant dense<0.000000e+00> : vector<2x8x8xf32>
    %39 = tpu.matmul %34, %36, %cst_20 {dimension_numbers = #tpu.dot_dimension_numbers<[2], [2], [1], [1], [0, 0, 0, 1, 1, 1], [0], [0]>} : vector<2x8x8xf32>, vector<2x8x8xf32>, vector<2x8x8xf32> -> vector<2x8x8xf32>
    "tpu.trace_stop"() : () -> ()
    %cst_21 = arith.constant dense<0xFF800000> : vector<2x8xf32>
    %40 = vector.multi_reduction <maximumf>, %39, %cst_21 [2] : vector<2x8x8xf32> to vector<2x8xf32>
    %41 = vector.shape_cast %40 : vector<2x8xf32> to vector<2x8x1xf32>
    %42 = vector.broadcast %41 : vector<2x8x1xf32> to vector<2x8x8xf32>
    %43 = arith.subf %39, %42 : vector<2x8x8xf32>
    %44 = math.exp %43 : vector<2x8x8xf32>
    %cst_22 = arith.constant dense<0.000000e+00> : vector<2x8xf32>
    %45 = vector.multi_reduction <add>, %44, %cst_22 [2] : vector<2x8x8xf32> to vector<2x8xf32>
    %46 = vector.shape_cast %45 : vector<2x8xf32> to vector<2x8x1xf32>
    %47 = tpu.reciprocal %46 {approx = true} : vector<2x8x1xf32> -> vector<2x8x1xf32>
    %48 = vector.broadcast %47 : vector<2x8x1xf32> to vector<2x8x8xf32>
    %49 = arith.mulf %44, %48 : vector<2x8x8xf32>
    "tpu.trace_start"() <{level = 10 : i32, message = "bnm,bmd->bnd"}> : () -> ()
    %cst_23 = arith.constant dense<0.000000e+00> : vector<2x8x8xf32>
    %50 = tpu.matmul %49, %38, %cst_23 {dimension_numbers = #tpu.dot_dimension_numbers<[2], [1], [1], [2], [0, 0, 0, 1, 1, 2], [0], [0]>} : vector<2x8x8xf32>, vector<2x8x8xf32>, vector<2x8x8xf32> -> vector<2x8x8xf32>
    "tpu.trace_stop"() : () -> ()
    %51 = vector.shape_cast %50 : vector<2x8x8xf32> to vector<16x8xf32>
    %52 = vector.extract_strided_slice %31 {offsets = [0, 0], sizes = [8, 32], strides = [1, 1]} : vector<32x32xf32> to vector<8x32xf32>
    %cst_24 = arith.constant dense<0.000000e+00> : vector<16x32xf32>
    %53 = tpu.matmul %51, %52, %cst_24 {dimension_numbers = #tpu.dot_dimension_numbers<[1], [0], [0], [1], [0, 0, 1, 1], [], []>} : vector<16x8xf32>, vector<8x32xf32>, vector<16x32xf32> -> vector<16x32xf32>
    %54 = arith.addf %32, %53 : vector<16x32xf32>
    %55 = vector.extract_strided_slice %29 {offsets = [0, 8], sizes = [16, 8], strides = [1, 1]} : vector<16x96xf32> to vector<16x8xf32>
    %56 = vector.shape_cast %55 : vector<16x8xf32> to vector<2x8x8xf32>
    %57 = vector.extract_strided_slice %29 {offsets = [0, 40], sizes = [16, 8], strides = [1, 1]} : vector<16x96xf32> to vector<16x8xf32>
    %58 = vector.shape_cast %57 : vector<16x8xf32> to vector<2x8x8xf32>
    %59 = vector.extract_strided_slice %29 {offsets = [0, 72], sizes = [16, 8], strides = [1, 1]} : vector<16x96xf32> to vector<16x8xf32>
    %60 = vector.shape_cast %59 : vector<16x8xf32> to vector<2x8x8xf32>
    "tpu.trace_start"() <{level = 10 : i32, message = "bnd,bmd->bnm"}> : () -> ()
    %cst_25 = arith.constant dense<0.000000e+00> : vector<2x8x8xf32>
    %61 = tpu.matmul %56, %58, %cst_25 {dimension_numbers = #tpu.dot_dimension_numbers<[2], [2], [1], [1], [0, 0, 0, 1, 1, 1], [0], [0]>} : vector<2x8x8xf32>, vector<2x8x8xf32>, vector<2x8x8xf32> -> vector<2x8x8xf32>
    "tpu.trace_stop"() : () -> ()
    %cst_26 = arith.constant dense<0xFF800000> : vector<2x8xf32>
    %62 = vector.multi_reduction <maximumf>, %61, %cst_26 [2] : vector<2x8x8xf32> to vector<2x8xf32>
    %63 = vector.shape_cast %62 : vector<2x8xf32> to vector<2x8x1xf32>
    %64 = vector.broadcast %63 : vector<2x8x1xf32> to vector<2x8x8xf32>
    %65 = arith.subf %61, %64 : vector<2x8x8xf32>
    %66 = math.exp %65 : vector<2x8x8xf32>
    %cst_27 = arith.constant dense<0.000000e+00> : vector<2x8xf32>
    %67 = vector.multi_reduction <add>, %66, %cst_27 [2] : vector<2x8x8xf32> to vector<2x8xf32>
    %68 = vector.shape_cast %67 : vector<2x8xf32> to vector<2x8x1xf32>
    %69 = tpu.reciprocal %68 {approx = true} : vector<2x8x1xf32> -> vector<2x8x1xf32>
    %70 = vector.broadcast %69 : vector<2x8x1xf32> to vector<2x8x8xf32>
    %71 = arith.mulf %66, %70 : vector<2x8x8xf32>
    "tpu.trace_start"() <{level = 10 : i32, message = "bnm,bmd->bnd"}> : () -> ()
    %cst_28 = arith.constant dense<0.000000e+00> : vector<2x8x8xf32>
    %72 = tpu.matmul %71, %60, %cst_28 {dimension_numbers = #tpu.dot_dimension_numbers<[2], [1], [1], [2], [0, 0, 0, 1, 1, 2], [0], [0]>} : vector<2x8x8xf32>, vector<2x8x8xf32>, vector<2x8x8xf32> -> vector<2x8x8xf32>
    "tpu.trace_stop"() : () -> ()
    %73 = vector.shape_cast %72 : vector<2x8x8xf32> to vector<16x8xf32>
    %74 = vector.extract_strided_slice %31 {offsets = [8, 0], sizes = [8, 32], strides = [1, 1]} : vector<32x32xf32> to vector<8x32xf32>
    %cst_29 = arith.constant dense<0.000000e+00> : vector<16x32xf32>
    %75 = tpu.matmul %73, %74, %cst_29 {dimension_numbers = #tpu.dot_dimension_numbers<[1], [0], [0], [1], [0, 0, 1, 1], [], []>} : vector<16x8xf32>, vector<8x32xf32>, vector<16x32xf32> -> vector<16x32xf32>
    %76 = arith.addf %54, %75 : vector<16x32xf32>
    %77 = vector.extract_strided_slice %29 {offsets = [0, 16], sizes = [16, 8], strides = [1, 1]} : vector<16x96xf32> to vector<16x8xf32>
    %78 = vector.shape_cast %77 : vector<16x8xf32> to vector<2x8x8xf32>
    %79 = vector.extract_strided_slice %29 {offsets = [0, 48], sizes = [16, 8], strides = [1, 1]} : vector<16x96xf32> to vector<16x8xf32>
    %80 = vector.shape_cast %79 : vector<16x8xf32> to vector<2x8x8xf32>
    %81 = vector.extract_strided_slice %29 {offsets = [0, 80], sizes = [16, 8], strides = [1, 1]} : vector<16x96xf32> to vector<16x8xf32>
    %82 = vector.shape_cast %81 : vector<16x8xf32> to vector<2x8x8xf32>
    "tpu.trace_start"() <{level = 10 : i32, message = "bnd,bmd->bnm"}> : () -> ()
    %cst_30 = arith.constant dense<0.000000e+00> : vector<2x8x8xf32>
    %83 = tpu.matmul %78, %80, %cst_30 {dimension_numbers = #tpu.dot_dimension_numbers<[2], [2], [1], [1], [0, 0, 0, 1, 1, 1], [0], [0]>} : vector<2x8x8xf32>, vector<2x8x8xf32>, vector<2x8x8xf32> -> vector<2x8x8xf32>
    "tpu.trace_stop"() : () -> ()
    %cst_31 = arith.constant dense<0xFF800000> : vector<2x8xf32>
    %84 = vector.multi_reduction <maximumf>, %83, %cst_31 [2] : vector<2x8x8xf32> to vector<2x8xf32>
    %85 = vector.shape_cast %84 : vector<2x8xf32> to vector<2x8x1xf32>
    %86 = vector.broadcast %85 : vector<2x8x1xf32> to vector<2x8x8xf32>
    %87 = arith.subf %83, %86 : vector<2x8x8xf32>
    %88 = math.exp %87 : vector<2x8x8xf32>
    %cst_32 = arith.constant dense<0.000000e+00> : vector<2x8xf32>
    %89 = vector.multi_reduction <add>, %88, %cst_32 [2] : vector<2x8x8xf32> to vector<2x8xf32>
    %90 = vector.shape_cast %89 : vector<2x8xf32> to vector<2x8x1xf32>
    %91 = tpu.reciprocal %90 {approx = true} : vector<2x8x1xf32> -> vector<2x8x1xf32>
    %92 = vector.broadcast %91 : vector<2x8x1xf32> to vector<2x8x8xf32>
    %93 = arith.mulf %88, %92 : vector<2x8x8xf32>
    "tpu.trace_start"() <{level = 10 : i32, message = "bnm,bmd->bnd"}> : () -> ()
    %cst_33 = arith.constant dense<0.000000e+00> : vector<2x8x8xf32>
    %94 = tpu.matmul %93, %82, %cst_33 {dimension_numbers = #tpu.dot_dimension_numbers<[2], [1], [1], [2], [0, 0, 0, 1, 1, 2], [0], [0]>} : vector<2x8x8xf32>, vector<2x8x8xf32>, vector<2x8x8xf32> -> vector<2x8x8xf32>
    "tpu.trace_stop"() : () -> ()
    %95 = vector.shape_cast %94 : vector<2x8x8xf32> to vector<16x8xf32>
    %96 = vector.extract_strided_slice %31 {offsets = [16, 0], sizes = [8, 32], strides = [1, 1]} : vector<32x32xf32> to vector<8x32xf32>
    %cst_34 = arith.constant dense<0.000000e+00> : vector<16x32xf32>
    %97 = tpu.matmul %95, %96, %cst_34 {dimension_numbers = #tpu.dot_dimension_numbers<[1], [0], [0], [1], [0, 0, 1, 1], [], []>} : vector<16x8xf32>, vector<8x32xf32>, vector<16x32xf32> -> vector<16x32xf32>
    %98 = arith.addf %76, %97 : vector<16x32xf32>
    %99 = vector.extract_strided_slice %29 {offsets = [0, 24], sizes = [16, 8], strides = [1, 1]} : vector<16x96xf32> to vector<16x8xf32>
    %100 = vector.shape_cast %99 : vector<16x8xf32> to vector<2x8x8xf32>
    %101 = vector.extract_strided_slice %29 {offsets = [0, 56], sizes = [16, 8], strides = [1, 1]} : vector<16x96xf32> to vector<16x8xf32>
    %102 = vector.shape_cast %101 : vector<16x8xf32> to vector<2x8x8xf32>
    %103 = vector.extract_strided_slice %29 {offsets = [0, 88], sizes = [16, 8], strides = [1, 1]} : vector<16x96xf32> to vector<16x8xf32>
    %104 = vector.shape_cast %103 : vector<16x8xf32> to vector<2x8x8xf32>
    "tpu.trace_start"() <{level = 10 : i32, message = "bnd,bmd->bnm"}> : () -> ()
    %cst_35 = arith.constant dense<0.000000e+00> : vector<2x8x8xf32>
    %105 = tpu.matmul %100, %102, %cst_35 {dimension_numbers = #tpu.dot_dimension_numbers<[2], [2], [1], [1], [0, 0, 0, 1, 1, 1], [0], [0]>} : vector<2x8x8xf32>, vector<2x8x8xf32>, vector<2x8x8xf32> -> vector<2x8x8xf32>
    "tpu.trace_stop"() : () -> ()
    %cst_36 = arith.constant dense<0xFF800000> : vector<2x8xf32>
    %106 = vector.multi_reduction <maximumf>, %105, %cst_36 [2] : vector<2x8x8xf32> to vector<2x8xf32>
    %107 = vector.shape_cast %106 : vector<2x8xf32> to vector<2x8x1xf32>
    %108 = vector.broadcast %107 : vector<2x8x1xf32> to vector<2x8x8xf32>
    %109 = arith.subf %105, %108 : vector<2x8x8xf32>
    %110 = math.exp %109 : vector<2x8x8xf32>
    %cst_37 = arith.constant dense<0.000000e+00> : vector<2x8xf32>
    %111 = vector.multi_reduction <add>, %110, %cst_37 [2] : vector<2x8x8xf32> to vector<2x8xf32>
    %112 = vector.shape_cast %111 : vector<2x8xf32> to vector<2x8x1xf32>
    %113 = tpu.reciprocal %112 {approx = true} : vector<2x8x1xf32> -> vector<2x8x1xf32>
    %114 = vector.broadcast %113 : vector<2x8x1xf32> to vector<2x8x8xf32>
    %115 = arith.mulf %110, %114 : vector<2x8x8xf32>
    "tpu.trace_start"() <{level = 10 : i32, message = "bnm,bmd->bnd"}> : () -> ()
    %cst_38 = arith.constant dense<0.000000e+00> : vector<2x8x8xf32>
    %116 = tpu.matmul %115, %104, %cst_38 {dimension_numbers = #tpu.dot_dimension_numbers<[2], [1], [1], [2], [0, 0, 0, 1, 1, 2], [0], [0]>} : vector<2x8x8xf32>, vector<2x8x8xf32>, vector<2x8x8xf32> -> vector<2x8x8xf32>
    "tpu.trace_stop"() : () -> ()
    %117 = vector.shape_cast %116 : vector<2x8x8xf32> to vector<16x8xf32>
    %118 = vector.extract_strided_slice %31 {offsets = [24, 0], sizes = [8, 32], strides = [1, 1]} : vector<32x32xf32> to vector<8x32xf32>
    %cst_39 = arith.constant dense<0.000000e+00> : vector<16x32xf32>
    %119 = tpu.matmul %117, %118, %cst_39 {dimension_numbers = #tpu.dot_dimension_numbers<[1], [0], [0], [1], [0, 0, 1, 1], [], []>} : vector<16x8xf32>, vector<8x32xf32>, vector<16x32xf32> -> vector<16x32xf32>
    %120 = arith.addf %98, %119 : vector<16x32xf32>
    %121 = arith.addf %4, %120 : vector<16x32xf32>
    %122 = vector.extract_strided_slice %2 {offsets = [0, 0], sizes = [1, 32], strides = [1, 1]} : vector<3x32xf32> to vector<1x32xf32>
    %123 = vector.broadcast %122 : vector<1x32xf32> to vector<16x32xf32>
    %124 = arith.addf %121, %123 : vector<16x32xf32>
    %c0_40 = arith.constant 0 : index
    %c0_41 = arith.constant 0 : index
    %c0_42 = arith.constant 0 : index
    %125 = vector.load %arg2[%c0_40, %c0_41, %c0_42] : memref<2x8x32xf32, #tpu.memory_space<vmem>>, vector<2x8x32xf32>
    %126 = vector.shape_cast %125 : vector<2x8x32xf32> to vector<16x32xf32>
    %cst_43 = arith.constant dense<0.000000e+00> : vector<16xf32>
    %127 = vector.multi_reduction <add>, %126, %cst_43 [1] : vector<16x32xf32> to vector<16xf32>
    %128 = vector.shape_cast %127 : vector<16xf32> to vector<16x1xf32>
    %cst_44 = arith.constant 3.125000e-02 : f32
    %129 = vector.broadcast %cst_44 : f32 to vector<16x1xf32>
    %130 = arith.mulf %128, %129 : vector<16x1xf32>
    %131 = vector.broadcast %130 : vector<16x1xf32> to vector<16x32xf32>
    %132 = arith.subf %126, %131 : vector<16x32xf32>
    %133 = arith.mulf %132, %132 : vector<16x32xf32>
    %cst_45 = arith.constant dense<0.000000e+00> : vector<16xf32>
    %134 = vector.multi_reduction <add>, %133, %cst_45 [1] : vector<16x32xf32> to vector<16xf32>
    %135 = vector.shape_cast %134 : vector<16xf32> to vector<16x1xf32>
    %cst_46 = arith.constant 3.125000e-02 : f32
    %136 = vector.broadcast %cst_46 : f32 to vector<16x1xf32>
    %137 = arith.mulf %135, %136 : vector<16x1xf32>
    %cst_47 = arith.constant 9.99999974E-6 : f32
    %138 = vector.broadcast %cst_47 : f32 to vector<16x1xf32>
    %139 = arith.addf %137, %138 : vector<16x1xf32>
    %140 = math.rsqrt %139 : vector<16x1xf32>
    %141 = vector.broadcast %140 : vector<16x1xf32> to vector<16x32xf32>
    %142 = arith.mulf %132, %141 : vector<16x32xf32>
    %143 = vector.extract_strided_slice %0 {offsets = [1, 0], sizes = [1, 32], strides = [1, 1]} : vector<3x32xf32> to vector<1x32xf32>
    %144 = vector.broadcast %143 : vector<1x32xf32> to vector<16x32xf32>
    %145 = arith.mulf %142, %144 : vector<16x32xf32>
    %146 = vector.extract_strided_slice %1 {offsets = [1, 0], sizes = [1, 32], strides = [1, 1]} : vector<3x32xf32> to vector<1x32xf32>
    %147 = vector.broadcast %146 : vector<1x32xf32> to vector<16x32xf32>
    %148 = arith.addf %145, %147 : vector<16x32xf32>
    %c1 = arith.constant 1 : index
    %c0_48 = arith.constant 0 : index
    %c0_49 = arith.constant 0 : index
    %149 = vector.load %arg6[%c1, %c0_48, %c0_49] : memref<3x32x96xf32, #tpu.memory_space<vmem>>, vector<1x32x96xf32>
    %150 = vector.shape_cast %149 : vector<1x32x96xf32> to vector<32x96xf32>
    %cst_50 = arith.constant dense<0.000000e+00> : vector<16x96xf32>
    %151 = tpu.matmul %148, %150, %cst_50 {dimension_numbers = #tpu.dot_dimension_numbers<[1], [0], [0], [1], [0, 0, 1, 1], [], []>} : vector<16x32xf32>, vector<32x96xf32>, vector<16x96xf32> -> vector<16x96xf32>
    %c1_51 = arith.constant 1 : index
    %c0_52 = arith.constant 0 : index
    %c0_53 = arith.constant 0 : index
    %152 = vector.load %arg7[%c1_51, %c0_52, %c0_53] : memref<3x32x32xf32, #tpu.memory_space<vmem>>, vector<1x32x32xf32>
    %153 = vector.shape_cast %152 : vector<1x32x32xf32> to vector<32x32xf32>
    %cst_54 = arith.constant 0.000000e+00 : f32
    %154 = vector.broadcast %cst_54 : f32 to vector<16x32xf32>
    %155 = vector.extract_strided_slice %151 {offsets = [0, 0], sizes = [16, 8], strides = [1, 1]} : vector<16x96xf32> to vector<16x8xf32>
    %156 = vector.shape_cast %155 : vector<16x8xf32> to vector<2x8x8xf32>
    %157 = vector.extract_strided_slice %151 {offsets = [0, 32], sizes = [16, 8], strides = [1, 1]} : vector<16x96xf32> to vector<16x8xf32>
    %158 = vector.shape_cast %157 : vector<16x8xf32> to vector<2x8x8xf32>
    %159 = vector.extract_strided_slice %151 {offsets = [0, 64], sizes = [16, 8], strides = [1, 1]} : vector<16x96xf32> to vector<16x8xf32>
    %160 = vector.shape_cast %159 : vector<16x8xf32> to vector<2x8x8xf32>
    "tpu.trace_start"() <{level = 10 : i32, message = "bnd,bmd->bnm"}> : () -> ()
    %cst_55 = arith.constant dense<0.000000e+00> : vector<2x8x8xf32>
    %161 = tpu.matmul %156, %158, %cst_55 {dimension_numbers = #tpu.dot_dimension_numbers<[2], [2], [1], [1], [0, 0, 0, 1, 1, 1], [0], [0]>} : vector<2x8x8xf32>, vector<2x8x8xf32>, vector<2x8x8xf32> -> vector<2x8x8xf32>
    "tpu.trace_stop"() : () -> ()
    %cst_56 = arith.constant dense<0xFF800000> : vector<2x8xf32>
    %162 = vector.multi_reduction <maximumf>, %161, %cst_56 [2] : vector<2x8x8xf32> to vector<2x8xf32>
    %163 = vector.shape_cast %162 : vector<2x8xf32> to vector<2x8x1xf32>
    %164 = vector.broadcast %163 : vector<2x8x1xf32> to vector<2x8x8xf32>
    %165 = arith.subf %161, %164 : vector<2x8x8xf32>
    %166 = math.exp %165 : vector<2x8x8xf32>
    %cst_57 = arith.constant dense<0.000000e+00> : vector<2x8xf32>
    %167 = vector.multi_reduction <add>, %166, %cst_57 [2] : vector<2x8x8xf32> to vector<2x8xf32>
    %168 = vector.shape_cast %167 : vector<2x8xf32> to vector<2x8x1xf32>
    %169 = tpu.reciprocal %168 {approx = true} : vector<2x8x1xf32> -> vector<2x8x1xf32>
    %170 = vector.broadcast %169 : vector<2x8x1xf32> to vector<2x8x8xf32>
    %171 = arith.mulf %166, %170 : vector<2x8x8xf32>
    "tpu.trace_start"() <{level = 10 : i32, message = "bnm,bmd->bnd"}> : () -> ()
    %cst_58 = arith.constant dense<0.000000e+00> : vector<2x8x8xf32>
    %172 = tpu.matmul %171, %160, %cst_58 {dimension_numbers = #tpu.dot_dimension_numbers<[2], [1], [1], [2], [0, 0, 0, 1, 1, 2], [0], [0]>} : vector<2x8x8xf32>, vector<2x8x8xf32>, vector<2x8x8xf32> -> vector<2x8x8xf32>
    "tpu.trace_stop"() : () -> ()
    %173 = vector.shape_cast %172 : vector<2x8x8xf32> to vector<16x8xf32>
    %174 = vector.extract_strided_slice %153 {offsets = [0, 0], sizes = [8, 32], strides = [1, 1]} : vector<32x32xf32> to vector<8x32xf32>
    %cst_59 = arith.constant dense<0.000000e+00> : vector<16x32xf32>
    %175 = tpu.matmul %173, %174, %cst_59 {dimension_numbers = #tpu.dot_dimension_numbers<[1], [0], [0], [1], [0, 0, 1, 1], [], []>} : vector<16x8xf32>, vector<8x32xf32>, vector<16x32xf32> -> vector<16x32xf32>
    %176 = arith.addf %154, %175 : vector<16x32xf32>
    %177 = vector.extract_strided_slice %151 {offsets = [0, 8], sizes = [16, 8], strides = [1, 1]} : vector<16x96xf32> to vector<16x8xf32>
    %178 = vector.shape_cast %177 : vector<16x8xf32> to vector<2x8x8xf32>
    %179 = vector.extract_strided_slice %151 {offsets = [0, 40], sizes = [16, 8], strides = [1, 1]} : vector<16x96xf32> to vector<16x8xf32>
    %180 = vector.shape_cast %179 : vector<16x8xf32> to vector<2x8x8xf32>
    %181 = vector.extract_strided_slice %151 {offsets = [0, 72], sizes = [16, 8], strides = [1, 1]} : vector<16x96xf32> to vector<16x8xf32>
    %182 = vector.shape_cast %181 : vector<16x8xf32> to vector<2x8x8xf32>
    "tpu.trace_start"() <{level = 10 : i32, message = "bnd,bmd->bnm"}> : () -> ()
    %cst_60 = arith.constant dense<0.000000e+00> : vector<2x8x8xf32>
    %183 = tpu.matmul %178, %180, %cst_60 {dimension_numbers = #tpu.dot_dimension_numbers<[2], [2], [1], [1], [0, 0, 0, 1, 1, 1], [0], [0]>} : vector<2x8x8xf32>, vector<2x8x8xf32>, vector<2x8x8xf32> -> vector<2x8x8xf32>
    "tpu.trace_stop"() : () -> ()
    %cst_61 = arith.constant dense<0xFF800000> : vector<2x8xf32>
    %184 = vector.multi_reduction <maximumf>, %183, %cst_61 [2] : vector<2x8x8xf32> to vector<2x8xf32>
    %185 = vector.shape_cast %184 : vector<2x8xf32> to vector<2x8x1xf32>
    %186 = vector.broadcast %185 : vector<2x8x1xf32> to vector<2x8x8xf32>
    %187 = arith.subf %183, %186 : vector<2x8x8xf32>
    %188 = math.exp %187 : vector<2x8x8xf32>
    %cst_62 = arith.constant dense<0.000000e+00> : vector<2x8xf32>
    %189 = vector.multi_reduction <add>, %188, %cst_62 [2] : vector<2x8x8xf32> to vector<2x8xf32>
    %190 = vector.shape_cast %189 : vector<2x8xf32> to vector<2x8x1xf32>
    %191 = tpu.reciprocal %190 {approx = true} : vector<2x8x1xf32> -> vector<2x8x1xf32>
    %192 = vector.broadcast %191 : vector<2x8x1xf32> to vector<2x8x8xf32>
    %193 = arith.mulf %188, %192 : vector<2x8x8xf32>
    "tpu.trace_start"() <{level = 10 : i32, message = "bnm,bmd->bnd"}> : () -> ()
    %cst_63 = arith.constant dense<0.000000e+00> : vector<2x8x8xf32>
    %194 = tpu.matmul %193, %182, %cst_63 {dimension_numbers = #tpu.dot_dimension_numbers<[2], [1], [1], [2], [0, 0, 0, 1, 1, 2], [0], [0]>} : vector<2x8x8xf32>, vector<2x8x8xf32>, vector<2x8x8xf32> -> vector<2x8x8xf32>
    "tpu.trace_stop"() : () -> ()
    %195 = vector.shape_cast %194 : vector<2x8x8xf32> to vector<16x8xf32>
    %196 = vector.extract_strided_slice %153 {offsets = [8, 0], sizes = [8, 32], strides = [1, 1]} : vector<32x32xf32> to vector<8x32xf32>
    %cst_64 = arith.constant dense<0.000000e+00> : vector<16x32xf32>
    %197 = tpu.matmul %195, %196, %cst_64 {dimension_numbers = #tpu.dot_dimension_numbers<[1], [0], [0], [1], [0, 0, 1, 1], [], []>} : vector<16x8xf32>, vector<8x32xf32>, vector<16x32xf32> -> vector<16x32xf32>
    %198 = arith.addf %176, %197 : vector<16x32xf32>
    %199 = vector.extract_strided_slice %151 {offsets = [0, 16], sizes = [16, 8], strides = [1, 1]} : vector<16x96xf32> to vector<16x8xf32>
    %200 = vector.shape_cast %199 : vector<16x8xf32> to vector<2x8x8xf32>
    %201 = vector.extract_strided_slice %151 {offsets = [0, 48], sizes = [16, 8], strides = [1, 1]} : vector<16x96xf32> to vector<16x8xf32>
    %202 = vector.shape_cast %201 : vector<16x8xf32> to vector<2x8x8xf32>
    %203 = vector.extract_strided_slice %151 {offsets = [0, 80], sizes = [16, 8], strides = [1, 1]} : vector<16x96xf32> to vector<16x8xf32>
    %204 = vector.shape_cast %203 : vector<16x8xf32> to vector<2x8x8xf32>
    "tpu.trace_start"() <{level = 10 : i32, message = "bnd,bmd->bnm"}> : () -> ()
    %cst_65 = arith.constant dense<0.000000e+00> : vector<2x8x8xf32>
    %205 = tpu.matmul %200, %202, %cst_65 {dimension_numbers = #tpu.dot_dimension_numbers<[2], [2], [1], [1], [0, 0, 0, 1, 1, 1], [0], [0]>} : vector<2x8x8xf32>, vector<2x8x8xf32>, vector<2x8x8xf32> -> vector<2x8x8xf32>
    "tpu.trace_stop"() : () -> ()
    %cst_66 = arith.constant dense<0xFF800000> : vector<2x8xf32>
    %206 = vector.multi_reduction <maximumf>, %205, %cst_66 [2] : vector<2x8x8xf32> to vector<2x8xf32>
    %207 = vector.shape_cast %206 : vector<2x8xf32> to vector<2x8x1xf32>
    %208 = vector.broadcast %207 : vector<2x8x1xf32> to vector<2x8x8xf32>
    %209 = arith.subf %205, %208 : vector<2x8x8xf32>
    %210 = math.exp %209 : vector<2x8x8xf32>
    %cst_67 = arith.constant dense<0.000000e+00> : vector<2x8xf32>
    %211 = vector.multi_reduction <add>, %210, %cst_67 [2] : vector<2x8x8xf32> to vector<2x8xf32>
    %212 = vector.shape_cast %211 : vector<2x8xf32> to vector<2x8x1xf32>
    %213 = tpu.reciprocal %212 {approx = true} : vector<2x8x1xf32> -> vector<2x8x1xf32>
    %214 = vector.broadcast %213 : vector<2x8x1xf32> to vector<2x8x8xf32>
    %215 = arith.mulf %210, %214 : vector<2x8x8xf32>
    "tpu.trace_start"() <{level = 10 : i32, message = "bnm,bmd->bnd"}> : () -> ()
    %cst_68 = arith.constant dense<0.000000e+00> : vector<2x8x8xf32>
    %216 = tpu.matmul %215, %204, %cst_68 {dimension_numbers = #tpu.dot_dimension_numbers<[2], [1], [1], [2], [0, 0, 0, 1, 1, 2], [0], [0]>} : vector<2x8x8xf32>, vector<2x8x8xf32>, vector<2x8x8xf32> -> vector<2x8x8xf32>
    "tpu.trace_stop"() : () -> ()
    %217 = vector.shape_cast %216 : vector<2x8x8xf32> to vector<16x8xf32>
    %218 = vector.extract_strided_slice %153 {offsets = [16, 0], sizes = [8, 32], strides = [1, 1]} : vector<32x32xf32> to vector<8x32xf32>
    %cst_69 = arith.constant dense<0.000000e+00> : vector<16x32xf32>
    %219 = tpu.matmul %217, %218, %cst_69 {dimension_numbers = #tpu.dot_dimension_numbers<[1], [0], [0], [1], [0, 0, 1, 1], [], []>} : vector<16x8xf32>, vector<8x32xf32>, vector<16x32xf32> -> vector<16x32xf32>
    %220 = arith.addf %198, %219 : vector<16x32xf32>
    %221 = vector.extract_strided_slice %151 {offsets = [0, 24], sizes = [16, 8], strides = [1, 1]} : vector<16x96xf32> to vector<16x8xf32>
    %222 = vector.shape_cast %221 : vector<16x8xf32> to vector<2x8x8xf32>
    %223 = vector.extract_strided_slice %151 {offsets = [0, 56], sizes = [16, 8], strides = [1, 1]} : vector<16x96xf32> to vector<16x8xf32>
    %224 = vector.shape_cast %223 : vector<16x8xf32> to vector<2x8x8xf32>
    %225 = vector.extract_strided_slice %151 {offsets = [0, 88], sizes = [16, 8], strides = [1, 1]} : vector<16x96xf32> to vector<16x8xf32>
    %226 = vector.shape_cast %225 : vector<16x8xf32> to vector<2x8x8xf32>
    "tpu.trace_start"() <{level = 10 : i32, message = "bnd,bmd->bnm"}> : () -> ()
    %cst_70 = arith.constant dense<0.000000e+00> : vector<2x8x8xf32>
    %227 = tpu.matmul %222, %224, %cst_70 {dimension_numbers = #tpu.dot_dimension_numbers<[2], [2], [1], [1], [0, 0, 0, 1, 1, 1], [0], [0]>} : vector<2x8x8xf32>, vector<2x8x8xf32>, vector<2x8x8xf32> -> vector<2x8x8xf32>
    "tpu.trace_stop"() : () -> ()
    %cst_71 = arith.constant dense<0xFF800000> : vector<2x8xf32>
    %228 = vector.multi_reduction <maximumf>, %227, %cst_71 [2] : vector<2x8x8xf32> to vector<2x8xf32>
    %229 = vector.shape_cast %228 : vector<2x8xf32> to vector<2x8x1xf32>
    %230 = vector.broadcast %229 : vector<2x8x1xf32> to vector<2x8x8xf32>
    %231 = arith.subf %227, %230 : vector<2x8x8xf32>
    %232 = math.exp %231 : vector<2x8x8xf32>
    %cst_72 = arith.constant dense<0.000000e+00> : vector<2x8xf32>
    %233 = vector.multi_reduction <add>, %232, %cst_72 [2] : vector<2x8x8xf32> to vector<2x8xf32>
    %234 = vector.shape_cast %233 : vector<2x8xf32> to vector<2x8x1xf32>
    %235 = tpu.reciprocal %234 {approx = true} : vector<2x8x1xf32> -> vector<2x8x1xf32>
    %236 = vector.broadcast %235 : vector<2x8x1xf32> to vector<2x8x8xf32>
    %237 = arith.mulf %232, %236 : vector<2x8x8xf32>
    "tpu.trace_start"() <{level = 10 : i32, message = "bnm,bmd->bnd"}> : () -> ()
    %cst_73 = arith.constant dense<0.000000e+00> : vector<2x8x8xf32>
    %238 = tpu.matmul %237, %226, %cst_73 {dimension_numbers = #tpu.dot_dimension_numbers<[2], [1], [1], [2], [0, 0, 0, 1, 1, 2], [0], [0]>} : vector<2x8x8xf32>, vector<2x8x8xf32>, vector<2x8x8xf32> -> vector<2x8x8xf32>
    "tpu.trace_stop"() : () -> ()
    %239 = vector.shape_cast %238 : vector<2x8x8xf32> to vector<16x8xf32>
    %240 = vector.extract_strided_slice %153 {offsets = [24, 0], sizes = [8, 32], strides = [1, 1]} : vector<32x32xf32> to vector<8x32xf32>
    %cst_74 = arith.constant dense<0.000000e+00> : vector<16x32xf32>
    %241 = tpu.matmul %239, %240, %cst_74 {dimension_numbers = #tpu.dot_dimension_numbers<[1], [0], [0], [1], [0, 0, 1, 1], [], []>} : vector<16x8xf32>, vector<8x32xf32>, vector<16x32xf32> -> vector<16x32xf32>
    %242 = arith.addf %220, %241 : vector<16x32xf32>
    %243 = arith.addf %126, %242 : vector<16x32xf32>
    %244 = vector.extract_strided_slice %2 {offsets = [1, 0], sizes = [1, 32], strides = [1, 1]} : vector<3x32xf32> to vector<1x32xf32>
    %245 = vector.broadcast %244 : vector<1x32xf32> to vector<16x32xf32>
    %246 = arith.addf %243, %245 : vector<16x32xf32>
    %c0_75 = arith.constant 0 : index
    %c0_76 = arith.constant 0 : index
    %c0_77 = arith.constant 0 : index
    %247 = vector.load %arg3[%c0_75, %c0_76, %c0_77] : memref<2x8x32xf32, #tpu.memory_space<vmem>>, vector<2x8x32xf32>
    %248 = vector.shape_cast %247 : vector<2x8x32xf32> to vector<16x32xf32>
    %cst_78 = arith.constant dense<0.000000e+00> : vector<16xf32>
    %249 = vector.multi_reduction <add>, %248, %cst_78 [1] : vector<16x32xf32> to vector<16xf32>
    %250 = vector.shape_cast %249 : vector<16xf32> to vector<16x1xf32>
    %cst_79 = arith.constant 3.125000e-02 : f32
    %251 = vector.broadcast %cst_79 : f32 to vector<16x1xf32>
    %252 = arith.mulf %250, %251 : vector<16x1xf32>
    %253 = vector.broadcast %252 : vector<16x1xf32> to vector<16x32xf32>
    %254 = arith.subf %248, %253 : vector<16x32xf32>
    %255 = arith.mulf %254, %254 : vector<16x32xf32>
    %cst_80 = arith.constant dense<0.000000e+00> : vector<16xf32>
    %256 = vector.multi_reduction <add>, %255, %cst_80 [1] : vector<16x32xf32> to vector<16xf32>
    %257 = vector.shape_cast %256 : vector<16xf32> to vector<16x1xf32>
    %cst_81 = arith.constant 3.125000e-02 : f32
    %258 = vector.broadcast %cst_81 : f32 to vector<16x1xf32>
    %259 = arith.mulf %257, %258 : vector<16x1xf32>
    %cst_82 = arith.constant 9.99999974E-6 : f32
    %260 = vector.broadcast %cst_82 : f32 to vector<16x1xf32>
    %261 = arith.addf %259, %260 : vector<16x1xf32>
    %262 = math.rsqrt %261 : vector<16x1xf32>
    %263 = vector.broadcast %262 : vector<16x1xf32> to vector<16x32xf32>
    %264 = arith.mulf %254, %263 : vector<16x32xf32>
    %265 = vector.extract_strided_slice %0 {offsets = [2, 0], sizes = [1, 32], strides = [1, 1]} : vector<3x32xf32> to vector<1x32xf32>
    %266 = vector.broadcast %265 : vector<1x32xf32> to vector<16x32xf32>
    %267 = arith.mulf %264, %266 : vector<16x32xf32>
    %268 = vector.extract_strided_slice %1 {offsets = [2, 0], sizes = [1, 32], strides = [1, 1]} : vector<3x32xf32> to vector<1x32xf32>
    %269 = vector.broadcast %268 : vector<1x32xf32> to vector<16x32xf32>
    %270 = arith.addf %267, %269 : vector<16x32xf32>
    %c2 = arith.constant 2 : index
    %c0_83 = arith.constant 0 : index
    %c0_84 = arith.constant 0 : index
    %271 = vector.load %arg6[%c2, %c0_83, %c0_84] : memref<3x32x96xf32, #tpu.memory_space<vmem>>, vector<1x32x96xf32>
    %272 = vector.shape_cast %271 : vector<1x32x96xf32> to vector<32x96xf32>
    %cst_85 = arith.constant dense<0.000000e+00> : vector<16x96xf32>
    %273 = tpu.matmul %270, %272, %cst_85 {dimension_numbers = #tpu.dot_dimension_numbers<[1], [0], [0], [1], [0, 0, 1, 1], [], []>} : vector<16x32xf32>, vector<32x96xf32>, vector<16x96xf32> -> vector<16x96xf32>
    %c2_86 = arith.constant 2 : index
    %c0_87 = arith.constant 0 : index
    %c0_88 = arith.constant 0 : index
    %274 = vector.load %arg7[%c2_86, %c0_87, %c0_88] : memref<3x32x32xf32, #tpu.memory_space<vmem>>, vector<1x32x32xf32>
    %275 = vector.shape_cast %274 : vector<1x32x32xf32> to vector<32x32xf32>
    %cst_89 = arith.constant 0.000000e+00 : f32
    %276 = vector.broadcast %cst_89 : f32 to vector<16x32xf32>
    %277 = vector.extract_strided_slice %273 {offsets = [0, 0], sizes = [16, 8], strides = [1, 1]} : vector<16x96xf32> to vector<16x8xf32>
    %278 = vector.shape_cast %277 : vector<16x8xf32> to vector<2x8x8xf32>
    %279 = vector.extract_strided_slice %273 {offsets = [0, 32], sizes = [16, 8], strides = [1, 1]} : vector<16x96xf32> to vector<16x8xf32>
    %280 = vector.shape_cast %279 : vector<16x8xf32> to vector<2x8x8xf32>
    %281 = vector.extract_strided_slice %273 {offsets = [0, 64], sizes = [16, 8], strides = [1, 1]} : vector<16x96xf32> to vector<16x8xf32>
    %282 = vector.shape_cast %281 : vector<16x8xf32> to vector<2x8x8xf32>
    "tpu.trace_start"() <{level = 10 : i32, message = "bnd,bmd->bnm"}> : () -> ()
    %cst_90 = arith.constant dense<0.000000e+00> : vector<2x8x8xf32>
    %283 = tpu.matmul %278, %280, %cst_90 {dimension_numbers = #tpu.dot_dimension_numbers<[2], [2], [1], [1], [0, 0, 0, 1, 1, 1], [0], [0]>} : vector<2x8x8xf32>, vector<2x8x8xf32>, vector<2x8x8xf32> -> vector<2x8x8xf32>
    "tpu.trace_stop"() : () -> ()
    %cst_91 = arith.constant dense<0xFF800000> : vector<2x8xf32>
    %284 = vector.multi_reduction <maximumf>, %283, %cst_91 [2] : vector<2x8x8xf32> to vector<2x8xf32>
    %285 = vector.shape_cast %284 : vector<2x8xf32> to vector<2x8x1xf32>
    %286 = vector.broadcast %285 : vector<2x8x1xf32> to vector<2x8x8xf32>
    %287 = arith.subf %283, %286 : vector<2x8x8xf32>
    %288 = math.exp %287 : vector<2x8x8xf32>
    %cst_92 = arith.constant dense<0.000000e+00> : vector<2x8xf32>
    %289 = vector.multi_reduction <add>, %288, %cst_92 [2] : vector<2x8x8xf32> to vector<2x8xf32>
    %290 = vector.shape_cast %289 : vector<2x8xf32> to vector<2x8x1xf32>
    %291 = tpu.reciprocal %290 {approx = true} : vector<2x8x1xf32> -> vector<2x8x1xf32>
    %292 = vector.broadcast %291 : vector<2x8x1xf32> to vector<2x8x8xf32>
    %293 = arith.mulf %288, %292 : vector<2x8x8xf32>
    "tpu.trace_start"() <{level = 10 : i32, message = "bnm,bmd->bnd"}> : () -> ()
    %cst_93 = arith.constant dense<0.000000e+00> : vector<2x8x8xf32>
    %294 = tpu.matmul %293, %282, %cst_93 {dimension_numbers = #tpu.dot_dimension_numbers<[2], [1], [1], [2], [0, 0, 0, 1, 1, 2], [0], [0]>} : vector<2x8x8xf32>, vector<2x8x8xf32>, vector<2x8x8xf32> -> vector<2x8x8xf32>
    "tpu.trace_stop"() : () -> ()
    %295 = vector.shape_cast %294 : vector<2x8x8xf32> to vector<16x8xf32>
    %296 = vector.extract_strided_slice %275 {offsets = [0, 0], sizes = [8, 32], strides = [1, 1]} : vector<32x32xf32> to vector<8x32xf32>
    %cst_94 = arith.constant dense<0.000000e+00> : vector<16x32xf32>
    %297 = tpu.matmul %295, %296, %cst_94 {dimension_numbers = #tpu.dot_dimension_numbers<[1], [0], [0], [1], [0, 0, 1, 1], [], []>} : vector<16x8xf32>, vector<8x32xf32>, vector<16x32xf32> -> vector<16x32xf32>
    %298 = arith.addf %276, %297 : vector<16x32xf32>
    %299 = vector.extract_strided_slice %273 {offsets = [0, 8], sizes = [16, 8], strides = [1, 1]} : vector<16x96xf32> to vector<16x8xf32>
    %300 = vector.shape_cast %299 : vector<16x8xf32> to vector<2x8x8xf32>
    %301 = vector.extract_strided_slice %273 {offsets = [0, 40], sizes = [16, 8], strides = [1, 1]} : vector<16x96xf32> to vector<16x8xf32>
    %302 = vector.shape_cast %301 : vector<16x8xf32> to vector<2x8x8xf32>
    %303 = vector.extract_strided_slice %273 {offsets = [0, 72], sizes = [16, 8], strides = [1, 1]} : vector<16x96xf32> to vector<16x8xf32>
    %304 = vector.shape_cast %303 : vector<16x8xf32> to vector<2x8x8xf32>
    "tpu.trace_start"() <{level = 10 : i32, message = "bnd,bmd->bnm"}> : () -> ()
    %cst_95 = arith.constant dense<0.000000e+00> : vector<2x8x8xf32>
    %305 = tpu.matmul %300, %302, %cst_95 {dimension_numbers = #tpu.dot_dimension_numbers<[2], [2], [1], [1], [0, 0, 0, 1, 1, 1], [0], [0]>} : vector<2x8x8xf32>, vector<2x8x8xf32>, vector<2x8x8xf32> -> vector<2x8x8xf32>
    "tpu.trace_stop"() : () -> ()
    %cst_96 = arith.constant dense<0xFF800000> : vector<2x8xf32>
    %306 = vector.multi_reduction <maximumf>, %305, %cst_96 [2] : vector<2x8x8xf32> to vector<2x8xf32>
    %307 = vector.shape_cast %306 : vector<2x8xf32> to vector<2x8x1xf32>
    %308 = vector.broadcast %307 : vector<2x8x1xf32> to vector<2x8x8xf32>
    %309 = arith.subf %305, %308 : vector<2x8x8xf32>
    %310 = math.exp %309 : vector<2x8x8xf32>
    %cst_97 = arith.constant dense<0.000000e+00> : vector<2x8xf32>
    %311 = vector.multi_reduction <add>, %310, %cst_97 [2] : vector<2x8x8xf32> to vector<2x8xf32>
    %312 = vector.shape_cast %311 : vector<2x8xf32> to vector<2x8x1xf32>
    %313 = tpu.reciprocal %312 {approx = true} : vector<2x8x1xf32> -> vector<2x8x1xf32>
    %314 = vector.broadcast %313 : vector<2x8x1xf32> to vector<2x8x8xf32>
    %315 = arith.mulf %310, %314 : vector<2x8x8xf32>
    "tpu.trace_start"() <{level = 10 : i32, message = "bnm,bmd->bnd"}> : () -> ()
    %cst_98 = arith.constant dense<0.000000e+00> : vector<2x8x8xf32>
    %316 = tpu.matmul %315, %304, %cst_98 {dimension_numbers = #tpu.dot_dimension_numbers<[2], [1], [1], [2], [0, 0, 0, 1, 1, 2], [0], [0]>} : vector<2x8x8xf32>, vector<2x8x8xf32>, vector<2x8x8xf32> -> vector<2x8x8xf32>
    "tpu.trace_stop"() : () -> ()
    %317 = vector.shape_cast %316 : vector<2x8x8xf32> to vector<16x8xf32>
    %318 = vector.extract_strided_slice %275 {offsets = [8, 0], sizes = [8, 32], strides = [1, 1]} : vector<32x32xf32> to vector<8x32xf32>
    %cst_99 = arith.constant dense<0.000000e+00> : vector<16x32xf32>
    %319 = tpu.matmul %317, %318, %cst_99 {dimension_numbers = #tpu.dot_dimension_numbers<[1], [0], [0], [1], [0, 0, 1, 1], [], []>} : vector<16x8xf32>, vector<8x32xf32>, vector<16x32xf32> -> vector<16x32xf32>
    %320 = arith.addf %298, %319 : vector<16x32xf32>
    %321 = vector.extract_strided_slice %273 {offsets = [0, 16], sizes = [16, 8], strides = [1, 1]} : vector<16x96xf32> to vector<16x8xf32>
    %322 = vector.shape_cast %321 : vector<16x8xf32> to vector<2x8x8xf32>
    %323 = vector.extract_strided_slice %273 {offsets = [0, 48], sizes = [16, 8], strides = [1, 1]} : vector<16x96xf32> to vector<16x8xf32>
    %324 = vector.shape_cast %323 : vector<16x8xf32> to vector<2x8x8xf32>
    %325 = vector.extract_strided_slice %273 {offsets = [0, 80], sizes = [16, 8], strides = [1, 1]} : vector<16x96xf32> to vector<16x8xf32>
    %326 = vector.shape_cast %325 : vector<16x8xf32> to vector<2x8x8xf32>
    "tpu.trace_start"() <{level = 10 : i32, message = "bnd,bmd->bnm"}> : () -> ()
    %cst_100 = arith.constant dense<0.000000e+00> : vector<2x8x8xf32>
    %327 = tpu.matmul %322, %324, %cst_100 {dimension_numbers = #tpu.dot_dimension_numbers<[2], [2], [1], [1], [0, 0, 0, 1, 1, 1], [0], [0]>} : vector<2x8x8xf32>, vector<2x8x8xf32>, vector<2x8x8xf32> -> vector<2x8x8xf32>
    "tpu.trace_stop"() : () -> ()
    %cst_101 = arith.constant dense<0xFF800000> : vector<2x8xf32>
    %328 = vector.multi_reduction <maximumf>, %327, %cst_101 [2] : vector<2x8x8xf32> to vector<2x8xf32>
    %329 = vector.shape_cast %328 : vector<2x8xf32> to vector<2x8x1xf32>
    %330 = vector.broadcast %329 : vector<2x8x1xf32> to vector<2x8x8xf32>
    %331 = arith.subf %327, %330 : vector<2x8x8xf32>
    %332 = math.exp %331 : vector<2x8x8xf32>
    %cst_102 = arith.constant dense<0.000000e+00> : vector<2x8xf32>
    %333 = vector.multi_reduction <add>, %332, %cst_102 [2] : vector<2x8x8xf32> to vector<2x8xf32>
    %334 = vector.shape_cast %333 : vector<2x8xf32> to vector<2x8x1xf32>
    %335 = tpu.reciprocal %334 {approx = true} : vector<2x8x1xf32> -> vector<2x8x1xf32>
    %336 = vector.broadcast %335 : vector<2x8x1xf32> to vector<2x8x8xf32>
    %337 = arith.mulf %332, %336 : vector<2x8x8xf32>
    "tpu.trace_start"() <{level = 10 : i32, message = "bnm,bmd->bnd"}> : () -> ()
    %cst_103 = arith.constant dense<0.000000e+00> : vector<2x8x8xf32>
    %338 = tpu.matmul %337, %326, %cst_103 {dimension_numbers = #tpu.dot_dimension_numbers<[2], [1], [1], [2], [0, 0, 0, 1, 1, 2], [0], [0]>} : vector<2x8x8xf32>, vector<2x8x8xf32>, vector<2x8x8xf32> -> vector<2x8x8xf32>
    "tpu.trace_stop"() : () -> ()
    %339 = vector.shape_cast %338 : vector<2x8x8xf32> to vector<16x8xf32>
    %340 = vector.extract_strided_slice %275 {offsets = [16, 0], sizes = [8, 32], strides = [1, 1]} : vector<32x32xf32> to vector<8x32xf32>
    %cst_104 = arith.constant dense<0.000000e+00> : vector<16x32xf32>
    %341 = tpu.matmul %339, %340, %cst_104 {dimension_numbers = #tpu.dot_dimension_numbers<[1], [0], [0], [1], [0, 0, 1, 1], [], []>} : vector<16x8xf32>, vector<8x32xf32>, vector<16x32xf32> -> vector<16x32xf32>
    %342 = arith.addf %320, %341 : vector<16x32xf32>
    %343 = vector.extract_strided_slice %273 {offsets = [0, 24], sizes = [16, 8], strides = [1, 1]} : vector<16x96xf32> to vector<16x8xf32>
    %344 = vector.shape_cast %343 : vector<16x8xf32> to vector<2x8x8xf32>
    %345 = vector.extract_strided_slice %273 {offsets = [0, 56], sizes = [16, 8], strides = [1, 1]} : vector<16x96xf32> to vector<16x8xf32>
    %346 = vector.shape_cast %345 : vector<16x8xf32> to vector<2x8x8xf32>
    %347 = vector.extract_strided_slice %273 {offsets = [0, 88], sizes = [16, 8], strides = [1, 1]} : vector<16x96xf32> to vector<16x8xf32>
    %348 = vector.shape_cast %347 : vector<16x8xf32> to vector<2x8x8xf32>
    "tpu.trace_start"() <{level = 10 : i32, message = "bnd,bmd->bnm"}> : () -> ()
    %cst_105 = arith.constant dense<0.000000e+00> : vector<2x8x8xf32>
    %349 = tpu.matmul %344, %346, %cst_105 {dimension_numbers = #tpu.dot_dimension_numbers<[2], [2], [1], [1], [0, 0, 0, 1, 1, 1], [0], [0]>} : vector<2x8x8xf32>, vector<2x8x8xf32>, vector<2x8x8xf32> -> vector<2x8x8xf32>
    "tpu.trace_stop"() : () -> ()
    %cst_106 = arith.constant dense<0xFF800000> : vector<2x8xf32>
    %350 = vector.multi_reduction <maximumf>, %349, %cst_106 [2] : vector<2x8x8xf32> to vector<2x8xf32>
    %351 = vector.shape_cast %350 : vector<2x8xf32> to vector<2x8x1xf32>
    %352 = vector.broadcast %351 : vector<2x8x1xf32> to vector<2x8x8xf32>
    %353 = arith.subf %349, %352 : vector<2x8x8xf32>
    %354 = math.exp %353 : vector<2x8x8xf32>
    %cst_107 = arith.constant dense<0.000000e+00> : vector<2x8xf32>
    %355 = vector.multi_reduction <add>, %354, %cst_107 [2] : vector<2x8x8xf32> to vector<2x8xf32>
    %356 = vector.shape_cast %355 : vector<2x8xf32> to vector<2x8x1xf32>
    %357 = tpu.reciprocal %356 {approx = true} : vector<2x8x1xf32> -> vector<2x8x1xf32>
    %358 = vector.broadcast %357 : vector<2x8x1xf32> to vector<2x8x8xf32>
    %359 = arith.mulf %354, %358 : vector<2x8x8xf32>
    "tpu.trace_start"() <{level = 10 : i32, message = "bnm,bmd->bnd"}> : () -> ()
    %cst_108 = arith.constant dense<0.000000e+00> : vector<2x8x8xf32>
    %360 = tpu.matmul %359, %348, %cst_108 {dimension_numbers = #tpu.dot_dimension_numbers<[2], [1], [1], [2], [0, 0, 0, 1, 1, 2], [0], [0]>} : vector<2x8x8xf32>, vector<2x8x8xf32>, vector<2x8x8xf32> -> vector<2x8x8xf32>
    "tpu.trace_stop"() : () -> ()
    %361 = vector.shape_cast %360 : vector<2x8x8xf32> to vector<16x8xf32>
    %362 = vector.extract_strided_slice %275 {offsets = [24, 0], sizes = [8, 32], strides = [1, 1]} : vector<32x32xf32> to vector<8x32xf32>
    %cst_109 = arith.constant dense<0.000000e+00> : vector<16x32xf32>
    %363 = tpu.matmul %361, %362, %cst_109 {dimension_numbers = #tpu.dot_dimension_numbers<[1], [0], [0], [1], [0, 0, 1, 1], [], []>} : vector<16x8xf32>, vector<8x32xf32>, vector<16x32xf32> -> vector<16x32xf32>
    %364 = arith.addf %342, %363 : vector<16x32xf32>
    %365 = arith.addf %248, %364 : vector<16x32xf32>
    %366 = vector.extract_strided_slice %2 {offsets = [2, 0], sizes = [1, 32], strides = [1, 1]} : vector<3x32xf32> to vector<1x32xf32>
    %367 = vector.broadcast %366 : vector<1x32xf32> to vector<16x32xf32>
    %368 = arith.addf %365, %367 : vector<16x32xf32>
    %cst_110 = arith.constant 0.000000e+00 : f32
    %369 = vector.broadcast %cst_110 : f32 to vector<16x1xf32>
    %cst_111 = arith.constant 0.000000e+00 : f32
    %370 = vector.broadcast %cst_111 : f32 to vector<16x1xf32>
    %cst_112 = arith.constant dense<0.000000e+00> : vector<16xf32>
    %371 = vector.multi_reduction <add>, %124, %cst_112 [1] : vector<16x32xf32> to vector<16xf32>
    %372 = vector.shape_cast %371 : vector<16xf32> to vector<16x1xf32>
    %373 = arith.addf %369, %372 : vector<16x1xf32>
    %374 = arith.mulf %124, %124 : vector<16x32xf32>
    %cst_113 = arith.constant dense<0.000000e+00> : vector<16xf32>
    %375 = vector.multi_reduction <add>, %374, %cst_113 [1] : vector<16x32xf32> to vector<16xf32>
    %376 = vector.shape_cast %375 : vector<16xf32> to vector<16x1xf32>
    %377 = arith.addf %370, %376 : vector<16x1xf32>
    %cst_114 = arith.constant dense<0.000000e+00> : vector<16xf32>
    %378 = vector.multi_reduction <add>, %246, %cst_114 [1] : vector<16x32xf32> to vector<16xf32>
    %379 = vector.shape_cast %378 : vector<16xf32> to vector<16x1xf32>
    %380 = arith.addf %373, %379 : vector<16x1xf32>
    %381 = arith.mulf %246, %246 : vector<16x32xf32>
    %cst_115 = arith.constant dense<0.000000e+00> : vector<16xf32>
    %382 = vector.multi_reduction <add>, %381, %cst_115 [1] : vector<16x32xf32> to vector<16xf32>
    %383 = vector.shape_cast %382 : vector<16xf32> to vector<16x1xf32>
    %384 = arith.addf %377, %383 : vector<16x1xf32>
    %cst_116 = arith.constant dense<0.000000e+00> : vector<16xf32>
    %385 = vector.multi_reduction <add>, %368, %cst_116 [1] : vector<16x32xf32> to vector<16xf32>
    %386 = vector.shape_cast %385 : vector<16xf32> to vector<16x1xf32>
    %387 = arith.addf %380, %386 : vector<16x1xf32>
    %388 = arith.mulf %368, %368 : vector<16x32xf32>
    %cst_117 = arith.constant dense<0.000000e+00> : vector<16xf32>
    %389 = vector.multi_reduction <add>, %388, %cst_117 [1] : vector<16x32xf32> to vector<16xf32>
    %390 = vector.shape_cast %389 : vector<16xf32> to vector<16x1xf32>
    %391 = arith.addf %384, %390 : vector<16x1xf32>
    %cst_118 = arith.constant 0.010416667 : f32
    %392 = vector.broadcast %cst_118 : f32 to vector<16x1xf32>
    %393 = arith.mulf %387, %392 : vector<16x1xf32>
    %cst_119 = arith.constant 0.010416667 : f32
    %394 = vector.broadcast %cst_119 : f32 to vector<16x1xf32>
    %395 = arith.mulf %391, %394 : vector<16x1xf32>
    %396 = arith.mulf %393, %393 : vector<16x1xf32>
    %397 = arith.subf %395, %396 : vector<16x1xf32>
    %cst_120 = arith.constant 0.000000e+00 : f32
    %398 = vector.broadcast %cst_120 : f32 to vector<16x1xf32>
    %399 = arith.maximumf %397, %398 : vector<16x1xf32>
    %cst_121 = arith.constant 9.99999974E-6 : f32
    %400 = vector.broadcast %cst_121 : f32 to vector<16x1xf32>
    %401 = arith.addf %399, %400 : vector<16x1xf32>
    %402 = math.rsqrt %401 : vector<16x1xf32>
    %c0_122 = arith.constant 0 : index
    %c0_123 = arith.constant 0 : index
    %403 = vector.load %arg9[%c0_122, %c0_123] : memref<3x32xf32, #tpu.memory_space<vmem>>, vector<3x32xf32>
    %c0_124 = arith.constant 0 : index
    %c0_125 = arith.constant 0 : index
    %404 = vector.load %arg10[%c0_124, %c0_125] : memref<3x32xf32, #tpu.memory_space<vmem>>, vector<3x32xf32>
    %c0_126 = arith.constant 0 : index
    %c0_127 = arith.constant 0 : index
    %405 = vector.load %arg12[%c0_126, %c0_127] : memref<1x64xf32, #tpu.memory_space<vmem>>, vector<1x64xf32>
    %cst_128 = arith.constant 0.000000e+00 : f32
    %406 = vector.broadcast %cst_128 : f32 to vector<16x64xf32>
    %407 = vector.broadcast %393 : vector<16x1xf32> to vector<16x32xf32>
    %408 = arith.subf %124, %407 : vector<16x32xf32>
    %409 = vector.broadcast %402 : vector<16x1xf32> to vector<16x32xf32>
    %410 = arith.mulf %408, %409 : vector<16x32xf32>
    %411 = vector.extract_strided_slice %403 {offsets = [0, 0], sizes = [1, 32], strides = [1, 1]} : vector<3x32xf32> to vector<1x32xf32>
    %412 = vector.broadcast %411 : vector<1x32xf32> to vector<16x32xf32>
    %413 = arith.mulf %410, %412 : vector<16x32xf32>
    %414 = vector.extract_strided_slice %404 {offsets = [0, 0], sizes = [1, 32], strides = [1, 1]} : vector<3x32xf32> to vector<1x32xf32>
    %415 = vector.broadcast %414 : vector<1x32xf32> to vector<16x32xf32>
    %416 = arith.addf %413, %415 : vector<16x32xf32>
    %c0_129 = arith.constant 0 : index
    %c0_130 = arith.constant 0 : index
    %c0_131 = arith.constant 0 : index
    %417 = vector.load %arg11[%c0_129, %c0_130, %c0_131] : memref<3x32x64xf32, #tpu.memory_space<vmem>>, vector<1x32x64xf32>
    %418 = vector.shape_cast %417 : vector<1x32x64xf32> to vector<32x64xf32>
    %cst_132 = arith.constant dense<0.000000e+00> : vector<16x64xf32>
    %419 = tpu.matmul %416, %418, %cst_132 {dimension_numbers = #tpu.dot_dimension_numbers<[1], [0], [0], [1], [0, 0, 1, 1], [], []>} : vector<16x32xf32>, vector<32x64xf32>, vector<16x64xf32> -> vector<16x64xf32>
    %420 = arith.addf %406, %419 : vector<16x64xf32>
    %421 = vector.broadcast %393 : vector<16x1xf32> to vector<16x32xf32>
    %422 = arith.subf %246, %421 : vector<16x32xf32>
    %423 = vector.broadcast %402 : vector<16x1xf32> to vector<16x32xf32>
    %424 = arith.mulf %422, %423 : vector<16x32xf32>
    %425 = vector.extract_strided_slice %403 {offsets = [1, 0], sizes = [1, 32], strides = [1, 1]} : vector<3x32xf32> to vector<1x32xf32>
    %426 = vector.broadcast %425 : vector<1x32xf32> to vector<16x32xf32>
    %427 = arith.mulf %424, %426 : vector<16x32xf32>
    %428 = vector.extract_strided_slice %404 {offsets = [1, 0], sizes = [1, 32], strides = [1, 1]} : vector<3x32xf32> to vector<1x32xf32>
    %429 = vector.broadcast %428 : vector<1x32xf32> to vector<16x32xf32>
    %430 = arith.addf %427, %429 : vector<16x32xf32>
    %c1_133 = arith.constant 1 : index
    %c0_134 = arith.constant 0 : index
    %c0_135 = arith.constant 0 : index
    %431 = vector.load %arg11[%c1_133, %c0_134, %c0_135] : memref<3x32x64xf32, #tpu.memory_space<vmem>>, vector<1x32x64xf32>
    %432 = vector.shape_cast %431 : vector<1x32x64xf32> to vector<32x64xf32>
    %cst_136 = arith.constant dense<0.000000e+00> : vector<16x64xf32>
    %433 = tpu.matmul %430, %432, %cst_136 {dimension_numbers = #tpu.dot_dimension_numbers<[1], [0], [0], [1], [0, 0, 1, 1], [], []>} : vector<16x32xf32>, vector<32x64xf32>, vector<16x64xf32> -> vector<16x64xf32>
    %434 = arith.addf %420, %433 : vector<16x64xf32>
    %435 = vector.broadcast %393 : vector<16x1xf32> to vector<16x32xf32>
    %436 = arith.subf %368, %435 : vector<16x32xf32>
    %437 = vector.broadcast %402 : vector<16x1xf32> to vector<16x32xf32>
    %438 = arith.mulf %436, %437 : vector<16x32xf32>
    %439 = vector.extract_strided_slice %403 {offsets = [2, 0], sizes = [1, 32], strides = [1, 1]} : vector<3x32xf32> to vector<1x32xf32>
    %440 = vector.broadcast %439 : vector<1x32xf32> to vector<16x32xf32>
    %441 = arith.mulf %438, %440 : vector<16x32xf32>
    %442 = vector.extract_strided_slice %404 {offsets = [2, 0], sizes = [1, 32], strides = [1, 1]} : vector<3x32xf32> to vector<1x32xf32>
    %443 = vector.broadcast %442 : vector<1x32xf32> to vector<16x32xf32>
    %444 = arith.addf %441, %443 : vector<16x32xf32>
    %c2_137 = arith.constant 2 : index
    %c0_138 = arith.constant 0 : index
    %c0_139 = arith.constant 0 : index
    %445 = vector.load %arg11[%c2_137, %c0_138, %c0_139] : memref<3x32x64xf32, #tpu.memory_space<vmem>>, vector<1x32x64xf32>
    %446 = vector.shape_cast %445 : vector<1x32x64xf32> to vector<32x64xf32>
    %cst_140 = arith.constant dense<0.000000e+00> : vector<16x64xf32>
    %447 = tpu.matmul %444, %446, %cst_140 {dimension_numbers = #tpu.dot_dimension_numbers<[1], [0], [0], [1], [0, 0, 1, 1], [], []>} : vector<16x32xf32>, vector<32x64xf32>, vector<16x64xf32> -> vector<16x64xf32>
    %448 = arith.addf %434, %447 : vector<16x64xf32>
    %449 = vector.broadcast %405 : vector<1x64xf32> to vector<16x64xf32>
    %450 = arith.addf %448, %449 : vector<16x64xf32>
    %cst_141 = arith.constant 5.000000e-01 : f32
    %451 = vector.broadcast %cst_141 : f32 to vector<16x64xf32>
    %452 = arith.mulf %451, %450 : vector<16x64xf32>
    %cst_142 = arith.constant 0.707106769 : f32
    %453 = vector.broadcast %cst_142 : f32 to vector<16x64xf32>
    %454 = arith.mulf %450, %453 : vector<16x64xf32>
    %455 = math.erf %454 : vector<16x64xf32>
    %cst_143 = arith.constant 1.000000e+00 : f32
    %456 = vector.broadcast %cst_143 : f32 to vector<16x64xf32>
    %457 = arith.addf %456, %455 : vector<16x64xf32>
    %458 = arith.mulf %452, %457 : vector<16x64xf32>
    %c0_144 = arith.constant 0 : index
    %c0_145 = arith.constant 0 : index
    %459 = vector.load %arg14[%c0_144, %c0_145] : memref<3x32xf32, #tpu.memory_space<vmem>>, vector<3x32xf32>
    %c0_146 = arith.constant 0 : index
    %c0_147 = arith.constant 0 : index
    %c0_148 = arith.constant 0 : index
    %460 = vector.load %arg13[%c0_146, %c0_147, %c0_148] : memref<3x64x32xf32, #tpu.memory_space<vmem>>, vector<1x64x32xf32>
    %461 = vector.shape_cast %460 : vector<1x64x32xf32> to vector<64x32xf32>
    %cst_149 = arith.constant dense<0.000000e+00> : vector<16x32xf32>
    %462 = tpu.matmul %458, %461, %cst_149 {dimension_numbers = #tpu.dot_dimension_numbers<[1], [0], [0], [1], [0, 0, 1, 1], [], []>} : vector<16x64xf32>, vector<64x32xf32>, vector<16x32xf32> -> vector<16x32xf32>
    %463 = vector.extract_strided_slice %459 {offsets = [0, 0], sizes = [1, 32], strides = [1, 1]} : vector<3x32xf32> to vector<1x32xf32>
    %464 = vector.broadcast %463 : vector<1x32xf32> to vector<16x32xf32>
    %465 = arith.addf %462, %464 : vector<16x32xf32>
    %466 = arith.addf %124, %465 : vector<16x32xf32>
    %467 = vector.shape_cast %466 : vector<16x32xf32> to vector<2x8x32xf32>
    %c0_150 = arith.constant 0 : index
    %c0_151 = arith.constant 0 : index
    %c0_152 = arith.constant 0 : index
    %468 = vector.load %arg15[%c0_150, %c0_151, %c0_152] : memref<2x8x32xf32, #tpu.memory_space<vmem>>, vector<2x8x32xf32>
    tpu.vector_store %arg15[%c0_150, %c0_151, %c0_152], %467 {strides = array<i32>} : memref<2x8x32xf32, #tpu.memory_space<vmem>>, vector<2x8x32xf32>,
    %c1_153 = arith.constant 1 : index
    %c0_154 = arith.constant 0 : index
    %c0_155 = arith.constant 0 : index
    %469 = vector.load %arg13[%c1_153, %c0_154, %c0_155] : memref<3x64x32xf32, #tpu.memory_space<vmem>>, vector<1x64x32xf32>
    %470 = vector.shape_cast %469 : vector<1x64x32xf32> to vector<64x32xf32>
    %cst_156 = arith.constant dense<0.000000e+00> : vector<16x32xf32>
    %471 = tpu.matmul %458, %470, %cst_156 {dimension_numbers = #tpu.dot_dimension_numbers<[1], [0], [0], [1], [0, 0, 1, 1], [], []>} : vector<16x64xf32>, vector<64x32xf32>, vector<16x32xf32> -> vector<16x32xf32>
    %472 = vector.extract_strided_slice %459 {offsets = [1, 0], sizes = [1, 32], strides = [1, 1]} : vector<3x32xf32> to vector<1x32xf32>
    %473 = vector.broadcast %472 : vector<1x32xf32> to vector<16x32xf32>
    %474 = arith.addf %471, %473 : vector<16x32xf32>
    %475 = arith.addf %246, %474 : vector<16x32xf32>
    %476 = vector.shape_cast %475 : vector<16x32xf32> to vector<2x8x32xf32>
    %c0_157 = arith.constant 0 : index
    %c0_158 = arith.constant 0 : index
    %c0_159 = arith.constant 0 : index
    %477 = vector.load %arg16[%c0_157, %c0_158, %c0_159] : memref<2x8x32xf32, #tpu.memory_space<vmem>>, vector<2x8x32xf32>
    tpu.vector_store %arg16[%c0_157, %c0_158, %c0_159], %476 {strides = array<i32>} : memref<2x8x32xf32, #tpu.memory_space<vmem>>, vector<2x8x32xf32>,
    %c2_160 = arith.constant 2 : index
    %c0_161 = arith.constant 0 : index
    %c0_162 = arith.constant 0 : index
    %478 = vector.load %arg13[%c2_160, %c0_161, %c0_162] : memref<3x64x32xf32, #tpu.memory_space<vmem>>, vector<1x64x32xf32>
    %479 = vector.shape_cast %478 : vector<1x64x32xf32> to vector<64x32xf32>
    %cst_163 = arith.constant dense<0.000000e+00> : vector<16x32xf32>
    %480 = tpu.matmul %458, %479, %cst_163 {dimension_numbers = #tpu.dot_dimension_numbers<[1], [0], [0], [1], [0, 0, 1, 1], [], []>} : vector<16x64xf32>, vector<64x32xf32>, vector<16x32xf32> -> vector<16x32xf32>
    %481 = vector.extract_strided_slice %459 {offsets = [2, 0], sizes = [1, 32], strides = [1, 1]} : vector<3x32xf32> to vector<1x32xf32>
    %482 = vector.broadcast %481 : vector<1x32xf32> to vector<16x32xf32>
    %483 = arith.addf %480, %482 : vector<16x32xf32>
    %484 = arith.addf %368, %483 : vector<16x32xf32>
    %485 = vector.shape_cast %484 : vector<16x32xf32> to vector<2x8x32xf32>
    %c0_164 = arith.constant 0 : index
    %c0_165 = arith.constant 0 : index
    %c0_166 = arith.constant 0 : index
    %486 = vector.load %arg17[%c0_164, %c0_165, %c0_166] : memref<2x8x32xf32, #tpu.memory_space<vmem>>, vector<2x8x32xf32>
    tpu.vector_store %arg17[%c0_164, %c0_165, %c0_166], %485 {strides = array<i32>} : memref<2x8x32xf32, #tpu.memory_space<vmem>>, vector<2x8x32xf32>,
    return
  }
  func.func @transform_0(%arg0: i32) -> (i32, i32, i32) {
    %c0_i32 = arith.constant 0 : i32
    %c0_i32_0 = arith.constant 0 : i32
    %c0_i32_1 = arith.constant 0 : i32
    return %arg0, %c0_i32, %c0_i32_0 : i32, i32, i32
  }
  func.func @transform_1(%arg0: i32) -> (i32, i32, i32) {
    %c0_i32 = arith.constant 0 : i32
    %c0_i32_0 = arith.constant 0 : i32
    %c0_i32_1 = arith.constant 0 : i32
    return %arg0, %c0_i32, %c0_i32_0 : i32, i32, i32
  }
  func.func @transform_2(%arg0: i32) -> (i32, i32, i32) {
    %c0_i32 = arith.constant 0 : i32
    %c0_i32_0 = arith.constant 0 : i32
    %c0_i32_1 = arith.constant 0 : i32
    return %arg0, %c0_i32, %c0_i32_0 : i32, i32, i32
  }
  func.func @transform_3(%arg0: i32) -> (i32, i32) {
    %c0_i32 = arith.constant 0 : i32
    %c0_i32_0 = arith.constant 0 : i32
    %c0_i32_1 = arith.constant 0 : i32
    return %c0_i32, %c0_i32_0 : i32, i32
  }
  func.func @transform_4(%arg0: i32) -> (i32, i32) {
    %c0_i32 = arith.constant 0 : i32
    %c0_i32_0 = arith.constant 0 : i32
    %c0_i32_1 = arith.constant 0 : i32
    return %c0_i32, %c0_i32_0 : i32, i32
  }
  func.func @transform_5(%arg0: i32) -> (i32, i32, i32) {
    %c0_i32 = arith.constant 0 : i32
    %c0_i32_0 = arith.constant 0 : i32
    %c0_i32_1 = arith.constant 0 : i32
    %c0_i32_2 = arith.constant 0 : i32
    return %c0_i32, %c0_i32_0, %c0_i32_1 : i32, i32, i32
  }
  func.func @transform_6(%arg0: i32) -> (i32, i32, i32) {
    %c0_i32 = arith.constant 0 : i32
    %c0_i32_0 = arith.constant 0 : i32
    %c0_i32_1 = arith.constant 0 : i32
    %c0_i32_2 = arith.constant 0 : i32
    return %c0_i32, %c0_i32_0, %c0_i32_1 : i32, i32, i32
  }
  func.func @transform_7(%arg0: i32) -> (i32, i32) {
    %c0_i32 = arith.constant 0 : i32
    %c0_i32_0 = arith.constant 0 : i32
    %c0_i32_1 = arith.constant 0 : i32
    return %c0_i32, %c0_i32_0 : i32, i32
  }
  func.func @transform_8(%arg0: i32) -> (i32, i32) {
    %c0_i32 = arith.constant 0 : i32
    %c0_i32_0 = arith.constant 0 : i32
    %c0_i32_1 = arith.constant 0 : i32
    return %c0_i32, %c0_i32_0 : i32, i32
  }
  func.func @transform_9(%arg0: i32) -> (i32, i32) {
    %c0_i32 = arith.constant 0 : i32
    %c0_i32_0 = arith.constant 0 : i32
    %c0_i32_1 = arith.constant 0 : i32
    return %c0_i32, %c0_i32_0 : i32, i32
  }
  func.func @transform_10(%arg0: i32) -> (i32, i32, i32) {
    %c0_i32 = arith.constant 0 : i32
    %c0_i32_0 = arith.constant 0 : i32
    %c0_i32_1 = arith.constant 0 : i32
    %c0_i32_2 = arith.constant 0 : i32
    return %c0_i32, %c0_i32_0, %c0_i32_1 : i32, i32, i32
  }
  func.func @transform_11(%arg0: i32) -> (i32, i32) {
    %c0_i32 = arith.constant 0 : i32
    %c0_i32_0 = arith.constant 0 : i32
    %c0_i32_1 = arith.constant 0 : i32
    return %c0_i32, %c0_i32_0 : i32, i32
  }
  func.func @transform_12(%arg0: i32) -> (i32, i32, i32) {
    %c0_i32 = arith.constant 0 : i32
    %c0_i32_0 = arith.constant 0 : i32
    %c0_i32_1 = arith.constant 0 : i32
    %c0_i32_2 = arith.constant 0 : i32
    return %c0_i32, %c0_i32_0, %c0_i32_1 : i32, i32, i32
  }
  func.func @transform_13(%arg0: i32) -> (i32, i32) {
    %c0_i32 = arith.constant 0 : i32
    %c0_i32_0 = arith.constant 0 : i32
    %c0_i32_1 = arith.constant 0 : i32
    return %c0_i32, %c0_i32_0 : i32, i32
  }
  func.func @transform_14(%arg0: i32) -> (i32, i32, i32) {
    %c0_i32 = arith.constant 0 : i32
    %c0_i32_0 = arith.constant 0 : i32
    %c0_i32_1 = arith.constant 0 : i32
    return %arg0, %c0_i32, %c0_i32_0 : i32, i32, i32
  }
  func.func @transform_15(%arg0: i32) -> (i32, i32, i32) {
    %c0_i32 = arith.constant 0 : i32
    %c0_i32_0 = arith.constant 0 : i32
    %c0_i32_1 = arith.constant 0 : i32
    return %arg0, %c0_i32, %c0_i32_0 : i32, i32, i32
  }
  func.func @transform_16(%arg0: i32) -> (i32, i32, i32) {
    %c0_i32 = arith.constant 0 : i32
    %c0_i32_0 = arith.constant 0 : i32
    %c0_i32_1 = arith.constant 0 : i32
    return %arg0, %c0_i32, %c0_i32_0 : i32, i32, i32
  }
}

</mosaic_0001>

<llo_original>
// kernel: tpu_custom_call.1
$region0: #{tpu_custom_call.1}
  #allocation0 [shape = 'u32[]', space=smem, size = 0x4, offset = 0x4, fixed_abs, tag = 'smem constant byte address 0x4 - core index']
  #allocation1 [shape = 'u32[144,128]{1,0:T(1,128)}', space=vmem, size = 0x12000, scoped, tag = 'internal scratch']
  %s0 = inlined_call_operand.hbm [shape: f32[2,8,32], index: 0, kind: input, shape index: {}]
  %s1 = inlined_call_operand.hbm [shape: f32[2,8,32], index: 1, kind: input, shape index: {}]
  %s2 = inlined_call_operand.hbm [shape: f32[2,8,32], index: 2, kind: input, shape index: {}]
  %s3 = inlined_call_operand.hbm [shape: f32[3,32], index: 3, kind: input, shape index: {}]
  %s4 = inlined_call_operand.vmem [shape: f32[3,32], index: 4, kind: input, shape index: {}]
  %s5 = inlined_call_operand.vmem [shape: f32[3,32,96], index: 5, kind: input, shape index: {}]
  %s6 = inlined_call_operand.vmem [shape: f32[3,32,32], index: 6, kind: input, shape index: {}]
  %s7 = inlined_call_operand.vmem [shape: f32[3,32], index: 7, kind: input, shape index: {}]
  %s8 = inlined_call_operand.vmem [shape: f32[3,32], index: 8, kind: input, shape index: {}]
  %s9 = inlined_call_operand.hbm [shape: f32[3,32], index: 9, kind: input, shape index: {}]
  %s10 = inlined_call_operand.vmem [shape: f32[3,32,64], index: 10, kind: input, shape index: {}]
  %s11 = inlined_call_operand.vmem [shape: f32[1,64], index: 11, kind: input, shape index: {}]
  %s12 = inlined_call_operand.vmem [shape: f32[3,64,32], index: 12, kind: input, shape index: {}]
  %s13 = inlined_call_operand.vmem [shape: f32[3,32], index: 13, kind: input, shape index: {}]
  %s14 = inlined_call_operand.hbm [shape: f32[2,8,32], index: 14, kind: output, shape index: {0}]
  %s15 = inlined_call_operand.hbm [shape: f32[2,8,32], index: 15, kind: output, shape index: {1}]
  %s16 = inlined_call_operand.hbm [shape: f32[2,8,32], index: 16, kind: output, shape index: {2}]
  %17 = xla_tuple %s14, %s15, %s16
  %s18 = sld [smem:[#allocation0]]
  $region102: #{tpu_custom_call.1} parent=0
    _
  %s20 = ssub.s32 1, %s18
  %s21 = scalar_select 0, %s20, %s18
  $region1: #{tpu_custom_call.1} parent=0
    #allocation2 [shape = 'u8[8192]{0}', space=vmem, size = 0x2000, scoped, tag = 'input window, operand 0, single buffered']
    #allocation3 [shape = 's32[1]{0}', space=sflag, size = 0x4, scoped, tag = 'scoped memory for tpu_custom_call.1']
    #allocation4 [shape = 's32[1]{0}', space=sflag, size = 0x4, scoped, tag = 'scoped memory for tpu_custom_call.1']
    #allocation5 [shape = 'u8[8192]{0}', space=vmem, size = 0x2000, scoped, tag = 'input window, operand 1, single buffered']
    #allocation6 [shape = 's32[1]{0}', space=sflag, size = 0x4, scoped, tag = 'scoped memory for tpu_custom_call.1']
    #allocation7 [shape = 'u8[8192]{0}', space=vmem, size = 0x2000, scoped, tag = 'input window, operand 2, single buffered']
    #allocation8 [shape = 'u8[2048]{0}', space=vmem, size = 0x800, scoped, tag = 'input window, operand 3, single buffered']
    #allocation9 [shape = 's32[1]{0}', space=sflag, size = 0x4, scoped, tag = 'scoped memory for tpu_custom_call.1']
    #allocation10 [shape = 'u8[2048]{0}', space=vmem, size = 0x800, scoped, tag = 'input window, operand 9, single buffered']
    #allocation11 [shape = 'u8[8192]{0}', space=vmem, size = 0x2000, scoped, tag = 'output window, operand 0, single buffered']
    #allocation12 [shape = 'u8[8192]{0}', space=vmem, size = 0x2000, scoped, tag = 'output window, operand 1, single buffered']
    #allocation13 [shape = 's32[1]{0}', space=sflag, size = 0x4, scoped, tag = 'scoped memory for tpu_custom_call.1']
    #allocation14 [shape = 'u8[8192]{0}', space=vmem, size = 0x2000, scoped, tag = 'output window, operand 2, single buffered']
    %22 = vsyncpa [#allocation3], 0
    %23 = vsyncpa [#allocation6], 0
    %24 = vsyncpa [#allocation9], 0
    %25 = vsyncpa [#allocation4], 0
    %26 = vsyncpa [#allocation13], 0
    // Predicated region
    $region2: #{tpu_custom_call.1} parent=1 // pred_check
      _
    $region3: #{tpu_custom_call.1} parent=1 // pred_check_branch
      %28 = sbr.rel (0) target = $region5
    $region4: #{tpu_custom_call.1} parent=1 // pred_region
      %s30 = ssub.s32 256, 256
      %31 = vsyncadd [#allocation3], %s30
      %s32 = sshll.u32 [#allocation2], 4
      %s33 = int_to_ptr.vmem [resolvable:$true] %s32
      %38 = dma.hbm_to_vmem [thread:$0]  %s0, 256, %s33, [#allocation3], 128, 128, 8
    $region5: #{tpu_custom_call.1} parent=1 // pred_fallthru
      _
    // Predicated region
    $region6: #{tpu_custom_call.1} parent=1 // pred_check
      _
    $region7: #{tpu_custom_call.1} parent=1 // pred_check_branch
      %40 = sbr.rel (0) target = $region9
    $region8: #{tpu_custom_call.1} parent=1 // pred_region
      %s42 = ssub.s32 256, 256
      %43 = vsyncadd [#allocation6], %s42
      %s44 = sshll.u32 [#allocation5], 4
      %s45 = int_to_ptr.vmem [resolvable:$true] %s44
      %50 = dma.hbm_to_vmem [thread:$0]  %s1, 256, %s45, [#allocation6], 128, 128, 8
    $region9: #{tpu_custom_call.1} parent=1 // pred_fallthru
      _
    // Predicated region
    $region10: #{tpu_custom_call.1} parent=1 // pred_check
      _
    $region11: #{tpu_custom_call.1} parent=1 // pred_check_branch
      %52 = sbr.rel (0) target = $region13
    $region12: #{tpu_custom_call.1} parent=1 // pred_region
      %s54 = ssub.s32 256, 256
      %55 = vsyncadd [#allocation6], %s54
      %s56 = sshll.u32 [#allocation7], 4
      %s57 = int_to_ptr.vmem [resolvable:$true] %s56
      %62 = dma.hbm_to_vmem [thread:$0]  %s2, 256, %s57, [#allocation6], 128, 128, 8
    $region13: #{tpu_custom_call.1} parent=1 // pred_fallthru
      _
    // Predicated region
    $region14: #{tpu_custom_call.1} parent=1 // pred_check
      _
    $region15: #{tpu_custom_call.1} parent=1 // pred_check_branch
      %64 = sbr.rel (0) target = $region17
    $region16: #{tpu_custom_call.1} parent=1 // pred_region
      %s66 = ssub.s32 64, 64
      %67 = vsyncadd [#allocation9], %s66
      %s69 = sshll.u32 [#allocation8], 4
      %s70 = int_to_ptr.vmem [resolvable:$true] %s69
      %72 = dma.hbm_to_vmem [thread:$0]  %s3, 64, %s70, [#allocation9]
    $region17: #{tpu_custom_call.1} parent=1 // pred_fallthru
      _
    // Predicated region
    $region18: #{tpu_custom_call.1} parent=1 // pred_check
      _
    $region19: #{tpu_custom_call.1} parent=1 // pred_check_branch
      %74 = sbr.rel (0) target = $region21
    $region20: #{tpu_custom_call.1} parent=1 // pred_region
      _
    $region21: #{tpu_custom_call.1} parent=1 // pred_fallthru
      _
    // Predicated region
    $region22: #{tpu_custom_call.1} parent=1 // pred_check
      _
    $region23: #{tpu_custom_call.1} parent=1 // pred_check_branch
      %76 = sbr.rel (0) target = $region25
    $region24: #{tpu_custom_call.1} parent=1 // pred_region
      _
    $region25: #{tpu_custom_call.1} parent=1 // pred_fallthru
      _
    // Predicated region
    $region26: #{tpu_custom_call.1} parent=1 // pred_check
      _
    $region27: #{tpu_custom_call.1} parent=1 // pred_check_branch
      %78 = sbr.rel (0) target = $region29
    $region28: #{tpu_custom_call.1} parent=1 // pred_region
      _
    $region29: #{tpu_custom_call.1} parent=1 // pred_fallthru
      _
    // Predicated region
    $region30: #{tpu_custom_call.1} parent=1 // pred_check
      _
    $region31: #{tpu_custom_call.1} parent=1 // pred_check_branch
      %80 = sbr.rel (0) target = $region33
    $region32: #{tpu_custom_call.1} parent=1 // pred_region
      _
    $region33: #{tpu_custom_call.1} parent=1 // pred_fallthru
      _
    // Predicated region
    $region34: #{tpu_custom_call.1} parent=1 // pred_check
      _
    $region35: #{tpu_custom_call.1} parent=1 // pred_check_branch
      %82 = sbr.rel (0) target = $region37
    $region36: #{tpu_custom_call.1} parent=1 // pred_region
      _
    $region37: #{tpu_custom_call.1} parent=1 // pred_fallthru
      _
    // Predicated region
    $region38: #{tpu_custom_call.1} parent=1 // pred_check
      _
    $region39: #{tpu_custom_call.1} parent=1 // pred_check_branch
      %84 = sbr.rel (0) target = $region41
    $region40: #{tpu_custom_call.1} parent=1 // pred_region
      %s86 = ssub.s32 64, 64
      %87 = vsyncadd [#allocation9], %s86
      %s89 = sshll.u32 [#allocation10], 4
      %s90 = int_to_ptr.vmem [resolvable:$true] %s89
      %92 = dma.hbm_to_vmem [thread:$0]  %s9, 64, %s90, [#allocation9]
    $region41: #{tpu_custom_call.1} parent=1 // pred_fallthru
      _
    // Predicated region
    $region42: #{tpu_custom_call.1} parent=1 // pred_check
      _
    $region43: #{tpu_custom_call.1} parent=1 // pred_check_branch
      %94 = sbr.rel (0) target = $region45
    $region44: #{tpu_custom_call.1} parent=1 // pred_region
      _
    $region45: #{tpu_custom_call.1} parent=1 // pred_fallthru
      _
    // Predicated region
    $region46: #{tpu_custom_call.1} parent=1 // pred_check
      _
    $region47: #{tpu_custom_call.1} parent=1 // pred_check_branch
      %96 = sbr.rel (0) target = $region49
    $region48: #{tpu_custom_call.1} parent=1 // pred_region
      _
    $region49: #{tpu_custom_call.1} parent=1 // pred_fallthru
      _
    // Predicated region
    $region50: #{tpu_custom_call.1} parent=1 // pred_check
      _
    $region51: #{tpu_custom_call.1} parent=1 // pred_check_branch
      %98 = sbr.rel (0) target = $region53
    $region52: #{tpu_custom_call.1} parent=1 // pred_region
      _
    $region53: #{tpu_custom_call.1} parent=1 // pred_fallthru
      _
    // Predicated region
    $region54: #{tpu_custom_call.1} parent=1 // pred_check
      _
    $region55: #{tpu_custom_call.1} parent=1 // pred_check_branch
      %100 = sbr.rel (0) target = $region57
    $region56: #{tpu_custom_call.1} parent=1 // pred_region
      _
    $region57: #{tpu_custom_call.1} parent=1 // pred_fallthru
      _
    // Predicated region
    $region58: #{tpu_custom_call.1} parent=1 // pred_check
      _
    $region59: #{tpu_custom_call.1} parent=1 // pred_check_branch
      %102 = sbr.rel (0) target = $region61
    $region60: #{tpu_custom_call.1} parent=1 // pred_region
      %103 = dma.done [#allocation3], 256
    $region61: #{tpu_custom_call.1} parent=1 // pred_fallthru
      _
    // Predicated region
    $region62: #{tpu_custom_call.1} parent=1 // pred_check
      _
    $region63: #{tpu_custom_call.1} parent=1 // pred_check_branch
      %105 = sbr.rel (0) target = $region65
    $region64: #{tpu_custom_call.1} parent=1 // pred_region
      %106 = dma.done [#allocation6], 256
    $region65: #{tpu_custom_call.1} parent=1 // pred_fallthru
      _
    // Predicated region
    $region66: #{tpu_custom_call.1} parent=1 // pred_check
      _
    $region67: #{tpu_custom_call.1} parent=1 // pred_check_branch
      %108 = sbr.rel (0) target = $region69
    $region68: #{tpu_custom_call.1} parent=1 // pred_region
      %109 = dma.done [#allocation6], 256
    $region69: #{tpu_custom_call.1} parent=1 // pred_fallthru
      _
    // Predicated region
    $region70: #{tpu_custom_call.1} parent=1 // pred_check
      _
    $region71: #{tpu_custom_call.1} parent=1 // pred_check_branch
      %111 = sbr.rel (0) target = $region73
    $region72: #{tpu_custom_call.1} parent=1 // pred_region
      %112 = dma.done [#allocation9], 64
    $region73: #{tpu_custom_call.1} parent=1 // pred_fallthru
      _
    // Predicated region
    $region74: #{tpu_custom_call.1} parent=1 // pred_check
      _
    $region75: #{tpu_custom_call.1} parent=1 // pred_check_branch
      %114 = sbr.rel (0) target = $region77
    $region76: #{tpu_custom_call.1} parent=1 // pred_region
      %115 = dma.done [#allocation9], 64
    $region77: #{tpu_custom_call.1} parent=1 // pred_fallthru
      _
    %v116 = vld [vmem:[#allocation8] sm:$0x7]
    %v117 = vld [vmem:[%s4] sm:$0x7]
    %v118 = vld [vmem:[%s7] sm:$0x7]
    %v119 = vld [vmem:[#allocation2] sm:$0xff]
    %v120 = vld [vmem:[#allocation2 + $0x8] sm:$0xff]
    %vm121 = vcmask 261120
    %v122 = vsel %vm121, %v119, 0.0
    %123 = vadd.xlane.f32.xlu0 %v122
    %v124 = vpop.xlane.xlu0 %123
    %v125 = vsel %vm121, %v120, 0.0
    %126 = vadd.xlane.f32.xlu0 %v125
    %v127 = vpop.xlane.xlu0 %126
    %v128 = vmul.f32 %v124, 0.03125
    %v129 = vmul.f32 %v127, 0.03125
    %v130 = vsub.f32 %v119, %v128
    %v131 = vsub.f32 %v120, %v129
    %v132 = vmul.f32 %v130, %v130
    %v133 = vmul.f32 %v131, %v131
    %v134 = vsel %vm121, %v132, 0.0
    %135 = vadd.xlane.f32.xlu0 %v134
    %v136 = vpop.xlane.xlu0 %135
    %v137 = vsel %vm121, %v133, 0.0
    %138 = vadd.xlane.f32.xlu0 %v137
    %v139 = vpop.xlane.xlu0 %138
    %v140 = vmul.f32 %v136, 0.03125
    %v141 = vmul.f32 %v139, 0.03125
    %v142 = vadd.f32 %v140, 1e-05
    %v143 = vadd.f32 %v141, 1e-05
    %v144 = vrsqrt.pop %v142
    %v145 = vrsqrt.pop %v143
    %v146 = vmul.f32 %v130, %v144
    %v147 = vmul.f32 %v131, %v145
    %v148 = vlaneseq
    %v149 = vshrl.u32 %v148, 7
    %v150 = vsub.s32 0, %v149
    %v151 = vrot.slane %v116, %v150
    %v152 = vmul.f32 %v146, %v151
    %v153 = vmul.f32 %v147, %v151
    %v154 = vlaneseq
    %v155 = vshrl.u32 %v154, 7
    %v156 = vsub.s32 0, %v155
    %v157 = vrot.slane %v117, %v156
    %v158 = vadd.f32 %v152, %v157
    %v159 = vadd.f32 %v153, %v157
    %v160 = vld [vmem:[%s5] sm:$0xff]
    %v161 = vld [vmem:[%s5 + $0x8] sm:$0xff]
    %v162 = vld [vmem:[%s5 + $0x10] sm:$0xff]
    %v163 = vld [vmem:[%s5 + $0x18] sm:$0xff]
    %v165 = vsel %vm121, %v158, 0
    %v168 = vsel %vm121, %v159, 0
    %170 = vmatprep.subr.mxu0 0.0
    %171 = vmatpush1.msra.mxu0 0.0
    %172 = vmatprep.subr.mxu0 0.0
    %173 = vmatpush1.msra.mxu0 0.0
    %174 = vmatprep.subr.mxu0 0.0
    %175 = vmatpush1.msra.mxu0 0.0
    %176 = vmatprep.subr.mxu0 0.0
    %177 = vmatpush1.msra.mxu0 0.0
    %178 = vmatprep.subr.mxu0 0.0
    %179 = vmatpush1.msra.mxu0 0.0
    %180 = vmatprep.subr.mxu0 0.0
    %181 = vmatpush1.msra.mxu0 0.0
    %182 = vmatprep.subr.mxu0 0.0
    %183 = vmatpush1.msra.mxu0 0.0
    %184 = vmatprep.subr.mxu0 0.0
    %185 = vmatpush1.msra.mxu0 0.0
    %186 = vmatprep.subr.mxu0 0.0
    %187 = vmatpush1.msra.mxu0 0.0
    %188 = vmatprep.subr.mxu0 0.0
    %189 = vmatpush1.msra.mxu0 0.0
    %190 = vmatprep.subr.mxu0 0.0
    %191 = vmatpush1.msra.mxu0 0.0
    %192 = vmatprep.subr.mxu0 0.0
    %193 = vmatpush1.msra.mxu0 0.0
    %194 = vmatprep.subr.mxu0 0.0
    %195 = vmatpush1.msra.mxu0 %v163
    %196 = vmatprep.subr.mxu0 0.0
    %197 = vmatpush1.msra.mxu0 %v162
    %198 = vmatprep.subr.mxu0 0.0
    %199 = vmatpush1.msra.mxu0 %v161
    %200 = vmatprep.subr.mxu0 0.0
    %201 = vmatpush1.msra.mxu0 %v160
    %202 = vmatprep.subr.mxu0 0.0
    %203 = vmatpush2.msra.mxu0 0.0
    %204 = vmatprep.subr.mxu0 0.0
    %205 = vmatpush2.msra.mxu0 0.0
    %206 = vmatprep.subr.mxu0 0.0
    %207 = vmatpush2.msra.mxu0 0.0
    %208 = vmatprep.subr.mxu0 0.0
    %209 = vmatpush2.msra.mxu0 0.0
    %210 = vmatprep.subr.mxu0 0.0
    %211 = vmatpush2.msra.mxu0 0.0
    %212 = vmatprep.subr.mxu0 0.0
    %213 = vmatpush2.msra.mxu0 0.0
    %214 = vmatprep.subr.mxu0 0.0
    %215 = vmatpush2.msra.mxu0 0.0
    %216 = vmatprep.subr.mxu0 0.0
    %217 = vmatpush2.msra.mxu0 0.0
    %218 = vmatprep.subr.mxu0 0.0
    %219 = vmatpush2.msra.mxu0 0.0
    %220 = vmatprep.subr.mxu0 0.0
    %221 = vmatpush2.msra.mxu0 0.0
    %222 = vmatprep.subr.mxu0 0.0
    %223 = vmatpush2.msra.mxu0 0.0
    %224 = vmatprep.subr.mxu0 0.0
    %225 = vmatpush2.msra.mxu0 0.0
    %226 = vmatprep.subr.mxu0 0.0
    %227 = vmatpush2.msra.mxu0 0.0
    %228 = vmatprep.subr.mxu0 0.0
    %229 = vmatpush2.msra.mxu0 0.0
    %230 = vmatprep.subr.mxu0 0.0
    %231 = vmatpush2.msra.mxu0 0.0
    %232 = vmatprep.subr.mxu0 0.0
    %233 = vmatpush2.msra.mxu0 0.0
    %234 = vmatprep.mubr.f32.mxu0 0.0
    %235 = vmatmul.mubr.f32.gmra.mxu0 %v165
    %v236 = vpop.f32.mrf.mxu0
    %v237 = vadd.f32 0.0, %v236
    %v238 = vpop.f32.mrf.mxu0
    %239 = vmatprep.mubr.f32.mxu0 0.0
    %240 = vmatmul.mubr.f32.gmra.mxu0 %v168
    %v241 = vpop.f32.mrf.mxu0
    %v242 = vadd.f32 0.0, %v241
    %v243 = vpop.f32.mrf.mxu0
    %244 = vdwg.mxu0
    %v245 = vld [vmem:[%s6] sm:$0xff]
    %v246 = vld [vmem:[%s6 + $0x8] sm:$0xff]
    %v247 = vld [vmem:[%s6 + $0x10] sm:$0xff]
    %v248 = vld [vmem:[%s6 + $0x18] sm:$0xff]
    %250 = vrot.lane.b32.xlu0 %v237, 96
    %v251 = vpop.permute.xlu0 %250
    %vm252 = vcmask 64512
    %v253 = vsel %vm252, %v237, 0
    %v255 = vsel %vm252, %v251, 0
    %257 = vmatprep.subr.mxu0 0.0
    %258 = vmatpush1.xpose.msra.mxu0 0.0
    %259 = vmatprep.subr.mxu0 0.0
    %260 = vmatpush1.xpose.msra.mxu0 0.0
    %261 = vmatprep.subr.mxu0 0.0
    %262 = vmatpush1.xpose.msra.mxu0 0.0
    %263 = vmatprep.subr.mxu0 0.0
    %264 = vmatpush1.xpose.msra.mxu0 0.0
    %265 = vmatprep.subr.mxu0 0.0
    %266 = vmatpush1.xpose.msra.mxu0 0.0
    %267 = vmatprep.subr.mxu0 0.0
    %268 = vmatpush1.xpose.msra.mxu0 0.0
    %269 = vmatprep.subr.mxu0 0.0
    %270 = vmatpush1.xpose.msra.mxu0 0.0
    %271 = vmatprep.subr.mxu0 0.0
    %272 = vmatpush1.xpose.msra.mxu0 0.0
    %273 = vmatprep.subr.mxu0 0.0
    %274 = vmatpush1.xpose.msra.mxu0 0.0
    %275 = vmatprep.subr.mxu0 0.0
    %276 = vmatpush1.xpose.msra.mxu0 0.0
    %277 = vmatprep.subr.mxu0 0.0
    %278 = vmatpush1.xpose.msra.mxu0 0.0
    %279 = vmatprep.subr.mxu0 0.0
    %280 = vmatpush1.xpose.msra.mxu0 0.0
    %281 = vmatprep.subr.mxu0 0.0
    %282 = vmatpush1.xpose.msra.mxu0 0.0
    %283 = vmatprep.subr.mxu0 0.0
    %284 = vmatpush1.xpose.msra.mxu0 0.0
    %285 = vmatprep.subr.mxu0 0.0
    %286 = vmatpush1.xpose.msra.mxu0 0.0
    %287 = vmatprep.subr.mxu0 0.0
    %288 = vmatpush1.xpose.msra.mxu0 %v255
    %289 = vmatprep.subr.mxu0 0.0
    %290 = vmatpush2.xpose.msra.mxu0 0.0
    %291 = vmatprep.subr.mxu0 0.0
    %292 = vmatpush2.xpose.msra.mxu0 0.0
    %293 = vmatprep.subr.mxu0 0.0
    %294 = vmatpush2.xpose.msra.mxu0 0.0
    %295 = vmatprep.subr.mxu0 0.0
    %296 = vmatpush2.xpose.msra.mxu0 0.0
    %297 = vmatprep.subr.mxu0 0.0
    %298 = vmatpush2.xpose.msra.mxu0 0.0
    %299 = vmatprep.subr.mxu0 0.0
    %300 = vmatpush2.xpose.msra.mxu0 0.0
    %301 = vmatprep.subr.mxu0 0.0
    %302 = vmatpush2.xpose.msra.mxu0 0.0
    %303 = vmatprep.subr.mxu0 0.0
    %304 = vmatpush2.xpose.msra.mxu0 0.0
    %305 = vmatprep.subr.mxu0 0.0
    %306 = vmatpush2.xpose.msra.mxu0 0.0
    %307 = vmatprep.subr.mxu0 0.0
    %308 = vmatpush2.xpose.msra.mxu0 0.0
    %309 = vmatprep.subr.mxu0 0.0
    %310 = vmatpush2.xpose.msra.mxu0 0.0
    %311 = vmatprep.subr.mxu0 0.0
    %312 = vmatpush2.xpose.msra.mxu0 0.0
    %313 = vmatprep.subr.mxu0 0.0
    %314 = vmatpush2.xpose.msra.mxu0 0.0
    %315 = vmatprep.subr.mxu0 0.0
    %316 = vmatpush2.xpose.msra.mxu0 0.0
    %317 = vmatprep.subr.mxu0 0.0
    %318 = vmatpush2.xpose.msra.mxu0 0.0
    %319 = vmatprep.subr.mxu0 0.0
    %320 = vmatpush2.xpose.msra.mxu0 0.0
    %321 = vmatprep.mubr.f32.mxu0 0.0
    %322 = vmatmul.mubr.f32.gmra.mxu0 %v253
    %v323 = vpop.f32.mrf.mxu0
    %v324 = vadd.f32 0.0, %v323
    %v325 = vpop.f32.mrf.mxu0
    %326 = vdwg.mxu0
    %328 = vrot.lane.b32.xlu0 %v242, 96
    %v329 = vpop.permute.xlu0 %328
    %v330 = vsel %vm252, %v242, 0
    %v332 = vsel %vm252, %v329, 0
    %334 = vmatprep.subr.mxu0 0.0
    %335 = vmatpush1.xpose.msra.mxu0 0.0
    %336 = vmatprep.subr.mxu0 0.0
    %337 = vmatpush1.xpose.msra.mxu0 0.0
    %338 = vmatprep.subr.mxu0 0.0
    %339 = vmatpush1.xpose.msra.mxu0 0.0
    %340 = vmatprep.subr.mxu0 0.0
    %341 = vmatpush1.xpose.msra.mxu0 0.0
    %342 = vmatprep.subr.mxu0 0.0
    %343 = vmatpush1.xpose.msra.mxu0 0.0
    %344 = vmatprep.subr.mxu0 0.0
    %345 = vmatpush1.xpose.msra.mxu0 0.0
    %346 = vmatprep.subr.mxu0 0.0
    %347 = vmatpush1.xpose.msra.mxu0 0.0
    %348 = vmatprep.subr.mxu0 0.0
    %349 = vmatpush1.xpose.msra.mxu0 0.0
    %350 = vmatprep.subr.mxu0 0.0
    %351 = vmatpush1.xpose.msra.mxu0 0.0
    %352 = vmatprep.subr.mxu0 0.0
    %353 = vmatpush1.xpose.msra.mxu0 0.0
    %354 = vmatprep.subr.mxu0 0.0
    %355 = vmatpush1.xpose.msra.mxu0 0.0
    %356 = vmatprep.subr.mxu0 0.0
    %357 = vmatpush1.xpose.msra.mxu0 0.0
    %358 = vmatprep.subr.mxu0 0.0
    %359 = vmatpush1.xpose.msra.mxu0 0.0
    %360 = vmatprep.subr.mxu0 0.0
    %361 = vmatpush1.xpose.msra.mxu0 0.0
    %362 = vmatprep.subr.mxu0 0.0
    %363 = vmatpush1.xpose.msra.mxu0 0.0
    %364 = vmatprep.subr.mxu0 0.0
    %365 = vmatpush1.xpose.msra.mxu0 %v332
    %366 = vmatprep.subr.mxu0 0.0
    %367 = vmatpush2.xpose.msra.mxu0 0.0
    %368 = vmatprep.subr.mxu0 0.0
    %369 = vmatpush2.xpose.msra.mxu0 0.0
    %370 = vmatprep.subr.mxu0 0.0
    %371 = vmatpush2.xpose.msra.mxu0 0.0
    %372 = vmatprep.subr.mxu0 0.0
    %373 = vmatpush2.xpose.msra.mxu0 0.0
    %374 = vmatprep.subr.mxu0 0.0
    %375 = vmatpush2.xpose.msra.mxu0 0.0
    %376 = vmatprep.subr.mxu0 0.0
    %377 = vmatpush2.xpose.msra.mxu0 0.0
    %378 = vmatprep.subr.mxu0 0.0
    %379 = vmatpush2.xpose.msra.mxu0 0.0
    %380 = vmatprep.subr.mxu0 0.0
    %381 = vmatpush2.xpose.msra.mxu0 0.0
    %382 = vmatprep.subr.mxu0 0.0
    %383 = vmatpush2.xpose.msra.mxu0 0.0
    %384 = vmatprep.subr.mxu0 0.0
    %385 = vmatpush2.xpose.msra.mxu0 0.0
    %386 = vmatprep.subr.mxu0 0.0
    %387 = vmatpush2.xpose.msra.mxu0 0.0
    %388 = vmatprep.subr.mxu0 0.0
    %389 = vmatpush2.xpose.msra.mxu0 0.0
    %390 = vmatprep.subr.mxu0 0.0
    %391 = vmatpush2.xpose.msra.mxu0 0.0
    %392 = vmatprep.subr.mxu0 0.0
    %393 = vmatpush2.xpose.msra.mxu0 0.0
    %394 = vmatprep.subr.mxu0 0.0
    %395 = vmatpush2.xpose.msra.mxu0 0.0
    %396 = vmatprep.subr.mxu0 0.0
    %397 = vmatpush2.xpose.msra.mxu0 0.0
    %398 = vmatprep.mubr.f32.mxu0 0.0
    %399 = vmatmul.mubr.f32.gmra.mxu0 %v330
    %v400 = vpop.f32.mrf.mxu0
    %v401 = vadd.f32 0.0, %v400
    %v402 = vpop.f32.mrf.mxu0
    %403 = vdwg.mxu0
    %v404 = vsel %vm252, %v324, -inf
    %405 = vmax.xlane.f32.xlu0 %v404
    %v406 = vpop.xlane.xlu0 %405
    %v407 = vsel %vm252, %v401, -inf
    %408 = vmax.xlane.f32.xlu0 %v407
    %v409 = vpop.xlane.xlu0 %408
    %v410 = vsub.f32 %v324, %v406
    %v411 = vsub.f32 %v401, %v409
    %v412 = vmul.f32 %v410, 1.442695
    %v413 = vpow.pop %v412
    %v414 = vmul.f32 %v411, 1.442695
    %v415 = vpow.pop %v414
    %v416 = vsel %vm252, %v413, 0.0
    %417 = vadd.xlane.f32.xlu0 %v416
    %v418 = vpop.xlane.xlu0 %417
    %v419 = vsel %vm252, %v415, 0.0
    %420 = vadd.xlane.f32.xlu0 %v419
    %v421 = vpop.xlane.xlu0 %420
    %v422 = vrcp.pop %v418
    %v423 = vrcp.pop %v421
    %v424 = vmul.f32 %v413, %v422
    %v425 = vmul.f32 %v415, %v423
    %426 = vrot.lane.b32.xlu0 %v237, 64
    %v427 = vpop.permute.xlu0 %426
    %v430 = vsel %vm252, %v424, 0
    %432 = vmatprep.subr.mxu0 0.0
    %433 = vmatpush1.msra.mxu0 0.0
    %434 = vmatprep.subr.mxu0 0.0
    %435 = vmatpush1.msra.mxu0 0.0
    %436 = vmatprep.subr.mxu0 0.0
    %437 = vmatpush1.msra.mxu0 0.0
    %438 = vmatprep.subr.mxu0 0.0
    %439 = vmatpush1.msra.mxu0 0.0
    %440 = vmatprep.subr.mxu0 0.0
    %441 = vmatpush1.msra.mxu0 0.0
    %442 = vmatprep.subr.mxu0 0.0
    %443 = vmatpush1.msra.mxu0 0.0
    %444 = vmatprep.subr.mxu0 0.0
    %445 = vmatpush1.msra.mxu0 0.0
    %446 = vmatprep.subr.mxu0 0.0
    %447 = vmatpush1.msra.mxu0 0.0
    %448 = vmatprep.subr.mxu0 0.0
    %449 = vmatpush1.msra.mxu0 0.0
    %450 = vmatprep.subr.mxu0 0.0
    %451 = vmatpush1.msra.mxu0 0.0
    %452 = vmatprep.subr.mxu0 0.0
    %453 = vmatpush1.msra.mxu0 0.0
    %454 = vmatprep.subr.mxu0 0.0
    %455 = vmatpush1.msra.mxu0 0.0
    %456 = vmatprep.subr.mxu0 0.0
    %457 = vmatpush1.msra.mxu0 0.0
    %458 = vmatprep.subr.mxu0 0.0
    %459 = vmatpush1.msra.mxu0 0.0
    %460 = vmatprep.subr.mxu0 0.0
    %461 = vmatpush1.msra.mxu0 0.0
    %462 = vmatprep.subr.mxu0 0.0
    %463 = vmatpush1.msra.mxu0 %v427
    %464 = vmatprep.subr.mxu0 0.0
    %465 = vmatpush2.msra.mxu0 0.0
    %466 = vmatprep.subr.mxu0 0.0
    %467 = vmatpush2.msra.mxu0 0.0
    %468 = vmatprep.subr.mxu0 0.0
    %469 = vmatpush2.msra.mxu0 0.0
    %470 = vmatprep.subr.mxu0 0.0
    %471 = vmatpush2.msra.mxu0 0.0
    %472 = vmatprep.subr.mxu0 0.0
    %473 = vmatpush2.msra.mxu0 0.0
    %474 = vmatprep.subr.mxu0 0.0
    %475 = vmatpush2.msra.mxu0 0.0
    %476 = vmatprep.subr.mxu0 0.0
    %477 = vmatpush2.msra.mxu0 0.0
    %478 = vmatprep.subr.mxu0 0.0
    %479 = vmatpush2.msra.mxu0 0.0
    %480 = vmatprep.subr.mxu0 0.0
    %481 = vmatpush2.msra.mxu0 0.0
    %482 = vmatprep.subr.mxu0 0.0
    %483 = vmatpush2.msra.mxu0 0.0
    %484 = vmatprep.subr.mxu0 0.0
    %485 = vmatpush2.msra.mxu0 0.0
    %486 = vmatprep.subr.mxu0 0.0
    %487 = vmatpush2.msra.mxu0 0.0
    %488 = vmatprep.subr.mxu0 0.0
    %489 = vmatpush2.msra.mxu0 0.0
    %490 = vmatprep.subr.mxu0 0.0
    %491 = vmatpush2.msra.mxu0 0.0
    %492 = vmatprep.subr.mxu0 0.0
    %493 = vmatpush2.msra.mxu0 0.0
    %494 = vmatprep.subr.mxu0 0.0
    %495 = vmatpush2.msra.mxu0 0.0
    %496 = vmatprep.mubr.f32.mxu0 0.0
    %497 = vmatmul.mubr.f32.gmra.mxu0 %v430
    %v498 = vpop.f32.mrf.mxu0
    %v499 = vadd.f32 0.0, %v498
    %v500 = vpop.f32.mrf.mxu0
    %501 = vdwg.mxu0
    %502 = vrot.lane.b32.xlu0 %v242, 64
    %v503 = vpop.permute.xlu0 %502
    %v506 = vsel %vm252, %v425, 0
    %508 = vmatprep.subr.mxu0 0.0
    %509 = vmatpush1.msra.mxu0 0.0
    %510 = vmatprep.subr.mxu0 0.0
    %511 = vmatpush1.msra.mxu0 0.0
    %512 = vmatprep.subr.mxu0 0.0
    %513 = vmatpush1.msra.mxu0 0.0
    %514 = vmatprep.subr.mxu0 0.0
    %515 = vmatpush1.msra.mxu0 0.0
    %516 = vmatprep.subr.mxu0 0.0
    %517 = vmatpush1.msra.mxu0 0.0
    %518 = vmatprep.subr.mxu0 0.0
    %519 = vmatpush1.msra.mxu0 0.0
    %520 = vmatprep.subr.mxu0 0.0
    %521 = vmatpush1.msra.mxu0 0.0
    %522 = vmatprep.subr.mxu0 0.0
    %523 = vmatpush1.msra.mxu0 0.0
    %524 = vmatprep.subr.mxu0 0.0
    %525 = vmatpush1.msra.mxu0 0.0
    %526 = vmatprep.subr.mxu0 0.0
    %527 = vmatpush1.msra.mxu0 0.0
    %528 = vmatprep.subr.mxu0 0.0
    %529 = vmatpush1.msra.mxu0 0.0
    %530 = vmatprep.subr.mxu0 0.0
    %531 = vmatpush1.msra.mxu0 0.0
    %532 = vmatprep.subr.mxu0 0.0
    %533 = vmatpush1.msra.mxu0 0.0
    %534 = vmatprep.subr.mxu0 0.0
    %535 = vmatpush1.msra.mxu0 0.0
    %536 = vmatprep.subr.mxu0 0.0
    %537 = vmatpush1.msra.mxu0 0.0
    %538 = vmatprep.subr.mxu0 0.0
    %539 = vmatpush1.msra.mxu0 %v503
    %540 = vmatprep.subr.mxu0 0.0
    %541 = vmatpush2.msra.mxu0 0.0
    %542 = vmatprep.subr.mxu0 0.0
    %543 = vmatpush2.msra.mxu0 0.0
    %544 = vmatprep.subr.mxu0 0.0
    %545 = vmatpush2.msra.mxu0 0.0
    %546 = vmatprep.subr.mxu0 0.0
    %547 = vmatpush2.msra.mxu0 0.0
    %548 = vmatprep.subr.mxu0 0.0
    %549 = vmatpush2.msra.mxu0 0.0
    %550 = vmatprep.subr.mxu0 0.0
    %551 = vmatpush2.msra.mxu0 0.0
    %552 = vmatprep.subr.mxu0 0.0
    %553 = vmatpush2.msra.mxu0 0.0
    %554 = vmatprep.subr.mxu0 0.0
    %555 = vmatpush2.msra.mxu0 0.0
    %556 = vmatprep.subr.mxu0 0.0
    %557 = vmatpush2.msra.mxu0 0.0
    %558 = vmatprep.subr.mxu0 0.0
    %559 = vmatpush2.msra.mxu0 0.0
    %560 = vmatprep.subr.mxu0 0.0
    %561 = vmatpush2.msra.mxu0 0.0
    %562 = vmatprep.subr.mxu0 0.0
    %563 = vmatpush2.msra.mxu0 0.0
    %564 = vmatprep.subr.mxu0 0.0
    %565 = vmatpush2.msra.mxu0 0.0
    %566 = vmatprep.subr.mxu0 0.0
    %567 = vmatpush2.msra.mxu0 0.0
    %568 = vmatprep.subr.mxu0 0.0
    %569 = vmatpush2.msra.mxu0 0.0
    %570 = vmatprep.subr.mxu0 0.0
    %571 = vmatpush2.msra.mxu0 0.0
    %572 = vmatprep.mubr.f32.mxu0 0.0
    %573 = vmatmul.mubr.f32.gmra.mxu0 %v506
    %v574 = vpop.f32.mrf.mxu0
    %v575 = vadd.f32 0.0, %v574
    %v576 = vpop.f32.mrf.mxu0
    %577 = vdwg.mxu0
    %578 = vrot.lane.b32.xlu0 %v237, 120
    %v579 = vpop.permute.xlu0 %578
    %580 = vrot.lane.b32.xlu0 %v237, 88
    %v581 = vpop.permute.xlu0 %580
    %v582 = vsel %vm252, %v579, 0
    %v584 = vsel %vm252, %v581, 0
    %586 = vmatprep.subr.mxu0 0.0
    %587 = vmatpush1.xpose.msra.mxu0 0.0
    %588 = vmatprep.subr.mxu0 0.0
    %589 = vmatpush1.xpose.msra.mxu0 0.0
    %590 = vmatprep.subr.mxu0 0.0
    %591 = vmatpush1.xpose.msra.mxu0 0.0
    %592 = vmatprep.subr.mxu0 0.0
    %593 = vmatpush1.xpose.msra.mxu0 0.0
    %594 = vmatprep.subr.mxu0 0.0
    %595 = vmatpush1.xpose.msra.mxu0 0.0
    %596 = vmatprep.subr.mxu0 0.0
    %597 = vmatpush1.xpose.msra.mxu0 0.0
    %598 = vmatprep.subr.mxu0 0.0
    %599 = vmatpush1.xpose.msra.mxu0 0.0
    %600 = vmatprep.subr.mxu0 0.0
    %601 = vmatpush1.xpose.msra.mxu0 0.0
    %602 = vmatprep.subr.mxu0 0.0
    %603 = vmatpush1.xpose.msra.mxu0 0.0
    %604 = vmatprep.subr.mxu0 0.0
    %605 = vmatpush1.xpose.msra.mxu0 0.0
    %606 = vmatprep.subr.mxu0 0.0
    %607 = vmatpush1.xpose.msra.mxu0 0.0
    %608 = vmatprep.subr.mxu0 0.0
    %609 = vmatpush1.xpose.msra.mxu0 0.0
    %610 = vmatprep.subr.mxu0 0.0
    %611 = vmatpush1.xpose.msra.mxu0 0.0
    %612 = vmatprep.subr.mxu0 0.0
    %613 = vmatpush1.xpose.msra.mxu0 0.0
    %614 = vmatprep.subr.mxu0 0.0
    %615 = vmatpush1.xpose.msra.mxu0 0.0
    %616 = vmatprep.subr.mxu0 0.0
    %617 = vmatpush1.xpose.msra.mxu0 %v584
    %618 = vmatprep.subr.mxu0 0.0
    %619 = vmatpush2.xpose.msra.mxu0 0.0
    %620 = vmatprep.subr.mxu0 0.0
    %621 = vmatpush2.xpose.msra.mxu0 0.0
    %622 = vmatprep.subr.mxu0 0.0
    %623 = vmatpush2.xpose.msra.mxu0 0.0
    %624 = vmatprep.subr.mxu0 0.0
    %625 = vmatpush2.xpose.msra.mxu0 0.0
    %626 = vmatprep.subr.mxu0 0.0
    %627 = vmatpush2.xpose.msra.mxu0 0.0
    %628 = vmatprep.subr.mxu0 0.0
    %629 = vmatpush2.xpose.msra.mxu0 0.0
    %630 = vmatprep.subr.mxu0 0.0
    %631 = vmatpush2.xpose.msra.mxu0 0.0
    %632 = vmatprep.subr.mxu0 0.0
    %633 = vmatpush2.xpose.msra.mxu0 0.0
    %634 = vmatprep.subr.mxu0 0.0
    %635 = vmatpush2.xpose.msra.mxu0 0.0
    %636 = vmatprep.subr.mxu0 0.0
    %637 = vmatpush2.xpose.msra.mxu0 0.0
    %638 = vmatprep.subr.mxu0 0.0
    %639 = vmatpush2.xpose.msra.mxu0 0.0
    %640 = vmatprep.subr.mxu0 0.0
    %641 = vmatpush2.xpose.msra.mxu0 0.0
    %642 = vmatprep.subr.mxu0 0.0
    %643 = vmatpush2.xpose.msra.mxu0 0.0
    %644 = vmatprep.subr.mxu0 0.0
    %645 = vmatpush2.xpose.msra.mxu0 0.0
    %646 = vmatprep.subr.mxu0 0.0
    %647 = vmatpush2.xpose.msra.mxu0 0.0
    %648 = vmatprep.subr.mxu0 0.0
    %649 = vmatpush2.xpose.msra.mxu0 0.0
    %650 = vmatprep.mubr.f32.mxu0 0.0
    %651 = vmatmul.mubr.f32.gmra.mxu0 %v582
    %v652 = vpop.f32.mrf.mxu0
    %v653 = vadd.f32 0.0, %v652
    %v654 = vpop.f32.mrf.mxu0
    %655 = vdwg.mxu0
    %656 = vrot.lane.b32.xlu0 %v242, 120
    %v657 = vpop.permute.xlu0 %656
    %658 = vrot.lane.b32.xlu0 %v242, 88
    %v659 = vpop.permute.xlu0 %658
    %v660 = vsel %vm252, %v657, 0
    %v662 = vsel %vm252, %v659, 0
    %664 = vmatprep.subr.mxu0 0.0
    %665 = vmatpush1.xpose.msra.mxu0 0.0
    %666 = vmatprep.subr.mxu0 0.0
    %667 = vmatpush1.xpose.msra.mxu0 0.0
    %668 = vmatprep.subr.mxu0 0.0
    %669 = vmatpush1.xpose.msra.mxu0 0.0
    %670 = vmatprep.subr.mxu0 0.0
    %671 = vmatpush1.xpose.msra.mxu0 0.0
    %672 = vmatprep.subr.mxu0 0.0
    %673 = vmatpush1.xpose.msra.mxu0 0.0
    %674 = vmatprep.subr.mxu0 0.0
    %675 = vmatpush1.xpose.msra.mxu0 0.0
    %676 = vmatprep.subr.mxu0 0.0
    %677 = vmatpush1.xpose.msra.mxu0 0.0
    %678 = vmatprep.subr.mxu0 0.0
    %679 = vmatpush1.xpose.msra.mxu0 0.0
    %680 = vmatprep.subr.mxu0 0.0
    %681 = vmatpush1.xpose.msra.mxu0 0.0
    %682 = vmatprep.subr.mxu0 0.0
    %683 = vmatpush1.xpose.msra.mxu0 0.0
    %684 = vmatprep.subr.mxu0 0.0
    %685 = vmatpush1.xpose.msra.mxu0 0.0
    %686 = vmatprep.subr.mxu0 0.0
    %687 = vmatpush1.xpose.msra.mxu0 0.0
    %688 = vmatprep.subr.mxu0 0.0
    %689 = vmatpush1.xpose.msra.mxu0 0.0
    %690 = vmatprep.subr.mxu0 0.0
    %691 = vmatpush1.xpose.msra.mxu0 0.0
    %692 = vmatprep.subr.mxu0 0.0
    %693 = vmatpush1.xpose.msra.mxu0 0.0
    %694 = vmatprep.subr.mxu0 0.0
    %695 = vmatpush1.xpose.msra.mxu0 %v662
    %696 = vmatprep.subr.mxu0 0.0
    %697 = vmatpush2.xpose.msra.mxu0 0.0
    %698 = vmatprep.subr.mxu0 0.0
    %699 = vmatpush2.xpose.msra.mxu0 0.0
    %700 = vmatprep.subr.mxu0 0.0
    %701 = vmatpush2.xpose.msra.mxu0 0.0
    %702 = vmatprep.subr.mxu0 0.0
    %703 = vmatpush2.xpose.msra.mxu0 0.0
    %704 = vmatprep.subr.mxu0 0.0
    %705 = vmatpush2.xpose.msra.mxu0 0.0
    %706 = vmatprep.subr.mxu0 0.0
    %707 = vmatpush2.xpose.msra.mxu0 0.0
    %708 = vmatprep.subr.mxu0 0.0
    %709 = vmatpush2.xpose.msra.mxu0 0.0
    %710 = vmatprep.subr.mxu0 0.0
    %711 = vmatpush2.xpose.msra.mxu0 0.0
    %712 = vmatprep.subr.mxu0 0.0
    %713 = vmatpush2.xpose.msra.mxu0 0.0
    %714 = vmatprep.subr.mxu0 0.0
    %715 = vmatpush2.xpose.msra.mxu0 0.0
    %716 = vmatprep.subr.mxu0 0.0
    %717 = vmatpush2.xpose.msra.mxu0 0.0
    %718 = vmatprep.subr.mxu0 0.0
    %719 = vmatpush2.xpose.msra.mxu0 0.0
    %720 = vmatprep.subr.mxu0 0.0
    %721 = vmatpush2.xpose.msra.mxu0 0.0
    %722 = vmatprep.subr.mxu0 0.0
    %723 = vmatpush2.xpose.msra.mxu0 0.0
    %724 = vmatprep.subr.mxu0 0.0
    %725 = vmatpush2.xpose.msra.mxu0 0.0
    %726 = vmatprep.subr.mxu0 0.0
    %727 = vmatpush2.xpose.msra.mxu0 0.0
    %728 = vmatprep.mubr.f32.mxu0 0.0
    %729 = vmatmul.mubr.f32.gmra.mxu0 %v660
    %v730 = vpop.f32.mrf.mxu0
    %v731 = vadd.f32 0.0, %v730
    %v732 = vpop.f32.mrf.mxu0
    %733 = vdwg.mxu0
    %v734 = vsel %vm252, %v653, -inf
    %735 = vmax.xlane.f32.xlu0 %v734
    %v736 = vpop.xlane.xlu0 %735
    %v737 = vsel %vm252, %v731, -inf
    %738 = vmax.xlane.f32.xlu0 %v737
    %v739 = vpop.xlane.xlu0 %738
    %v740 = vsub.f32 %v653, %v736
    %v741 = vsub.f32 %v731, %v739
    %v742 = vmul.f32 %v740, 1.442695
    %v743 = vpow.pop %v742
    %v744 = vmul.f32 %v741, 1.442695
    %v745 = vpow.pop %v744
    %v746 = vsel %vm252, %v743, 0.0
    %747 = vadd.xlane.f32.xlu0 %v746
    %v748 = vpop.xlane.xlu0 %747
    %v749 = vsel %vm252, %v745, 0.0
    %750 = vadd.xlane.f32.xlu0 %v749
    %v751 = vpop.xlane.xlu0 %750
    %v752 = vrcp.pop %v748
    %v753 = vrcp.pop %v751
    %v754 = vmul.f32 %v743, %v752
    %v755 = vmul.f32 %v745, %v753
    %756 = vrot.lane.b32.xlu0 %v237, 56
    %v757 = vpop.permute.xlu0 %756
    %v760 = vsel %vm252, %v754, 0
    %762 = vmatprep.subr.mxu0 0.0
    %763 = vmatpush1.msra.mxu0 0.0
    %764 = vmatprep.subr.mxu0 0.0
    %765 = vmatpush1.msra.mxu0 0.0
    %766 = vmatprep.subr.mxu0 0.0
    %767 = vmatpush1.msra.mxu0 0.0
    %768 = vmatprep.subr.mxu0 0.0
    %769 = vmatpush1.msra.mxu0 0.0
    %770 = vmatprep.subr.mxu0 0.0
    %771 = vmatpush1.msra.mxu0 0.0
    %772 = vmatprep.subr.mxu0 0.0
    %773 = vmatpush1.msra.mxu0 0.0
    %774 = vmatprep.subr.mxu0 0.0
    %775 = vmatpush1.msra.mxu0 0.0
    %776 = vmatprep.subr.mxu0 0.0
    %777 = vmatpush1.msra.mxu0 0.0
    %778 = vmatprep.subr.mxu0 0.0
    %779 = vmatpush1.msra.mxu0 0.0
    %780 = vmatprep.subr.mxu0 0.0
    %781 = vmatpush1.msra.mxu0 0.0
    %782 = vmatprep.subr.mxu0 0.0
    %783 = vmatpush1.msra.mxu0 0.0
    %784 = vmatprep.subr.mxu0 0.0
    %785 = vmatpush1.msra.mxu0 0.0
    %786 = vmatprep.subr.mxu0 0.0
    %787 = vmatpush1.msra.mxu0 0.0
    %788 = vmatprep.subr.mxu0 0.0
    %789 = vmatpush1.msra.mxu0 0.0
    %790 = vmatprep.subr.mxu0 0.0
    %791 = vmatpush1.msra.mxu0 0.0
    %792 = vmatprep.subr.mxu0 0.0
    %793 = vmatpush1.msra.mxu0 %v757
    %794 = vmatprep.subr.mxu0 0.0
    %795 = vmatpush2.msra.mxu0 0.0
    %796 = vmatprep.subr.mxu0 0.0
    %797 = vmatpush2.msra.mxu0 0.0
    %798 = vmatprep.subr.mxu0 0.0
    %799 = vmatpush2.msra.mxu0 0.0
    %800 = vmatprep.subr.mxu0 0.0
    %801 = vmatpush2.msra.mxu0 0.0
    %802 = vmatprep.subr.mxu0 0.0
    %803 = vmatpush2.msra.mxu0 0.0
    %804 = vmatprep.subr.mxu0 0.0
    %805 = vmatpush2.msra.mxu0 0.0
    %806 = vmatprep.subr.mxu0 0.0
    %807 = vmatpush2.msra.mxu0 0.0
    %808 = vmatprep.subr.mxu0 0.0
    %809 = vmatpush2.msra.mxu0 0.0
    %810 = vmatprep.subr.mxu0 0.0
    %811 = vmatpush2.msra.mxu0 0.0
    %812 = vmatprep.subr.mxu0 0.0
    %813 = vmatpush2.msra.mxu0 0.0
    %814 = vmatprep.subr.mxu0 0.0
    %815 = vmatpush2.msra.mxu0 0.0
    %816 = vmatprep.subr.mxu0 0.0
    %817 = vmatpush2.msra.mxu0 0.0
    %818 = vmatprep.subr.mxu0 0.0
    %819 = vmatpush2.msra.mxu0 0.0
    %820 = vmatprep.subr.mxu0 0.0
    %821 = vmatpush2.msra.mxu0 0.0
    %822 = vmatprep.subr.mxu0 0.0
    %823 = vmatpush2.msra.mxu0 0.0
    %824 = vmatprep.subr.mxu0 0.0
    %825 = vmatpush2.msra.mxu0 0.0
    %826 = vmatprep.mubr.f32.mxu0 0.0
    %827 = vmatmul.mubr.f32.gmra.mxu0 %v760
    %v828 = vpop.f32.mrf.mxu0
    %v829 = vadd.f32 0.0, %v828
    %v830 = vpop.f32.mrf.mxu0
    %831 = vdwg.mxu0
    %832 = vrot.lane.b32.xlu0 %v242, 56
    %v833 = vpop.permute.xlu0 %832
    %v836 = vsel %vm252, %v755, 0
    %838 = vmatprep.subr.mxu0 0.0
    %839 = vmatpush1.msra.mxu0 0.0
    %840 = vmatprep.subr.mxu0 0.0
    %841 = vmatpush1.msra.mxu0 0.0
    %842 = vmatprep.subr.mxu0 0.0
    %843 = vmatpush1.msra.mxu0 0.0
    %844 = vmatprep.subr.mxu0 0.0
    %845 = vmatpush1.msra.mxu0 0.0
    %846 = vmatprep.subr.mxu0 0.0
    %847 = vmatpush1.msra.mxu0 0.0
    %848 = vmatprep.subr.mxu0 0.0
    %849 = vmatpush1.msra.mxu0 0.0
    %850 = vmatprep.subr.mxu0 0.0
    %851 = vmatpush1.msra.mxu0 0.0
    %852 = vmatprep.subr.mxu0 0.0
    %853 = vmatpush1.msra.mxu0 0.0
    %854 = vmatprep.subr.mxu0 0.0
    %855 = vmatpush1.msra.mxu0 0.0
    %856 = vmatprep.subr.mxu0 0.0
    %857 = vmatpush1.msra.mxu0 0.0
    %858 = vmatprep.subr.mxu0 0.0
    %859 = vmatpush1.msra.mxu0 0.0
    %860 = vmatprep.subr.mxu0 0.0
    %861 = vmatpush1.msra.mxu0 0.0
    %862 = vmatprep.subr.mxu0 0.0
    %863 = vmatpush1.msra.mxu0 0.0
    %864 = vmatprep.subr.mxu0 0.0
    %865 = vmatpush1.msra.mxu0 0.0
    %866 = vmatprep.subr.mxu0 0.0
    %867 = vmatpush1.msra.mxu0 0.0
    %868 = vmatprep.subr.mxu0 0.0
    %869 = vmatpush1.msra.mxu0 %v833
    %870 = vmatprep.subr.mxu0 0.0
    %871 = vmatpush2.msra.mxu0 0.0
    %872 = vmatprep.subr.mxu0 0.0
    %873 = vmatpush2.msra.mxu0 0.0
    %874 = vmatprep.subr.mxu0 0.0
    %875 = vmatpush2.msra.mxu0 0.0
    %876 = vmatprep.subr.mxu0 0.0
    %877 = vmatpush2.msra.mxu0 0.0
    %878 = vmatprep.subr.mxu0 0.0
    %879 = vmatpush2.msra.mxu0 0.0
    %880 = vmatprep.subr.mxu0 0.0
    %881 = vmatpush2.msra.mxu0 0.0
    %882 = vmatprep.subr.mxu0 0.0
    %883 = vmatpush2.msra.mxu0 0.0
    %884 = vmatprep.subr.mxu0 0.0
    %885 = vmatpush2.msra.mxu0 0.0
    %886 = vmatprep.subr.mxu0 0.0
    %887 = vmatpush2.msra.mxu0 0.0
    %888 = vmatprep.subr.mxu0 0.0
    %889 = vmatpush2.msra.mxu0 0.0
    %890 = vmatprep.subr.mxu0 0.0
    %891 = vmatpush2.msra.mxu0 0.0
    %892 = vmatprep.subr.mxu0 0.0
    %893 = vmatpush2.msra.mxu0 0.0
    %894 = vmatprep.subr.mxu0 0.0
    %895 = vmatpush2.msra.mxu0 0.0
    %896 = vmatprep.subr.mxu0 0.0
    %897 = vmatpush2.msra.mxu0 0.0
    %898 = vmatprep.subr.mxu0 0.0
    %899 = vmatpush2.msra.mxu0 0.0
    %900 = vmatprep.subr.mxu0 0.0
    %901 = vmatpush2.msra.mxu0 0.0
    %902 = vmatprep.mubr.f32.mxu0 0.0
    %903 = vmatmul.mubr.f32.gmra.mxu0 %v836
    %v904 = vpop.f32.mrf.mxu0
    %v905 = vadd.f32 0.0, %v904
    %v906 = vpop.f32.mrf.mxu0
    %907 = vdwg.mxu0
    %v909 = vsel %vm252, %v829, 0
    %v912 = vsel %vm252, %v905, 0
    %914 = vmatprep.subr.mxu0 0.0
    %915 = vmatpush1.msra.mxu0 0.0
    %916 = vmatprep.subr.mxu0 0.0
    %917 = vmatpush1.msra.mxu0 0.0
    %918 = vmatprep.subr.mxu0 0.0
    %919 = vmatpush1.msra.mxu0 0.0
    %920 = vmatprep.subr.mxu0 0.0
    %921 = vmatpush1.msra.mxu0 0.0
    %922 = vmatprep.subr.mxu0 0.0
    %923 = vmatpush1.msra.mxu0 0.0
    %924 = vmatprep.subr.mxu0 0.0
    %925 = vmatpush1.msra.mxu0 0.0
    %926 = vmatprep.subr.mxu0 0.0
    %927 = vmatpush1.msra.mxu0 0.0
    %928 = vmatprep.subr.mxu0 0.0
    %929 = vmatpush1.msra.mxu0 0.0
    %930 = vmatprep.subr.mxu0 0.0
    %931 = vmatpush1.msra.mxu0 0.0
    %932 = vmatprep.subr.mxu0 0.0
    %933 = vmatpush1.msra.mxu0 0.0
    %934 = vmatprep.subr.mxu0 0.0
    %935 = vmatpush1.msra.mxu0 0.0
    %936 = vmatprep.subr.mxu0 0.0
    %937 = vmatpush1.msra.mxu0 0.0
    %938 = vmatprep.subr.mxu0 0.0
    %939 = vmatpush1.msra.mxu0 0.0
    %940 = vmatprep.subr.mxu0 0.0
    %941 = vmatpush1.msra.mxu0 0.0
    %942 = vmatprep.subr.mxu0 0.0
    %943 = vmatpush1.msra.mxu0 0.0
    %944 = vmatprep.subr.mxu0 0.0
    %945 = vmatpush1.msra.mxu0 %v246
    %946 = vmatprep.subr.mxu0 0.0
    %947 = vmatpush2.msra.mxu0 0.0
    %948 = vmatprep.subr.mxu0 0.0
    %949 = vmatpush2.msra.mxu0 0.0
    %950 = vmatprep.subr.mxu0 0.0
    %951 = vmatpush2.msra.mxu0 0.0
    %952 = vmatprep.subr.mxu0 0.0
    %953 = vmatpush2.msra.mxu0 0.0
    %954 = vmatprep.subr.mxu0 0.0
    %955 = vmatpush2.msra.mxu0 0.0
    %956 = vmatprep.subr.mxu0 0.0
    %957 = vmatpush2.msra.mxu0 0.0
    %958 = vmatprep.subr.mxu0 0.0
    %959 = vmatpush2.msra.mxu0 0.0
    %960 = vmatprep.subr.mxu0 0.0
    %961 = vmatpush2.msra.mxu0 0.0
    %962 = vmatprep.subr.mxu0 0.0
    %963 = vmatpush2.msra.mxu0 0.0
    %964 = vmatprep.subr.mxu0 0.0
    %965 = vmatpush2.msra.mxu0 0.0
    %966 = vmatprep.subr.mxu0 0.0
    %967 = vmatpush2.msra.mxu0 0.0
    %968 = vmatprep.subr.mxu0 0.0
    %969 = vmatpush2.msra.mxu0 0.0
    %970 = vmatprep.subr.mxu0 0.0
    %971 = vmatpush2.msra.mxu0 0.0
    %972 = vmatprep.subr.mxu0 0.0
    %973 = vmatpush2.msra.mxu0 0.0
    %974 = vmatprep.subr.mxu0 0.0
    %975 = vmatpush2.msra.mxu0 0.0
    %976 = vmatprep.subr.mxu0 0.0
    %977 = vmatpush2.msra.mxu0 0.0
    %978 = vmatprep.mubr.f32.mxu0 0.0
    %979 = vmatmul.mubr.f32.gmra.mxu0 %v909
    %v980 = vpop.f32.mrf.mxu0
    %v981 = vadd.f32 0.0, %v980
    %v982 = vpop.f32.mrf.mxu0
    %983 = vmatprep.mubr.f32.mxu0 0.0
    %984 = vmatmul.mubr.f32.gmra.mxu0 %v912
    %v985 = vpop.f32.mrf.mxu0
    %v986 = vadd.f32 0.0, %v985
    %v987 = vpop.f32.mrf.mxu0
    %988 = vdwg.mxu0
    %v990 = vsel %vm252, %v499, 0
    %v993 = vsel %vm252, %v575, 0
    %995 = vmatprep.subr.mxu0 0.0
    %996 = vmatpush1.msra.mxu0 0.0
    %997 = vmatprep.subr.mxu0 0.0
    %998 = vmatpush1.msra.mxu0 0.0
    %999 = vmatprep.subr.mxu0 0.0
    %1000 = vmatpush1.msra.mxu0 0.0
    %1001 = vmatprep.subr.mxu0 0.0
    %1002 = vmatpush1.msra.mxu0 0.0
    %1003 = vmatprep.subr.mxu0 0.0
    %1004 = vmatpush1.msra.mxu0 0.0
    %1005 = vmatprep.subr.mxu0 0.0
    %1006 = vmatpush1.msra.mxu0 0.0
    %1007 = vmatprep.subr.mxu0 0.0
    %1008 = vmatpush1.msra.mxu0 0.0
    %1009 = vmatprep.subr.mxu0 0.0
    %1010 = vmatpush1.msra.mxu0 0.0
    %1011 = vmatprep.subr.mxu0 0.0
    %1012 = vmatpush1.msra.mxu0 0.0
    %1013 = vmatprep.subr.mxu0 0.0
    %1014 = vmatpush1.msra.mxu0 0.0
    %1015 = vmatprep.subr.mxu0 0.0
    %1016 = vmatpush1.msra.mxu0 0.0
    %1017 = vmatprep.subr.mxu0 0.0
    %1018 = vmatpush1.msra.mxu0 0.0
    %1019 = vmatprep.subr.mxu0 0.0
    %1020 = vmatpush1.msra.mxu0 0.0
    %1021 = vmatprep.subr.mxu0 0.0
    %1022 = vmatpush1.msra.mxu0 0.0
    %1023 = vmatprep.subr.mxu0 0.0
    %1024 = vmatpush1.msra.mxu0 0.0
    %1025 = vmatprep.subr.mxu0 0.0
    %1026 = vmatpush1.msra.mxu0 %v245
    %1027 = vmatprep.subr.mxu0 0.0
    %1028 = vmatpush2.msra.mxu0 0.0
    %1029 = vmatprep.subr.mxu0 0.0
    %1030 = vmatpush2.msra.mxu0 0.0
    %1031 = vmatprep.subr.mxu0 0.0
    %1032 = vmatpush2.msra.mxu0 0.0
    %1033 = vmatprep.subr.mxu0 0.0
    %1034 = vmatpush2.msra.mxu0 0.0
    %1035 = vmatprep.subr.mxu0 0.0
    %1036 = vmatpush2.msra.mxu0 0.0
    %1037 = vmatprep.subr.mxu0 0.0
    %1038 = vmatpush2.msra.mxu0 0.0
    %1039 = vmatprep.subr.mxu0 0.0
    %1040 = vmatpush2.msra.mxu0 0.0
    %1041 = vmatprep.subr.mxu0 0.0
    %1042 = vmatpush2.msra.mxu0 0.0
    %1043 = vmatprep.subr.mxu0 0.0
    %1044 = vmatpush2.msra.mxu0 0.0
    %1045 = vmatprep.subr.mxu0 0.0
    %1046 = vmatpush2.msra.mxu0 0.0
    %1047 = vmatprep.subr.mxu0 0.0
    %1048 = vmatpush2.msra.mxu0 0.0
    %1049 = vmatprep.subr.mxu0 0.0
    %1050 = vmatpush2.msra.mxu0 0.0
    %1051 = vmatprep.subr.mxu0 0.0
    %1052 = vmatpush2.msra.mxu0 0.0
    %1053 = vmatprep.subr.mxu0 0.0
    %1054 = vmatpush2.msra.mxu0 0.0
    %1055 = vmatprep.subr.mxu0 0.0
    %1056 = vmatpush2.msra.mxu0 0.0
    %1057 = vmatprep.subr.mxu0 0.0
    %1058 = vmatpush2.msra.mxu0 0.0
    %1059 = vmatprep.mubr.f32.mxu0 0.0
    %1060 = vmatmul.mubr.f32.gmra.mxu0 %v990
    %v1061 = vpop.f32.mrf.mxu0
    %v1062 = vadd.f32 %v981, %v1061
    %v1063 = vpop.f32.mrf.mxu0
    %1064 = vmatprep.mubr.f32.mxu0 0.0
    %1065 = vmatmul.mubr.f32.gmra.mxu0 %v993
    %v1066 = vpop.f32.mrf.mxu0
    %v1067 = vadd.f32 %v986, %v1066
    %v1068 = vpop.f32.mrf.mxu0
    %1069 = vdwg.mxu0
    %1070 = vrot.lane.b32.xlu0 %v237, 112
    %v1071 = vpop.permute.xlu0 %1070
    %1072 = vrot.lane.b32.xlu0 %v237, 80
    %v1073 = vpop.permute.xlu0 %1072
    %v1074 = vsel %vm252, %v1071, 0
    %v1076 = vsel %vm252, %v1073, 0
    %1078 = vmatprep.subr.mxu0 0.0
    %1079 = vmatpush1.xpose.msra.mxu0 0.0
    %1080 = vmatprep.subr.mxu0 0.0
    %1081 = vmatpush1.xpose.msra.mxu0 0.0
    %1082 = vmatprep.subr.mxu0 0.0
    %1083 = vmatpush1.xpose.msra.mxu0 0.0
    %1084 = vmatprep.subr.mxu0 0.0
    %1085 = vmatpush1.xpose.msra.mxu0 0.0
    %1086 = vmatprep.subr.mxu0 0.0
    %1087 = vmatpush1.xpose.msra.mxu0 0.0
    %1088 = vmatprep.subr.mxu0 0.0
    %1089 = vmatpush1.xpose.msra.mxu0 0.0
    %1090 = vmatprep.subr.mxu0 0.0
    %1091 = vmatpush1.xpose.msra.mxu0 0.0
    %1092 = vmatprep.subr.mxu0 0.0
    %1093 = vmatpush1.xpose.msra.mxu0 0.0
    %1094 = vmatprep.subr.mxu0 0.0
    %1095 = vmatpush1.xpose.msra.mxu0 0.0
    %1096 = vmatprep.subr.mxu0 0.0
    %1097 = vmatpush1.xpose.msra.mxu0 0.0
    %1098 = vmatprep.subr.mxu0 0.0
    %1099 = vmatpush1.xpose.msra.mxu0 0.0
    %1100 = vmatprep.subr.mxu0 0.0
    %1101 = vmatpush1.xpose.msra.mxu0 0.0
    %1102 = vmatprep.subr.mxu0 0.0
    %1103 = vmatpush1.xpose.msra.mxu0 0.0
    %1104 = vmatprep.subr.mxu0 0.0
    %1105 = vmatpush1.xpose.msra.mxu0 0.0
    %1106 = vmatprep.subr.mxu0 0.0
    %1107 = vmatpush1.xpose.msra.mxu0 0.0
    %1108 = vmatprep.subr.mxu0 0.0
    %1109 = vmatpush1.xpose.msra.mxu0 %v1076
    %1110 = vmatprep.subr.mxu0 0.0
    %1111 = vmatpush2.xpose.msra.mxu0 0.0
    %1112 = vmatprep.subr.mxu0 0.0
    %1113 = vmatpush2.xpose.msra.mxu0 0.0
    %1114 = vmatprep.subr.mxu0 0.0
    %1115 = vmatpush2.xpose.msra.mxu0 0.0
    %1116 = vmatprep.subr.mxu0 0.0
    %1117 = vmatpush2.xpose.msra.mxu0 0.0
    %1118 = vmatprep.subr.mxu0 0.0
    %1119 = vmatpush2.xpose.msra.mxu0 0.0
    %1120 = vmatprep.subr.mxu0 0.0
    %1121 = vmatpush2.xpose.msra.mxu0 0.0
    %1122 = vmatprep.subr.mxu0 0.0
    %1123 = vmatpush2.xpose.msra.mxu0 0.0
    %1124 = vmatprep.subr.mxu0 0.0
    %1125 = vmatpush2.xpose.msra.mxu0 0.0
    %1126 = vmatprep.subr.mxu0 0.0
    %1127 = vmatpush2.xpose.msra.mxu0 0.0
    %1128 = vmatprep.subr.mxu0 0.0
    %1129 = vmatpush2.xpose.msra.mxu0 0.0
    %1130 = vmatprep.subr.mxu0 0.0
    %1131 = vmatpush2.xpose.msra.mxu0 0.0
    %1132 = vmatprep.subr.mxu0 0.0
    %1133 = vmatpush2.xpose.msra.mxu0 0.0
    %1134 = vmatprep.subr.mxu0 0.0
    %1135 = vmatpush2.xpose.msra.mxu0 0.0
    %1136 = vmatprep.subr.mxu0 0.0
    %1137 = vmatpush2.xpose.msra.mxu0 0.0
    %1138 = vmatprep.subr.mxu0 0.0
    %1139 = vmatpush2.xpose.msra.mxu0 0.0
    %1140 = vmatprep.subr.mxu0 0.0
    %1141 = vmatpush2.xpose.msra.mxu0 0.0
    %1142 = vmatprep.mubr.f32.mxu0 0.0
    %1143 = vmatmul.mubr.f32.gmra.mxu0 %v1074
    %v1144 = vpop.f32.mrf.mxu0
    %v1145 = vadd.f32 0.0, %v1144
    %v1146 = vpop.f32.mrf.mxu0
    %1147 = vdwg.mxu0
    %1148 = vrot.lane.b32.xlu0 %v242, 112
    %v1149 = vpop.permute.xlu0 %1148
    %1150 = vrot.lane.b32.xlu0 %v242, 80
    %v1151 = vpop.permute.xlu0 %1150
    %v1152 = vsel %vm252, %v1149, 0
    %v1154 = vsel %vm252, %v1151, 0
    %1156 = vmatprep.subr.mxu0 0.0
    %1157 = vmatpush1.xpose.msra.mxu0 0.0
    %1158 = vmatprep.subr.mxu0 0.0
    %1159 = vmatpush1.xpose.msra.mxu0 0.0
    %1160 = vmatprep.subr.mxu0 0.0
    %1161 = vmatpush1.xpose.msra.mxu0 0.0
    %1162 = vmatprep.subr.mxu0 0.0
    %1163 = vmatpush1.xpose.msra.mxu0 0.0
    %1164 = vmatprep.subr.mxu0 0.0
    %1165 = vmatpush1.xpose.msra.mxu0 0.0
    %1166 = vmatprep.subr.mxu0 0.0
    %1167 = vmatpush1.xpose.msra.mxu0 0.0
    %1168 = vmatprep.subr.mxu0 0.0
    %1169 = vmatpush1.xpose.msra.mxu0 0.0
    %1170 = vmatprep.subr.mxu0 0.0
    %1171 = vmatpush1.xpose.msra.mxu0 0.0
    %1172 = vmatprep.subr.mxu0 0.0
    %1173 = vmatpush1.xpose.msra.mxu0 0.0
    %1174 = vmatprep.subr.mxu0 0.0
    %1175 = vmatpush1.xpose.msra.mxu0 0.0
    %1176 = vmatprep.subr.mxu0 0.0
    %1177 = vmatpush1.xpose.msra.mxu0 0.0
    %1178 = vmatprep.subr.mxu0 0.0
    %1179 = vmatpush1.xpose.msra.mxu0 0.0
    %1180 = vmatprep.subr.mxu0 0.0
    %1181 = vmatpush1.xpose.msra.mxu0 0.0
    %1182 = vmatprep.subr.mxu0 0.0
    %1183 = vmatpush1.xpose.msra.mxu0 0.0
    %1184 = vmatprep.subr.mxu0 0.0
    %1185 = vmatpush1.xpose.msra.mxu0 0.0
    %1186 = vmatprep.subr.mxu0 0.0
    %1187 = vmatpush1.xpose.msra.mxu0 %v1154
    %1188 = vmatprep.subr.mxu0 0.0
    %1189 = vmatpush2.xpose.msra.mxu0 0.0
    %1190 = vmatprep.subr.mxu0 0.0
    %1191 = vmatpush2.xpose.msra.mxu0 0.0
    %1192 = vmatprep.subr.mxu0 0.0
    %1193 = vmatpush2.xpose.msra.mxu0 0.0
    %1194 = vmatprep.subr.mxu0 0.0
    %1195 = vmatpush2.xpose.msra.mxu0 0.0
    %1196 = vmatprep.subr.mxu0 0.0
    %1197 = vmatpush2.xpose.msra.mxu0 0.0
    %1198 = vmatprep.subr.mxu0 0.0
    %1199 = vmatpush2.xpose.msra.mxu0 0.0
    %1200 = vmatprep.subr.mxu0 0.0
    %1201 = vmatpush2.xpose.msra.mxu0 0.0
    %1202 = vmatprep.subr.mxu0 0.0
    %1203 = vmatpush2.xpose.msra.mxu0 0.0
    %1204 = vmatprep.subr.mxu0 0.0
    %1205 = vmatpush2.xpose.msra.mxu0 0.0
    %1206 = vmatprep.subr.mxu0 0.0
    %1207 = vmatpush2.xpose.msra.mxu0 0.0
    %1208 = vmatprep.subr.mxu0 0.0
    %1209 = vmatpush2.xpose.msra.mxu0 0.0
    %1210 = vmatprep.subr.mxu0 0.0
    %1211 = vmatpush2.xpose.msra.mxu0 0.0
    %1212 = vmatprep.subr.mxu0 0.0
    %1213 = vmatpush2.xpose.msra.mxu0 0.0
    %1214 = vmatprep.subr.mxu0 0.0
    %1215 = vmatpush2.xpose.msra.mxu0 0.0
    %1216 = vmatprep.subr.mxu0 0.0
    %1217 = vmatpush2.xpose.msra.mxu0 0.0
    %1218 = vmatprep.subr.mxu0 0.0
    %1219 = vmatpush2.xpose.msra.mxu0 0.0
    %1220 = vmatprep.mubr.f32.mxu0 0.0
    %1221 = vmatmul.mubr.f32.gmra.mxu0 %v1152
    %v1222 = vpop.f32.mrf.mxu0
    %v1223 = vadd.f32 0.0, %v1222
    %v1224 = vpop.f32.mrf.mxu0
    %1225 = vdwg.mxu0
    %v1226 = vsel %vm252, %v1145, -inf
    %1227 = vmax.xlane.f32.xlu0 %v1226
    %v1228 = vpop.xlane.xlu0 %1227
    %v1229 = vsel %vm252, %v1223, -inf
    %1230 = vmax.xlane.f32.xlu0 %v1229
    %v1231 = vpop.xlane.xlu0 %1230
    %v1232 = vsub.f32 %v1145, %v1228
    %v1233 = vsub.f32 %v1223, %v1231
    %v1234 = vmul.f32 %v1232, 1.442695
    %v1235 = vpow.pop %v1234
    %v1236 = vmul.f32 %v1233, 1.442695
    %v1237 = vpow.pop %v1236
    %v1238 = vsel %vm252, %v1235, 0.0
    %1239 = vadd.xlane.f32.xlu0 %v1238
    %v1240 = vpop.xlane.xlu0 %1239
    %v1241 = vsel %vm252, %v1237, 0.0
    %1242 = vadd.xlane.f32.xlu0 %v1241
    %v1243 = vpop.xlane.xlu0 %1242
    %v1244 = vrcp.pop %v1240
    %v1245 = vrcp.pop %v1243
    %v1246 = vmul.f32 %v1235, %v1244
    %v1247 = vmul.f32 %v1237, %v1245
    %1248 = vrot.lane.b32.xlu0 %v237, 48
    %v1249 = vpop.permute.xlu0 %1248
    %v1252 = vsel %vm252, %v1246, 0
    %1254 = vmatprep.subr.mxu0 0.0
    %1255 = vmatpush1.msra.mxu0 0.0
    %1256 = vmatprep.subr.mxu0 0.0
    %1257 = vmatpush1.msra.mxu0 0.0
    %1258 = vmatprep.subr.mxu0 0.0
    %1259 = vmatpush1.msra.mxu0 0.0
    %1260 = vmatprep.subr.mxu0 0.0
    %1261 = vmatpush1.msra.mxu0 0.0
    %1262 = vmatprep.subr.mxu0 0.0
    %1263 = vmatpush1.msra.mxu0 0.0
    %1264 = vmatprep.subr.mxu0 0.0
    %1265 = vmatpush1.msra.mxu0 0.0
    %1266 = vmatprep.subr.mxu0 0.0
    %1267 = vmatpush1.msra.mxu0 0.0
    %1268 = vmatprep.subr.mxu0 0.0
    %1269 = vmatpush1.msra.mxu0 0.0
    %1270 = vmatprep.subr.mxu0 0.0
    %1271 = vmatpush1.msra.mxu0 0.0
    %1272 = vmatprep.subr.mxu0 0.0
    %1273 = vmatpush1.msra.mxu0 0.0
    %1274 = vmatprep.subr.mxu0 0.0
    %1275 = vmatpush1.msra.mxu0 0.0
    %1276 = vmatprep.subr.mxu0 0.0
    %1277 = vmatpush1.msra.mxu0 0.0
    %1278 = vmatprep.subr.mxu0 0.0
    %1279 = vmatpush1.msra.mxu0 0.0
    %1280 = vmatprep.subr.mxu0 0.0
    %1281 = vmatpush1.msra.mxu0 0.0
    %1282 = vmatprep.subr.mxu0 0.0
    %1283 = vmatpush1.msra.mxu0 0.0
    %1284 = vmatprep.subr.mxu0 0.0
    %1285 = vmatpush1.msra.mxu0 %v1249
    %1286 = vmatprep.subr.mxu0 0.0
    %1287 = vmatpush2.msra.mxu0 0.0
    %1288 = vmatprep.subr.mxu0 0.0
    %1289 = vmatpush2.msra.mxu0 0.0
    %1290 = vmatprep.subr.mxu0 0.0
    %1291 = vmatpush2.msra.mxu0 0.0
    %1292 = vmatprep.subr.mxu0 0.0
    %1293 = vmatpush2.msra.mxu0 0.0
    %1294 = vmatprep.subr.mxu0 0.0
    %1295 = vmatpush2.msra.mxu0 0.0
    %1296 = vmatprep.subr.mxu0 0.0
    %1297 = vmatpush2.msra.mxu0 0.0
    %1298 = vmatprep.subr.mxu0 0.0
    %1299 = vmatpush2.msra.mxu0 0.0
    %1300 = vmatprep.subr.mxu0 0.0
    %1301 = vmatpush2.msra.mxu0 0.0
    %1302 = vmatprep.subr.mxu0 0.0
    %1303 = vmatpush2.msra.mxu0 0.0
    %1304 = vmatprep.subr.mxu0 0.0
    %1305 = vmatpush2.msra.mxu0 0.0
    %1306 = vmatprep.subr.mxu0 0.0
    %1307 = vmatpush2.msra.mxu0 0.0
    %1308 = vmatprep.subr.mxu0 0.0
    %1309 = vmatpush2.msra.mxu0 0.0
    %1310 = vmatprep.subr.mxu0 0.0
    %1311 = vmatpush2.msra.mxu0 0.0
    %1312 = vmatprep.subr.mxu0 0.0
    %1313 = vmatpush2.msra.mxu0 0.0
    %1314 = vmatprep.subr.mxu0 0.0
    %1315 = vmatpush2.msra.mxu0 0.0
    %1316 = vmatprep.subr.mxu0 0.0
    %1317 = vmatpush2.msra.mxu0 0.0
    %1318 = vmatprep.mubr.f32.mxu0 0.0
    %1319 = vmatmul.mubr.f32.gmra.mxu0 %v1252
    %v1320 = vpop.f32.mrf.mxu0
    %v1321 = vadd.f32 0.0, %v1320
    %v1322 = vpop.f32.mrf.mxu0
    %1323 = vdwg.mxu0
    %1324 = vrot.lane.b32.xlu0 %v242, 48
    %v1325 = vpop.permute.xlu0 %1324
    %v1328 = vsel %vm252, %v1247, 0
    %1330 = vmatprep.subr.mxu0 0.0
    %1331 = vmatpush1.msra.mxu0 0.0
    %1332 = vmatprep.subr.mxu0 0.0
    %1333 = vmatpush1.msra.mxu0 0.0
    %1334 = vmatprep.subr.mxu0 0.0
    %1335 = vmatpush1.msra.mxu0 0.0
    %1336 = vmatprep.subr.mxu0 0.0
    %1337 = vmatpush1.msra.mxu0 0.0
    %1338 = vmatprep.subr.mxu0 0.0
    %1339 = vmatpush1.msra.mxu0 0.0
    %1340 = vmatprep.subr.mxu0 0.0
    %1341 = vmatpush1.msra.mxu0 0.0
    %1342 = vmatprep.subr.mxu0 0.0
    %1343 = vmatpush1.msra.mxu0 0.0
    %1344 = vmatprep.subr.mxu0 0.0
    %1345 = vmatpush1.msra.mxu0 0.0
    %1346 = vmatprep.subr.mxu0 0.0
    %1347 = vmatpush1.msra.mxu0 0.0
    %1348 = vmatprep.subr.mxu0 0.0
    %1349 = vmatpush1.msra.mxu0 0.0
    %1350 = vmatprep.subr.mxu0 0.0
    %1351 = vmatpush1.msra.mxu0 0.0
    %1352 = vmatprep.subr.mxu0 0.0
    %1353 = vmatpush1.msra.mxu0 0.0
    %1354 = vmatprep.subr.mxu0 0.0
    %1355 = vmatpush1.msra.mxu0 0.0
    %1356 = vmatprep.subr.mxu0 0.0
    %1357 = vmatpush1.msra.mxu0 0.0
    %1358 = vmatprep.subr.mxu0 0.0
    %1359 = vmatpush1.msra.mxu0 0.0
    %1360 = vmatprep.subr.mxu0 0.0
    %1361 = vmatpush1.msra.mxu0 %v1325
    %1362 = vmatprep.subr.mxu0 0.0
    %1363 = vmatpush2.msra.mxu0 0.0
    %1364 = vmatprep.subr.mxu0 0.0
    %1365 = vmatpush2.msra.mxu0 0.0
    %1366 = vmatprep.subr.mxu0 0.0
    %1367 = vmatpush2.msra.mxu0 0.0
    %1368 = vmatprep.subr.mxu0 0.0
    %1369 = vmatpush2.msra.mxu0 0.0
    %1370 = vmatprep.subr.mxu0 0.0
    %1371 = vmatpush2.msra.mxu0 0.0
    %1372 = vmatprep.subr.mxu0 0.0
    %1373 = vmatpush2.msra.mxu0 0.0
    %1374 = vmatprep.subr.mxu0 0.0
    %1375 = vmatpush2.msra.mxu0 0.0
    %1376 = vmatprep.subr.mxu0 0.0
    %1377 = vmatpush2.msra.mxu0 0.0
    %1378 = vmatprep.subr.mxu0 0.0
    %1379 = vmatpush2.msra.mxu0 0.0
    %1380 = vmatprep.subr.mxu0 0.0
    %1381 = vmatpush2.msra.mxu0 0.0
    %1382 = vmatprep.subr.mxu0 0.0
    %1383 = vmatpush2.msra.mxu0 0.0
    %1384 = vmatprep.subr.mxu0 0.0
    %1385 = vmatpush2.msra.mxu0 0.0
    %1386 = vmatprep.subr.mxu0 0.0
    %1387 = vmatpush2.msra.mxu0 0.0
    %1388 = vmatprep.subr.mxu0 0.0
    %1389 = vmatpush2.msra.mxu0 0.0
    %1390 = vmatprep.subr.mxu0 0.0
    %1391 = vmatpush2.msra.mxu0 0.0
    %1392 = vmatprep.subr.mxu0 0.0
    %1393 = vmatpush2.msra.mxu0 0.0
    %1394 = vmatprep.mubr.f32.mxu0 0.0
    %1395 = vmatmul.mubr.f32.gmra.mxu0 %v1328
    %v1396 = vpop.f32.mrf.mxu0
    %v1397 = vadd.f32 0.0, %v1396
    %v1398 = vpop.f32.mrf.mxu0
    %1399 = vdwg.mxu0
    %v1401 = vsel %vm252, %v1321, 0
    %v1404 = vsel %vm252, %v1397, 0
    %1406 = vmatprep.subr.mxu0 0.0
    %1407 = vmatpush1.msra.mxu0 0.0
    %1408 = vmatprep.subr.mxu0 0.0
    %1409 = vmatpush1.msra.mxu0 0.0
    %1410 = vmatprep.subr.mxu0 0.0
    %1411 = vmatpush1.msra.mxu0 0.0
    %1412 = vmatprep.subr.mxu0 0.0
    %1413 = vmatpush1.msra.mxu0 0.0
    %1414 = vmatprep.subr.mxu0 0.0
    %1415 = vmatpush1.msra.mxu0 0.0
    %1416 = vmatprep.subr.mxu0 0.0
    %1417 = vmatpush1.msra.mxu0 0.0
    %1418 = vmatprep.subr.mxu0 0.0
    %1419 = vmatpush1.msra.mxu0 0.0
    %1420 = vmatprep.subr.mxu0 0.0
    %1421 = vmatpush1.msra.mxu0 0.0
    %1422 = vmatprep.subr.mxu0 0.0
    %1423 = vmatpush1.msra.mxu0 0.0
    %1424 = vmatprep.subr.mxu0 0.0
    %1425 = vmatpush1.msra.mxu0 0.0
    %1426 = vmatprep.subr.mxu0 0.0
    %1427 = vmatpush1.msra.mxu0 0.0
    %1428 = vmatprep.subr.mxu0 0.0
    %1429 = vmatpush1.msra.mxu0 0.0
    %1430 = vmatprep.subr.mxu0 0.0
    %1431 = vmatpush1.msra.mxu0 0.0
    %1432 = vmatprep.subr.mxu0 0.0
    %1433 = vmatpush1.msra.mxu0 0.0
    %1434 = vmatprep.subr.mxu0 0.0
    %1435 = vmatpush1.msra.mxu0 0.0
    %1436 = vmatprep.subr.mxu0 0.0
    %1437 = vmatpush1.msra.mxu0 %v247
    %1438 = vmatprep.subr.mxu0 0.0
    %1439 = vmatpush2.msra.mxu0 0.0
    %1440 = vmatprep.subr.mxu0 0.0
    %1441 = vmatpush2.msra.mxu0 0.0
    %1442 = vmatprep.subr.mxu0 0.0
    %1443 = vmatpush2.msra.mxu0 0.0
    %1444 = vmatprep.subr.mxu0 0.0
    %1445 = vmatpush2.msra.mxu0 0.0
    %1446 = vmatprep.subr.mxu0 0.0
    %1447 = vmatpush2.msra.mxu0 0.0
    %1448 = vmatprep.subr.mxu0 0.0
    %1449 = vmatpush2.msra.mxu0 0.0
    %1450 = vmatprep.subr.mxu0 0.0
    %1451 = vmatpush2.msra.mxu0 0.0
    %1452 = vmatprep.subr.mxu0 0.0
    %1453 = vmatpush2.msra.mxu0 0.0
    %1454 = vmatprep.subr.mxu0 0.0
    %1455 = vmatpush2.msra.mxu0 0.0
    %1456 = vmatprep.subr.mxu0 0.0
    %1457 = vmatpush2.msra.mxu0 0.0
    %1458 = vmatprep.subr.mxu0 0.0
    %1459 = vmatpush2.msra.mxu0 0.0
    %1460 = vmatprep.subr.mxu0 0.0
    %1461 = vmatpush2.msra.mxu0 0.0
    %1462 = vmatprep.subr.mxu0 0.0
    %1463 = vmatpush2.msra.mxu0 0.0
    %1464 = vmatprep.subr.mxu0 0.0
    %1465 = vmatpush2.msra.mxu0 0.0
    %1466 = vmatprep.subr.mxu0 0.0
    %1467 = vmatpush2.msra.mxu0 0.0
    %1468 = vmatprep.subr.mxu0 0.0
    %1469 = vmatpush2.msra.mxu0 0.0
    %1470 = vmatprep.mubr.f32.mxu0 0.0
    %1471 = vmatmul.mubr.f32.gmra.mxu0 %v1401
    %v1472 = vpop.f32.mrf.mxu0
    %v1473 = vadd.f32 0.0, %v1472
    %v1474 = vpop.f32.mrf.mxu0
    %1475 = vmatprep.mubr.f32.mxu0 0.0
    %1476 = vmatmul.mubr.f32.gmra.mxu0 %v1404
    %v1477 = vpop.f32.mrf.mxu0
    %v1478 = vadd.f32 0.0, %v1477
    %v1479 = vpop.f32.mrf.mxu0
    %1480 = vdwg.mxu0
    %v1481 = vadd.f32 %v1062, %v1473
    %v1482 = vadd.f32 %v1067, %v1478
    %1483 = vrot.lane.b32.xlu0 %v237, 104
    %v1484 = vpop.permute.xlu0 %1483
    %1485 = vrot.lane.b32.xlu0 %v237, 72
    %v1486 = vpop.permute.xlu0 %1485
    %v1487 = vsel %vm252, %v1484, 0
    %v1489 = vsel %vm252, %v1486, 0
    %1491 = vmatprep.subr.mxu0 0.0
    %1492 = vmatpush1.xpose.msra.mxu0 0.0
    %1493 = vmatprep.subr.mxu0 0.0
    %1494 = vmatpush1.xpose.msra.mxu0 0.0
    %1495 = vmatprep.subr.mxu0 0.0
    %1496 = vmatpush1.xpose.msra.mxu0 0.0
    %1497 = vmatprep.subr.mxu0 0.0
    %1498 = vmatpush1.xpose.msra.mxu0 0.0
    %1499 = vmatprep.subr.mxu0 0.0
    %1500 = vmatpush1.xpose.msra.mxu0 0.0
    %1501 = vmatprep.subr.mxu0 0.0
    %1502 = vmatpush1.xpose.msra.mxu0 0.0
    %1503 = vmatprep.subr.mxu0 0.0
    %1504 = vmatpush1.xpose.msra.mxu0 0.0
    %1505 = vmatprep.subr.mxu0 0.0
    %1506 = vmatpush1.xpose.msra.mxu0 0.0
    %1507 = vmatprep.subr.mxu0 0.0
    %1508 = vmatpush1.xpose.msra.mxu0 0.0
    %1509 = vmatprep.subr.mxu0 0.0
    %1510 = vmatpush1.xpose.msra.mxu0 0.0
    %1511 = vmatprep.subr.mxu0 0.0
    %1512 = vmatpush1.xpose.msra.mxu0 0.0
    %1513 = vmatprep.subr.mxu0 0.0
    %1514 = vmatpush1.xpose.msra.mxu0 0.0
    %1515 = vmatprep.subr.mxu0 0.0
    %1516 = vmatpush1.xpose.msra.mxu0 0.0
    %1517 = vmatprep.subr.mxu0 0.0
    %1518 = vmatpush1.xpose.msra.mxu0 0.0
    %1519 = vmatprep.subr.mxu0 0.0
    %1520 = vmatpush1.xpose.msra.mxu0 0.0
    %1521 = vmatprep.subr.mxu0 0.0
    %1522 = vmatpush1.xpose.msra.mxu0 %v1489
    %1523 = vmatprep.subr.mxu0 0.0
    %1524 = vmatpush2.xpose.msra.mxu0 0.0
    %1525 = vmatprep.subr.mxu0 0.0
    %1526 = vmatpush2.xpose.msra.mxu0 0.0
    %1527 = vmatprep.subr.mxu0 0.0
    %1528 = vmatpush2.xpose.msra.mxu0 0.0
    %1529 = vmatprep.subr.mxu0 0.0
    %1530 = vmatpush2.xpose.msra.mxu0 0.0
    %1531 = vmatprep.subr.mxu0 0.0
    %1532 = vmatpush2.xpose.msra.mxu0 0.0
    %1533 = vmatprep.subr.mxu0 0.0
    %1534 = vmatpush2.xpose.msra.mxu0 0.0
    %1535 = vmatprep.subr.mxu0 0.0
    %1536 = vmatpush2.xpose.msra.mxu0 0.0
    %1537 = vmatprep.subr.mxu0 0.0
    %1538 = vmatpush2.xpose.msra.mxu0 0.0
    %1539 = vmatprep.subr.mxu0 0.0
    %1540 = vmatpush2.xpose.msra.mxu0 0.0
    %1541 = vmatprep.subr.mxu0 0.0
    %1542 = vmatpush2.xpose.msra.mxu0 0.0
    %1543 = vmatprep.subr.mxu0 0.0
    %1544 = vmatpush2.xpose.msra.mxu0 0.0
    %1545 = vmatprep.subr.mxu0 0.0
    %1546 = vmatpush2.xpose.msra.mxu0 0.0
    %1547 = vmatprep.subr.mxu0 0.0
    %1548 = vmatpush2.xpose.msra.mxu0 0.0
    %1549 = vmatprep.subr.mxu0 0.0
    %1550 = vmatpush2.xpose.msra.mxu0 0.0
    %1551 = vmatprep.subr.mxu0 0.0
    %1552 = vmatpush2.xpose.msra.mxu0 0.0
    %1553 = vmatprep.subr.mxu0 0.0
    %1554 = vmatpush2.xpose.msra.mxu0 0.0
    %1555 = vmatprep.mubr.f32.mxu0 0.0
    %1556 = vmatmul.mubr.f32.gmra.mxu0 %v1487
    %v1557 = vpop.f32.mrf.mxu0
    %v1558 = vadd.f32 0.0, %v1557
    %v1559 = vpop.f32.mrf.mxu0
    %1560 = vdwg.mxu0
    %1561 = vrot.lane.b32.xlu0 %v242, 104
    %v1562 = vpop.permute.xlu0 %1561
    %1563 = vrot.lane.b32.xlu0 %v242, 72
    %v1564 = vpop.permute.xlu0 %1563
    %v1565 = vsel %vm252, %v1562, 0
    %v1567 = vsel %vm252, %v1564, 0
    %1569 = vmatprep.subr.mxu0 0.0
    %1570 = vmatpush1.xpose.msra.mxu0 0.0
    %1571 = vmatprep.subr.mxu0 0.0
    %1572 = vmatpush1.xpose.msra.mxu0 0.0
    %1573 = vmatprep.subr.mxu0 0.0
    %1574 = vmatpush1.xpose.msra.mxu0 0.0
    %1575 = vmatprep.subr.mxu0 0.0
    %1576 = vmatpush1.xpose.msra.mxu0 0.0
    %1577 = vmatprep.subr.mxu0 0.0
    %1578 = vmatpush1.xpose.msra.mxu0 0.0
    %1579 = vmatprep.subr.mxu0 0.0
    %1580 = vmatpush1.xpose.msra.mxu0 0.0
    %1581 = vmatprep.subr.mxu0 0.0
    %1582 = vmatpush1.xpose.msra.mxu0 0.0
    %1583 = vmatprep.subr.mxu0 0.0
    %1584 = vmatpush1.xpose.msra.mxu0 0.0
    %1585 = vmatprep.subr.mxu0 0.0
    %1586 = vmatpush1.xpose.msra.mxu0 0.0
    %1587 = vmatprep.subr.mxu0 0.0
    %1588 = vmatpush1.xpose.msra.mxu0 0.0
    %1589 = vmatprep.subr.mxu0 0.0
    %1590 = vmatpush1.xpose.msra.mxu0 0.0
    %1591 = vmatprep.subr.mxu0 0.0
    %1592 = vmatpush1.xpose.msra.mxu0 0.0
    %1593 = vmatprep.subr.mxu0 0.0
    %1594 = vmatpush1.xpose.msra.mxu0 0.0
    %1595 = vmatprep.subr.mxu0 0.0
    %1596 = vmatpush1.xpose.msra.mxu0 0.0
    %1597 = vmatprep.subr.mxu0 0.0
    %1598 = vmatpush1.xpose.msra.mxu0 0.0
    %1599 = vmatprep.subr.mxu0 0.0
    %1600 = vmatpush1.xpose.msra.mxu0 %v1567
    %1601 = vmatprep.subr.mxu0 0.0
    %1602 = vmatpush2.xpose.msra.mxu0 0.0
    %1603 = vmatprep.subr.mxu0 0.0
    %1604 = vmatpush2.xpose.msra.mxu0 0.0
    %1605 = vmatprep.subr.mxu0 0.0
    %1606 = vmatpush2.xpose.msra.mxu0 0.0
    %1607 = vmatprep.subr.mxu0 0.0
    %1608 = vmatpush2.xpose.msra.mxu0 0.0
    %1609 = vmatprep.subr.mxu0 0.0
    %1610 = vmatpush2.xpose.msra.mxu0 0.0
    %1611 = vmatprep.subr.mxu0 0.0
    %1612 = vmatpush2.xpose.msra.mxu0 0.0
    %1613 = vmatprep.subr.mxu0 0.0
    %1614 = vmatpush2.xpose.msra.mxu0 0.0
    %1615 = vmatprep.subr.mxu0 0.0
    %1616 = vmatpush2.xpose.msra.mxu0 0.0
    %1617 = vmatprep.subr.mxu0 0.0
    %1618 = vmatpush2.xpose.msra.mxu0 0.0
    %1619 = vmatprep.subr.mxu0 0.0
    %1620 = vmatpush2.xpose.msra.mxu0 0.0
    %1621 = vmatprep.subr.mxu0 0.0
    %1622 = vmatpush2.xpose.msra.mxu0 0.0
    %1623 = vmatprep.subr.mxu0 0.0
    %1624 = vmatpush2.xpose.msra.mxu0 0.0
    %1625 = vmatprep.subr.mxu0 0.0
    %1626 = vmatpush2.xpose.msra.mxu0 0.0
    %1627 = vmatprep.subr.mxu0 0.0
    %1628 = vmatpush2.xpose.msra.mxu0 0.0
    %1629 = vmatprep.subr.mxu0 0.0
    %1630 = vmatpush2.xpose.msra.mxu0 0.0
    %1631 = vmatprep.subr.mxu0 0.0
    %1632 = vmatpush2.xpose.msra.mxu0 0.0
    %1633 = vmatprep.mubr.f32.mxu0 0.0
    %1634 = vmatmul.mubr.f32.gmra.mxu0 %v1565
    %v1635 = vpop.f32.mrf.mxu0
    %v1636 = vadd.f32 0.0, %v1635
    %v1637 = vpop.f32.mrf.mxu0
    %1638 = vdwg.mxu0
    %v1639 = vsel %vm252, %v1558, -inf
    %1640 = vmax.xlane.f32.xlu0 %v1639
    %v1641 = vpop.xlane.xlu0 %1640
    %v1642 = vsel %vm252, %v1636, -inf
    %1643 = vmax.xlane.f32.xlu0 %v1642
    %v1644 = vpop.xlane.xlu0 %1643
    %v1645 = vsub.f32 %v1558, %v1641
    %v1646 = vsub.f32 %v1636, %v1644
    %v1647 = vmul.f32 %v1645, 1.442695
    %v1648 = vpow.pop %v1647
    %v1649 = vmul.f32 %v1646, 1.442695
    %v1650 = vpow.pop %v1649
    %v1651 = vsel %vm252, %v1648, 0.0
    %1652 = vadd.xlane.f32.xlu0 %v1651
    %v1653 = vpop.xlane.xlu0 %1652
    %v1654 = vsel %vm252, %v1650, 0.0
    %1655 = vadd.xlane.f32.xlu0 %v1654
    %v1656 = vpop.xlane.xlu0 %1655
    %v1657 = vrcp.pop %v1653
    %v1658 = vrcp.pop %v1656
    %v1659 = vmul.f32 %v1648, %v1657
    %v1660 = vmul.f32 %v1650, %v1658
    %1661 = vrot.lane.b32.xlu0 %v237, 40
    %v1662 = vpop.permute.xlu0 %1661
    %v1665 = vsel %vm252, %v1659, 0
    %1667 = vmatprep.subr.mxu0 0.0
    %1668 = vmatpush1.msra.mxu0 0.0
    %1669 = vmatprep.subr.mxu0 0.0
    %1670 = vmatpush1.msra.mxu0 0.0
    %1671 = vmatprep.subr.mxu0 0.0
    %1672 = vmatpush1.msra.mxu0 0.0
    %1673 = vmatprep.subr.mxu0 0.0
    %1674 = vmatpush1.msra.mxu0 0.0
    %1675 = vmatprep.subr.mxu0 0.0
    %1676 = vmatpush1.msra.mxu0 0.0
    %1677 = vmatprep.subr.mxu0 0.0
    %1678 = vmatpush1.msra.mxu0 0.0
    %1679 = vmatprep.subr.mxu0 0.0
    %1680 = vmatpush1.msra.mxu0 0.0
    %1681 = vmatprep.subr.mxu0 0.0
    %1682 = vmatpush1.msra.mxu0 0.0
    %1683 = vmatprep.subr.mxu0 0.0
    %1684 = vmatpush1.msra.mxu0 0.0
    %1685 = vmatprep.subr.mxu0 0.0
    %1686 = vmatpush1.msra.mxu0 0.0
    %1687 = vmatprep.subr.mxu0 0.0
    %1688 = vmatpush1.msra.mxu0 0.0
    %1689 = vmatprep.subr.mxu0 0.0
    %1690 = vmatpush1.msra.mxu0 0.0
    %1691 = vmatprep.subr.mxu0 0.0
    %1692 = vmatpush1.msra.mxu0 0.0
    %1693 = vmatprep.subr.mxu0 0.0
    %1694 = vmatpush1.msra.mxu0 0.0
    %1695 = vmatprep.subr.mxu0 0.0
    %1696 = vmatpush1.msra.mxu0 0.0
    %1697 = vmatprep.subr.mxu0 0.0
    %1698 = vmatpush1.msra.mxu0 %v1662
    %1699 = vmatprep.subr.mxu0 0.0
    %1700 = vmatpush2.msra.mxu0 0.0
    %1701 = vmatprep.subr.mxu0 0.0
    %1702 = vmatpush2.msra.mxu0 0.0
    %1703 = vmatprep.subr.mxu0 0.0
    %1704 = vmatpush2.msra.mxu0 0.0
    %1705 = vmatprep.subr.mxu0 0.0
    %1706 = vmatpush2.msra.mxu0 0.0
    %1707 = vmatprep.subr.mxu0 0.0
    %1708 = vmatpush2.msra.mxu0 0.0
    %1709 = vmatprep.subr.mxu0 0.0
    %1710 = vmatpush2.msra.mxu0 0.0
    %1711 = vmatprep.subr.mxu0 0.0
    %1712 = vmatpush2.msra.mxu0 0.0
    %1713 = vmatprep.subr.mxu0 0.0
    %1714 = vmatpush2.msra.mxu0 0.0
    %1715 = vmatprep.subr.mxu0 0.0
    %1716 = vmatpush2.msra.mxu0 0.0
    %1717 = vmatprep.subr.mxu0 0.0
    %1718 = vmatpush2.msra.mxu0 0.0
    %1719 = vmatprep.subr.mxu0 0.0
    %1720 = vmatpush2.msra.mxu0 0.0
    %1721 = vmatprep.subr.mxu0 0.0
    %1722 = vmatpush2.msra.mxu0 0.0
    %1723 = vmatprep.subr.mxu0 0.0
    %1724 = vmatpush2.msra.mxu0 0.0
    %1725 = vmatprep.subr.mxu0 0.0
    %1726 = vmatpush2.msra.mxu0 0.0
    %1727 = vmatprep.subr.mxu0 0.0
    %1728 = vmatpush2.msra.mxu0 0.0
    %1729 = vmatprep.subr.mxu0 0.0
    %1730 = vmatpush2.msra.mxu0 0.0
    %1731 = vmatprep.mubr.f32.mxu0 0.0
    %1732 = vmatmul.mubr.f32.gmra.mxu0 %v1665
    %v1733 = vpop.f32.mrf.mxu0
    %v1734 = vadd.f32 0.0, %v1733
    %v1735 = vpop.f32.mrf.mxu0
    %1736 = vdwg.mxu0
    %1737 = vrot.lane.b32.xlu0 %v242, 40
    %v1738 = vpop.permute.xlu0 %1737
    %v1741 = vsel %vm252, %v1660, 0
    %1743 = vmatprep.subr.mxu0 0.0
    %1744 = vmatpush1.msra.mxu0 0.0
    %1745 = vmatprep.subr.mxu0 0.0
    %1746 = vmatpush1.msra.mxu0 0.0
    %1747 = vmatprep.subr.mxu0 0.0
    %1748 = vmatpush1.msra.mxu0 0.0
    %1749 = vmatprep.subr.mxu0 0.0
    %1750 = vmatpush1.msra.mxu0 0.0
    %1751 = vmatprep.subr.mxu0 0.0
    %1752 = vmatpush1.msra.mxu0 0.0
    %1753 = vmatprep.subr.mxu0 0.0
    %1754 = vmatpush1.msra.mxu0 0.0
    %1755 = vmatprep.subr.mxu0 0.0
    %1756 = vmatpush1.msra.mxu0 0.0
    %1757 = vmatprep.subr.mxu0 0.0
    %1758 = vmatpush1.msra.mxu0 0.0
    %1759 = vmatprep.subr.mxu0 0.0
    %1760 = vmatpush1.msra.mxu0 0.0
    %1761 = vmatprep.subr.mxu0 0.0
    %1762 = vmatpush1.msra.mxu0 0.0
    %1763 = vmatprep.subr.mxu0 0.0
    %1764 = vmatpush1.msra.mxu0 0.0
    %1765 = vmatprep.subr.mxu0 0.0
    %1766 = vmatpush1.msra.mxu0 0.0
    %1767 = vmatprep.subr.mxu0 0.0
    %1768 = vmatpush1.msra.mxu0 0.0
    %1769 = vmatprep.subr.mxu0 0.0
    %1770 = vmatpush1.msra.mxu0 0.0
    %1771 = vmatprep.subr.mxu0 0.0
    %1772 = vmatpush1.msra.mxu0 0.0
    %1773 = vmatprep.subr.mxu0 0.0
    %1774 = vmatpush1.msra.mxu0 %v1738
    %1775 = vmatprep.subr.mxu0 0.0
    %1776 = vmatpush2.msra.mxu0 0.0
    %1777 = vmatprep.subr.mxu0 0.0
    %1778 = vmatpush2.msra.mxu0 0.0
    %1779 = vmatprep.subr.mxu0 0.0
    %1780 = vmatpush2.msra.mxu0 0.0
    %1781 = vmatprep.subr.mxu0 0.0
    %1782 = vmatpush2.msra.mxu0 0.0
    %1783 = vmatprep.subr.mxu0 0.0
    %1784 = vmatpush2.msra.mxu0 0.0
    %1785 = vmatprep.subr.mxu0 0.0
    %1786 = vmatpush2.msra.mxu0 0.0
    %1787 = vmatprep.subr.mxu0 0.0
    %1788 = vmatpush2.msra.mxu0 0.0
    %1789 = vmatprep.subr.mxu0 0.0
    %1790 = vmatpush2.msra.mxu0 0.0
    %1791 = vmatprep.subr.mxu0 0.0
    %1792 = vmatpush2.msra.mxu0 0.0
    %1793 = vmatprep.subr.mxu0 0.0
    %1794 = vmatpush2.msra.mxu0 0.0
    %1795 = vmatprep.subr.mxu0 0.0
    %1796 = vmatpush2.msra.mxu0 0.0
    %1797 = vmatprep.subr.mxu0 0.0
    %1798 = vmatpush2.msra.mxu0 0.0
    %1799 = vmatprep.subr.mxu0 0.0
    %1800 = vmatpush2.msra.mxu0 0.0
    %1801 = vmatprep.subr.mxu0 0.0
    %1802 = vmatpush2.msra.mxu0 0.0
    %1803 = vmatprep.subr.mxu0 0.0
    %1804 = vmatpush2.msra.mxu0 0.0
    %1805 = vmatprep.subr.mxu0 0.0
    %1806 = vmatpush2.msra.mxu0 0.0
    %1807 = vmatprep.mubr.f32.mxu0 0.0
    %1808 = vmatmul.mubr.f32.gmra.mxu0 %v1741
    %v1809 = vpop.f32.mrf.mxu0
    %v1810 = vadd.f32 0.0, %v1809
    %v1811 = vpop.f32.mrf.mxu0
    %1812 = vdwg.mxu0
    %v1814 = vsel %vm252, %v1734, 0
    %v1817 = vsel %vm252, %v1810, 0
    %1819 = vmatprep.subr.mxu0 0.0
    %1820 = vmatpush1.msra.mxu0 0.0
    %1821 = vmatprep.subr.mxu0 0.0
    %1822 = vmatpush1.msra.mxu0 0.0
    %1823 = vmatprep.subr.mxu0 0.0
    %1824 = vmatpush1.msra.mxu0 0.0
    %1825 = vmatprep.subr.mxu0 0.0
    %1826 = vmatpush1.msra.mxu0 0.0
    %1827 = vmatprep.subr.mxu0 0.0
    %1828 = vmatpush1.msra.mxu0 0.0
    %1829 = vmatprep.subr.mxu0 0.0
    %1830 = vmatpush1.msra.mxu0 0.0
    %1831 = vmatprep.subr.mxu0 0.0
    %1832 = vmatpush1.msra.mxu0 0.0
    %1833 = vmatprep.subr.mxu0 0.0
    %1834 = vmatpush1.msra.mxu0 0.0
    %1835 = vmatprep.subr.mxu0 0.0
    %1836 = vmatpush1.msra.mxu0 0.0
    %1837 = vmatprep.subr.mxu0 0.0
    %1838 = vmatpush1.msra.mxu0 0.0
    %1839 = vmatprep.subr.mxu0 0.0
    %1840 = vmatpush1.msra.mxu0 0.0
    %1841 = vmatprep.subr.mxu0 0.0
    %1842 = vmatpush1.msra.mxu0 0.0
    %1843 = vmatprep.subr.mxu0 0.0
    %1844 = vmatpush1.msra.mxu0 0.0
    %1845 = vmatprep.subr.mxu0 0.0
    %1846 = vmatpush1.msra.mxu0 0.0
    %1847 = vmatprep.subr.mxu0 0.0
    %1848 = vmatpush1.msra.mxu0 0.0
    %1849 = vmatprep.subr.mxu0 0.0
    %1850 = vmatpush1.msra.mxu0 %v248
    %1851 = vmatprep.subr.mxu0 0.0
    %1852 = vmatpush2.msra.mxu0 0.0
    %1853 = vmatprep.subr.mxu0 0.0
    %1854 = vmatpush2.msra.mxu0 0.0
    %1855 = vmatprep.subr.mxu0 0.0
    %1856 = vmatpush2.msra.mxu0 0.0
    %1857 = vmatprep.subr.mxu0 0.0
    %1858 = vmatpush2.msra.mxu0 0.0
    %1859 = vmatprep.subr.mxu0 0.0
    %1860 = vmatpush2.msra.mxu0 0.0
    %1861 = vmatprep.subr.mxu0 0.0
    %1862 = vmatpush2.msra.mxu0 0.0
    %1863 = vmatprep.subr.mxu0 0.0
    %1864 = vmatpush2.msra.mxu0 0.0
    %1865 = vmatprep.subr.mxu0 0.0
    %1866 = vmatpush2.msra.mxu0 0.0
    %1867 = vmatprep.subr.mxu0 0.0
    %1868 = vmatpush2.msra.mxu0 0.0
    %1869 = vmatprep.subr.mxu0 0.0
    %1870 = vmatpush2.msra.mxu0 0.0
    %1871 = vmatprep.subr.mxu0 0.0
    %1872 = vmatpush2.msra.mxu0 0.0
    %1873 = vmatprep.subr.mxu0 0.0
    %1874 = vmatpush2.msra.mxu0 0.0
    %1875 = vmatprep.subr.mxu0 0.0
    %1876 = vmatpush2.msra.mxu0 0.0
    %1877 = vmatprep.subr.mxu0 0.0
    %1878 = vmatpush2.msra.mxu0 0.0
    %1879 = vmatprep.subr.mxu0 0.0
    %1880 = vmatpush2.msra.mxu0 0.0
    %1881 = vmatprep.subr.mxu0 0.0
    %1882 = vmatpush2.msra.mxu0 0.0
    %1883 = vmatprep.mubr.f32.mxu0 0.0
    %1884 = vmatmul.mubr.f32.gmra.mxu0 %v1814
    %v1885 = vpop.f32.mrf.mxu0
    %v1886 = vadd.f32 0.0, %v1885
    %v1887 = vpop.f32.mrf.mxu0
    %1888 = vmatprep.mubr.f32.mxu0 0.0
    %1889 = vmatmul.mubr.f32.gmra.mxu0 %v1817
    %v1890 = vpop.f32.mrf.mxu0
    %v1891 = vadd.f32 0.0, %v1890
    %v1892 = vpop.f32.mrf.mxu0
    %1893 = vdwg.mxu0
    %v1894 = vadd.f32 %v1481, %v1886
    %v1895 = vadd.f32 %v1482, %v1891
    %v1896 = vadd.f32 %v119, %v1894
    %v1897 = vadd.f32 %v120, %v1895
    %v1898 = vlaneseq
    %v1899 = vshrl.u32 %v1898, 7
    %v1900 = vsub.s32 0, %v1899
    %v1901 = vrot.slane %v118, %v1900
    %v1902 = vadd.f32 %v1896, %v1901
    %v1903 = vadd.f32 %v1897, %v1901
    %v1904 = vld [vmem:[#allocation5] sm:$0xff]
    %v1905 = vld [vmem:[#allocation5 + $0x8] sm:$0xff]
    %v1906 = vsel %vm121, %v1904, 0.0
    %1907 = vadd.xlane.f32.xlu0 %v1906
    %v1908 = vpop.xlane.xlu0 %1907
    %v1909 = vsel %vm121, %v1905, 0.0
    %1910 = vadd.xlane.f32.xlu0 %v1909
    %v1911 = vpop.xlane.xlu0 %1910
    %v1912 = vmul.f32 %v1908, 0.03125
    %v1913 = vmul.f32 %v1911, 0.03125
    %v1914 = vsub.f32 %v1904, %v1912
    %v1915 = vsub.f32 %v1905, %v1913
    %v1916 = vmul.f32 %v1914, %v1914
    %v1917 = vmul.f32 %v1915, %v1915
    %v1918 = vsel %vm121, %v1916, 0.0
    %1919 = vadd.xlane.f32.xlu0 %v1918
    %v1920 = vpop.xlane.xlu0 %1919
    %v1921 = vsel %vm121, %v1917, 0.0
    %1922 = vadd.xlane.f32.xlu0 %v1921
    %v1923 = vpop.xlane.xlu0 %1922
    %v1924 = vmul.f32 %v1920, 0.03125
    %v1925 = vmul.f32 %v1923, 0.03125
    %v1926 = vadd.f32 %v1924, 1e-05
    %v1927 = vadd.f32 %v1925, 1e-05
    %v1928 = vrsqrt.pop %v1926
    %v1929 = vrsqrt.pop %v1927
    %v1930 = vmul.f32 %v1914, %v1928
    %v1931 = vmul.f32 %v1915, %v1929
    %v1932 = vlaneseq
    %v1933 = vshrl.u32 %v1932, 7
    %v1934 = vsub.s32 1, %v1933
    %v1935 = vrot.slane %v116, %v1934
    %v1936 = vmul.f32 %v1930, %v1935
    %v1937 = vmul.f32 %v1931, %v1935
    %v1938 = vlaneseq
    %v1939 = vshrl.u32 %v1938, 7
    %v1940 = vsub.s32 1, %v1939
    %v1941 = vrot.slane %v117, %v1940
    %v1942 = vadd.f32 %v1936, %v1941
    %v1943 = vadd.f32 %v1937, %v1941
    %s1944 = scalar_lea.vmem %s5, 32
    %v1945 = vld [vmem:[%s1944] sm:$0xff]
    %v1946 = vld [vmem:[%s1944 + $0x8] sm:$0xff]
    %v1947 = vld [vmem:[%s1944 + $0x10] sm:$0xff]
    %v1948 = vld [vmem:[%s1944 + $0x18] sm:$0xff]
    %v1950 = vsel %vm121, %v1942, 0
    %v1953 = vsel %vm121, %v1943, 0
    %1955 = vmatprep.subr.mxu0 0.0
    %1956 = vmatpush1.msra.mxu0 0.0
    %1957 = vmatprep.subr.mxu0 0.0
    %1958 = vmatpush1.msra.mxu0 0.0
    %1959 = vmatprep.subr.mxu0 0.0
    %1960 = vmatpush1.msra.mxu0 0.0
    %1961 = vmatprep.subr.mxu0 0.0
    %1962 = vmatpush1.msra.mxu0 0.0
    %1963 = vmatprep.subr.mxu0 0.0
    %1964 = vmatpush1.msra.mxu0 0.0
    %1965 = vmatprep.subr.mxu0 0.0
    %1966 = vmatpush1.msra.mxu0 0.0
    %1967 = vmatprep.subr.mxu0 0.0
    %1968 = vmatpush1.msra.mxu0 0.0
    %1969 = vmatprep.subr.mxu0 0.0
    %1970 = vmatpush1.msra.mxu0 0.0
    %1971 = vmatprep.subr.mxu0 0.0
    %1972 = vmatpush1.msra.mxu0 0.0
    %1973 = vmatprep.subr.mxu0 0.0
    %1974 = vmatpush1.msra.mxu0 0.0
    %1975 = vmatprep.subr.mxu0 0.0
    %1976 = vmatpush1.msra.mxu0 0.0
    %1977 = vmatprep.subr.mxu0 0.0
    %1978 = vmatpush1.msra.mxu0 0.0
    %1979 = vmatprep.subr.mxu0 0.0
    %1980 = vmatpush1.msra.mxu0 %v1948
    %1981 = vmatprep.subr.mxu0 0.0
    %1982 = vmatpush1.msra.mxu0 %v1947
    %1983 = vmatprep.subr.mxu0 0.0
    %1984 = vmatpush1.msra.mxu0 %v1946
    %1985 = vmatprep.subr.mxu0 0.0
    %1986 = vmatpush1.msra.mxu0 %v1945
    %1987 = vmatprep.subr.mxu0 0.0
    %1988 = vmatpush2.msra.mxu0 0.0
    %1989 = vmatprep.subr.mxu0 0.0
    %1990 = vmatpush2.msra.mxu0 0.0
    %1991 = vmatprep.subr.mxu0 0.0
    %1992 = vmatpush2.msra.mxu0 0.0
    %1993 = vmatprep.subr.mxu0 0.0
    %1994 = vmatpush2.msra.mxu0 0.0
    %1995 = vmatprep.subr.mxu0 0.0
    %1996 = vmatpush2.msra.mxu0 0.0
    %1997 = vmatprep.subr.mxu0 0.0
    %1998 = vmatpush2.msra.mxu0 0.0
    %1999 = vmatprep.subr.mxu0 0.0
    %2000 = vmatpush2.msra.mxu0 0.0
    %2001 = vmatprep.subr.mxu0 0.0
    %2002 = vmatpush2.msra.mxu0 0.0
    %2003 = vmatprep.subr.mxu0 0.0
    %2004 = vmatpush2.msra.mxu0 0.0
    %2005 = vmatprep.subr.mxu0 0.0
    %2006 = vmatpush2.msra.mxu0 0.0
    %2007 = vmatprep.subr.mxu0 0.0
    %2008 = vmatpush2.msra.mxu0 0.0
    %2009 = vmatprep.subr.mxu0 0.0
    %2010 = vmatpush2.msra.mxu0 0.0
    %2011 = vmatprep.subr.mxu0 0.0
    %2012 = vmatpush2.msra.mxu0 0.0
    %2013 = vmatprep.subr.mxu0 0.0
    %2014 = vmatpush2.msra.mxu0 0.0
    %2015 = vmatprep.subr.mxu0 0.0
    %2016 = vmatpush2.msra.mxu0 0.0
    %2017 = vmatprep.subr.mxu0 0.0
    %2018 = vmatpush2.msra.mxu0 0.0
    %2019 = vmatprep.mubr.f32.mxu0 0.0
    %2020 = vmatmul.mubr.f32.gmra.mxu0 %v1950
    %v2021 = vpop.f32.mrf.mxu0
    %v2022 = vadd.f32 0.0, %v2021
    %v2023 = vpop.f32.mrf.mxu0
    %2024 = vmatprep.mubr.f32.mxu0 0.0
    %2025 = vmatmul.mubr.f32.gmra.mxu0 %v1953
    %v2026 = vpop.f32.mrf.mxu0
    %v2027 = vadd.f32 0.0, %v2026
    %v2028 = vpop.f32.mrf.mxu0
    %2029 = vdwg.mxu0
    %s2030 = scalar_lea.vmem %s6, 32
    %v2031 = vld [vmem:[%s2030] sm:$0xff]
    %v2032 = vld [vmem:[%s2030 + $0x8] sm:$0xff]
    %v2033 = vld [vmem:[%s2030 + $0x10] sm:$0xff]
    %v2034 = vld [vmem:[%s2030 + $0x18] sm:$0xff]
    %2036 = vrot.lane.b32.xlu0 %v2022, 96
    %v2037 = vpop.permute.xlu0 %2036
    %v2038 = vsel %vm252, %v2022, 0
    %v2040 = vsel %vm252, %v2037, 0
    %2042 = vmatprep.subr.mxu0 0.0
    %2043 = vmatpush1.xpose.msra.mxu0 0.0
    %2044 = vmatprep.subr.mxu0 0.0
    %2045 = vmatpush1.xpose.msra.mxu0 0.0
    %2046 = vmatprep.subr.mxu0 0.0
    %2047 = vmatpush1.xpose.msra.mxu0 0.0
    %2048 = vmatprep.subr.mxu0 0.0
    %2049 = vmatpush1.xpose.msra.mxu0 0.0
    %2050 = vmatprep.subr.mxu0 0.0
    %2051 = vmatpush1.xpose.msra.mxu0 0.0
    %2052 = vmatprep.subr.mxu0 0.0
    %2053 = vmatpush1.xpose.msra.mxu0 0.0
    %2054 = vmatprep.subr.mxu0 0.0
    %2055 = vmatpush1.xpose.msra.mxu0 0.0
    %2056 = vmatprep.subr.mxu0 0.0
    %2057 = vmatpush1.xpose.msra.mxu0 0.0
    %2058 = vmatprep.subr.mxu0 0.0
    %2059 = vmatpush1.xpose.msra.mxu0 0.0
    %2060 = vmatprep.subr.mxu0 0.0
    %2061 = vmatpush1.xpose.msra.mxu0 0.0
    %2062 = vmatprep.subr.mxu0 0.0
    %2063 = vmatpush1.xpose.msra.mxu0 0.0
    %2064 = vmatprep.subr.mxu0 0.0
    %2065 = vmatpush1.xpose.msra.mxu0 0.0
    %2066 = vmatprep.subr.mxu0 0.0
    %2067 = vmatpush1.xpose.msra.mxu0 0.0
    %2068 = vmatprep.subr.mxu0 0.0
    %2069 = vmatpush1.xpose.msra.mxu0 0.0
    %2070 = vmatprep.subr.mxu0 0.0
    %2071 = vmatpush1.xpose.msra.mxu0 0.0
    %2072 = vmatprep.subr.mxu0 0.0
    %2073 = vmatpush1.xpose.msra.mxu0 %v2040
    %2074 = vmatprep.subr.mxu0 0.0
    %2075 = vmatpush2.xpose.msra.mxu0 0.0
    %2076 = vmatprep.subr.mxu0 0.0
    %2077 = vmatpush2.xpose.msra.mxu0 0.0
    %2078 = vmatprep.subr.mxu0 0.0
    %2079 = vmatpush2.xpose.msra.mxu0 0.0
    %2080 = vmatprep.subr.mxu0 0.0
    %2081 = vmatpush2.xpose.msra.mxu0 0.0
    %2082 = vmatprep.subr.mxu0 0.0
    %2083 = vmatpush2.xpose.msra.mxu0 0.0
    %2084 = vmatprep.subr.mxu0 0.0
    %2085 = vmatpush2.xpose.msra.mxu0 0.0
    %2086 = vmatprep.subr.mxu0 0.0
    %2087 = vmatpush2.xpose.msra.mxu0 0.0
    %2088 = vmatprep.subr.mxu0 0.0
    %2089 = vmatpush2.xpose.msra.mxu0 0.0
    %2090 = vmatprep.subr.mxu0 0.0
    %2091 = vmatpush2.xpose.msra.mxu0 0.0
    %2092 = vmatprep.subr.mxu0 0.0
    %2093 = vmatpush2.xpose.msra.mxu0 0.0
    %2094 = vmatprep.subr.mxu0 0.0
    %2095 = vmatpush2.xpose.msra.mxu0 0.0
    %2096 = vmatprep.subr.mxu0 0.0
    %2097 = vmatpush2.xpose.msra.mxu0 0.0
    %2098 = vmatprep.subr.mxu0 0.0
    %2099 = vmatpush2.xpose.msra.mxu0 0.0
    %2100 = vmatprep.subr.mxu0 0.0
    %2101 = vmatpush2.xpose.msra.mxu0 0.0
    %2102 = vmatprep.subr.mxu0 0.0
    %2103 = vmatpush2.xpose.msra.mxu0 0.0
    %2104 = vmatprep.subr.mxu0 0.0
    %2105 = vmatpush2.xpose.msra.mxu0 0.0
    %2106 = vmatprep.mubr.f32.mxu0 0.0
    %2107 = vmatmul.mubr.f32.gmra.mxu0 %v2038
    %v2108 = vpop.f32.mrf.mxu0
    %v2109 = vadd.f32 0.0, %v2108
    %v2110 = vpop.f32.mrf.mxu0
    %2111 = vdwg.mxu0
    %2113 = vrot.lane.b32.xlu0 %v2027, 96
    %v2114 = vpop.permute.xlu0 %2113
    %v2115 = vsel %vm252, %v2027, 0
    %v2117 = vsel %vm252, %v2114, 0
    %2119 = vmatprep.subr.mxu0 0.0
    %2120 = vmatpush1.xpose.msra.mxu0 0.0
    %2121 = vmatprep.subr.mxu0 0.0
    %2122 = vmatpush1.xpose.msra.mxu0 0.0
    %2123 = vmatprep.subr.mxu0 0.0
    %2124 = vmatpush1.xpose.msra.mxu0 0.0
    %2125 = vmatprep.subr.mxu0 0.0
    %2126 = vmatpush1.xpose.msra.mxu0 0.0
    %2127 = vmatprep.subr.mxu0 0.0
    %2128 = vmatpush1.xpose.msra.mxu0 0.0
    %2129 = vmatprep.subr.mxu0 0.0
    %2130 = vmatpush1.xpose.msra.mxu0 0.0
    %2131 = vmatprep.subr.mxu0 0.0
    %2132 = vmatpush1.xpose.msra.mxu0 0.0
    %2133 = vmatprep.subr.mxu0 0.0
    %2134 = vmatpush1.xpose.msra.mxu0 0.0
    %2135 = vmatprep.subr.mxu0 0.0
    %2136 = vmatpush1.xpose.msra.mxu0 0.0
    %2137 = vmatprep.subr.mxu0 0.0
    %2138 = vmatpush1.xpose.msra.mxu0 0.0
    %2139 = vmatprep.subr.mxu0 0.0
    %2140 = vmatpush1.xpose.msra.mxu0 0.0
    %2141 = vmatprep.subr.mxu0 0.0
    %2142 = vmatpush1.xpose.msra.mxu0 0.0
    %2143 = vmatprep.subr.mxu0 0.0
    %2144 = vmatpush1.xpose.msra.mxu0 0.0
    %2145 = vmatprep.subr.mxu0 0.0
    %2146 = vmatpush1.xpose.msra.mxu0 0.0
    %2147 = vmatprep.subr.mxu0 0.0
    %2148 = vmatpush1.xpose.msra.mxu0 0.0
    %2149 = vmatprep.subr.mxu0 0.0
    %2150 = vmatpush1.xpose.msra.mxu0 %v2117
    %2151 = vmatprep.subr.mxu0 0.0
    %2152 = vmatpush2.xpose.msra.mxu0 0.0
    %2153 = vmatprep.subr.mxu0 0.0
    %2154 = vmatpush2.xpose.msra.mxu0 0.0
    %2155 = vmatprep.subr.mxu0 0.0
    %2156 = vmatpush2.xpose.msra.mxu0 0.0
    %2157 = vmatprep.subr.mxu0 0.0
    %2158 = vmatpush2.xpose.msra.mxu0 0.0
    %2159 = vmatprep.subr.mxu0 0.0
    %2160 = vmatpush2.xpose.msra.mxu0 0.0
    %2161 = vmatprep.subr.mxu0 0.0
    %2162 = vmatpush2.xpose.msra.mxu0 0.0
    %2163 = vmatprep.subr.mxu0 0.0
    %2164 = vmatpush2.xpose.msra.mxu0 0.0
    %2165 = vmatprep.subr.mxu0 0.0
    %2166 = vmatpush2.xpose.msra.mxu0 0.0
    %2167 = vmatprep.subr.mxu0 0.0
    %2168 = vmatpush2.xpose.msra.mxu0 0.0
    %2169 = vmatprep.subr.mxu0 0.0
    %2170 = vmatpush2.xpose.msra.mxu0 0.0
    %2171 = vmatprep.subr.mxu0 0.0
    %2172 = vmatpush2.xpose.msra.mxu0 0.0
    %2173 = vmatprep.subr.mxu0 0.0
    %2174 = vmatpush2.xpose.msra.mxu0 0.0
    %2175 = vmatprep.subr.mxu0 0.0
    %2176 = vmatpush2.xpose.msra.mxu0 0.0
    %2177 = vmatprep.subr.mxu0 0.0
    %2178 = vmatpush2.xpose.msra.mxu0 0.0
    %2179 = vmatprep.subr.mxu0 0.0
    %2180 = vmatpush2.xpose.msra.mxu0 0.0
    %2181 = vmatprep.subr.mxu0 0.0
    %2182 = vmatpush2.xpose.msra.mxu0 0.0
    %2183 = vmatprep.mubr.f32.mxu0 0.0
    %2184 = vmatmul.mubr.f32.gmra.mxu0 %v2115
    %v2185 = vpop.f32.mrf.mxu0
    %v2186 = vadd.f32 0.0, %v2185
    %v2187 = vpop.f32.mrf.mxu0
    %2188 = vdwg.mxu0
    %v2189 = vsel %vm252, %v2109, -inf
    %2190 = vmax.xlane.f32.xlu0 %v2189
    %v2191 = vpop.xlane.xlu0 %2190
    %v2192 = vsel %vm252, %v2186, -inf
    %2193 = vmax.xlane.f32.xlu0 %v2192
    %v2194 = vpop.xlane.xlu0 %2193
    %v2195 = vsub.f32 %v2109, %v2191
    %v2196 = vsub.f32 %v2186, %v2194
    %v2197 = vmul.f32 %v2195, 1.442695
    %v2198 = vpow.pop %v2197
    %v2199 = vmul.f32 %v2196, 1.442695
    %v2200 = vpow.pop %v2199
    %v2201 = vsel %vm252, %v2198, 0.0
    %2202 = vadd.xlane.f32.xlu0 %v2201
    %v2203 = vpop.xlane.xlu0 %2202
    %v2204 = vsel %vm252, %v2200, 0.0
    %2205 = vadd.xlane.f32.xlu0 %v2204
    %v2206 = vpop.xlane.xlu0 %2205
    %v2207 = vrcp.pop %v2203
    %v2208 = vrcp.pop %v2206
    %v2209 = vmul.f32 %v2198, %v2207
    %v2210 = vmul.f32 %v2200, %v2208
    %2211 = vrot.lane.b32.xlu0 %v2022, 64
    %v2212 = vpop.permute.xlu0 %2211
    %v2215 = vsel %vm252, %v2209, 0
    %2217 = vmatprep.subr.mxu0 0.0
    %2218 = vmatpush1.msra.mxu0 0.0
    %2219 = vmatprep.subr.mxu0 0.0
    %2220 = vmatpush1.msra.mxu0 0.0
    %2221 = vmatprep.subr.mxu0 0.0
    %2222 = vmatpush1.msra.mxu0 0.0
    %2223 = vmatprep.subr.mxu0 0.0
    %2224 = vmatpush1.msra.mxu0 0.0
    %2225 = vmatprep.subr.mxu0 0.0
    %2226 = vmatpush1.msra.mxu0 0.0
    %2227 = vmatprep.subr.mxu0 0.0
    %2228 = vmatpush1.msra.mxu0 0.0
    %2229 = vmatprep.subr.mxu0 0.0
    %2230 = vmatpush1.msra.mxu0 0.0
    %2231 = vmatprep.subr.mxu0 0.0
    %2232 = vmatpush1.msra.mxu0 0.0
    %2233 = vmatprep.subr.mxu0 0.0
    %2234 = vmatpush1.msra.mxu0 0.0
    %2235 = vmatprep.subr.mxu0 0.0
    %2236 = vmatpush1.msra.mxu0 0.0
    %2237 = vmatprep.subr.mxu0 0.0
    %2238 = vmatpush1.msra.mxu0 0.0
    %2239 = vmatprep.subr.mxu0 0.0
    %2240 = vmatpush1.msra.mxu0 0.0
    %2241 = vmatprep.subr.mxu0 0.0
    %2242 = vmatpush1.msra.mxu0 0.0
    %2243 = vmatprep.subr.mxu0 0.0
    %2244 = vmatpush1.msra.mxu0 0.0
    %2245 = vmatprep.subr.mxu0 0.0
    %2246 = vmatpush1.msra.mxu0 0.0
    %2247 = vmatprep.subr.mxu0 0.0
    %2248 = vmatpush1.msra.mxu0 %v2212
    %2249 = vmatprep.subr.mxu0 0.0
    %2250 = vmatpush2.msra.mxu0 0.0
    %2251 = vmatprep.subr.mxu0 0.0
    %2252 = vmatpush2.msra.mxu0 0.0
    %2253 = vmatprep.subr.mxu0 0.0
    %2254 = vmatpush2.msra.mxu0 0.0
    %2255 = vmatprep.subr.mxu0 0.0
    %2256 = vmatpush2.msra.mxu0 0.0
    %2257 = vmatprep.subr.mxu0 0.0
    %2258 = vmatpush2.msra.mxu0 0.0
    %2259 = vmatprep.subr.mxu0 0.0
    %2260 = vmatpush2.msra.mxu0 0.0
    %2261 = vmatprep.subr.mxu0 0.0
    %2262 = vmatpush2.msra.mxu0 0.0
    %2263 = vmatprep.subr.mxu0 0.0
    %2264 = vmatpush2.msra.mxu0 0.0
    %2265 = vmatprep.subr.mxu0 0.0
    %2266 = vmatpush2.msra.mxu0 0.0
    %2267 = vmatprep.subr.mxu0 0.0
    %2268 = vmatpush2.msra.mxu0 0.0
    %2269 = vmatprep.subr.mxu0 0.0
    %2270 = vmatpush2.msra.mxu0 0.0
    %2271 = vmatprep.subr.mxu0 0.0
    %2272 = vmatpush2.msra.mxu0 0.0
    %2273 = vmatprep.subr.mxu0 0.0
    %2274 = vmatpush2.msra.mxu0 0.0
    %2275 = vmatprep.subr.mxu0 0.0
    %2276 = vmatpush2.msra.mxu0 0.0
    %2277 = vmatprep.subr.mxu0 0.0
    %2278 = vmatpush2.msra.mxu0 0.0
    %2279 = vmatprep.subr.mxu0 0.0
    %2280 = vmatpush2.msra.mxu0 0.0
    %2281 = vmatprep.mubr.f32.mxu0 0.0
    %2282 = vmatmul.mubr.f32.gmra.mxu0 %v2215
    %v2283 = vpop.f32.mrf.mxu0
    %v2284 = vadd.f32 0.0, %v2283
    %v2285 = vpop.f32.mrf.mxu0
    %2286 = vdwg.mxu0
    %2287 = vrot.lane.b32.xlu0 %v2027, 64
    %v2288 = vpop.permute.xlu0 %2287
    %v2291 = vsel %vm252, %v2210, 0
    %2293 = vmatprep.subr.mxu0 0.0
    %2294 = vmatpush1.msra.mxu0 0.0
    %2295 = vmatprep.subr.mxu0 0.0
    %2296 = vmatpush1.msra.mxu0 0.0
    %2297 = vmatprep.subr.mxu0 0.0
    %2298 = vmatpush1.msra.mxu0 0.0
    %2299 = vmatprep.subr.mxu0 0.0
    %2300 = vmatpush1.msra.mxu0 0.0
    %2301 = vmatprep.subr.mxu0 0.0
    %2302 = vmatpush1.msra.mxu0 0.0
    %2303 = vmatprep.subr.mxu0 0.0
    %2304 = vmatpush1.msra.mxu0 0.0
    %2305 = vmatprep.subr.mxu0 0.0
    %2306 = vmatpush1.msra.mxu0 0.0
    %2307 = vmatprep.subr.mxu0 0.0
    %2308 = vmatpush1.msra.mxu0 0.0
    %2309 = vmatprep.subr.mxu0 0.0
    %2310 = vmatpush1.msra.mxu0 0.0
    %2311 = vmatprep.subr.mxu0 0.0
    %2312 = vmatpush1.msra.mxu0 0.0
    %2313 = vmatprep.subr.mxu0 0.0
    %2314 = vmatpush1.msra.mxu0 0.0
    %2315 = vmatprep.subr.mxu0 0.0
    %2316 = vmatpush1.msra.mxu0 0.0
    %2317 = vmatprep.subr.mxu0 0.0
    %2318 = vmatpush1.msra.mxu0 0.0
    %2319 = vmatprep.subr.mxu0 0.0
    %2320 = vmatpush1.msra.mxu0 0.0
    %2321 = vmatprep.subr.mxu0 0.0
    %2322 = vmatpush1.msra.mxu0 0.0
    %2323 = vmatprep.subr.mxu0 0.0
    %2324 = vmatpush1.msra.mxu0 %v2288
    %2325 = vmatprep.subr.mxu0 0.0
    %2326 = vmatpush2.msra.mxu0 0.0
    %2327 = vmatprep.subr.mxu0 0.0
    %2328 = vmatpush2.msra.mxu0 0.0
    %2329 = vmatprep.subr.mxu0 0.0
    %2330 = vmatpush2.msra.mxu0 0.0
    %2331 = vmatprep.subr.mxu0 0.0
    %2332 = vmatpush2.msra.mxu0 0.0
    %2333 = vmatprep.subr.mxu0 0.0
    %2334 = vmatpush2.msra.mxu0 0.0
    %2335 = vmatprep.subr.mxu0 0.0
    %2336 = vmatpush2.msra.mxu0 0.0
    %2337 = vmatprep.subr.mxu0 0.0
    %2338 = vmatpush2.msra.mxu0 0.0
    %2339 = vmatprep.subr.mxu0 0.0
    %2340 = vmatpush2.msra.mxu0 0.0
    %2341 = vmatprep.subr.mxu0 0.0
    %2342 = vmatpush2.msra.mxu0 0.0
    %2343 = vmatprep.subr.mxu0 0.0
    %2344 = vmatpush2.msra.mxu0 0.0
    %2345 = vmatprep.subr.mxu0 0.0
    %2346 = vmatpush2.msra.mxu0 0.0
    %2347 = vmatprep.subr.mxu0 0.0
    %2348 = vmatpush2.msra.mxu0 0.0
    %2349 = vmatprep.subr.mxu0 0.0
    %2350 = vmatpush2.msra.mxu0 0.0
    %2351 = vmatprep.subr.mxu0 0.0
    %2352 = vmatpush2.msra.mxu0 0.0
    %2353 = vmatprep.subr.mxu0 0.0
    %2354 = vmatpush2.msra.mxu0 0.0
    %2355 = vmatprep.subr.mxu0 0.0
    %2356 = vmatpush2.msra.mxu0 0.0
    %2357 = vmatprep.mubr.f32.mxu0 0.0
    %2358 = vmatmul.mubr.f32.gmra.mxu0 %v2291
    %v2359 = vpop.f32.mrf.mxu0
    %v2360 = vadd.f32 0.0, %v2359
    %v2361 = vpop.f32.mrf.mxu0
    %2362 = vdwg.mxu0
    %2363 = vrot.lane.b32.xlu0 %v2022, 120
    %v2364 = vpop.permute.xlu0 %2363
    %2365 = vrot.lane.b32.xlu0 %v2022, 88
    %v2366 = vpop.permute.xlu0 %2365
    %v2367 = vsel %vm252, %v2364, 0
    %v2369 = vsel %vm252, %v2366, 0
    %2371 = vmatprep.subr.mxu0 0.0
    %2372 = vmatpush1.xpose.msra.mxu0 0.0
    %2373 = vmatprep.subr.mxu0 0.0
    %2374 = vmatpush1.xpose.msra.mxu0 0.0
    %2375 = vmatprep.subr.mxu0 0.0
    %2376 = vmatpush1.xpose.msra.mxu0 0.0
    %2377 = vmatprep.subr.mxu0 0.0
    %2378 = vmatpush1.xpose.msra.mxu0 0.0
    %2379 = vmatprep.subr.mxu0 0.0
    %2380 = vmatpush1.xpose.msra.mxu0 0.0
    %2381 = vmatprep.subr.mxu0 0.0
    %2382 = vmatpush1.xpose.msra.mxu0 0.0
    %2383 = vmatprep.subr.mxu0 0.0
    %2384 = vmatpush1.xpose.msra.mxu0 0.0
    %2385 = vmatprep.subr.mxu0 0.0
    %2386 = vmatpush1.xpose.msra.mxu0 0.0
    %2387 = vmatprep.subr.mxu0 0.0
    %2388 = vmatpush1.xpose.msra.mxu0 0.0
    %2389 = vmatprep.subr.mxu0 0.0
    %2390 = vmatpush1.xpose.msra.mxu0 0.0
    %2391 = vmatprep.subr.mxu0 0.0
    %2392 = vmatpush1.xpose.msra.mxu0 0.0
    %2393 = vmatprep.subr.mxu0 0.0
    %2394 = vmatpush1.xpose.msra.mxu0 0.0
    %2395 = vmatprep.subr.mxu0 0.0
    %2396 = vmatpush1.xpose.msra.mxu0 0.0
    %2397 = vmatprep.subr.mxu0 0.0
    %2398 = vmatpush1.xpose.msra.mxu0 0.0
    %2399 = vmatprep.subr.mxu0 0.0
    %2400 = vmatpush1.xpose.msra.mxu0 0.0
    %2401 = vmatprep.subr.mxu0 0.0
    %2402 = vmatpush1.xpose.msra.mxu0 %v2369
    %2403 = vmatprep.subr.mxu0 0.0
    %2404 = vmatpush2.xpose.msra.mxu0 0.0
    %2405 = vmatprep.subr.mxu0 0.0
    %2406 = vmatpush2.xpose.msra.mxu0 0.0
    %2407 = vmatprep.subr.mxu0 0.0
    %2408 = vmatpush2.xpose.msra.mxu0 0.0
    %2409 = vmatprep.subr.mxu0 0.0
    %2410 = vmatpush2.xpose.msra.mxu0 0.0
    %2411 = vmatprep.subr.mxu0 0.0
    %2412 = vmatpush2.xpose.msra.mxu0 0.0
    %2413 = vmatprep.subr.mxu0 0.0
    %2414 = vmatpush2.xpose.msra.mxu0 0.0
    %2415 = vmatprep.subr.mxu0 0.0
    %2416 = vmatpush2.xpose.msra.mxu0 0.0
    %2417 = vmatprep.subr.mxu0 0.0
    %2418 = vmatpush2.xpose.msra.mxu0 0.0
    %2419 = vmatprep.subr.mxu0 0.0
    %2420 = vmatpush2.xpose.msra.mxu0 0.0
    %2421 = vmatprep.subr.mxu0 0.0
    %2422 = vmatpush2.xpose.msra.mxu0 0.0
    %2423 = vmatprep.subr.mxu0 0.0
    %2424 = vmatpush2.xpose.msra.mxu0 0.0
    %2425 = vmatprep.subr.mxu0 0.0
    %2426 = vmatpush2.xpose.msra.mxu0 0.0
    %2427 = vmatprep.subr.mxu0 0.0
    %2428 = vmatpush2.xpose.msra.mxu0 0.0
    %2429 = vmatprep.subr.mxu0 0.0
    %2430 = vmatpush2.xpose.msra.mxu0 0.0
    %2431 = vmatprep.subr.mxu0 0.0
    %2432 = vmatpush2.xpose.msra.mxu0 0.0
    %2433 = vmatprep.subr.mxu0 0.0
    %2434 = vmatpush2.xpose.msra.mxu0 0.0
    %2435 = vmatprep.mubr.f32.mxu0 0.0
    %2436 = vmatmul.mubr.f32.gmra.mxu0 %v2367
    %v2437 = vpop.f32.mrf.mxu0
    %v2438 = vadd.f32 0.0, %v2437
    %v2439 = vpop.f32.mrf.mxu0
    %2440 = vdwg.mxu0
    %2441 = vrot.lane.b32.xlu0 %v2027, 120
    %v2442 = vpop.permute.xlu0 %2441
    %2443 = vrot.lane.b32.xlu0 %v2027, 88
    %v2444 = vpop.permute.xlu0 %2443
    %v2445 = vsel %vm252, %v2442, 0
    %v2447 = vsel %vm252, %v2444, 0
    %2449 = vmatprep.subr.mxu0 0.0
    %2450 = vmatpush1.xpose.msra.mxu0 0.0
    %2451 = vmatprep.subr.mxu0 0.0
    %2452 = vmatpush1.xpose.msra.mxu0 0.0
    %2453 = vmatprep.subr.mxu0 0.0
    %2454 = vmatpush1.xpose.msra.mxu0 0.0
    %2455 = vmatprep.subr.mxu0 0.0
    %2456 = vmatpush1.xpose.msra.mxu0 0.0
    %2457 = vmatprep.subr.mxu0 0.0
    %2458 = vmatpush1.xpose.msra.mxu0 0.0
    %2459 = vmatprep.subr.mxu0 0.0
    %2460 = vmatpush1.xpose.msra.mxu0 0.0
    %2461 = vmatprep.subr.mxu0 0.0
    %2462 = vmatpush1.xpose.msra.mxu0 0.0
    %2463 = vmatprep.subr.mxu0 0.0
    %2464 = vmatpush1.xpose.msra.mxu0 0.0
    %2465 = vmatprep.subr.mxu0 0.0
    %2466 = vmatpush1.xpose.msra.mxu0 0.0
    %2467 = vmatprep.subr.mxu0 0.0
    %2468 = vmatpush1.xpose.msra.mxu0 0.0
    %2469 = vmatprep.subr.mxu0 0.0
    %2470 = vmatpush1.xpose.msra.mxu0 0.0
    %2471 = vmatprep.subr.mxu0 0.0
    %2472 = vmatpush1.xpose.msra.mxu0 0.0
    %2473 = vmatprep.subr.mxu0 0.0
    %2474 = vmatpush1.xpose.msra.mxu0 0.0
    %2475 = vmatprep.subr.mxu0 0.0
    %2476 = vmatpush1.xpose.msra.mxu0 0.0
    %2477 = vmatprep.subr.mxu0 0.0
    %2478 = vmatpush1.xpose.msra.mxu0 0.0
    %2479 = vmatprep.subr.mxu0 0.0
    %2480 = vmatpush1.xpose.msra.mxu0 %v2447
    %2481 = vmatprep.subr.mxu0 0.0
    %2482 = vmatpush2.xpose.msra.mxu0 0.0
    %2483 = vmatprep.subr.mxu0 0.0
    %2484 = vmatpush2.xpose.msra.mxu0 0.0
    %2485 = vmatprep.subr.mxu0 0.0
    %2486 = vmatpush2.xpose.msra.mxu0 0.0
    %2487 = vmatprep.subr.mxu0 0.0
    %2488 = vmatpush2.xpose.msra.mxu0 0.0
    %2489 = vmatprep.subr.mxu0 0.0
    %2490 = vmatpush2.xpose.msra.mxu0 0.0
    %2491 = vmatprep.subr.mxu0 0.0
    %2492 = vmatpush2.xpose.msra.mxu0 0.0
    %2493 = vmatprep.subr.mxu0 0.0
    %2494 = vmatpush2.xpose.msra.mxu0 0.0
    %2495 = vmatprep.subr.mxu0 0.0
    %2496 = vmatpush2.xpose.msra.mxu0 0.0
    %2497 = vmatprep.subr.mxu0 0.0
    %2498 = vmatpush2.xpose.msra.mxu0 0.0
    %2499 = vmatprep.subr.mxu0 0.0
    %2500 = vmatpush2.xpose.msra.mxu0 0.0
    %2501 = vmatprep.subr.mxu0 0.0
    %2502 = vmatpush2.xpose.msra.mxu0 0.0
    %2503 = vmatprep.subr.mxu0 0.0
    %2504 = vmatpush2.xpose.msra.mxu0 0.0
    %2505 = vmatprep.subr.mxu0 0.0
    %2506 = vmatpush2.xpose.msra.mxu0 0.0
    %2507 = vmatprep.subr.mxu0 0.0
    %2508 = vmatpush2.xpose.msra.mxu0 0.0
    %2509 = vmatprep.subr.mxu0 0.0
    %2510 = vmatpush2.xpose.msra.mxu0 0.0
    %2511 = vmatprep.subr.mxu0 0.0
    %2512 = vmatpush2.xpose.msra.mxu0 0.0
    %2513 = vmatprep.mubr.f32.mxu0 0.0
    %2514 = vmatmul.mubr.f32.gmra.mxu0 %v2445
    %v2515 = vpop.f32.mrf.mxu0
    %v2516 = vadd.f32 0.0, %v2515
    %v2517 = vpop.f32.mrf.mxu0
    %2518 = vdwg.mxu0
    %v2519 = vsel %vm252, %v2438, -inf
    %2520 = vmax.xlane.f32.xlu0 %v2519
    %v2521 = vpop.xlane.xlu0 %2520
    %v2522 = vsel %vm252, %v2516, -inf
    %2523 = vmax.xlane.f32.xlu0 %v2522
    %v2524 = vpop.xlane.xlu0 %2523
    %v2525 = vsub.f32 %v2438, %v2521
    %v2526 = vsub.f32 %v2516, %v2524
    %v2527 = vmul.f32 %v2525, 1.442695
    %v2528 = vpow.pop %v2527
    %v2529 = vmul.f32 %v2526, 1.442695
    %v2530 = vpow.pop %v2529
    %v2531 = vsel %vm252, %v2528, 0.0
    %2532 = vadd.xlane.f32.xlu0 %v2531
    %v2533 = vpop.xlane.xlu0 %2532
    %v2534 = vsel %vm252, %v2530, 0.0
    %2535 = vadd.xlane.f32.xlu0 %v2534
    %v2536 = vpop.xlane.xlu0 %2535
    %v2537 = vrcp.pop %v2533
    %v2538 = vrcp.pop %v2536
    %v2539 = vmul.f32 %v2528, %v2537
    %v2540 = vmul.f32 %v2530, %v2538
    %2541 = vrot.lane.b32.xlu0 %v2022, 56
    %v2542 = vpop.permute.xlu0 %2541
    %v2545 = vsel %vm252, %v2539, 0
    %2547 = vmatprep.subr.mxu0 0.0
    %2548 = vmatpush1.msra.mxu0 0.0
    %2549 = vmatprep.subr.mxu0 0.0
    %2550 = vmatpush1.msra.mxu0 0.0
    %2551 = vmatprep.subr.mxu0 0.0
    %2552 = vmatpush1.msra.mxu0 0.0
    %2553 = vmatprep.subr.mxu0 0.0
    %2554 = vmatpush1.msra.mxu0 0.0
    %2555 = vmatprep.subr.mxu0 0.0
    %2556 = vmatpush1.msra.mxu0 0.0
    %2557 = vmatprep.subr.mxu0 0.0
    %2558 = vmatpush1.msra.mxu0 0.0
    %2559 = vmatprep.subr.mxu0 0.0
    %2560 = vmatpush1.msra.mxu0 0.0
    %2561 = vmatprep.subr.mxu0 0.0
    %2562 = vmatpush1.msra.mxu0 0.0
    %2563 = vmatprep.subr.mxu0 0.0
    %2564 = vmatpush1.msra.mxu0 0.0
    %2565 = vmatprep.subr.mxu0 0.0
    %2566 = vmatpush1.msra.mxu0 0.0
    %2567 = vmatprep.subr.mxu0 0.0
    %2568 = vmatpush1.msra.mxu0 0.0
    %2569 = vmatprep.subr.mxu0 0.0
    %2570 = vmatpush1.msra.mxu0 0.0
    %2571 = vmatprep.subr.mxu0 0.0
    %2572 = vmatpush1.msra.mxu0 0.0
    %2573 = vmatprep.subr.mxu0 0.0
    %2574 = vmatpush1.msra.mxu0 0.0
    %2575 = vmatprep.subr.mxu0 0.0
    %2576 = vmatpush1.msra.mxu0 0.0
    %2577 = vmatprep.subr.mxu0 0.0
    %2578 = vmatpush1.msra.mxu0 %v2542
    %2579 = vmatprep.subr.mxu0 0.0
    %2580 = vmatpush2.msra.mxu0 0.0
    %2581 = vmatprep.subr.mxu0 0.0
    %2582 = vmatpush2.msra.mxu0 0.0
    %2583 = vmatprep.subr.mxu0 0.0
    %2584 = vmatpush2.msra.mxu0 0.0
    %2585 = vmatprep.subr.mxu0 0.0
    %2586 = vmatpush2.msra.mxu0 0.0
    %2587 = vmatprep.subr.mxu0 0.0
    %2588 = vmatpush2.msra.mxu0 0.0
    %2589 = vmatprep.subr.mxu0 0.0
    %2590 = vmatpush2.msra.mxu0 0.0
    %2591 = vmatprep.subr.mxu0 0.0
    %2592 = vmatpush2.msra.mxu0 0.0
    %2593 = vmatprep.subr.mxu0 0.0
    %2594 = vmatpush2.msra.mxu0 0.0
    %2595 = vmatprep.subr.mxu0 0.0
    %2596 = vmatpush2.msra.mxu0 0.0
    %2597 = vmatprep.subr.mxu0 0.0
    %2598 = vmatpush2.msra.mxu0 0.0
    %2599 = vmatprep.subr.mxu0 0.0
    %2600 = vmatpush2.msra.mxu0 0.0
    %2601 = vmatprep.subr.mxu0 0.0
    %2602 = vmatpush2.msra.mxu0 0.0
    %2603 = vmatprep.subr.mxu0 0.0
    %2604 = vmatpush2.msra.mxu0 0.0
    %2605 = vmatprep.subr.mxu0 0.0
    %2606 = vmatpush2.msra.mxu0 0.0
    %2607 = vmatprep.subr.mxu0 0.0
    %2608 = vmatpush2.msra.mxu0 0.0
    %2609 = vmatprep.subr.mxu0 0.0
    %2610 = vmatpush2.msra.mxu0 0.0
    %2611 = vmatprep.mubr.f32.mxu0 0.0
    %2612 = vmatmul.mubr.f32.gmra.mxu0 %v2545
    %v2613 = vpop.f32.mrf.mxu0
    %v2614 = vadd.f32 0.0, %v2613
    %v2615 = vpop.f32.mrf.mxu0
    %2616 = vdwg.mxu0
    %2617 = vrot.lane.b32.xlu0 %v2027, 56
    %v2618 = vpop.permute.xlu0 %2617
    %v2621 = vsel %vm252, %v2540, 0
    %2623 = vmatprep.subr.mxu0 0.0
    %2624 = vmatpush1.msra.mxu0 0.0
    %2625 = vmatprep.subr.mxu0 0.0
    %2626 = vmatpush1.msra.mxu0 0.0
    %2627 = vmatprep.subr.mxu0 0.0
    %2628 = vmatpush1.msra.mxu0 0.0
    %2629 = vmatprep.subr.mxu0 0.0
    %2630 = vmatpush1.msra.mxu0 0.0
    %2631 = vmatprep.subr.mxu0 0.0
    %2632 = vmatpush1.msra.mxu0 0.0
    %2633 = vmatprep.subr.mxu0 0.0
    %2634 = vmatpush1.msra.mxu0 0.0
    %2635 = vmatprep.subr.mxu0 0.0
    %2636 = vmatpush1.msra.mxu0 0.0
    %2637 = vmatprep.subr.mxu0 0.0
    %2638 = vmatpush1.msra.mxu0 0.0
    %2639 = vmatprep.subr.mxu0 0.0
    %2640 = vmatpush1.msra.mxu0 0.0
    %2641 = vmatprep.subr.mxu0 0.0
    %2642 = vmatpush1.msra.mxu0 0.0
    %2643 = vmatprep.subr.mxu0 0.0
    %2644 = vmatpush1.msra.mxu0 0.0
    %2645 = vmatprep.subr.mxu0 0.0
    %2646 = vmatpush1.msra.mxu0 0.0
    %2647 = vmatprep.subr.mxu0 0.0
    %2648 = vmatpush1.msra.mxu0 0.0
    %2649 = vmatprep.subr.mxu0 0.0
    %2650 = vmatpush1.msra.mxu0 0.0
    %2651 = vmatprep.subr.mxu0 0.0
    %2652 = vmatpush1.msra.mxu0 0.0
    %2653 = vmatprep.subr.mxu0 0.0
    %2654 = vmatpush1.msra.mxu0 %v2618
    %2655 = vmatprep.subr.mxu0 0.0
    %2656 = vmatpush2.msra.mxu0 0.0
    %2657 = vmatprep.subr.mxu0 0.0
    %2658 = vmatpush2.msra.mxu0 0.0
    %2659 = vmatprep.subr.mxu0 0.0
    %2660 = vmatpush2.msra.mxu0 0.0
    %2661 = vmatprep.subr.mxu0 0.0
    %2662 = vmatpush2.msra.mxu0 0.0
    %2663 = vmatprep.subr.mxu0 0.0
    %2664 = vmatpush2.msra.mxu0 0.0
    %2665 = vmatprep.subr.mxu0 0.0
    %2666 = vmatpush2.msra.mxu0 0.0
    %2667 = vmatprep.subr.mxu0 0.0
    %2668 = vmatpush2.msra.mxu0 0.0
    %2669 = vmatprep.subr.mxu0 0.0
    %2670 = vmatpush2.msra.mxu0 0.0
    %2671 = vmatprep.subr.mxu0 0.0
    %2672 = vmatpush2.msra.mxu0 0.0
    %2673 = vmatprep.subr.mxu0 0.0
    %2674 = vmatpush2.msra.mxu0 0.0
    %2675 = vmatprep.subr.mxu0 0.0
    %2676 = vmatpush2.msra.mxu0 0.0
    %2677 = vmatprep.subr.mxu0 0.0
    %2678 = vmatpush2.msra.mxu0 0.0
    %2679 = vmatprep.subr.mxu0 0.0
    %2680 = vmatpush2.msra.mxu0 0.0
    %2681 = vmatprep.subr.mxu0 0.0
    %2682 = vmatpush2.msra.mxu0 0.0
    %2683 = vmatprep.subr.mxu0 0.0
    %2684 = vmatpush2.msra.mxu0 0.0
    %2685 = vmatprep.subr.mxu0 0.0
    %2686 = vmatpush2.msra.mxu0 0.0
    %2687 = vmatprep.mubr.f32.mxu0 0.0
    %2688 = vmatmul.mubr.f32.gmra.mxu0 %v2621
    %v2689 = vpop.f32.mrf.mxu0
    %v2690 = vadd.f32 0.0, %v2689
    %v2691 = vpop.f32.mrf.mxu0
    %2692 = vdwg.mxu0
    %v2694 = vsel %vm252, %v2614, 0
    %v2697 = vsel %vm252, %v2690, 0
    %2699 = vmatprep.subr.mxu0 0.0
    %2700 = vmatpush1.msra.mxu0 0.0
    %2701 = vmatprep.subr.mxu0 0.0
    %2702 = vmatpush1.msra.mxu0 0.0
    %2703 = vmatprep.subr.mxu0 0.0
    %2704 = vmatpush1.msra.mxu0 0.0
    %2705 = vmatprep.subr.mxu0 0.0
    %2706 = vmatpush1.msra.mxu0 0.0
    %2707 = vmatprep.subr.mxu0 0.0
    %2708 = vmatpush1.msra.mxu0 0.0
    %2709 = vmatprep.subr.mxu0 0.0
    %2710 = vmatpush1.msra.mxu0 0.0
    %2711 = vmatprep.subr.mxu0 0.0
    %2712 = vmatpush1.msra.mxu0 0.0
    %2713 = vmatprep.subr.mxu0 0.0
    %2714 = vmatpush1.msra.mxu0 0.0
    %2715 = vmatprep.subr.mxu0 0.0
    %2716 = vmatpush1.msra.mxu0 0.0
    %2717 = vmatprep.subr.mxu0 0.0
    %2718 = vmatpush1.msra.mxu0 0.0
    %2719 = vmatprep.subr.mxu0 0.0
    %2720 = vmatpush1.msra.mxu0 0.0
    %2721 = vmatprep.subr.mxu0 0.0
    %2722 = vmatpush1.msra.mxu0 0.0
    %2723 = vmatprep.subr.mxu0 0.0
    %2724 = vmatpush1.msra.mxu0 0.0
    %2725 = vmatprep.subr.mxu0 0.0
    %2726 = vmatpush1.msra.mxu0 0.0
    %2727 = vmatprep.subr.mxu0 0.0
    %2728 = vmatpush1.msra.mxu0 0.0
    %2729 = vmatprep.subr.mxu0 0.0
    %2730 = vmatpush1.msra.mxu0 %v2032
    %2731 = vmatprep.subr.mxu0 0.0
    %2732 = vmatpush2.msra.mxu0 0.0
    %2733 = vmatprep.subr.mxu0 0.0
    %2734 = vmatpush2.msra.mxu0 0.0
    %2735 = vmatprep.subr.mxu0 0.0
    %2736 = vmatpush2.msra.mxu0 0.0
    %2737 = vmatprep.subr.mxu0 0.0
    %2738 = vmatpush2.msra.mxu0 0.0
    %2739 = vmatprep.subr.mxu0 0.0
    %2740 = vmatpush2.msra.mxu0 0.0
    %2741 = vmatprep.subr.mxu0 0.0
    %2742 = vmatpush2.msra.mxu0 0.0
    %2743 = vmatprep.subr.mxu0 0.0
    %2744 = vmatpush2.msra.mxu0 0.0
    %2745 = vmatprep.subr.mxu0 0.0
    %2746 = vmatpush2.msra.mxu0 0.0
    %2747 = vmatprep.subr.mxu0 0.0
    %2748 = vmatpush2.msra.mxu0 0.0
    %2749 = vmatprep.subr.mxu0 0.0
    %2750 = vmatpush2.msra.mxu0 0.0
    %2751 = vmatprep.subr.mxu0 0.0
    %2752 = vmatpush2.msra.mxu0 0.0
    %2753 = vmatprep.subr.mxu0 0.0
    %2754 = vmatpush2.msra.mxu0 0.0
    %2755 = vmatprep.subr.mxu0 0.0
    %2756 = vmatpush2.msra.mxu0 0.0
    %2757 = vmatprep.subr.mxu0 0.0
    %2758 = vmatpush2.msra.mxu0 0.0
    %2759 = vmatprep.subr.mxu0 0.0
    %2760 = vmatpush2.msra.mxu0 0.0
    %2761 = vmatprep.subr.mxu0 0.0
    %2762 = vmatpush2.msra.mxu0 0.0
    %2763 = vmatprep.mubr.f32.mxu0 0.0
    %2764 = vmatmul.mubr.f32.gmra.mxu0 %v2694
    %v2765 = vpop.f32.mrf.mxu0
    %v2766 = vadd.f32 0.0, %v2765
    %v2767 = vpop.f32.mrf.mxu0
    %2768 = vmatprep.mubr.f32.mxu0 0.0
    %2769 = vmatmul.mubr.f32.gmra.mxu0 %v2697
    %v2770 = vpop.f32.mrf.mxu0
    %v2771 = vadd.f32 0.0, %v2770
    %v2772 = vpop.f32.mrf.mxu0
    %2773 = vdwg.mxu0
    %v2775 = vsel %vm252, %v2284, 0
    %v2778 = vsel %vm252, %v2360, 0
    %2780 = vmatprep.subr.mxu0 0.0
    %2781 = vmatpush1.msra.mxu0 0.0
    %2782 = vmatprep.subr.mxu0 0.0
    %2783 = vmatpush1.msra.mxu0 0.0
    %2784 = vmatprep.subr.mxu0 0.0
    %2785 = vmatpush1.msra.mxu0 0.0
    %2786 = vmatprep.subr.mxu0 0.0
    %2787 = vmatpush1.msra.mxu0 0.0
    %2788 = vmatprep.subr.mxu0 0.0
    %2789 = vmatpush1.msra.mxu0 0.0
    %2790 = vmatprep.subr.mxu0 0.0
    %2791 = vmatpush1.msra.mxu0 0.0
    %2792 = vmatprep.subr.mxu0 0.0
    %2793 = vmatpush1.msra.mxu0 0.0
    %2794 = vmatprep.subr.mxu0 0.0
    %2795 = vmatpush1.msra.mxu0 0.0
    %2796 = vmatprep.subr.mxu0 0.0
    %2797 = vmatpush1.msra.mxu0 0.0
    %2798 = vmatprep.subr.mxu0 0.0
    %2799 = vmatpush1.msra.mxu0 0.0
    %2800 = vmatprep.subr.mxu0 0.0
    %2801 = vmatpush1.msra.mxu0 0.0
    %2802 = vmatprep.subr.mxu0 0.0
    %2803 = vmatpush1.msra.mxu0 0.0
    %2804 = vmatprep.subr.mxu0 0.0
    %2805 = vmatpush1.msra.mxu0 0.0
    %2806 = vmatprep.subr.mxu0 0.0
    %2807 = vmatpush1.msra.mxu0 0.0
    %2808 = vmatprep.subr.mxu0 0.0
    %2809 = vmatpush1.msra.mxu0 0.0
    %2810 = vmatprep.subr.mxu0 0.0
    %2811 = vmatpush1.msra.mxu0 %v2031
    %2812 = vmatprep.subr.mxu0 0.0
    %2813 = vmatpush2.msra.mxu0 0.0
    %2814 = vmatprep.subr.mxu0 0.0
    %2815 = vmatpush2.msra.mxu0 0.0
    %2816 = vmatprep.subr.mxu0 0.0
    %2817 = vmatpush2.msra.mxu0 0.0
    %2818 = vmatprep.subr.mxu0 0.0
    %2819 = vmatpush2.msra.mxu0 0.0
    %2820 = vmatprep.subr.mxu0 0.0
    %2821 = vmatpush2.msra.mxu0 0.0
    %2822 = vmatprep.subr.mxu0 0.0
    %2823 = vmatpush2.msra.mxu0 0.0
    %2824 = vmatprep.subr.mxu0 0.0
    %2825 = vmatpush2.msra.mxu0 0.0
    %2826 = vmatprep.subr.mxu0 0.0
    %2827 = vmatpush2.msra.mxu0 0.0
    %2828 = vmatprep.subr.mxu0 0.0
    %2829 = vmatpush2.msra.mxu0 0.0
    %2830 = vmatprep.subr.mxu0 0.0
    %2831 = vmatpush2.msra.mxu0 0.0
    %2832 = vmatprep.subr.mxu0 0.0
    %2833 = vmatpush2.msra.mxu0 0.0
    %2834 = vmatprep.subr.mxu0 0.0
    %2835 = vmatpush2.msra.mxu0 0.0
    %2836 = vmatprep.subr.mxu0 0.0
    %2837 = vmatpush2.msra.mxu0 0.0
    %2838 = vmatprep.subr.mxu0 0.0
    %2839 = vmatpush2.msra.mxu0 0.0
    %2840 = vmatprep.subr.mxu0 0.0
    %2841 = vmatpush2.msra.mxu0 0.0
    %2842 = vmatprep.subr.mxu0 0.0
    %2843 = vmatpush2.msra.mxu0 0.0
    %2844 = vmatprep.mubr.f32.mxu0 0.0
    %2845 = vmatmul.mubr.f32.gmra.mxu0 %v2775
    %v2846 = vpop.f32.mrf.mxu0
    %v2847 = vadd.f32 %v2766, %v2846
    %v2848 = vpop.f32.mrf.mxu0
    %2849 = vmatprep.mubr.f32.mxu0 0.0
    %2850 = vmatmul.mubr.f32.gmra.mxu0 %v2778
    %v2851 = vpop.f32.mrf.mxu0
    %v2852 = vadd.f32 %v2771, %v2851
    %v2853 = vpop.f32.mrf.mxu0
    %2854 = vdwg.mxu0
    %2855 = vrot.lane.b32.xlu0 %v2022, 112
    %v2856 = vpop.permute.xlu0 %2855
    %2857 = vrot.lane.b32.xlu0 %v2022, 80
    %v2858 = vpop.permute.xlu0 %2857
    %v2859 = vsel %vm252, %v2856, 0
    %v2861 = vsel %vm252, %v2858, 0
    %2863 = vmatprep.subr.mxu0 0.0
    %2864 = vmatpush1.xpose.msra.mxu0 0.0
    %2865 = vmatprep.subr.mxu0 0.0
    %2866 = vmatpush1.xpose.msra.mxu0 0.0
    %2867 = vmatprep.subr.mxu0 0.0
    %2868 = vmatpush1.xpose.msra.mxu0 0.0
    %2869 = vmatprep.subr.mxu0 0.0
    %2870 = vmatpush1.xpose.msra.mxu0 0.0
    %2871 = vmatprep.subr.mxu0 0.0
    %2872 = vmatpush1.xpose.msra.mxu0 0.0
    %2873 = vmatprep.subr.mxu0 0.0
    %2874 = vmatpush1.xpose.msra.mxu0 0.0
    %2875 = vmatprep.subr.mxu0 0.0
    %2876 = vmatpush1.xpose.msra.mxu0 0.0
    %2877 = vmatprep.subr.mxu0 0.0
    %2878 = vmatpush1.xpose.msra.mxu0 0.0
    %2879 = vmatprep.subr.mxu0 0.0
    %2880 = vmatpush1.xpose.msra.mxu0 0.0
    %2881 = vmatprep.subr.mxu0 0.0
    %2882 = vmatpush1.xpose.msra.mxu0 0.0
    %2883 = vmatprep.subr.mxu0 0.0
    %2884 = vmatpush1.xpose.msra.mxu0 0.0
    %2885 = vmatprep.subr.mxu0 0.0
    %2886 = vmatpush1.xpose.msra.mxu0 0.0
    %2887 = vmatprep.subr.mxu0 0.0
    %2888 = vmatpush1.xpose.msra.mxu0 0.0
    %2889 = vmatprep.subr.mxu0 0.0
    %2890 = vmatpush1.xpose.msra.mxu0 0.0
    %2891 = vmatprep.subr.mxu0 0.0
    %2892 = vmatpush1.xpose.msra.mxu0 0.0
    %2893 = vmatprep.subr.mxu0 0.0
    %2894 = vmatpush1.xpose.msra.mxu0 %v2861
    %2895 = vmatprep.subr.mxu0 0.0
    %2896 = vmatpush2.xpose.msra.mxu0 0.0
    %2897 = vmatprep.subr.mxu0 0.0
    %2898 = vmatpush2.xpose.msra.mxu0 0.0
    %2899 = vmatprep.subr.mxu0 0.0
    %2900 = vmatpush2.xpose.msra.mxu0 0.0
    %2901 = vmatprep.subr.mxu0 0.0
    %2902 = vmatpush2.xpose.msra.mxu0 0.0
    %2903 = vmatprep.subr.mxu0 0.0
    %2904 = vmatpush2.xpose.msra.mxu0 0.0
    %2905 = vmatprep.subr.mxu0 0.0
    %2906 = vmatpush2.xpose.msra.mxu0 0.0
    %2907 = vmatprep.subr.mxu0 0.0
    %2908 = vmatpush2.xpose.msra.mxu0 0.0
    %2909 = vmatprep.subr.mxu0 0.0
    %2910 = vmatpush2.xpose.msra.mxu0 0.0
    %2911 = vmatprep.subr.mxu0 0.0
    %2912 = vmatpush2.xpose.msra.mxu0 0.0
    %2913 = vmatprep.subr.mxu0 0.0
    %2914 = vmatpush2.xpose.msra.mxu0 0.0
    %2915 = vmatprep.subr.mxu0 0.0
    %2916 = vmatpush2.xpose.msra.mxu0 0.0
    %2917 = vmatprep.subr.mxu0 0.0
    %2918 = vmatpush2.xpose.msra.mxu0 0.0
    %2919 = vmatprep.subr.mxu0 0.0
    %2920 = vmatpush2.xpose.msra.mxu0 0.0
    %2921 = vmatprep.subr.mxu0 0.0
    %2922 = vmatpush2.xpose.msra.mxu0 0.0
    %2923 = vmatprep.subr.mxu0 0.0
    %2924 = vmatpush2.xpose.msra.mxu0 0.0
    %2925 = vmatprep.subr.mxu0 0.0
    %2926 = vmatpush2.xpose.msra.mxu0 0.0
    %2927 = vmatprep.mubr.f32.mxu0 0.0
    %2928 = vmatmul.mubr.f32.gmra.mxu0 %v2859
    %v2929 = vpop.f32.mrf.mxu0
    %v2930 = vadd.f32 0.0, %v2929
    %v2931 = vpop.f32.mrf.mxu0
    %2932 = vdwg.mxu0
    %2933 = vrot.lane.b32.xlu0 %v2027, 112
    %v2934 = vpop.permute.xlu0 %2933
    %2935 = vrot.lane.b32.xlu0 %v2027, 80
    %v2936 = vpop.permute.xlu0 %2935
    %v2937 = vsel %vm252, %v2934, 0
    %v2939 = vsel %vm252, %v2936, 0
    %2941 = vmatprep.subr.mxu0 0.0
    %2942 = vmatpush1.xpose.msra.mxu0 0.0
    %2943 = vmatprep.subr.mxu0 0.0
    %2944 = vmatpush1.xpose.msra.mxu0 0.0
    %2945 = vmatprep.subr.mxu0 0.0
    %2946 = vmatpush1.xpose.msra.mxu0 0.0
    %2947 = vmatprep.subr.mxu0 0.0
    %2948 = vmatpush1.xpose.msra.mxu0 0.0
    %2949 = vmatprep.subr.mxu0 0.0
    %2950 = vmatpush1.xpose.msra.mxu0 0.0
    %2951 = vmatprep.subr.mxu0 0.0
    %2952 = vmatpush1.xpose.msra.mxu0 0.0
    %2953 = vmatprep.subr.mxu0 0.0
    %2954 = vmatpush1.xpose.msra.mxu0 0.0
    %2955 = vmatprep.subr.mxu0 0.0
    %2956 = vmatpush1.xpose.msra.mxu0 0.0
    %2957 = vmatprep.subr.mxu0 0.0
    %2958 = vmatpush1.xpose.msra.mxu0 0.0
    %2959 = vmatprep.subr.mxu0 0.0
    %2960 = vmatpush1.xpose.msra.mxu0 0.0
    %2961 = vmatprep.subr.mxu0 0.0
    %2962 = vmatpush1.xpose.msra.mxu0 0.0
    %2963 = vmatprep.subr.mxu0 0.0
    %2964 = vmatpush1.xpose.msra.mxu0 0.0
    %2965 = vmatprep.subr.mxu0 0.0
    %2966 = vmatpush1.xpose.msra.mxu0 0.0
    %2967 = vmatprep.subr.mxu0 0.0
    %2968 = vmatpush1.xpose.msra.mxu0 0.0
    %2969 = vmatprep.subr.mxu0 0.0
    %2970 = vmatpush1.xpose.msra.mxu0 0.0
    %2971 = vmatprep.subr.mxu0 0.0
    %2972 = vmatpush1.xpose.msra.mxu0 %v2939
    %2973 = vmatprep.subr.mxu0 0.0
    %2974 = vmatpush2.xpose.msra.mxu0 0.0
    %2975 = vmatprep.subr.mxu0 0.0
    %2976 = vmatpush2.xpose.msra.mxu0 0.0
    %2977 = vmatprep.subr.mxu0 0.0
    %2978 = vmatpush2.xpose.msra.mxu0 0.0
    %2979 = vmatprep.subr.mxu0 0.0
    %2980 = vmatpush2.xpose.msra.mxu0 0.0
    %2981 = vmatprep.subr.mxu0 0.0
    %2982 = vmatpush2.xpose.msra.mxu0 0.0
    %2983 = vmatprep.subr.mxu0 0.0
    %2984 = vmatpush2.xpose.msra.mxu0 0.0
    %2985 = vmatprep.subr.mxu0 0.0
    %2986 = vmatpush2.xpose.msra.mxu0 0.0
    %2987 = vmatprep.subr.mxu0 0.0
    %2988 = vmatpush2.xpose.msra.mxu0 0.0
    %2989 = vmatprep.subr.mxu0 0.0
    %2990 = vmatpush2.xpose.msra.mxu0 0.0
    %2991 = vmatprep.subr.mxu0 0.0
    %2992 = vmatpush2.xpose.msra.mxu0 0.0
    %2993 = vmatprep.subr.mxu0 0.0
    %2994 = vmatpush2.xpose.msra.mxu0 0.0
    %2995 = vmatprep.subr.mxu0 0.0
    %2996 = vmatpush2.xpose.msra.mxu0 0.0
    %2997 = vmatprep.subr.mxu0 0.0
    %2998 = vmatpush2.xpose.msra.mxu0 0.0
    %2999 = vmatprep.subr.mxu0 0.0
    %3000 = vmatpush2.xpose.msra.mxu0 0.0
    %3001 = vmatprep.subr.mxu0 0.0
    %3002 = vmatpush2.xpose.msra.mxu0 0.0
    %3003 = vmatprep.subr.mxu0 0.0
    %3004 = vmatpush2.xpose.msra.mxu0 0.0
    %3005 = vmatprep.mubr.f32.mxu0 0.0
    %3006 = vmatmul.mubr.f32.gmra.mxu0 %v2937
    %v3007 = vpop.f32.mrf.mxu0
    %v3008 = vadd.f32 0.0, %v3007
    %v3009 = vpop.f32.mrf.mxu0
    %3010 = vdwg.mxu0
    %v3011 = vsel %vm252, %v2930, -inf
    %3012 = vmax.xlane.f32.xlu0 %v3011
    %v3013 = vpop.xlane.xlu0 %3012
    %v3014 = vsel %vm252, %v3008, -inf
    %3015 = vmax.xlane.f32.xlu0 %v3014
    %v3016 = vpop.xlane.xlu0 %3015
    %v3017 = vsub.f32 %v2930, %v3013
    %v3018 = vsub.f32 %v3008, %v3016
    %v3019 = vmul.f32 %v3017, 1.442695
    %v3020 = vpow.pop %v3019
    %v3021 = vmul.f32 %v3018, 1.442695
    %v3022 = vpow.pop %v3021
    %v3023 = vsel %vm252, %v3020, 0.0
    %3024 = vadd.xlane.f32.xlu0 %v3023
    %v3025 = vpop.xlane.xlu0 %3024
    %v3026 = vsel %vm252, %v3022, 0.0
    %3027 = vadd.xlane.f32.xlu0 %v3026
    %v3028 = vpop.xlane.xlu0 %3027
    %v3029 = vrcp.pop %v3025
    %v3030 = vrcp.pop %v3028
    %v3031 = vmul.f32 %v3020, %v3029
    %v3032 = vmul.f32 %v3022, %v3030
    %3033 = vrot.lane.b32.xlu0 %v2022, 48
    %v3034 = vpop.permute.xlu0 %3033
    %v3037 = vsel %vm252, %v3031, 0
    %3039 = vmatprep.subr.mxu0 0.0
    %3040 = vmatpush1.msra.mxu0 0.0
    %3041 = vmatprep.subr.mxu0 0.0
    %3042 = vmatpush1.msra.mxu0 0.0
    %3043 = vmatprep.subr.mxu0 0.0
    %3044 = vmatpush1.msra.mxu0 0.0
    %3045 = vmatprep.subr.mxu0 0.0
    %3046 = vmatpush1.msra.mxu0 0.0
    %3047 = vmatprep.subr.mxu0 0.0
    %3048 = vmatpush1.msra.mxu0 0.0
    %3049 = vmatprep.subr.mxu0 0.0
    %3050 = vmatpush1.msra.mxu0 0.0
    %3051 = vmatprep.subr.mxu0 0.0
    %3052 = vmatpush1.msra.mxu0 0.0
    %3053 = vmatprep.subr.mxu0 0.0
    %3054 = vmatpush1.msra.mxu0 0.0
    %3055 = vmatprep.subr.mxu0 0.0
    %3056 = vmatpush1.msra.mxu0 0.0
    %3057 = vmatprep.subr.mxu0 0.0
    %3058 = vmatpush1.msra.mxu0 0.0
    %3059 = vmatprep.subr.mxu0 0.0
    %3060 = vmatpush1.msra.mxu0 0.0
    %3061 = vmatprep.subr.mxu0 0.0
    %3062 = vmatpush1.msra.mxu0 0.0
    %3063 = vmatprep.subr.mxu0 0.0
    %3064 = vmatpush1.msra.mxu0 0.0
    %3065 = vmatprep.subr.mxu0 0.0
    %3066 = vmatpush1.msra.mxu0 0.0
    %3067 = vmatprep.subr.mxu0 0.0
    %3068 = vmatpush1.msra.mxu0 0.0
    %3069 = vmatprep.subr.mxu0 0.0
    %3070 = vmatpush1.msra.mxu0 %v3034
    %3071 = vmatprep.subr.mxu0 0.0
    %3072 = vmatpush2.msra.mxu0 0.0
    %3073 = vmatprep.subr.mxu0 0.0
    %3074 = vmatpush2.msra.mxu0 0.0
    %3075 = vmatprep.subr.mxu0 0.0
    %3076 = vmatpush2.msra.mxu0 0.0
    %3077 = vmatprep.subr.mxu0 0.0
    %3078 = vmatpush2.msra.mxu0 0.0
    %3079 = vmatprep.subr.mxu0 0.0
    %3080 = vmatpush2.msra.mxu0 0.0
    %3081 = vmatprep.subr.mxu0 0.0
    %3082 = vmatpush2.msra.mxu0 0.0
    %3083 = vmatprep.subr.mxu0 0.0
    %3084 = vmatpush2.msra.mxu0 0.0
    %3085 = vmatprep.subr.mxu0 0.0
    %3086 = vmatpush2.msra.mxu0 0.0
    %3087 = vmatprep.subr.mxu0 0.0
    %3088 = vmatpush2.msra.mxu0 0.0
    %3089 = vmatprep.subr.mxu0 0.0
    %3090 = vmatpush2.msra.mxu0 0.0
    %3091 = vmatprep.subr.mxu0 0.0
    %3092 = vmatpush2.msra.mxu0 0.0
    %3093 = vmatprep.subr.mxu0 0.0
    %3094 = vmatpush2.msra.mxu0 0.0
    %3095 = vmatprep.subr.mxu0 0.0
    %3096 = vmatpush2.msra.mxu0 0.0
    %3097 = vmatprep.subr.mxu0 0.0
    %3098 = vmatpush2.msra.mxu0 0.0
    %3099 = vmatprep.subr.mxu0 0.0
    %3100 = vmatpush2.msra.mxu0 0.0
    %3101 = vmatprep.subr.mxu0 0.0
    %3102 = vmatpush2.msra.mxu0 0.0
    %3103 = vmatprep.mubr.f32.mxu0 0.0
    %3104 = vmatmul.mubr.f32.gmra.mxu0 %v3037
    %v3105 = vpop.f32.mrf.mxu0
    %v3106 = vadd.f32 0.0, %v3105
    %v3107 = vpop.f32.mrf.mxu0
    %3108 = vdwg.mxu0
    %3109 = vrot.lane.b32.xlu0 %v2027, 48
    %v3110 = vpop.permute.xlu0 %3109
    %v3113 = vsel %vm252, %v3032, 0
    %3115 = vmatprep.subr.mxu0 0.0
    %3116 = vmatpush1.msra.mxu0 0.0
    %3117 = vmatprep.subr.mxu0 0.0
    %3118 = vmatpush1.msra.mxu0 0.0
    %3119 = vmatprep.subr.mxu0 0.0
    %3120 = vmatpush1.msra.mxu0 0.0
    %3121 = vmatprep.subr.mxu0 0.0
    %3122 = vmatpush1.msra.mxu0 0.0
    %3123 = vmatprep.subr.mxu0 0.0
    %3124 = vmatpush1.msra.mxu0 0.0
    %3125 = vmatprep.subr.mxu0 0.0
    %3126 = vmatpush1.msra.mxu0 0.0
    %3127 = vmatprep.subr.mxu0 0.0
    %3128 = vmatpush1.msra.mxu0 0.0
    %3129 = vmatprep.subr.mxu0 0.0
    %3130 = vmatpush1.msra.mxu0 0.0
    %3131 = vmatprep.subr.mxu0 0.0
    %3132 = vmatpush1.msra.mxu0 0.0
    %3133 = vmatprep.subr.mxu0 0.0
    %3134 = vmatpush1.msra.mxu0 0.0
    %3135 = vmatprep.subr.mxu0 0.0
    %3136 = vmatpush1.msra.mxu0 0.0
    %3137 = vmatprep.subr.mxu0 0.0
    %3138 = vmatpush1.msra.mxu0 0.0
    %3139 = vmatprep.subr.mxu0 0.0
    %3140 = vmatpush1.msra.mxu0 0.0
    %3141 = vmatprep.subr.mxu0 0.0
    %3142 = vmatpush1.msra.mxu0 0.0
    %3143 = vmatprep.subr.mxu0 0.0
    %3144 = vmatpush1.msra.mxu0 0.0
    %3145 = vmatprep.subr.mxu0 0.0
    %3146 = vmatpush1.msra.mxu0 %v3110
    %3147 = vmatprep.subr.mxu0 0.0
    %3148 = vmatpush2.msra.mxu0 0.0
    %3149 = vmatprep.subr.mxu0 0.0
    %3150 = vmatpush2.msra.mxu0 0.0
    %3151 = vmatprep.subr.mxu0 0.0
    %3152 = vmatpush2.msra.mxu0 0.0
    %3153 = vmatprep.subr.mxu0 0.0
    %3154 = vmatpush2.msra.mxu0 0.0
    %3155 = vmatprep.subr.mxu0 0.0
    %3156 = vmatpush2.msra.mxu0 0.0
    %3157 = vmatprep.subr.mxu0 0.0
    %3158 = vmatpush2.msra.mxu0 0.0
    %3159 = vmatprep.subr.mxu0 0.0
    %3160 = vmatpush2.msra.mxu0 0.0
    %3161 = vmatprep.subr.mxu0 0.0
    %3162 = vmatpush2.msra.mxu0 0.0
    %3163 = vmatprep.subr.mxu0 0.0
    %3164 = vmatpush2.msra.mxu0 0.0
    %3165 = vmatprep.subr.mxu0 0.0
    %3166 = vmatpush2.msra.mxu0 0.0
    %3167 = vmatprep.subr.mxu0 0.0
    %3168 = vmatpush2.msra.mxu0 0.0
    %3169 = vmatprep.subr.mxu0 0.0
    %3170 = vmatpush2.msra.mxu0 0.0
    %3171 = vmatprep.subr.mxu0 0.0
    %3172 = vmatpush2.msra.mxu0 0.0
    %3173 = vmatprep.subr.mxu0 0.0
    %3174 = vmatpush2.msra.mxu0 0.0
    %3175 = vmatprep.subr.mxu0 0.0
    %3176 = vmatpush2.msra.mxu0 0.0
    %3177 = vmatprep.subr.mxu0 0.0
    %3178 = vmatpush2.msra.mxu0 0.0
    %3179 = vmatprep.mubr.f32.mxu0 0.0
    %3180 = vmatmul.mubr.f32.gmra.mxu0 %v3113
    %v3181 = vpop.f32.mrf.mxu0
    %v3182 = vadd.f32 0.0, %v3181
    %v3183 = vpop.f32.mrf.mxu0
    %3184 = vdwg.mxu0
    %v3186 = vsel %vm252, %v3106, 0
    %v3189 = vsel %vm252, %v3182, 0
    %3191 = vmatprep.subr.mxu0 0.0
    %3192 = vmatpush1.msra.mxu0 0.0
    %3193 = vmatprep.subr.mxu0 0.0
    %3194 = vmatpush1.msra.mxu0 0.0
    %3195 = vmatprep.subr.mxu0 0.0
    %3196 = vmatpush1.msra.mxu0 0.0
    %3197 = vmatprep.subr.mxu0 0.0
    %3198 = vmatpush1.msra.mxu0 0.0
    %3199 = vmatprep.subr.mxu0 0.0
    %3200 = vmatpush1.msra.mxu0 0.0
    %3201 = vmatprep.subr.mxu0 0.0
    %3202 = vmatpush1.msra.mxu0 0.0
    %3203 = vmatprep.subr.mxu0 0.0
    %3204 = vmatpush1.msra.mxu0 0.0
    %3205 = vmatprep.subr.mxu0 0.0
    %3206 = vmatpush1.msra.mxu0 0.0
    %3207 = vmatprep.subr.mxu0 0.0
    %3208 = vmatpush1.msra.mxu0 0.0
    %3209 = vmatprep.subr.mxu0 0.0
    %3210 = vmatpush1.msra.mxu0 0.0
    %3211 = vmatprep.subr.mxu0 0.0
    %3212 = vmatpush1.msra.mxu0 0.0
    %3213 = vmatprep.subr.mxu0 0.0
    %3214 = vmatpush1.msra.mxu0 0.0
    %3215 = vmatprep.subr.mxu0 0.0
    %3216 = vmatpush1.msra.mxu0 0.0
    %3217 = vmatprep.subr.mxu0 0.0
    %3218 = vmatpush1.msra.mxu0 0.0
    %3219 = vmatprep.subr.mxu0 0.0
    %3220 = vmatpush1.msra.mxu0 0.0
    %3221 = vmatprep.subr.mxu0 0.0
    %3222 = vmatpush1.msra.mxu0 %v2033
    %3223 = vmatprep.subr.mxu0 0.0
    %3224 = vmatpush2.msra.mxu0 0.0
    %3225 = vmatprep.subr.mxu0 0.0
    %3226 = vmatpush2.msra.mxu0 0.0
    %3227 = vmatprep.subr.mxu0 0.0
    %3228 = vmatpush2.msra.mxu0 0.0
    %3229 = vmatprep.subr.mxu0 0.0
    %3230 = vmatpush2.msra.mxu0 0.0
    %3231 = vmatprep.subr.mxu0 0.0
    %3232 = vmatpush2.msra.mxu0 0.0
    %3233 = vmatprep.subr.mxu0 0.0
    %3234 = vmatpush2.msra.mxu0 0.0
    %3235 = vmatprep.subr.mxu0 0.0
    %3236 = vmatpush2.msra.mxu0 0.0
    %3237 = vmatprep.subr.mxu0 0.0
    %3238 = vmatpush2.msra.mxu0 0.0
    %3239 = vmatprep.subr.mxu0 0.0
    %3240 = vmatpush2.msra.mxu0 0.0
    %3241 = vmatprep.subr.mxu0 0.0
    %3242 = vmatpush2.msra.mxu0 0.0
    %3243 = vmatprep.subr.mxu0 0.0
    %3244 = vmatpush2.msra.mxu0 0.0
    %3245 = vmatprep.subr.mxu0 0.0
    %3246 = vmatpush2.msra.mxu0 0.0
    %3247 = vmatprep.subr.mxu0 0.0
    %3248 = vmatpush2.msra.mxu0 0.0
    %3249 = vmatprep.subr.mxu0 0.0
    %3250 = vmatpush2.msra.mxu0 0.0
    %3251 = vmatprep.subr.mxu0 0.0
    %3252 = vmatpush2.msra.mxu0 0.0
    %3253 = vmatprep.subr.mxu0 0.0
    %3254 = vmatpush2.msra.mxu0 0.0
    %3255 = vmatprep.mubr.f32.mxu0 0.0
    %3256 = vmatmul.mubr.f32.gmra.mxu0 %v3186
    %v3257 = vpop.f32.mrf.mxu0
    %v3258 = vadd.f32 0.0, %v3257
    %v3259 = vpop.f32.mrf.mxu0
    %3260 = vmatprep.mubr.f32.mxu0 0.0
    %3261 = vmatmul.mubr.f32.gmra.mxu0 %v3189
    %v3262 = vpop.f32.mrf.mxu0
    %v3263 = vadd.f32 0.0, %v3262
    %v3264 = vpop.f32.mrf.mxu0
    %3265 = vdwg.mxu0
    %v3266 = vadd.f32 %v2847, %v3258
    %v3267 = vadd.f32 %v2852, %v3263
    %3268 = vrot.lane.b32.xlu0 %v2022, 104
    %v3269 = vpop.permute.xlu0 %3268
    %3270 = vrot.lane.b32.xlu0 %v2022, 72
    %v3271 = vpop.permute.xlu0 %3270
    %v3272 = vsel %vm252, %v3269, 0
    %v3274 = vsel %vm252, %v3271, 0
    %3276 = vmatprep.subr.mxu0 0.0
    %3277 = vmatpush1.xpose.msra.mxu0 0.0
    %3278 = vmatprep.subr.mxu0 0.0
    %3279 = vmatpush1.xpose.msra.mxu0 0.0
    %3280 = vmatprep.subr.mxu0 0.0
    %3281 = vmatpush1.xpose.msra.mxu0 0.0
    %3282 = vmatprep.subr.mxu0 0.0
    %3283 = vmatpush1.xpose.msra.mxu0 0.0
    %3284 = vmatprep.subr.mxu0 0.0
    %3285 = vmatpush1.xpose.msra.mxu0 0.0
    %3286 = vmatprep.subr.mxu0 0.0
    %3287 = vmatpush1.xpose.msra.mxu0 0.0
    %3288 = vmatprep.subr.mxu0 0.0
    %3289 = vmatpush1.xpose.msra.mxu0 0.0
    %3290 = vmatprep.subr.mxu0 0.0
    %3291 = vmatpush1.xpose.msra.mxu0 0.0
    %3292 = vmatprep.subr.mxu0 0.0
    %3293 = vmatpush1.xpose.msra.mxu0 0.0
    %3294 = vmatprep.subr.mxu0 0.0
    %3295 = vmatpush1.xpose.msra.mxu0 0.0
    %3296 = vmatprep.subr.mxu0 0.0
    %3297 = vmatpush1.xpose.msra.mxu0 0.0
    %3298 = vmatprep.subr.mxu0 0.0
    %3299 = vmatpush1.xpose.msra.mxu0 0.0
    %3300 = vmatprep.subr.mxu0 0.0
    %3301 = vmatpush1.xpose.msra.mxu0 0.0
    %3302 = vmatprep.subr.mxu0 0.0
    %3303 = vmatpush1.xpose.msra.mxu0 0.0
    %3304 = vmatprep.subr.mxu0 0.0
    %3305 = vmatpush1.xpose.msra.mxu0 0.0
    %3306 = vmatprep.subr.mxu0 0.0
    %3307 = vmatpush1.xpose.msra.mxu0 %v3274
    %3308 = vmatprep.subr.mxu0 0.0
    %3309 = vmatpush2.xpose.msra.mxu0 0.0
    %3310 = vmatprep.subr.mxu0 0.0
    %3311 = vmatpush2.xpose.msra.mxu0 0.0
    %3312 = vmatprep.subr.mxu0 0.0
    %3313 = vmatpush2.xpose.msra.mxu0 0.0
    %3314 = vmatprep.subr.mxu0 0.0
    %3315 = vmatpush2.xpose.msra.mxu0 0.0
    %3316 = vmatprep.subr.mxu0 0.0
    %3317 = vmatpush2.xpose.msra.mxu0 0.0
    %3318 = vmatprep.subr.mxu0 0.0
    %3319 = vmatpush2.xpose.msra.mxu0 0.0
    %3320 = vmatprep.subr.mxu0 0.0
    %3321 = vmatpush2.xpose.msra.mxu0 0.0
    %3322 = vmatprep.subr.mxu0 0.0
    %3323 = vmatpush2.xpose.msra.mxu0 0.0
    %3324 = vmatprep.subr.mxu0 0.0
    %3325 = vmatpush2.xpose.msra.mxu0 0.0
    %3326 = vmatprep.subr.mxu0 0.0
    %3327 = vmatpush2.xpose.msra.mxu0 0.0
    %3328 = vmatprep.subr.mxu0 0.0
    %3329 = vmatpush2.xpose.msra.mxu0 0.0
    %3330 = vmatprep.subr.mxu0 0.0
    %3331 = vmatpush2.xpose.msra.mxu0 0.0
    %3332 = vmatprep.subr.mxu0 0.0
    %3333 = vmatpush2.xpose.msra.mxu0 0.0
    %3334 = vmatprep.subr.mxu0 0.0
    %3335 = vmatpush2.xpose.msra.mxu0 0.0
    %3336 = vmatprep.subr.mxu0 0.0
    %3337 = vmatpush2.xpose.msra.mxu0 0.0
    %3338 = vmatprep.subr.mxu0 0.0
    %3339 = vmatpush2.xpose.msra.mxu0 0.0
    %3340 = vmatprep.mubr.f32.mxu0 0.0
    %3341 = vmatmul.mubr.f32.gmra.mxu0 %v3272
    %v3342 = vpop.f32.mrf.mxu0
    %v3343 = vadd.f32 0.0, %v3342
    %v3344 = vpop.f32.mrf.mxu0
    %3345 = vdwg.mxu0
    %3346 = vrot.lane.b32.xlu0 %v2027, 104
    %v3347 = vpop.permute.xlu0 %3346
    %3348 = vrot.lane.b32.xlu0 %v2027, 72
    %v3349 = vpop.permute.xlu0 %3348
    %v3350 = vsel %vm252, %v3347, 0
    %v3352 = vsel %vm252, %v3349, 0
    %3354 = vmatprep.subr.mxu0 0.0
    %3355 = vmatpush1.xpose.msra.mxu0 0.0
    %3356 = vmatprep.subr.mxu0 0.0
    %3357 = vmatpush1.xpose.msra.mxu0 0.0
    %3358 = vmatprep.subr.mxu0 0.0
    %3359 = vmatpush1.xpose.msra.mxu0 0.0
    %3360 = vmatprep.subr.mxu0 0.0
    %3361 = vmatpush1.xpose.msra.mxu0 0.0
    %3362 = vmatprep.subr.mxu0 0.0
    %3363 = vmatpush1.xpose.msra.mxu0 0.0
    %3364 = vmatprep.subr.mxu0 0.0
    %3365 = vmatpush1.xpose.msra.mxu0 0.0
    %3366 = vmatprep.subr.mxu0 0.0
    %3367 = vmatpush1.xpose.msra.mxu0 0.0
    %3368 = vmatprep.subr.mxu0 0.0
    %3369 = vmatpush1.xpose.msra.mxu0 0.0
    %3370 = vmatprep.subr.mxu0 0.0
    %3371 = vmatpush1.xpose.msra.mxu0 0.0
    %3372 = vmatprep.subr.mxu0 0.0
    %3373 = vmatpush1.xpose.msra.mxu0 0.0
    %3374 = vmatprep.subr.mxu0 0.0
    %3375 = vmatpush1.xpose.msra.mxu0 0.0
    %3376 = vmatprep.subr.mxu0 0.0
    %3377 = vmatpush1.xpose.msra.mxu0 0.0
    %3378 = vmatprep.subr.mxu0 0.0
    %3379 = vmatpush1.xpose.msra.mxu0 0.0
    %3380 = vmatprep.subr.mxu0 0.0
    %3381 = vmatpush1.xpose.msra.mxu0 0.0
    %3382 = vmatprep.subr.mxu0 0.0
    %3383 = vmatpush1.xpose.msra.mxu0 0.0
    %3384 = vmatprep.subr.mxu0 0.0
    %3385 = vmatpush1.xpose.msra.mxu0 %v3352
    %3386 = vmatprep.subr.mxu0 0.0
    %3387 = vmatpush2.xpose.msra.mxu0 0.0
    %3388 = vmatprep.subr.mxu0 0.0
    %3389 = vmatpush2.xpose.msra.mxu0 0.0
    %3390 = vmatprep.subr.mxu0 0.0
    %3391 = vmatpush2.xpose.msra.mxu0 0.0
    %3392 = vmatprep.subr.mxu0 0.0
    %3393 = vmatpush2.xpose.msra.mxu0 0.0
    %3394 = vmatprep.subr.mxu0 0.0
    %3395 = vmatpush2.xpose.msra.mxu0 0.0
    %3396 = vmatprep.subr.mxu0 0.0
    %3397 = vmatpush2.xpose.msra.mxu0 0.0
    %3398 = vmatprep.subr.mxu0 0.0
    %3399 = vmatpush2.xpose.msra.mxu0 0.0
    %3400 = vmatprep.subr.mxu0 0.0
    %3401 = vmatpush2.xpose.msra.mxu0 0.0
    %3402 = vmatprep.subr.mxu0 0.0
    %3403 = vmatpush2.xpose.msra.mxu0 0.0
    %3404 = vmatprep.subr.mxu0 0.0
    %3405 = vmatpush2.xpose.msra.mxu0 0.0
    %3406 = vmatprep.subr.mxu0 0.0
    %3407 = vmatpush2.xpose.msra.mxu0 0.0
    %3408 = vmatprep.subr.mxu0 0.0
    %3409 = vmatpush2.xpose.msra.mxu0 0.0
    %3410 = vmatprep.subr.mxu0 0.0
    %3411 = vmatpush2.xpose.msra.mxu0 0.0
    %3412 = vmatprep.subr.mxu0 0.0
    %3413 = vmatpush2.xpose.msra.mxu0 0.0
    %3414 = vmatprep.subr.mxu0 0.0
    %3415 = vmatpush2.xpose.msra.mxu0 0.0
    %3416 = vmatprep.subr.mxu0 0.0
    %3417 = vmatpush2.xpose.msra.mxu0 0.0
    %3418 = vmatprep.mubr.f32.mxu0 0.0
    %3419 = vmatmul.mubr.f32.gmra.mxu0 %v3350
    %v3420 = vpop.f32.mrf.mxu0
    %v3421 = vadd.f32 0.0, %v3420
    %v3422 = vpop.f32.mrf.mxu0
    %3423 = vdwg.mxu0
    %v3424 = vsel %vm252, %v3343, -inf
    %3425 = vmax.xlane.f32.xlu0 %v3424
    %v3426 = vpop.xlane.xlu0 %3425
    %v3427 = vsel %vm252, %v3421, -inf
    %3428 = vmax.xlane.f32.xlu0 %v3427
    %v3429 = vpop.xlane.xlu0 %3428
    %v3430 = vsub.f32 %v3343, %v3426
    %v3431 = vsub.f32 %v3421, %v3429
    %v3432 = vmul.f32 %v3430, 1.442695
    %v3433 = vpow.pop %v3432
    %v3434 = vmul.f32 %v3431, 1.442695
    %v3435 = vpow.pop %v3434
    %v3436 = vsel %vm252, %v3433, 0.0
    %3437 = vadd.xlane.f32.xlu0 %v3436
    %v3438 = vpop.xlane.xlu0 %3437
    %v3439 = vsel %vm252, %v3435, 0.0
    %3440 = vadd.xlane.f32.xlu0 %v3439
    %v3441 = vpop.xlane.xlu0 %3440
    %v3442 = vrcp.pop %v3438
    %v3443 = vrcp.pop %v3441
    %v3444 = vmul.f32 %v3433, %v3442
    %v3445 = vmul.f32 %v3435, %v3443
    %3446 = vrot.lane.b32.xlu0 %v2022, 40
    %v3447 = vpop.permute.xlu0 %3446
    %v3450 = vsel %vm252, %v3444, 0
    %3452 = vmatprep.subr.mxu0 0.0
    %3453 = vmatpush1.msra.mxu0 0.0
    %3454 = vmatprep.subr.mxu0 0.0
    %3455 = vmatpush1.msra.mxu0 0.0
    %3456 = vmatprep.subr.mxu0 0.0
    %3457 = vmatpush1.msra.mxu0 0.0
    %3458 = vmatprep.subr.mxu0 0.0
    %3459 = vmatpush1.msra.mxu0 0.0
    %3460 = vmatprep.subr.mxu0 0.0
    %3461 = vmatpush1.msra.mxu0 0.0
    %3462 = vmatprep.subr.mxu0 0.0
    %3463 = vmatpush1.msra.mxu0 0.0
    %3464 = vmatprep.subr.mxu0 0.0
    %3465 = vmatpush1.msra.mxu0 0.0
    %3466 = vmatprep.subr.mxu0 0.0
    %3467 = vmatpush1.msra.mxu0 0.0
    %3468 = vmatprep.subr.mxu0 0.0
    %3469 = vmatpush1.msra.mxu0 0.0
    %3470 = vmatprep.subr.mxu0 0.0
    %3471 = vmatpush1.msra.mxu0 0.0
    %3472 = vmatprep.subr.mxu0 0.0
    %3473 = vmatpush1.msra.mxu0 0.0
    %3474 = vmatprep.subr.mxu0 0.0
    %3475 = vmatpush1.msra.mxu0 0.0
    %3476 = vmatprep.subr.mxu0 0.0
    %3477 = vmatpush1.msra.mxu0 0.0
    %3478 = vmatprep.subr.mxu0 0.0
    %3479 = vmatpush1.msra.mxu0 0.0
    %3480 = vmatprep.subr.mxu0 0.0
    %3481 = vmatpush1.msra.mxu0 0.0
    %3482 = vmatprep.subr.mxu0 0.0
    %3483 = vmatpush1.msra.mxu0 %v3447
    %3484 = vmatprep.subr.mxu0 0.0
    %3485 = vmatpush2.msra.mxu0 0.0
    %3486 = vmatprep.subr.mxu0 0.0
    %3487 = vmatpush2.msra.mxu0 0.0
    %3488 = vmatprep.subr.mxu0 0.0
    %3489 = vmatpush2.msra.mxu0 0.0
    %3490 = vmatprep.subr.mxu0 0.0
    %3491 = vmatpush2.msra.mxu0 0.0
    %3492 = vmatprep.subr.mxu0 0.0
    %3493 = vmatpush2.msra.mxu0 0.0
    %3494 = vmatprep.subr.mxu0 0.0
    %3495 = vmatpush2.msra.mxu0 0.0
    %3496 = vmatprep.subr.mxu0 0.0
    %3497 = vmatpush2.msra.mxu0 0.0
    %3498 = vmatprep.subr.mxu0 0.0
    %3499 = vmatpush2.msra.mxu0 0.0
    %3500 = vmatprep.subr.mxu0 0.0
    %3501 = vmatpush2.msra.mxu0 0.0
    %3502 = vmatprep.subr.mxu0 0.0
    %3503 = vmatpush2.msra.mxu0 0.0
    %3504 = vmatprep.subr.mxu0 0.0
    %3505 = vmatpush2.msra.mxu0 0.0
    %3506 = vmatprep.subr.mxu0 0.0
    %3507 = vmatpush2.msra.mxu0 0.0
    %3508 = vmatprep.subr.mxu0 0.0
    %3509 = vmatpush2.msra.mxu0 0.0
    %3510 = vmatprep.subr.mxu0 0.0
    %3511 = vmatpush2.msra.mxu0 0.0
    %3512 = vmatprep.subr.mxu0 0.0
    %3513 = vmatpush2.msra.mxu0 0.0
    %3514 = vmatprep.subr.mxu0 0.0
    %3515 = vmatpush2.msra.mxu0 0.0
    %3516 = vmatprep.mubr.f32.mxu0 0.0
    %3517 = vmatmul.mubr.f32.gmra.mxu0 %v3450
    %v3518 = vpop.f32.mrf.mxu0
    %v3519 = vadd.f32 0.0, %v3518
    %v3520 = vpop.f32.mrf.mxu0
    %3521 = vdwg.mxu0
    %3522 = vrot.lane.b32.xlu0 %v2027, 40
    %v3523 = vpop.permute.xlu0 %3522
    %v3526 = vsel %vm252, %v3445, 0
    %3528 = vmatprep.subr.mxu0 0.0
    %3529 = vmatpush1.msra.mxu0 0.0
    %3530 = vmatprep.subr.mxu0 0.0
    %3531 = vmatpush1.msra.mxu0 0.0
    %3532 = vmatprep.subr.mxu0 0.0
    %3533 = vmatpush1.msra.mxu0 0.0
    %3534 = vmatprep.subr.mxu0 0.0
    %3535 = vmatpush1.msra.mxu0 0.0
    %3536 = vmatprep.subr.mxu0 0.0
    %3537 = vmatpush1.msra.mxu0 0.0
    %3538 = vmatprep.subr.mxu0 0.0
    %3539 = vmatpush1.msra.mxu0 0.0
    %3540 = vmatprep.subr.mxu0 0.0
    %3541 = vmatpush1.msra.mxu0 0.0
    %3542 = vmatprep.subr.mxu0 0.0
    %3543 = vmatpush1.msra.mxu0 0.0
    %3544 = vmatprep.subr.mxu0 0.0
    %3545 = vmatpush1.msra.mxu0 0.0
    %3546 = vmatprep.subr.mxu0 0.0
    %3547 = vmatpush1.msra.mxu0 0.0
    %3548 = vmatprep.subr.mxu0 0.0
    %3549 = vmatpush1.msra.mxu0 0.0
    %3550 = vmatprep.subr.mxu0 0.0
    %3551 = vmatpush1.msra.mxu0 0.0
    %3552 = vmatprep.subr.mxu0 0.0
    %3553 = vmatpush1.msra.mxu0 0.0
    %3554 = vmatprep.subr.mxu0 0.0
    %3555 = vmatpush1.msra.mxu0 0.0
    %3556 = vmatprep.subr.mxu0 0.0
    %3557 = vmatpush1.msra.mxu0 0.0
    %3558 = vmatprep.subr.mxu0 0.0
    %3559 = vmatpush1.msra.mxu0 %v3523
    %3560 = vmatprep.subr.mxu0 0.0
    %3561 = vmatpush2.msra.mxu0 0.0
    %3562 = vmatprep.subr.mxu0 0.0
    %3563 = vmatpush2.msra.mxu0 0.0
    %3564 = vmatprep.subr.mxu0 0.0
    %3565 = vmatpush2.msra.mxu0 0.0
    %3566 = vmatprep.subr.mxu0 0.0
    %3567 = vmatpush2.msra.mxu0 0.0
    %3568 = vmatprep.subr.mxu0 0.0
    %3569 = vmatpush2.msra.mxu0 0.0
    %3570 = vmatprep.subr.mxu0 0.0
    %3571 = vmatpush2.msra.mxu0 0.0
    %3572 = vmatprep.subr.mxu0 0.0
    %3573 = vmatpush2.msra.mxu0 0.0
    %3574 = vmatprep.subr.mxu0 0.0
    %3575 = vmatpush2.msra.mxu0 0.0
    %3576 = vmatprep.subr.mxu0 0.0
    %3577 = vmatpush2.msra.mxu0 0.0
    %3578 = vmatprep.subr.mxu0 0.0
    %3579 = vmatpush2.msra.mxu0 0.0
    %3580 = vmatprep.subr.mxu0 0.0
    %3581 = vmatpush2.msra.mxu0 0.0
    %3582 = vmatprep.subr.mxu0 0.0
    %3583 = vmatpush2.msra.mxu0 0.0
    %3584 = vmatprep.subr.mxu0 0.0
    %3585 = vmatpush2.msra.mxu0 0.0
    %3586 = vmatprep.subr.mxu0 0.0
    %3587 = vmatpush2.msra.mxu0 0.0
    %3588 = vmatprep.subr.mxu0 0.0
    %3589 = vmatpush2.msra.mxu0 0.0
    %3590 = vmatprep.subr.mxu0 0.0
    %3591 = vmatpush2.msra.mxu0 0.0
    %3592 = vmatprep.mubr.f32.mxu0 0.0
    %3593 = vmatmul.mubr.f32.gmra.mxu0 %v3526
    %v3594 = vpop.f32.mrf.mxu0
    %v3595 = vadd.f32 0.0, %v3594
    %v3596 = vpop.f32.mrf.mxu0
    %3597 = vdwg.mxu0
    %v3599 = vsel %vm252, %v3519, 0
    %v3602 = vsel %vm252, %v3595, 0
    %3604 = vmatprep.subr.mxu0 0.0
    %3605 = vmatpush1.msra.mxu0 0.0
    %3606 = vmatprep.subr.mxu0 0.0
    %3607 = vmatpush1.msra.mxu0 0.0
    %3608 = vmatprep.subr.mxu0 0.0
    %3609 = vmatpush1.msra.mxu0 0.0
    %3610 = vmatprep.subr.mxu0 0.0
    %3611 = vmatpush1.msra.mxu0 0.0
    %3612 = vmatprep.subr.mxu0 0.0
    %3613 = vmatpush1.msra.mxu0 0.0
    %3614 = vmatprep.subr.mxu0 0.0
    %3615 = vmatpush1.msra.mxu0 0.0
    %3616 = vmatprep.subr.mxu0 0.0
    %3617 = vmatpush1.msra.mxu0 0.0
    %3618 = vmatprep.subr.mxu0 0.0
    %3619 = vmatpush1.msra.mxu0 0.0
    %3620 = vmatprep.subr.mxu0 0.0
    %3621 = vmatpush1.msra.mxu0 0.0
    %3622 = vmatprep.subr.mxu0 0.0
    %3623 = vmatpush1.msra.mxu0 0.0
    %3624 = vmatprep.subr.mxu0 0.0
    %3625 = vmatpush1.msra.mxu0 0.0
    %3626 = vmatprep.subr.mxu0 0.0
    %3627 = vmatpush1.msra.mxu0 0.0
    %3628 = vmatprep.subr.mxu0 0.0
    %3629 = vmatpush1.msra.mxu0 0.0
    %3630 = vmatprep.subr.mxu0 0.0
    %3631 = vmatpush1.msra.mxu0 0.0
    %3632 = vmatprep.subr.mxu0 0.0
    %3633 = vmatpush1.msra.mxu0 0.0
    %3634 = vmatprep.subr.mxu0 0.0
    %3635 = vmatpush1.msra.mxu0 %v2034
    %3636 = vmatprep.subr.mxu0 0.0
    %3637 = vmatpush2.msra.mxu0 0.0
    %3638 = vmatprep.subr.mxu0 0.0
    %3639 = vmatpush2.msra.mxu0 0.0
    %3640 = vmatprep.subr.mxu0 0.0
    %3641 = vmatpush2.msra.mxu0 0.0
    %3642 = vmatprep.subr.mxu0 0.0
    %3643 = vmatpush2.msra.mxu0 0.0
    %3644 = vmatprep.subr.mxu0 0.0
    %3645 = vmatpush2.msra.mxu0 0.0
    %3646 = vmatprep.subr.mxu0 0.0
    %3647 = vmatpush2.msra.mxu0 0.0
    %3648 = vmatprep.subr.mxu0 0.0
    %3649 = vmatpush2.msra.mxu0 0.0
    %3650 = vmatprep.subr.mxu0 0.0
    %3651 = vmatpush2.msra.mxu0 0.0
    %3652 = vmatprep.subr.mxu0 0.0
    %3653 = vmatpush2.msra.mxu0 0.0
    %3654 = vmatprep.subr.mxu0 0.0
    %3655 = vmatpush2.msra.mxu0 0.0
    %3656 = vmatprep.subr.mxu0 0.0
    %3657 = vmatpush2.msra.mxu0 0.0
    %3658 = vmatprep.subr.mxu0 0.0
    %3659 = vmatpush2.msra.mxu0 0.0
    %3660 = vmatprep.subr.mxu0 0.0
    %3661 = vmatpush2.msra.mxu0 0.0
    %3662 = vmatprep.subr.mxu0 0.0
    %3663 = vmatpush2.msra.mxu0 0.0
    %3664 = vmatprep.subr.mxu0 0.0
    %3665 = vmatpush2.msra.mxu0 0.0
    %3666 = vmatprep.subr.mxu0 0.0
    %3667 = vmatpush2.msra.mxu0 0.0
    %3668 = vmatprep.mubr.f32.mxu0 0.0
    %3669 = vmatmul.mubr.f32.gmra.mxu0 %v3599
    %v3670 = vpop.f32.mrf.mxu0
    %v3671 = vadd.f32 0.0, %v3670
    %v3672 = vpop.f32.mrf.mxu0
    %3673 = vmatprep.mubr.f32.mxu0 0.0
    %3674 = vmatmul.mubr.f32.gmra.mxu0 %v3602
    %v3675 = vpop.f32.mrf.mxu0
    %v3676 = vadd.f32 0.0, %v3675
    %v3677 = vpop.f32.mrf.mxu0
    %3678 = vdwg.mxu0
    %v3679 = vadd.f32 %v3266, %v3671
    %v3680 = vadd.f32 %v3267, %v3676
    %v3681 = vadd.f32 %v1904, %v3679
    %v3682 = vadd.f32 %v1905, %v3680
    %v3683 = vlaneseq
    %v3684 = vshrl.u32 %v3683, 7
    %v3685 = vsub.s32 1, %v3684
    %v3686 = vrot.slane %v118, %v3685
    %v3687 = vadd.f32 %v3681, %v3686
    %v3688 = vadd.f32 %v3682, %v3686
    %v3689 = vld [vmem:[#allocation7] sm:$0xff]
    %v3690 = vld [vmem:[#allocation7 + $0x8] sm:$0xff]
    %v3691 = vsel %vm121, %v3689, 0.0
    %3692 = vadd.xlane.f32.xlu0 %v3691
    %v3693 = vpop.xlane.xlu0 %3692
    %v3694 = vsel %vm121, %v3690, 0.0
    %3695 = vadd.xlane.f32.xlu0 %v3694
    %v3696 = vpop.xlane.xlu0 %3695
    %v3697 = vmul.f32 %v3693, 0.03125
    %v3698 = vmul.f32 %v3696, 0.03125
    %v3699 = vsub.f32 %v3689, %v3697
    %v3700 = vsub.f32 %v3690, %v3698
    %v3701 = vmul.f32 %v3699, %v3699
    %v3702 = vmul.f32 %v3700, %v3700
    %v3703 = vsel %vm121, %v3701, 0.0
    %3704 = vadd.xlane.f32.xlu0 %v3703
    %v3705 = vpop.xlane.xlu0 %3704
    %v3706 = vsel %vm121, %v3702, 0.0
    %3707 = vadd.xlane.f32.xlu0 %v3706
    %v3708 = vpop.xlane.xlu0 %3707
    %v3709 = vmul.f32 %v3705, 0.03125
    %v3710 = vmul.f32 %v3708, 0.03125
    %v3711 = vadd.f32 %v3709, 1e-05
    %v3712 = vadd.f32 %v3710, 1e-05
    %v3713 = vrsqrt.pop %v3711
    %v3714 = vrsqrt.pop %v3712
    %v3715 = vmul.f32 %v3699, %v3713
    %v3716 = vmul.f32 %v3700, %v3714
    %v3717 = vlaneseq
    %v3718 = vshrl.u32 %v3717, 7
    %v3719 = vsub.s32 2, %v3718
    %v3720 = vrot.slane %v116, %v3719
    %v3721 = vmul.f32 %v3715, %v3720
    %v3722 = vmul.f32 %v3716, %v3720
    %v3723 = vlaneseq
    %v3724 = vshrl.u32 %v3723, 7
    %v3725 = vsub.s32 2, %v3724
    %v3726 = vrot.slane %v117, %v3725
    %v3727 = vadd.f32 %v3721, %v3726
    %v3728 = vadd.f32 %v3722, %v3726
    %s3729 = scalar_lea.vmem %s5, 64
    %v3730 = vld [vmem:[%s3729] sm:$0xff]
    %v3731 = vld [vmem:[%s3729 + $0x8] sm:$0xff]
    %v3732 = vld [vmem:[%s3729 + $0x10] sm:$0xff]
    %v3733 = vld [vmem:[%s3729 + $0x18] sm:$0xff]
    %v3735 = vsel %vm121, %v3727, 0
    %v3738 = vsel %vm121, %v3728, 0
    %3740 = vmatprep.subr.mxu0 0.0
    %3741 = vmatpush1.msra.mxu0 0.0
    %3742 = vmatprep.subr.mxu0 0.0
    %3743 = vmatpush1.msra.mxu0 0.0
    %3744 = vmatprep.subr.mxu0 0.0
    %3745 = vmatpush1.msra.mxu0 0.0
    %3746 = vmatprep.subr.mxu0 0.0
    %3747 = vmatpush1.msra.mxu0 0.0
    %3748 = vmatprep.subr.mxu0 0.0
    %3749 = vmatpush1.msra.mxu0 0.0
    %3750 = vmatprep.subr.mxu0 0.0
    %3751 = vmatpush1.msra.mxu0 0.0
    %3752 = vmatprep.subr.mxu0 0.0
    %3753 = vmatpush1.msra.mxu0 0.0
    %3754 = vmatprep.subr.mxu0 0.0
    %3755 = vmatpush1.msra.mxu0 0.0
    %3756 = vmatprep.subr.mxu0 0.0
    %3757 = vmatpush1.msra.mxu0 0.0
    %3758 = vmatprep.subr.mxu0 0.0
    %3759 = vmatpush1.msra.mxu0 0.0
    %3760 = vmatprep.subr.mxu0 0.0
    %3761 = vmatpush1.msra.mxu0 0.0
    %3762 = vmatprep.subr.mxu0 0.0
    %3763 = vmatpush1.msra.mxu0 0.0
    %3764 = vmatprep.subr.mxu0 0.0
    %3765 = vmatpush1.msra.mxu0 %v3733
    %3766 = vmatprep.subr.mxu0 0.0
    %3767 = vmatpush1.msra.mxu0 %v3732
    %3768 = vmatprep.subr.mxu0 0.0
    %3769 = vmatpush1.msra.mxu0 %v3731
    %3770 = vmatprep.subr.mxu0 0.0
    %3771 = vmatpush1.msra.mxu0 %v3730
    %3772 = vmatprep.subr.mxu0 0.0
    %3773 = vmatpush2.msra.mxu0 0.0
    %3774 = vmatprep.subr.mxu0 0.0
    %3775 = vmatpush2.msra.mxu0 0.0
    %3776 = vmatprep.subr.mxu0 0.0
    %3777 = vmatpush2.msra.mxu0 0.0
    %3778 = vmatprep.subr.mxu0 0.0
    %3779 = vmatpush2.msra.mxu0 0.0
    %3780 = vmatprep.subr.mxu0 0.0
    %3781 = vmatpush2.msra.mxu0 0.0
    %3782 = vmatprep.subr.mxu0 0.0
    %3783 = vmatpush2.msra.mxu0 0.0
    %3784 = vmatprep.subr.mxu0 0.0
    %3785 = vmatpush2.msra.mxu0 0.0
    %3786 = vmatprep.subr.mxu0 0.0
    %3787 = vmatpush2.msra.mxu0 0.0
    %3788 = vmatprep.subr.mxu0 0.0
    %3789 = vmatpush2.msra.mxu0 0.0
    %3790 = vmatprep.subr.mxu0 0.0
    %3791 = vmatpush2.msra.mxu0 0.0
    %3792 = vmatprep.subr.mxu0 0.0
    %3793 = vmatpush2.msra.mxu0 0.0
    %3794 = vmatprep.subr.mxu0 0.0
    %3795 = vmatpush2.msra.mxu0 0.0
    %3796 = vmatprep.subr.mxu0 0.0
    %3797 = vmatpush2.msra.mxu0 0.0
    %3798 = vmatprep.subr.mxu0 0.0
    %3799 = vmatpush2.msra.mxu0 0.0
    %3800 = vmatprep.subr.mxu0 0.0
    %3801 = vmatpush2.msra.mxu0 0.0
    %3802 = vmatprep.subr.mxu0 0.0
    %3803 = vmatpush2.msra.mxu0 0.0
    %3804 = vmatprep.mubr.f32.mxu0 0.0
    %3805 = vmatmul.mubr.f32.gmra.mxu0 %v3735
    %v3806 = vpop.f32.mrf.mxu0
    %v3807 = vadd.f32 0.0, %v3806
    %v3808 = vpop.f32.mrf.mxu0
    %3809 = vmatprep.mubr.f32.mxu0 0.0
    %3810 = vmatmul.mubr.f32.gmra.mxu0 %v3738
    %v3811 = vpop.f32.mrf.mxu0
    %v3812 = vadd.f32 0.0, %v3811
    %v3813 = vpop.f32.mrf.mxu0
    %3814 = vdwg.mxu0
    %s3815 = scalar_lea.vmem %s6, 64
    %v3816 = vld [vmem:[%s3815] sm:$0xff]
    %v3817 = vld [vmem:[%s3815 + $0x8] sm:$0xff]
    %v3818 = vld [vmem:[%s3815 + $0x10] sm:$0xff]
    %v3819 = vld [vmem:[%s3815 + $0x18] sm:$0xff]
    %3821 = vrot.lane.b32.xlu0 %v3807, 96
    %v3822 = vpop.permute.xlu0 %3821
    %v3823 = vsel %vm252, %v3807, 0
    %v3825 = vsel %vm252, %v3822, 0
    %3827 = vmatprep.subr.mxu0 0.0
    %3828 = vmatpush1.xpose.msra.mxu0 0.0
    %3829 = vmatprep.subr.mxu0 0.0
    %3830 = vmatpush1.xpose.msra.mxu0 0.0
    %3831 = vmatprep.subr.mxu0 0.0
    %3832 = vmatpush1.xpose.msra.mxu0 0.0
    %3833 = vmatprep.subr.mxu0 0.0
    %3834 = vmatpush1.xpose.msra.mxu0 0.0
    %3835 = vmatprep.subr.mxu0 0.0
    %3836 = vmatpush1.xpose.msra.mxu0 0.0
    %3837 = vmatprep.subr.mxu0 0.0
    %3838 = vmatpush1.xpose.msra.mxu0 0.0
    %3839 = vmatprep.subr.mxu0 0.0
    %3840 = vmatpush1.xpose.msra.mxu0 0.0
    %3841 = vmatprep.subr.mxu0 0.0
    %3842 = vmatpush1.xpose.msra.mxu0 0.0
    %3843 = vmatprep.subr.mxu0 0.0
    %3844 = vmatpush1.xpose.msra.mxu0 0.0
    %3845 = vmatprep.subr.mxu0 0.0
    %3846 = vmatpush1.xpose.msra.mxu0 0.0
    %3847 = vmatprep.subr.mxu0 0.0
    %3848 = vmatpush1.xpose.msra.mxu0 0.0
    %3849 = vmatprep.subr.mxu0 0.0
    %3850 = vmatpush1.xpose.msra.mxu0 0.0
    %3851 = vmatprep.subr.mxu0 0.0
    %3852 = vmatpush1.xpose.msra.mxu0 0.0
    %3853 = vmatprep.subr.mxu0 0.0
    %3854 = vmatpush1.xpose.msra.mxu0 0.0
    %3855 = vmatprep.subr.mxu0 0.0
    %3856 = vmatpush1.xpose.msra.mxu0 0.0
    %3857 = vmatprep.subr.mxu0 0.0
    %3858 = vmatpush1.xpose.msra.mxu0 %v3825
    %3859 = vmatprep.subr.mxu0 0.0
    %3860 = vmatpush2.xpose.msra.mxu0 0.0
    %3861 = vmatprep.subr.mxu0 0.0
    %3862 = vmatpush2.xpose.msra.mxu0 0.0
    %3863 = vmatprep.subr.mxu0 0.0
    %3864 = vmatpush2.xpose.msra.mxu0 0.0
    %3865 = vmatprep.subr.mxu0 0.0
    %3866 = vmatpush2.xpose.msra.mxu0 0.0
    %3867 = vmatprep.subr.mxu0 0.0
    %3868 = vmatpush2.xpose.msra.mxu0 0.0
    %3869 = vmatprep.subr.mxu0 0.0
    %3870 = vmatpush2.xpose.msra.mxu0 0.0
    %3871 = vmatprep.subr.mxu0 0.0
    %3872 = vmatpush2.xpose.msra.mxu0 0.0
    %3873 = vmatprep.subr.mxu0 0.0
    %3874 = vmatpush2.xpose.msra.mxu0 0.0
    %3875 = vmatprep.subr.mxu0 0.0
    %3876 = vmatpush2.xpose.msra.mxu0 0.0
    %3877 = vmatprep.subr.mxu0 0.0
    %3878 = vmatpush2.xpose.msra.mxu0 0.0
    %3879 = vmatprep.subr.mxu0 0.0
    %3880 = vmatpush2.xpose.msra.mxu0 0.0
    %3881 = vmatprep.subr.mxu0 0.0
    %3882 = vmatpush2.xpose.msra.mxu0 0.0
    %3883 = vmatprep.subr.mxu0 0.0
    %3884 = vmatpush2.xpose.msra.mxu0 0.0
    %3885 = vmatprep.subr.mxu0 0.0
    %3886 = vmatpush2.xpose.msra.mxu0 0.0
    %3887 = vmatprep.subr.mxu0 0.0
    %3888 = vmatpush2.xpose.msra.mxu0 0.0
    %3889 = vmatprep.subr.mxu0 0.0
    %3890 = vmatpush2.xpose.msra.mxu0 0.0
    %3891 = vmatprep.mubr.f32.mxu0 0.0
    %3892 = vmatmul.mubr.f32.gmra.mxu0 %v3823
    %v3893 = vpop.f32.mrf.mxu0
    %v3894 = vadd.f32 0.0, %v3893
    %v3895 = vpop.f32.mrf.mxu0
    %3896 = vdwg.mxu0
    %3898 = vrot.lane.b32.xlu0 %v3812, 96
    %v3899 = vpop.permute.xlu0 %3898
    %v3900 = vsel %vm252, %v3812, 0
    %v3902 = vsel %vm252, %v3899, 0
    %3904 = vmatprep.subr.mxu0 0.0
    %3905 = vmatpush1.xpose.msra.mxu0 0.0
    %3906 = vmatprep.subr.mxu0 0.0
    %3907 = vmatpush1.xpose.msra.mxu0 0.0
    %3908 = vmatprep.subr.mxu0 0.0
    %3909 = vmatpush1.xpose.msra.mxu0 0.0
    %3910 = vmatprep.subr.mxu0 0.0
    %3911 = vmatpush1.xpose.msra.mxu0 0.0
    %3912 = vmatprep.subr.mxu0 0.0
    %3913 = vmatpush1.xpose.msra.mxu0 0.0
    %3914 = vmatprep.subr.mxu0 0.0
    %3915 = vmatpush1.xpose.msra.mxu0 0.0
    %3916 = vmatprep.subr.mxu0 0.0
    %3917 = vmatpush1.xpose.msra.mxu0 0.0
    %3918 = vmatprep.subr.mxu0 0.0
    %3919 = vmatpush1.xpose.msra.mxu0 0.0
    %3920 = vmatprep.subr.mxu0 0.0
    %3921 = vmatpush1.xpose.msra.mxu0 0.0
    %3922 = vmatprep.subr.mxu0 0.0
    %3923 = vmatpush1.xpose.msra.mxu0 0.0
    %3924 = vmatprep.subr.mxu0 0.0
    %3925 = vmatpush1.xpose.msra.mxu0 0.0
    %3926 = vmatprep.subr.mxu0 0.0
    %3927 = vmatpush1.xpose.msra.mxu0 0.0
    %3928 = vmatprep.subr.mxu0 0.0
    %3929 = vmatpush1.xpose.msra.mxu0 0.0
    %3930 = vmatprep.subr.mxu0 0.0
    %3931 = vmatpush1.xpose.msra.mxu0 0.0
    %3932 = vmatprep.subr.mxu0 0.0
    %3933 = vmatpush1.xpose.msra.mxu0 0.0
    %3934 = vmatprep.subr.mxu0 0.0
    %3935 = vmatpush1.xpose.msra.mxu0 %v3902
    %3936 = vmatprep.subr.mxu0 0.0
    %3937 = vmatpush2.xpose.msra.mxu0 0.0
    %3938 = vmatprep.subr.mxu0 0.0
    %3939 = vmatpush2.xpose.msra.mxu0 0.0
    %3940 = vmatprep.subr.mxu0 0.0
    %3941 = vmatpush2.xpose.msra.mxu0 0.0
    %3942 = vmatprep.subr.mxu0 0.0
    %3943 = vmatpush2.xpose.msra.mxu0 0.0
    %3944 = vmatprep.subr.mxu0 0.0
    %3945 = vmatpush2.xpose.msra.mxu0 0.0
    %3946 = vmatprep.subr.mxu0 0.0
    %3947 = vmatpush2.xpose.msra.mxu0 0.0
    %3948 = vmatprep.subr.mxu0 0.0
    %3949 = vmatpush2.xpose.msra.mxu0 0.0
    %3950 = vmatprep.subr.mxu0 0.0
    %3951 = vmatpush2.xpose.msra.mxu0 0.0
    %3952 = vmatprep.subr.mxu0 0.0
    %3953 = vmatpush2.xpose.msra.mxu0 0.0
    %3954 = vmatprep.subr.mxu0 0.0
    %3955 = vmatpush2.xpose.msra.mxu0 0.0
    %3956 = vmatprep.subr.mxu0 0.0
    %3957 = vmatpush2.xpose.msra.mxu0 0.0
    %3958 = vmatprep.subr.mxu0 0.0
    %3959 = vmatpush2.xpose.msra.mxu0 0.0
    %3960 = vmatprep.subr.mxu0 0.0
    %3961 = vmatpush2.xpose.msra.mxu0 0.0
    %3962 = vmatprep.subr.mxu0 0.0
    %3963 = vmatpush2.xpose.msra.mxu0 0.0
    %3964 = vmatprep.subr.mxu0 0.0
    %3965 = vmatpush2.xpose.msra.mxu0 0.0
    %3966 = vmatprep.subr.mxu0 0.0
    %3967 = vmatpush2.xpose.msra.mxu0 0.0
    %3968 = vmatprep.mubr.f32.mxu0 0.0
    %3969 = vmatmul.mubr.f32.gmra.mxu0 %v3900
    %v3970 = vpop.f32.mrf.mxu0
    %v3971 = vadd.f32 0.0, %v3970
    %v3972 = vpop.f32.mrf.mxu0
    %3973 = vdwg.mxu0
    %v3974 = vsel %vm252, %v3894, -inf
    %3975 = vmax.xlane.f32.xlu0 %v3974
    %v3976 = vpop.xlane.xlu0 %3975
    %v3977 = vsel %vm252, %v3971, -inf
    %3978 = vmax.xlane.f32.xlu0 %v3977
    %v3979 = vpop.xlane.xlu0 %3978
    %v3980 = vsub.f32 %v3894, %v3976
    %v3981 = vsub.f32 %v3971, %v3979
    %v3982 = vmul.f32 %v3980, 1.442695
    %v3983 = vpow.pop %v3982
    %v3984 = vmul.f32 %v3981, 1.442695
    %v3985 = vpow.pop %v3984
    %v3986 = vsel %vm252, %v3983, 0.0
    %3987 = vadd.xlane.f32.xlu0 %v3986
    %v3988 = vpop.xlane.xlu0 %3987
    %v3989 = vsel %vm252, %v3985, 0.0
    %3990 = vadd.xlane.f32.xlu0 %v3989
    %v3991 = vpop.xlane.xlu0 %3990
    %v3992 = vrcp.pop %v3988
    %v3993 = vrcp.pop %v3991
    %v3994 = vmul.f32 %v3983, %v3992
    %v3995 = vmul.f32 %v3985, %v3993
    %3996 = vrot.lane.b32.xlu0 %v3807, 64
    %v3997 = vpop.permute.xlu0 %3996
    %v4000 = vsel %vm252, %v3994, 0
    %4002 = vmatprep.subr.mxu0 0.0
    %4003 = vmatpush1.msra.mxu0 0.0
    %4004 = vmatprep.subr.mxu0 0.0
    %4005 = vmatpush1.msra.mxu0 0.0
    %4006 = vmatprep.subr.mxu0 0.0
    %4007 = vmatpush1.msra.mxu0 0.0
    %4008 = vmatprep.subr.mxu0 0.0
    %4009 = vmatpush1.msra.mxu0 0.0
    %4010 = vmatprep.subr.mxu0 0.0
    %4011 = vmatpush1.msra.mxu0 0.0
    %4012 = vmatprep.subr.mxu0 0.0
    %4013 = vmatpush1.msra.mxu0 0.0
    %4014 = vmatprep.subr.mxu0 0.0
    %4015 = vmatpush1.msra.mxu0 0.0
    %4016 = vmatprep.subr.mxu0 0.0
    %4017 = vmatpush1.msra.mxu0 0.0
    %4018 = vmatprep.subr.mxu0 0.0
    %4019 = vmatpush1.msra.mxu0 0.0
    %4020 = vmatprep.subr.mxu0 0.0
    %4021 = vmatpush1.msra.mxu0 0.0
    %4022 = vmatprep.subr.mxu0 0.0
    %4023 = vmatpush1.msra.mxu0 0.0
    %4024 = vmatprep.subr.mxu0 0.0
    %4025 = vmatpush1.msra.mxu0 0.0
    %4026 = vmatprep.subr.mxu0 0.0
    %4027 = vmatpush1.msra.mxu0 0.0
    %4028 = vmatprep.subr.mxu0 0.0
    %4029 = vmatpush1.msra.mxu0 0.0
    %4030 = vmatprep.subr.mxu0 0.0
    %4031 = vmatpush1.msra.mxu0 0.0
    %4032 = vmatprep.subr.mxu0 0.0
    %4033 = vmatpush1.msra.mxu0 %v3997
    %4034 = vmatprep.subr.mxu0 0.0
    %4035 = vmatpush2.msra.mxu0 0.0
    %4036 = vmatprep.subr.mxu0 0.0
    %4037 = vmatpush2.msra.mxu0 0.0
    %4038 = vmatprep.subr.mxu0 0.0
    %4039 = vmatpush2.msra.mxu0 0.0
    %4040 = vmatprep.subr.mxu0 0.0
    %4041 = vmatpush2.msra.mxu0 0.0
    %4042 = vmatprep.subr.mxu0 0.0
    %4043 = vmatpush2.msra.mxu0 0.0
    %4044 = vmatprep.subr.mxu0 0.0
    %4045 = vmatpush2.msra.mxu0 0.0
    %4046 = vmatprep.subr.mxu0 0.0
    %4047 = vmatpush2.msra.mxu0 0.0
    %4048 = vmatprep.subr.mxu0 0.0
    %4049 = vmatpush2.msra.mxu0 0.0
    %4050 = vmatprep.subr.mxu0 0.0
    %4051 = vmatpush2.msra.mxu0 0.0
    %4052 = vmatprep.subr.mxu0 0.0
    %4053 = vmatpush2.msra.mxu0 0.0
    %4054 = vmatprep.subr.mxu0 0.0
    %4055 = vmatpush2.msra.mxu0 0.0
    %4056 = vmatprep.subr.mxu0 0.0
    %4057 = vmatpush2.msra.mxu0 0.0
    %4058 = vmatprep.subr.mxu0 0.0
    %4059 = vmatpush2.msra.mxu0 0.0
    %4060 = vmatprep.subr.mxu0 0.0
    %4061 = vmatpush2.msra.mxu0 0.0
    %4062 = vmatprep.subr.mxu0 0.0
    %4063 = vmatpush2.msra.mxu0 0.0
    %4064 = vmatprep.subr.mxu0 0.0
    %4065 = vmatpush2.msra.mxu0 0.0
    %4066 = vmatprep.mubr.f32.mxu0 0.0
    %4067 = vmatmul.mubr.f32.gmra.mxu0 %v4000
    %v4068 = vpop.f32.mrf.mxu0
    %v4069 = vadd.f32 0.0, %v4068
    %v4070 = vpop.f32.mrf.mxu0
    %4071 = vdwg.mxu0
    %4072 = vrot.lane.b32.xlu0 %v3812, 64
    %v4073 = vpop.permute.xlu0 %4072
    %v4076 = vsel %vm252, %v3995, 0
    %4078 = vmatprep.subr.mxu0 0.0
    %4079 = vmatpush1.msra.mxu0 0.0
    %4080 = vmatprep.subr.mxu0 0.0
    %4081 = vmatpush1.msra.mxu0 0.0
    %4082 = vmatprep.subr.mxu0 0.0
    %4083 = vmatpush1.msra.mxu0 0.0
    %4084 = vmatprep.subr.mxu0 0.0
    %4085 = vmatpush1.msra.mxu0 0.0
    %4086 = vmatprep.subr.mxu0 0.0
    %4087 = vmatpush1.msra.mxu0 0.0
    %4088 = vmatprep.subr.mxu0 0.0
    %4089 = vmatpush1.msra.mxu0 0.0
    %4090 = vmatprep.subr.mxu0 0.0
    %4091 = vmatpush1.msra.mxu0 0.0
    %4092 = vmatprep.subr.mxu0 0.0
    %4093 = vmatpush1.msra.mxu0 0.0
    %4094 = vmatprep.subr.mxu0 0.0
    %4095 = vmatpush1.msra.mxu0 0.0
    %4096 = vmatprep.subr.mxu0 0.0
    %4097 = vmatpush1.msra.mxu0 0.0
    %4098 = vmatprep.subr.mxu0 0.0
    %4099 = vmatpush1.msra.mxu0 0.0
    %4100 = vmatprep.subr.mxu0 0.0
    %4101 = vmatpush1.msra.mxu0 0.0
    %4102 = vmatprep.subr.mxu0 0.0
    %4103 = vmatpush1.msra.mxu0 0.0
    %4104 = vmatprep.subr.mxu0 0.0
    %4105 = vmatpush1.msra.mxu0 0.0
    %4106 = vmatprep.subr.mxu0 0.0
    %4107 = vmatpush1.msra.mxu0 0.0
    %4108 = vmatprep.subr.mxu0 0.0
    %4109 = vmatpush1.msra.mxu0 %v4073
    %4110 = vmatprep.subr.mxu0 0.0
    %4111 = vmatpush2.msra.mxu0 0.0
    %4112 = vmatprep.subr.mxu0 0.0
    %4113 = vmatpush2.msra.mxu0 0.0
    %4114 = vmatprep.subr.mxu0 0.0
    %4115 = vmatpush2.msra.mxu0 0.0
    %4116 = vmatprep.subr.mxu0 0.0
    %4117 = vmatpush2.msra.mxu0 0.0
    %4118 = vmatprep.subr.mxu0 0.0
    %4119 = vmatpush2.msra.mxu0 0.0
    %4120 = vmatprep.subr.mxu0 0.0
    %4121 = vmatpush2.msra.mxu0 0.0
    %4122 = vmatprep.subr.mxu0 0.0
    %4123 = vmatpush2.msra.mxu0 0.0
    %4124 = vmatprep.subr.mxu0 0.0
    %4125 = vmatpush2.msra.mxu0 0.0
    %4126 = vmatprep.subr.mxu0 0.0
    %4127 = vmatpush2.msra.mxu0 0.0
    %4128 = vmatprep.subr.mxu0 0.0
    %4129 = vmatpush2.msra.mxu0 0.0
    %4130 = vmatprep.subr.mxu0 0.0
    %4131 = vmatpush2.msra.mxu0 0.0
    %4132 = vmatprep.subr.mxu0 0.0
    %4133 = vmatpush2.msra.mxu0 0.0
    %4134 = vmatprep.subr.mxu0 0.0
    %4135 = vmatpush2.msra.mxu0 0.0
    %4136 = vmatprep.subr.mxu0 0.0
    %4137 = vmatpush2.msra.mxu0 0.0
    %4138 = vmatprep.subr.mxu0 0.0
    %4139 = vmatpush2.msra.mxu0 0.0
    %4140 = vmatprep.subr.mxu0 0.0
    %4141 = vmatpush2.msra.mxu0 0.0
    %4142 = vmatprep.mubr.f32.mxu0 0.0
    %4143 = vmatmul.mubr.f32.gmra.mxu0 %v4076
    %v4144 = vpop.f32.mrf.mxu0
    %v4145 = vadd.f32 0.0, %v4144
    %v4146 = vpop.f32.mrf.mxu0
    %4147 = vdwg.mxu0
    %4148 = vrot.lane.b32.xlu0 %v3807, 120
    %v4149 = vpop.permute.xlu0 %4148
    %4150 = vrot.lane.b32.xlu0 %v3807, 88
    %v4151 = vpop.permute.xlu0 %4150
    %v4152 = vsel %vm252, %v4149, 0
    %v4154 = vsel %vm252, %v4151, 0
    %4156 = vmatprep.subr.mxu0 0.0
    %4157 = vmatpush1.xpose.msra.mxu0 0.0
    %4158 = vmatprep.subr.mxu0 0.0
    %4159 = vmatpush1.xpose.msra.mxu0 0.0
    %4160 = vmatprep.subr.mxu0 0.0
    %4161 = vmatpush1.xpose.msra.mxu0 0.0
    %4162 = vmatprep.subr.mxu0 0.0
    %4163 = vmatpush1.xpose.msra.mxu0 0.0
    %4164 = vmatprep.subr.mxu0 0.0
    %4165 = vmatpush1.xpose.msra.mxu0 0.0
    %4166 = vmatprep.subr.mxu0 0.0
    %4167 = vmatpush1.xpose.msra.mxu0 0.0
    %4168 = vmatprep.subr.mxu0 0.0
    %4169 = vmatpush1.xpose.msra.mxu0 0.0
    %4170 = vmatprep.subr.mxu0 0.0
    %4171 = vmatpush1.xpose.msra.mxu0 0.0
    %4172 = vmatprep.subr.mxu0 0.0
    %4173 = vmatpush1.xpose.msra.mxu0 0.0
    %4174 = vmatprep.subr.mxu0 0.0
    %4175 = vmatpush1.xpose.msra.mxu0 0.0
    %4176 = vmatprep.subr.mxu0 0.0
    %4177 = vmatpush1.xpose.msra.mxu0 0.0
    %4178 = vmatprep.subr.mxu0 0.0
    %4179 = vmatpush1.xpose.msra.mxu0 0.0
    %4180 = vmatprep.subr.mxu0 0.0
    %4181 = vmatpush1.xpose.msra.mxu0 0.0
    %4182 = vmatprep.subr.mxu0 0.0
    %4183 = vmatpush1.xpose.msra.mxu0 0.0
    %4184 = vmatprep.subr.mxu0 0.0
    %4185 = vmatpush1.xpose.msra.mxu0 0.0
    %4186 = vmatprep.subr.mxu0 0.0
    %4187 = vmatpush1.xpose.msra.mxu0 %v4154
    %4188 = vmatprep.subr.mxu0 0.0
    %4189 = vmatpush2.xpose.msra.mxu0 0.0
    %4190 = vmatprep.subr.mxu0 0.0
    %4191 = vmatpush2.xpose.msra.mxu0 0.0
    %4192 = vmatprep.subr.mxu0 0.0
    %4193 = vmatpush2.xpose.msra.mxu0 0.0
    %4194 = vmatprep.subr.mxu0 0.0
    %4195 = vmatpush2.xpose.msra.mxu0 0.0
    %4196 = vmatprep.subr.mxu0 0.0
    %4197 = vmatpush2.xpose.msra.mxu0 0.0
    %4198 = vmatprep.subr.mxu0 0.0
    %4199 = vmatpush2.xpose.msra.mxu0 0.0
    %4200 = vmatprep.subr.mxu0 0.0
    %4201 = vmatpush2.xpose.msra.mxu0 0.0
    %4202 = vmatprep.subr.mxu0 0.0
    %4203 = vmatpush2.xpose.msra.mxu0 0.0
    %4204 = vmatprep.subr.mxu0 0.0
    %4205 = vmatpush2.xpose.msra.mxu0 0.0
    %4206 = vmatprep.subr.mxu0 0.0
    %4207 = vmatpush2.xpose.msra.mxu0 0.0
    %4208 = vmatprep.subr.mxu0 0.0
    %4209 = vmatpush2.xpose.msra.mxu0 0.0
    %4210 = vmatprep.subr.mxu0 0.0
    %4211 = vmatpush2.xpose.msra.mxu0 0.0
    %4212 = vmatprep.subr.mxu0 0.0
    %4213 = vmatpush2.xpose.msra.mxu0 0.0
    %4214 = vmatprep.subr.mxu0 0.0
    %4215 = vmatpush2.xpose.msra.mxu0 0.0
    %4216 = vmatprep.subr.mxu0 0.0
    %4217 = vmatpush2.xpose.msra.mxu0 0.0
    %4218 = vmatprep.subr.mxu0 0.0
    %4219 = vmatpush2.xpose.msra.mxu0 0.0
    %4220 = vmatprep.mubr.f32.mxu0 0.0
    %4221 = vmatmul.mubr.f32.gmra.mxu0 %v4152
    %v4222 = vpop.f32.mrf.mxu0
    %v4223 = vadd.f32 0.0, %v4222
    %v4224 = vpop.f32.mrf.mxu0
    %4225 = vdwg.mxu0
    %4226 = vrot.lane.b32.xlu0 %v3812, 120
    %v4227 = vpop.permute.xlu0 %4226
    %4228 = vrot.lane.b32.xlu0 %v3812, 88
    %v4229 = vpop.permute.xlu0 %4228
    %v4230 = vsel %vm252, %v4227, 0
    %v4232 = vsel %vm252, %v4229, 0
    %4234 = vmatprep.subr.mxu0 0.0
    %4235 = vmatpush1.xpose.msra.mxu0 0.0
    %4236 = vmatprep.subr.mxu0 0.0
    %4237 = vmatpush1.xpose.msra.mxu0 0.0
    %4238 = vmatprep.subr.mxu0 0.0
    %4239 = vmatpush1.xpose.msra.mxu0 0.0
    %4240 = vmatprep.subr.mxu0 0.0
    %4241 = vmatpush1.xpose.msra.mxu0 0.0
    %4242 = vmatprep.subr.mxu0 0.0
    %4243 = vmatpush1.xpose.msra.mxu0 0.0
    %4244 = vmatprep.subr.mxu0 0.0
    %4245 = vmatpush1.xpose.msra.mxu0 0.0
    %4246 = vmatprep.subr.mxu0 0.0
    %4247 = vmatpush1.xpose.msra.mxu0 0.0
    %4248 = vmatprep.subr.mxu0 0.0
    %4249 = vmatpush1.xpose.msra.mxu0 0.0
    %4250 = vmatprep.subr.mxu0 0.0
    %4251 = vmatpush1.xpose.msra.mxu0 0.0
    %4252 = vmatprep.subr.mxu0 0.0
    %4253 = vmatpush1.xpose.msra.mxu0 0.0
    %4254 = vmatprep.subr.mxu0 0.0
    %4255 = vmatpush1.xpose.msra.mxu0 0.0
    %4256 = vmatprep.subr.mxu0 0.0
    %4257 = vmatpush1.xpose.msra.mxu0 0.0
    %4258 = vmatprep.subr.mxu0 0.0
    %4259 = vmatpush1.xpose.msra.mxu0 0.0
    %4260 = vmatprep.subr.mxu0 0.0
    %4261 = vmatpush1.xpose.msra.mxu0 0.0
    %4262 = vmatprep.subr.mxu0 0.0
    %4263 = vmatpush1.xpose.msra.mxu0 0.0
    %4264 = vmatprep.subr.mxu0 0.0
    %4265 = vmatpush1.xpose.msra.mxu0 %v4232
    %4266 = vmatprep.subr.mxu0 0.0
    %4267 = vmatpush2.xpose.msra.mxu0 0.0
    %4268 = vmatprep.subr.mxu0 0.0
    %4269 = vmatpush2.xpose.msra.mxu0 0.0
    %4270 = vmatprep.subr.mxu0 0.0
    %4271 = vmatpush2.xpose.msra.mxu0 0.0
    %4272 = vmatprep.subr.mxu0 0.0
    %4273 = vmatpush2.xpose.msra.mxu0 0.0
    %4274 = vmatprep.subr.mxu0 0.0
    %4275 = vmatpush2.xpose.msra.mxu0 0.0
    %4276 = vmatprep.subr.mxu0 0.0
    %4277 = vmatpush2.xpose.msra.mxu0 0.0
    %4278 = vmatprep.subr.mxu0 0.0
    %4279 = vmatpush2.xpose.msra.mxu0 0.0
    %4280 = vmatprep.subr.mxu0 0.0
    %4281 = vmatpush2.xpose.msra.mxu0 0.0
    %4282 = vmatprep.subr.mxu0 0.0
    %4283 = vmatpush2.xpose.msra.mxu0 0.0
    %4284 = vmatprep.subr.mxu0 0.0
    %4285 = vmatpush2.xpose.msra.mxu0 0.0
    %4286 = vmatprep.subr.mxu0 0.0
    %4287 = vmatpush2.xpose.msra.mxu0 0.0
    %4288 = vmatprep.subr.mxu0 0.0
    %4289 = vmatpush2.xpose.msra.mxu0 0.0
    %4290 = vmatprep.subr.mxu0 0.0
    %4291 = vmatpush2.xpose.msra.mxu0 0.0
    %4292 = vmatprep.subr.mxu0 0.0
    %4293 = vmatpush2.xpose.msra.mxu0 0.0
    %4294 = vmatprep.subr.mxu0 0.0
    %4295 = vmatpush2.xpose.msra.mxu0 0.0
    %4296 = vmatprep.subr.mxu0 0.0
    %4297 = vmatpush2.xpose.msra.mxu0 0.0
    %4298 = vmatprep.mubr.f32.mxu0 0.0
    %4299 = vmatmul.mubr.f32.gmra.mxu0 %v4230
    %v4300 = vpop.f32.mrf.mxu0
    %v4301 = vadd.f32 0.0, %v4300
    %v4302 = vpop.f32.mrf.mxu0
    %4303 = vdwg.mxu0
    %v4304 = vsel %vm252, %v4223, -inf
    %4305 = vmax.xlane.f32.xlu0 %v4304
    %v4306 = vpop.xlane.xlu0 %4305
    %v4307 = vsel %vm252, %v4301, -inf
    %4308 = vmax.xlane.f32.xlu0 %v4307
    %v4309 = vpop.xlane.xlu0 %4308
    %v4310 = vsub.f32 %v4223, %v4306
    %v4311 = vsub.f32 %v4301, %v4309
    %v4312 = vmul.f32 %v4310, 1.442695
    %v4313 = vpow.pop %v4312
    %v4314 = vmul.f32 %v4311, 1.442695
    %v4315 = vpow.pop %v4314
    %v4316 = vsel %vm252, %v4313, 0.0
    %4317 = vadd.xlane.f32.xlu0 %v4316
    %v4318 = vpop.xlane.xlu0 %4317
    %v4319 = vsel %vm252, %v4315, 0.0
    %4320 = vadd.xlane.f32.xlu0 %v4319
    %v4321 = vpop.xlane.xlu0 %4320
    %v4322 = vrcp.pop %v4318
    %v4323 = vrcp.pop %v4321
    %v4324 = vmul.f32 %v4313, %v4322
    %v4325 = vmul.f32 %v4315, %v4323
    %4326 = vrot.lane.b32.xlu0 %v3807, 56
    %v4327 = vpop.permute.xlu0 %4326
    %v4330 = vsel %vm252, %v4324, 0
    %4332 = vmatprep.subr.mxu0 0.0
    %4333 = vmatpush1.msra.mxu0 0.0
    %4334 = vmatprep.subr.mxu0 0.0
    %4335 = vmatpush1.msra.mxu0 0.0
    %4336 = vmatprep.subr.mxu0 0.0
    %4337 = vmatpush1.msra.mxu0 0.0
    %4338 = vmatprep.subr.mxu0 0.0
    %4339 = vmatpush1.msra.mxu0 0.0
    %4340 = vmatprep.subr.mxu0 0.0
    %4341 = vmatpush1.msra.mxu0 0.0
    %4342 = vmatprep.subr.mxu0 0.0
    %4343 = vmatpush1.msra.mxu0 0.0
    %4344 = vmatprep.subr.mxu0 0.0
    %4345 = vmatpush1.msra.mxu0 0.0
    %4346 = vmatprep.subr.mxu0 0.0
    %4347 = vmatpush1.msra.mxu0 0.0
    %4348 = vmatprep.subr.mxu0 0.0
    %4349 = vmatpush1.msra.mxu0 0.0
    %4350 = vmatprep.subr.mxu0 0.0
    %4351 = vmatpush1.msra.mxu0 0.0
    %4352 = vmatprep.subr.mxu0 0.0
    %4353 = vmatpush1.msra.mxu0 0.0
    %4354 = vmatprep.subr.mxu0 0.0
    %4355 = vmatpush1.msra.mxu0 0.0
    %4356 = vmatprep.subr.mxu0 0.0
    %4357 = vmatpush1.msra.mxu0 0.0
    %4358 = vmatprep.subr.mxu0 0.0
    %4359 = vmatpush1.msra.mxu0 0.0
    %4360 = vmatprep.subr.mxu0 0.0
    %4361 = vmatpush1.msra.mxu0 0.0
    %4362 = vmatprep.subr.mxu0 0.0
    %4363 = vmatpush1.msra.mxu0 %v4327
    %4364 = vmatprep.subr.mxu0 0.0
    %4365 = vmatpush2.msra.mxu0 0.0
    %4366 = vmatprep.subr.mxu0 0.0
    %4367 = vmatpush2.msra.mxu0 0.0
    %4368 = vmatprep.subr.mxu0 0.0
    %4369 = vmatpush2.msra.mxu0 0.0
    %4370 = vmatprep.subr.mxu0 0.0
    %4371 = vmatpush2.msra.mxu0 0.0
    %4372 = vmatprep.subr.mxu0 0.0
    %4373 = vmatpush2.msra.mxu0 0.0
    %4374 = vmatprep.subr.mxu0 0.0
    %4375 = vmatpush2.msra.mxu0 0.0
    %4376 = vmatprep.subr.mxu0 0.0
    %4377 = vmatpush2.msra.mxu0 0.0
    %4378 = vmatprep.subr.mxu0 0.0
    %4379 = vmatpush2.msra.mxu0 0.0
    %4380 = vmatprep.subr.mxu0 0.0
    %4381 = vmatpush2.msra.mxu0 0.0
    %4382 = vmatprep.subr.mxu0 0.0
    %4383 = vmatpush2.msra.mxu0 0.0
    %4384 = vmatprep.subr.mxu0 0.0
    %4385 = vmatpush2.msra.mxu0 0.0
    %4386 = vmatprep.subr.mxu0 0.0
    %4387 = vmatpush2.msra.mxu0 0.0
    %4388 = vmatprep.subr.mxu0 0.0
    %4389 = vmatpush2.msra.mxu0 0.0
    %4390 = vmatprep.subr.mxu0 0.0
    %4391 = vmatpush2.msra.mxu0 0.0
    %4392 = vmatprep.subr.mxu0 0.0
    %4393 = vmatpush2.msra.mxu0 0.0
    %4394 = vmatprep.subr.mxu0 0.0
    %4395 = vmatpush2.msra.mxu0 0.0
    %4396 = vmatprep.mubr.f32.mxu0 0.0
    %4397 = vmatmul.mubr.f32.gmra.mxu0 %v4330
    %v4398 = vpop.f32.mrf.mxu0
    %v4399 = vadd.f32 0.0, %v4398
    %v4400 = vpop.f32.mrf.mxu0
    %4401 = vdwg.mxu0
    %4402 = vrot.lane.b32.xlu0 %v3812, 56
    %v4403 = vpop.permute.xlu0 %4402
    %v4406 = vsel %vm252, %v4325, 0
    %4408 = vmatprep.subr.mxu0 0.0
    %4409 = vmatpush1.msra.mxu0 0.0
    %4410 = vmatprep.subr.mxu0 0.0
    %4411 = vmatpush1.msra.mxu0 0.0
    %4412 = vmatprep.subr.mxu0 0.0
    %4413 = vmatpush1.msra.mxu0 0.0
    %4414 = vmatprep.subr.mxu0 0.0
    %4415 = vmatpush1.msra.mxu0 0.0
    %4416 = vmatprep.subr.mxu0 0.0
    %4417 = vmatpush1.msra.mxu0 0.0
    %4418 = vmatprep.subr.mxu0 0.0
    %4419 = vmatpush1.msra.mxu0 0.0
    %4420 = vmatprep.subr.mxu0 0.0
    %4421 = vmatpush1.msra.mxu0 0.0
    %4422 = vmatprep.subr.mxu0 0.0
    %4423 = vmatpush1.msra.mxu0 0.0
    %4424 = vmatprep.subr.mxu0 0.0
    %4425 = vmatpush1.msra.mxu0 0.0
    %4426 = vmatprep.subr.mxu0 0.0
    %4427 = vmatpush1.msra.mxu0 0.0
    %4428 = vmatprep.subr.mxu0 0.0
    %4429 = vmatpush1.msra.mxu0 0.0
    %4430 = vmatprep.subr.mxu0 0.0
    %4431 = vmatpush1.msra.mxu0 0.0
    %4432 = vmatprep.subr.mxu0 0.0
    %4433 = vmatpush1.msra.mxu0 0.0
    %4434 = vmatprep.subr.mxu0 0.0
    %4435 = vmatpush1.msra.mxu0 0.0
    %4436 = vmatprep.subr.mxu0 0.0
    %4437 = vmatpush1.msra.mxu0 0.0
    %4438 = vmatprep.subr.mxu0 0.0
    %4439 = vmatpush1.msra.mxu0 %v4403
    %4440 = vmatprep.subr.mxu0 0.0
    %4441 = vmatpush2.msra.mxu0 0.0
    %4442 = vmatprep.subr.mxu0 0.0
    %4443 = vmatpush2.msra.mxu0 0.0
    %4444 = vmatprep.subr.mxu0 0.0
    %4445 = vmatpush2.msra.mxu0 0.0
    %4446 = vmatprep.subr.mxu0 0.0
    %4447 = vmatpush2.msra.mxu0 0.0
    %4448 = vmatprep.subr.mxu0 0.0
    %4449 = vmatpush2.msra.mxu0 0.0
    %4450 = vmatprep.subr.mxu0 0.0
    %4451 = vmatpush2.msra.mxu0 0.0
    %4452 = vmatprep.subr.mxu0 0.0
    %4453 = vmatpush2.msra.mxu0 0.0
    %4454 = vmatprep.subr.mxu0 0.0
    %4455 = vmatpush2.msra.mxu0 0.0
    %4456 = vmatprep.subr.mxu0 0.0
    %4457 = vmatpush2.msra.mxu0 0.0
    %4458 = vmatprep.subr.mxu0 0.0
    %4459 = vmatpush2.msra.mxu0 0.0
    %4460 = vmatprep.subr.mxu0 0.0
    %4461 = vmatpush2.msra.mxu0 0.0
    %4462 = vmatprep.subr.mxu0 0.0
    %4463 = vmatpush2.msra.mxu0 0.0
    %4464 = vmatprep.subr.mxu0 0.0
    %4465 = vmatpush2.msra.mxu0 0.0
    %4466 = vmatprep.subr.mxu0 0.0
    %4467 = vmatpush2.msra.mxu0 0.0
    %4468 = vmatprep.subr.mxu0 0.0
    %4469 = vmatpush2.msra.mxu0 0.0
    %4470 = vmatprep.subr.mxu0 0.0
    %4471 = vmatpush2.msra.mxu0 0.0
    %4472 = vmatprep.mubr.f32.mxu0 0.0
    %4473 = vmatmul.mubr.f32.gmra.mxu0 %v4406
    %v4474 = vpop.f32.mrf.mxu0
    %v4475 = vadd.f32 0.0, %v4474
    %v4476 = vpop.f32.mrf.mxu0
    %4477 = vdwg.mxu0
    %v4479 = vsel %vm252, %v4399, 0
    %v4482 = vsel %vm252, %v4475, 0
    %4484 = vmatprep.subr.mxu0 0.0
    %4485 = vmatpush1.msra.mxu0 0.0
    %4486 = vmatprep.subr.mxu0 0.0
    %4487 = vmatpush1.msra.mxu0 0.0
    %4488 = vmatprep.subr.mxu0 0.0
    %4489 = vmatpush1.msra.mxu0 0.0
    %4490 = vmatprep.subr.mxu0 0.0
    %4491 = vmatpush1.msra.mxu0 0.0
    %4492 = vmatprep.subr.mxu0 0.0
    %4493 = vmatpush1.msra.mxu0 0.0
    %4494 = vmatprep.subr.mxu0 0.0
    %4495 = vmatpush1.msra.mxu0 0.0
    %4496 = vmatprep.subr.mxu0 0.0
    %4497 = vmatpush1.msra.mxu0 0.0
    %4498 = vmatprep.subr.mxu0 0.0
    %4499 = vmatpush1.msra.mxu0 0.0
    %4500 = vmatprep.subr.mxu0 0.0
    %4501 = vmatpush1.msra.mxu0 0.0
    %4502 = vmatprep.subr.mxu0 0.0
    %4503 = vmatpush1.msra.mxu0 0.0
    %4504 = vmatprep.subr.mxu0 0.0
    %4505 = vmatpush1.msra.mxu0 0.0
    %4506 = vmatprep.subr.mxu0 0.0
    %4507 = vmatpush1.msra.mxu0 0.0
    %4508 = vmatprep.subr.mxu0 0.0
    %4509 = vmatpush1.msra.mxu0 0.0
    %4510 = vmatprep.subr.mxu0 0.0
    %4511 = vmatpush1.msra.mxu0 0.0
    %4512 = vmatprep.subr.mxu0 0.0
    %4513 = vmatpush1.msra.mxu0 0.0
    %4514 = vmatprep.subr.mxu0 0.0
    %4515 = vmatpush1.msra.mxu0 %v3817
    %4516 = vmatprep.subr.mxu0 0.0
    %4517 = vmatpush2.msra.mxu0 0.0
    %4518 = vmatprep.subr.mxu0 0.0
    %4519 = vmatpush2.msra.mxu0 0.0
    %4520 = vmatprep.subr.mxu0 0.0
    %4521 = vmatpush2.msra.mxu0 0.0
    %4522 = vmatprep.subr.mxu0 0.0
    %4523 = vmatpush2.msra.mxu0 0.0
    %4524 = vmatprep.subr.mxu0 0.0
    %4525 = vmatpush2.msra.mxu0 0.0
    %4526 = vmatprep.subr.mxu0 0.0
    %4527 = vmatpush2.msra.mxu0 0.0
    %4528 = vmatprep.subr.mxu0 0.0
    %4529 = vmatpush2.msra.mxu0 0.0
    %4530 = vmatprep.subr.mxu0 0.0
    %4531 = vmatpush2.msra.mxu0 0.0
    %4532 = vmatprep.subr.mxu0 0.0
    %4533 = vmatpush2.msra.mxu0 0.0
    %4534 = vmatprep.subr.mxu0 0.0
    %4535 = vmatpush2.msra.mxu0 0.0
    %4536 = vmatprep.subr.mxu0 0.0
    %4537 = vmatpush2.msra.mxu0 0.0
    %4538 = vmatprep.subr.mxu0 0.0
    %4539 = vmatpush2.msra.mxu0 0.0
    %4540 = vmatprep.subr.mxu0 0.0
    %4541 = vmatpush2.msra.mxu0 0.0
    %4542 = vmatprep.subr.mxu0 0.0
    %4543 = vmatpush2.msra.mxu0 0.0
    %4544 = vmatprep.subr.mxu0 0.0
    %4545 = vmatpush2.msra.mxu0 0.0
    %4546 = vmatprep.subr.mxu0 0.0
    %4547 = vmatpush2.msra.mxu0 0.0
    %4548 = vmatprep.mubr.f32.mxu0 0.0
    %4549 = vmatmul.mubr.f32.gmra.mxu0 %v4479
    %v4550 = vpop.f32.mrf.mxu0
    %v4551 = vadd.f32 0.0, %v4550
    %v4552 = vpop.f32.mrf.mxu0
    %4553 = vmatprep.mubr.f32.mxu0 0.0
    %4554 = vmatmul.mubr.f32.gmra.mxu0 %v4482
    %v4555 = vpop.f32.mrf.mxu0
    %v4556 = vadd.f32 0.0, %v4555
    %v4557 = vpop.f32.mrf.mxu0
    %4558 = vdwg.mxu0
    %v4560 = vsel %vm252, %v4069, 0
    %v4563 = vsel %vm252, %v4145, 0
    %4565 = vmatprep.subr.mxu0 0.0
    %4566 = vmatpush1.msra.mxu0 0.0
    %4567 = vmatprep.subr.mxu0 0.0
    %4568 = vmatpush1.msra.mxu0 0.0
    %4569 = vmatprep.subr.mxu0 0.0
    %4570 = vmatpush1.msra.mxu0 0.0
    %4571 = vmatprep.subr.mxu0 0.0
    %4572 = vmatpush1.msra.mxu0 0.0
    %4573 = vmatprep.subr.mxu0 0.0
    %4574 = vmatpush1.msra.mxu0 0.0
    %4575 = vmatprep.subr.mxu0 0.0
    %4576 = vmatpush1.msra.mxu0 0.0
    %4577 = vmatprep.subr.mxu0 0.0
    %4578 = vmatpush1.msra.mxu0 0.0
    %4579 = vmatprep.subr.mxu0 0.0
    %4580 = vmatpush1.msra.mxu0 0.0
    %4581 = vmatprep.subr.mxu0 0.0
    %4582 = vmatpush1.msra.mxu0 0.0
    %4583 = vmatprep.subr.mxu0 0.0
    %4584 = vmatpush1.msra.mxu0 0.0
    %4585 = vmatprep.subr.mxu0 0.0
    %4586 = vmatpush1.msra.mxu0 0.0
    %4587 = vmatprep.subr.mxu0 0.0
    %4588 = vmatpush1.msra.mxu0 0.0
    %4589 = vmatprep.subr.mxu0 0.0
    %4590 = vmatpush1.msra.mxu0 0.0
    %4591 = vmatprep.subr.mxu0 0.0
    %4592 = vmatpush1.msra.mxu0 0.0
    %4593 = vmatprep.subr.mxu0 0.0
    %4594 = vmatpush1.msra.mxu0 0.0
    %4595 = vmatprep.subr.mxu0 0.0
    %4596 = vmatpush1.msra.mxu0 %v3816
    %4597 = vmatprep.subr.mxu0 0.0
    %4598 = vmatpush2.msra.mxu0 0.0
    %4599 = vmatprep.subr.mxu0 0.0
    %4600 = vmatpush2.msra.mxu0 0.0
    %4601 = vmatprep.subr.mxu0 0.0
    %4602 = vmatpush2.msra.mxu0 0.0
    %4603 = vmatprep.subr.mxu0 0.0
    %4604 = vmatpush2.msra.mxu0 0.0
    %4605 = vmatprep.subr.mxu0 0.0
    %4606 = vmatpush2.msra.mxu0 0.0
    %4607 = vmatprep.subr.mxu0 0.0
    %4608 = vmatpush2.msra.mxu0 0.0
    %4609 = vmatprep.subr.mxu0 0.0
    %4610 = vmatpush2.msra.mxu0 0.0
    %4611 = vmatprep.subr.mxu0 0.0
    %4612 = vmatpush2.msra.mxu0 0.0
    %4613 = vmatprep.subr.mxu0 0.0
    %4614 = vmatpush2.msra.mxu0 0.0
    %4615 = vmatprep.subr.mxu0 0.0
    %4616 = vmatpush2.msra.mxu0 0.0
    %4617 = vmatprep.subr.mxu0 0.0
    %4618 = vmatpush2.msra.mxu0 0.0
    %4619 = vmatprep.subr.mxu0 0.0
    %4620 = vmatpush2.msra.mxu0 0.0
    %4621 = vmatprep.subr.mxu0 0.0
    %4622 = vmatpush2.msra.mxu0 0.0
    %4623 = vmatprep.subr.mxu0 0.0
    %4624 = vmatpush2.msra.mxu0 0.0
    %4625 = vmatprep.subr.mxu0 0.0
    %4626 = vmatpush2.msra.mxu0 0.0
    %4627 = vmatprep.subr.mxu0 0.0
    %4628 = vmatpush2.msra.mxu0 0.0
    %4629 = vmatprep.mubr.f32.mxu0 0.0
    %4630 = vmatmul.mubr.f32.gmra.mxu0 %v4560
    %v4631 = vpop.f32.mrf.mxu0
    %v4632 = vadd.f32 %v4551, %v4631
    %v4633 = vpop.f32.mrf.mxu0
    %4634 = vmatprep.mubr.f32.mxu0 0.0
    %4635 = vmatmul.mubr.f32.gmra.mxu0 %v4563
    %v4636 = vpop.f32.mrf.mxu0
    %v4637 = vadd.f32 %v4556, %v4636
    %v4638 = vpop.f32.mrf.mxu0
    %4639 = vdwg.mxu0
    %4640 = vrot.lane.b32.xlu0 %v3807, 112
    %v4641 = vpop.permute.xlu0 %4640
    %4642 = vrot.lane.b32.xlu0 %v3807, 80
    %v4643 = vpop.permute.xlu0 %4642
    %v4644 = vsel %vm252, %v4641, 0
    %v4646 = vsel %vm252, %v4643, 0
    %4648 = vmatprep.subr.mxu0 0.0
    %4649 = vmatpush1.xpose.msra.mxu0 0.0
    %4650 = vmatprep.subr.mxu0 0.0
    %4651 = vmatpush1.xpose.msra.mxu0 0.0
    %4652 = vmatprep.subr.mxu0 0.0
    %4653 = vmatpush1.xpose.msra.mxu0 0.0
    %4654 = vmatprep.subr.mxu0 0.0
    %4655 = vmatpush1.xpose.msra.mxu0 0.0
    %4656 = vmatprep.subr.mxu0 0.0
    %4657 = vmatpush1.xpose.msra.mxu0 0.0
    %4658 = vmatprep.subr.mxu0 0.0
    %4659 = vmatpush1.xpose.msra.mxu0 0.0
    %4660 = vmatprep.subr.mxu0 0.0
    %4661 = vmatpush1.xpose.msra.mxu0 0.0
    %4662 = vmatprep.subr.mxu0 0.0
    %4663 = vmatpush1.xpose.msra.mxu0 0.0
    %4664 = vmatprep.subr.mxu0 0.0
    %4665 = vmatpush1.xpose.msra.mxu0 0.0
    %4666 = vmatprep.subr.mxu0 0.0
    %4667 = vmatpush1.xpose.msra.mxu0 0.0
    %4668 = vmatprep.subr.mxu0 0.0
    %4669 = vmatpush1.xpose.msra.mxu0 0.0
    %4670 = vmatprep.subr.mxu0 0.0
    %4671 = vmatpush1.xpose.msra.mxu0 0.0
    %4672 = vmatprep.subr.mxu0 0.0
    %4673 = vmatpush1.xpose.msra.mxu0 0.0
    %4674 = vmatprep.subr.mxu0 0.0
    %4675 = vmatpush1.xpose.msra.mxu0 0.0
    %4676 = vmatprep.subr.mxu0 0.0
    %4677 = vmatpush1.xpose.msra.mxu0 0.0
    %4678 = vmatprep.subr.mxu0 0.0
    %4679 = vmatpush1.xpose.msra.mxu0 %v4646
    %4680 = vmatprep.subr.mxu0 0.0
    %4681 = vmatpush2.xpose.msra.mxu0 0.0
    %4682 = vmatprep.subr.mxu0 0.0
    %4683 = vmatpush2.xpose.msra.mxu0 0.0
    %4684 = vmatprep.subr.mxu0 0.0
    %4685 = vmatpush2.xpose.msra.mxu0 0.0
    %4686 = vmatprep.subr.mxu0 0.0
    %4687 = vmatpush2.xpose.msra.mxu0 0.0
    %4688 = vmatprep.subr.mxu0 0.0
    %4689 = vmatpush2.xpose.msra.mxu0 0.0
    %4690 = vmatprep.subr.mxu0 0.0
    %4691 = vmatpush2.xpose.msra.mxu0 0.0
    %4692 = vmatprep.subr.mxu0 0.0
    %4693 = vmatpush2.xpose.msra.mxu0 0.0
    %4694 = vmatprep.subr.mxu0 0.0
    %4695 = vmatpush2.xpose.msra.mxu0 0.0
    %4696 = vmatprep.subr.mxu0 0.0
    %4697 = vmatpush2.xpose.msra.mxu0 0.0
    %4698 = vmatprep.subr.mxu0 0.0
    %4699 = vmatpush2.xpose.msra.mxu0 0.0
    %4700 = vmatprep.subr.mxu0 0.0
    %4701 = vmatpush2.xpose.msra.mxu0 0.0
    %4702 = vmatprep.subr.mxu0 0.0
    %4703 = vmatpush2.xpose.msra.mxu0 0.0
    %4704 = vmatprep.subr.mxu0 0.0
    %4705 = vmatpush2.xpose.msra.mxu0 0.0
    %4706 = vmatprep.subr.mxu0 0.0
    %4707 = vmatpush2.xpose.msra.mxu0 0.0
    %4708 = vmatprep.subr.mxu0 0.0
    %4709 = vmatpush2.xpose.msra.mxu0 0.0
    %4710 = vmatprep.subr.mxu0 0.0
    %4711 = vmatpush2.xpose.msra.mxu0 0.0
    %4712 = vmatprep.mubr.f32.mxu0 0.0
    %4713 = vmatmul.mubr.f32.gmra.mxu0 %v4644
    %v4714 = vpop.f32.mrf.mxu0
    %v4715 = vadd.f32 0.0, %v4714
    %v4716 = vpop.f32.mrf.mxu0
    %4717 = vdwg.mxu0
    %4718 = vrot.lane.b32.xlu0 %v3812, 112
    %v4719 = vpop.permute.xlu0 %4718
    %4720 = vrot.lane.b32.xlu0 %v3812, 80
    %v4721 = vpop.permute.xlu0 %4720
    %v4722 = vsel %vm252, %v4719, 0
    %v4724 = vsel %vm252, %v4721, 0
    %4726 = vmatprep.subr.mxu0 0.0
    %4727 = vmatpush1.xpose.msra.mxu0 0.0
    %4728 = vmatprep.subr.mxu0 0.0
    %4729 = vmatpush1.xpose.msra.mxu0 0.0
    %4730 = vmatprep.subr.mxu0 0.0
    %4731 = vmatpush1.xpose.msra.mxu0 0.0
    %4732 = vmatprep.subr.mxu0 0.0
    %4733 = vmatpush1.xpose.msra.mxu0 0.0
    %4734 = vmatprep.subr.mxu0 0.0
    %4735 = vmatpush1.xpose.msra.mxu0 0.0
    %4736 = vmatprep.subr.mxu0 0.0
    %4737 = vmatpush1.xpose.msra.mxu0 0.0
    %4738 = vmatprep.subr.mxu0 0.0
    %4739 = vmatpush1.xpose.msra.mxu0 0.0
    %4740 = vmatprep.subr.mxu0 0.0
    %4741 = vmatpush1.xpose.msra.mxu0 0.0
    %4742 = vmatprep.subr.mxu0 0.0
    %4743 = vmatpush1.xpose.msra.mxu0 0.0
    %4744 = vmatprep.subr.mxu0 0.0
    %4745 = vmatpush1.xpose.msra.mxu0 0.0
    %4746 = vmatprep.subr.mxu0 0.0
    %4747 = vmatpush1.xpose.msra.mxu0 0.0
    %4748 = vmatprep.subr.mxu0 0.0
    %4749 = vmatpush1.xpose.msra.mxu0 0.0
    %4750 = vmatprep.subr.mxu0 0.0
    %4751 = vmatpush1.xpose.msra.mxu0 0.0
    %4752 = vmatprep.subr.mxu0 0.0
    %4753 = vmatpush1.xpose.msra.mxu0 0.0
    %4754 = vmatprep.subr.mxu0 0.0
    %4755 = vmatpush1.xpose.msra.mxu0 0.0
    %4756 = vmatprep.subr.mxu0 0.0
    %4757 = vmatpush1.xpose.msra.mxu0 %v4724
    %4758 = vmatprep.subr.mxu0 0.0
    %4759 = vmatpush2.xpose.msra.mxu0 0.0
    %4760 = vmatprep.subr.mxu0 0.0
    %4761 = vmatpush2.xpose.msra.mxu0 0.0
    %4762 = vmatprep.subr.mxu0 0.0
    %4763 = vmatpush2.xpose.msra.mxu0 0.0
    %4764 = vmatprep.subr.mxu0 0.0
    %4765 = vmatpush2.xpose.msra.mxu0 0.0
    %4766 = vmatprep.subr.mxu0 0.0
    %4767 = vmatpush2.xpose.msra.mxu0 0.0
    %4768 = vmatprep.subr.mxu0 0.0
    %4769 = vmatpush2.xpose.msra.mxu0 0.0
    %4770 = vmatprep.subr.mxu0 0.0
    %4771 = vmatpush2.xpose.msra.mxu0 0.0
    %4772 = vmatprep.subr.mxu0 0.0
    %4773 = vmatpush2.xpose.msra.mxu0 0.0
    %4774 = vmatprep.subr.mxu0 0.0
    %4775 = vmatpush2.xpose.msra.mxu0 0.0
    %4776 = vmatprep.subr.mxu0 0.0
    %4777 = vmatpush2.xpose.msra.mxu0 0.0
    %4778 = vmatprep.subr.mxu0 0.0
    %4779 = vmatpush2.xpose.msra.mxu0 0.0
    %4780 = vmatprep.subr.mxu0 0.0
    %4781 = vmatpush2.xpose.msra.mxu0 0.0
    %4782 = vmatprep.subr.mxu0 0.0
    %4783 = vmatpush2.xpose.msra.mxu0 0.0
    %4784 = vmatprep.subr.mxu0 0.0
    %4785 = vmatpush2.xpose.msra.mxu0 0.0
    %4786 = vmatprep.subr.mxu0 0.0
    %4787 = vmatpush2.xpose.msra.mxu0 0.0
    %4788 = vmatprep.subr.mxu0 0.0
    %4789 = vmatpush2.xpose.msra.mxu0 0.0
    %4790 = vmatprep.mubr.f32.mxu0 0.0
    %4791 = vmatmul.mubr.f32.gmra.mxu0 %v4722
    %v4792 = vpop.f32.mrf.mxu0
    %v4793 = vadd.f32 0.0, %v4792
    %v4794 = vpop.f32.mrf.mxu0
    %4795 = vdwg.mxu0
    %v4796 = vsel %vm252, %v4715, -inf
    %4797 = vmax.xlane.f32.xlu0 %v4796
    %v4798 = vpop.xlane.xlu0 %4797
    %v4799 = vsel %vm252, %v4793, -inf
    %4800 = vmax.xlane.f32.xlu0 %v4799
    %v4801 = vpop.xlane.xlu0 %4800
    %v4802 = vsub.f32 %v4715, %v4798
    %v4803 = vsub.f32 %v4793, %v4801
    %v4804 = vmul.f32 %v4802, 1.442695
    %v4805 = vpow.pop %v4804
    %v4806 = vmul.f32 %v4803, 1.442695
    %v4807 = vpow.pop %v4806
    %v4808 = vsel %vm252, %v4805, 0.0
    %4809 = vadd.xlane.f32.xlu0 %v4808
    %v4810 = vpop.xlane.xlu0 %4809
    %v4811 = vsel %vm252, %v4807, 0.0
    %4812 = vadd.xlane.f32.xlu0 %v4811
    %v4813 = vpop.xlane.xlu0 %4812
    %v4814 = vrcp.pop %v4810
    %v4815 = vrcp.pop %v4813
    %v4816 = vmul.f32 %v4805, %v4814
    %v4817 = vmul.f32 %v4807, %v4815
    %4818 = vrot.lane.b32.xlu0 %v3807, 48
    %v4819 = vpop.permute.xlu0 %4818
    %v4822 = vsel %vm252, %v4816, 0
    %4824 = vmatprep.subr.mxu0 0.0
    %4825 = vmatpush1.msra.mxu0 0.0
    %4826 = vmatprep.subr.mxu0 0.0
    %4827 = vmatpush1.msra.mxu0 0.0
    %4828 = vmatprep.subr.mxu0 0.0
    %4829 = vmatpush1.msra.mxu0 0.0
    %4830 = vmatprep.subr.mxu0 0.0
    %4831 = vmatpush1.msra.mxu0 0.0
    %4832 = vmatprep.subr.mxu0 0.0
    %4833 = vmatpush1.msra.mxu0 0.0
    %4834 = vmatprep.subr.mxu0 0.0
    %4835 = vmatpush1.msra.mxu0 0.0
    %4836 = vmatprep.subr.mxu0 0.0
    %4837 = vmatpush1.msra.mxu0 0.0
    %4838 = vmatprep.subr.mxu0 0.0
    %4839 = vmatpush1.msra.mxu0 0.0
    %4840 = vmatprep.subr.mxu0 0.0
    %4841 = vmatpush1.msra.mxu0 0.0
    %4842 = vmatprep.subr.mxu0 0.0
    %4843 = vmatpush1.msra.mxu0 0.0
    %4844 = vmatprep.subr.mxu0 0.0
    %4845 = vmatpush1.msra.mxu0 0.0
    %4846 = vmatprep.subr.mxu0 0.0
    %4847 = vmatpush1.msra.mxu0 0.0
    %4848 = vmatprep.subr.mxu0 0.0
    %4849 = vmatpush1.msra.mxu0 0.0
    %4850 = vmatprep.subr.mxu0 0.0
    %4851 = vmatpush1.msra.mxu0 0.0
    %4852 = vmatprep.subr.mxu0 0.0
    %4853 = vmatpush1.msra.mxu0 0.0
    %4854 = vmatprep.subr.mxu0 0.0
    %4855 = vmatpush1.msra.mxu0 %v4819
    %4856 = vmatprep.subr.mxu0 0.0
    %4857 = vmatpush2.msra.mxu0 0.0
    %4858 = vmatprep.subr.mxu0 0.0
    %4859 = vmatpush2.msra.mxu0 0.0
    %4860 = vmatprep.subr.mxu0 0.0
    %4861 = vmatpush2.msra.mxu0 0.0
    %4862 = vmatprep.subr.mxu0 0.0
    %4863 = vmatpush2.msra.mxu0 0.0
    %4864 = vmatprep.subr.mxu0 0.0
    %4865 = vmatpush2.msra.mxu0 0.0
    %4866 = vmatprep.subr.mxu0 0.0
    %4867 = vmatpush2.msra.mxu0 0.0
    %4868 = vmatprep.subr.mxu0 0.0
    %4869 = vmatpush2.msra.mxu0 0.0
    %4870 = vmatprep.subr.mxu0 0.0
    %4871 = vmatpush2.msra.mxu0 0.0
    %4872 = vmatprep.subr.mxu0 0.0
    %4873 = vmatpush2.msra.mxu0 0.0
    %4874 = vmatprep.subr.mxu0 0.0
    %4875 = vmatpush2.msra.mxu0 0.0
    %4876 = vmatprep.subr.mxu0 0.0
    %4877 = vmatpush2.msra.mxu0 0.0
    %4878 = vmatprep.subr.mxu0 0.0
    %4879 = vmatpush2.msra.mxu0 0.0
    %4880 = vmatprep.subr.mxu0 0.0
    %4881 = vmatpush2.msra.mxu0 0.0
    %4882 = vmatprep.subr.mxu0 0.0
    %4883 = vmatpush2.msra.mxu0 0.0
    %4884 = vmatprep.subr.mxu0 0.0
    %4885 = vmatpush2.msra.mxu0 0.0
    %4886 = vmatprep.subr.mxu0 0.0
    %4887 = vmatpush2.msra.mxu0 0.0
    %4888 = vmatprep.mubr.f32.mxu0 0.0
    %4889 = vmatmul.mubr.f32.gmra.mxu0 %v4822
    %v4890 = vpop.f32.mrf.mxu0
    %v4891 = vadd.f32 0.0, %v4890
    %v4892 = vpop.f32.mrf.mxu0
    %4893 = vdwg.mxu0
    %4894 = vrot.lane.b32.xlu0 %v3812, 48
    %v4895 = vpop.permute.xlu0 %4894
    %v4898 = vsel %vm252, %v4817, 0
    %4900 = vmatprep.subr.mxu0 0.0
    %4901 = vmatpush1.msra.mxu0 0.0
    %4902 = vmatprep.subr.mxu0 0.0
    %4903 = vmatpush1.msra.mxu0 0.0
    %4904 = vmatprep.subr.mxu0 0.0
    %4905 = vmatpush1.msra.mxu0 0.0
    %4906 = vmatprep.subr.mxu0 0.0
    %4907 = vmatpush1.msra.mxu0 0.0
    %4908 = vmatprep.subr.mxu0 0.0
    %4909 = vmatpush1.msra.mxu0 0.0
    %4910 = vmatprep.subr.mxu0 0.0
    %4911 = vmatpush1.msra.mxu0 0.0
    %4912 = vmatprep.subr.mxu0 0.0
    %4913 = vmatpush1.msra.mxu0 0.0
    %4914 = vmatprep.subr.mxu0 0.0
    %4915 = vmatpush1.msra.mxu0 0.0
    %4916 = vmatprep.subr.mxu0 0.0
    %4917 = vmatpush1.msra.mxu0 0.0
    %4918 = vmatprep.subr.mxu0 0.0
    %4919 = vmatpush1.msra.mxu0 0.0
    %4920 = vmatprep.subr.mxu0 0.0
    %4921 = vmatpush1.msra.mxu0 0.0
    %4922 = vmatprep.subr.mxu0 0.0
    %4923 = vmatpush1.msra.mxu0 0.0
    %4924 = vmatprep.subr.mxu0 0.0
    %4925 = vmatpush1.msra.mxu0 0.0
    %4926 = vmatprep.subr.mxu0 0.0
    %4927 = vmatpush1.msra.mxu0 0.0
    %4928 = vmatprep.subr.mxu0 0.0
    %4929 = vmatpush1.msra.mxu0 0.0
    %4930 = vmatprep.subr.mxu0 0.0
    %4931 = vmatpush1.msra.mxu0 %v4895
    %4932 = vmatprep.subr.mxu0 0.0
    %4933 = vmatpush2.msra.mxu0 0.0
    %4934 = vmatprep.subr.mxu0 0.0
    %4935 = vmatpush2.msra.mxu0 0.0
    %4936 = vmatprep.subr.mxu0 0.0
    %4937 = vmatpush2.msra.mxu0 0.0
    %4938 = vmatprep.subr.mxu0 0.0
    %4939 = vmatpush2.msra.mxu0 0.0
    %4940 = vmatprep.subr.mxu0 0.0
    %4941 = vmatpush2.msra.mxu0 0.0
    %4942 = vmatprep.subr.mxu0 0.0
    %4943 = vmatpush2.msra.mxu0 0.0
    %4944 = vmatprep.subr.mxu0 0.0
    %4945 = vmatpush2.msra.mxu0 0.0
    %4946 = vmatprep.subr.mxu0 0.0
    %4947 = vmatpush2.msra.mxu0 0.0
    %4948 = vmatprep.subr.mxu0 0.0
    %4949 = vmatpush2.msra.mxu0 0.0
    %4950 = vmatprep.subr.mxu0 0.0
    %4951 = vmatpush2.msra.mxu0 0.0
    %4952 = vmatprep.subr.mxu0 0.0
    %4953 = vmatpush2.msra.mxu0 0.0
    %4954 = vmatprep.subr.mxu0 0.0
    %4955 = vmatpush2.msra.mxu0 0.0
    %4956 = vmatprep.subr.mxu0 0.0
    %4957 = vmatpush2.msra.mxu0 0.0
    %4958 = vmatprep.subr.mxu0 0.0
    %4959 = vmatpush2.msra.mxu0 0.0
    %4960 = vmatprep.subr.mxu0 0.0
    %4961 = vmatpush2.msra.mxu0 0.0
    %4962 = vmatprep.subr.mxu0 0.0
    %4963 = vmatpush2.msra.mxu0 0.0
    %4964 = vmatprep.mubr.f32.mxu0 0.0
    %4965 = vmatmul.mubr.f32.gmra.mxu0 %v4898
    %v4966 = vpop.f32.mrf.mxu0
    %v4967 = vadd.f32 0.0, %v4966
    %v4968 = vpop.f32.mrf.mxu0
    %4969 = vdwg.mxu0
    %v4971 = vsel %vm252, %v4891, 0
    %v4974 = vsel %vm252, %v4967, 0
    %4976 = vmatprep.subr.mxu0 0.0
    %4977 = vmatpush1.msra.mxu0 0.0
    %4978 = vmatprep.subr.mxu0 0.0
    %4979 = vmatpush1.msra.mxu0 0.0
    %4980 = vmatprep.subr.mxu0 0.0
    %4981 = vmatpush1.msra.mxu0 0.0
    %4982 = vmatprep.subr.mxu0 0.0
    %4983 = vmatpush1.msra.mxu0 0.0
    %4984 = vmatprep.subr.mxu0 0.0
    %4985 = vmatpush1.msra.mxu0 0.0
    %4986 = vmatprep.subr.mxu0 0.0
    %4987 = vmatpush1.msra.mxu0 0.0
    %4988 = vmatprep.subr.mxu0 0.0
    %4989 = vmatpush1.msra.mxu0 0.0
    %4990 = vmatprep.subr.mxu0 0.0
    %4991 = vmatpush1.msra.mxu0 0.0
    %4992 = vmatprep.subr.mxu0 0.0
    %4993 = vmatpush1.msra.mxu0 0.0
    %4994 = vmatprep.subr.mxu0 0.0
    %4995 = vmatpush1.msra.mxu0 0.0
    %4996 = vmatprep.subr.mxu0 0.0
    %4997 = vmatpush1.msra.mxu0 0.0
    %4998 = vmatprep.subr.mxu0 0.0
    %4999 = vmatpush1.msra.mxu0 0.0
    %5000 = vmatprep.subr.mxu0 0.0
    %5001 = vmatpush1.msra.mxu0 0.0
    %5002 = vmatprep.subr.mxu0 0.0
    %5003 = vmatpush1.msra.mxu0 0.0
    %5004 = vmatprep.subr.mxu0 0.0
    %5005 = vmatpush1.msra.mxu0 0.0
    %5006 = vmatprep.subr.mxu0 0.0
    %5007 = vmatpush1.msra.mxu0 %v3818
    %5008 = vmatprep.subr.mxu0 0.0
    %5009 = vmatpush2.msra.mxu0 0.0
    %5010 = vmatprep.subr.mxu0 0.0
    %5011 = vmatpush2.msra.mxu0 0.0
    %5012 = vmatprep.subr.mxu0 0.0
    %5013 = vmatpush2.msra.mxu0 0.0
    %5014 = vmatprep.subr.mxu0 0.0
    %5015 = vmatpush2.msra.mxu0 0.0
    %5016 = vmatprep.subr.mxu0 0.0
    %5017 = vmatpush2.msra.mxu0 0.0
    %5018 = vmatprep.subr.mxu0 0.0
    %5019 = vmatpush2.msra.mxu0 0.0
    %5020 = vmatprep.subr.mxu0 0.0
    %5021 = vmatpush2.msra.mxu0 0.0
    %5022 = vmatprep.subr.mxu0 0.0
    %5023 = vmatpush2.msra.mxu0 0.0
    %5024 = vmatprep.subr.mxu0 0.0
    %5025 = vmatpush2.msra.mxu0 0.0
    %5026 = vmatprep.subr.mxu0 0.0
    %5027 = vmatpush2.msra.mxu0 0.0
    %5028 = vmatprep.subr.mxu0 0.0
    %5029 = vmatpush2.msra.mxu0 0.0
    %5030 = vmatprep.subr.mxu0 0.0
    %5031 = vmatpush2.msra.mxu0 0.0
    %5032 = vmatprep.subr.mxu0 0.0
    %5033 = vmatpush2.msra.mxu0 0.0
    %5034 = vmatprep.subr.mxu0 0.0
    %5035 = vmatpush2.msra.mxu0 0.0
    %5036 = vmatprep.subr.mxu0 0.0
    %5037 = vmatpush2.msra.mxu0 0.0
    %5038 = vmatprep.subr.mxu0 0.0
    %5039 = vmatpush2.msra.mxu0 0.0
    %5040 = vmatprep.mubr.f32.mxu0 0.0
    %5041 = vmatmul.mubr.f32.gmra.mxu0 %v4971
    %v5042 = vpop.f32.mrf.mxu0
    %v5043 = vadd.f32 0.0, %v5042
    %v5044 = vpop.f32.mrf.mxu0
    %5045 = vmatprep.mubr.f32.mxu0 0.0
    %5046 = vmatmul.mubr.f32.gmra.mxu0 %v4974
    %v5047 = vpop.f32.mrf.mxu0
    %v5048 = vadd.f32 0.0, %v5047
    %v5049 = vpop.f32.mrf.mxu0
    %5050 = vdwg.mxu0
    %v5051 = vadd.f32 %v4632, %v5043
    %v5052 = vadd.f32 %v4637, %v5048
    %5053 = vrot.lane.b32.xlu0 %v3807, 104
    %v5054 = vpop.permute.xlu0 %5053
    %5055 = vrot.lane.b32.xlu0 %v3807, 72
    %v5056 = vpop.permute.xlu0 %5055
    %v5057 = vsel %vm252, %v5054, 0
    %v5059 = vsel %vm252, %v5056, 0
    %5061 = vmatprep.subr.mxu0 0.0
    %5062 = vmatpush1.xpose.msra.mxu0 0.0
    %5063 = vmatprep.subr.mxu0 0.0
    %5064 = vmatpush1.xpose.msra.mxu0 0.0
    %5065 = vmatprep.subr.mxu0 0.0
    %5066 = vmatpush1.xpose.msra.mxu0 0.0
    %5067 = vmatprep.subr.mxu0 0.0
    %5068 = vmatpush1.xpose.msra.mxu0 0.0
    %5069 = vmatprep.subr.mxu0 0.0
    %5070 = vmatpush1.xpose.msra.mxu0 0.0
    %5071 = vmatprep.subr.mxu0 0.0
    %5072 = vmatpush1.xpose.msra.mxu0 0.0
    %5073 = vmatprep.subr.mxu0 0.0
    %5074 = vmatpush1.xpose.msra.mxu0 0.0
    %5075 = vmatprep.subr.mxu0 0.0
    %5076 = vmatpush1.xpose.msra.mxu0 0.0
    %5077 = vmatprep.subr.mxu0 0.0
    %5078 = vmatpush1.xpose.msra.mxu0 0.0
    %5079 = vmatprep.subr.mxu0 0.0
    %5080 = vmatpush1.xpose.msra.mxu0 0.0
    %5081 = vmatprep.subr.mxu0 0.0
    %5082 = vmatpush1.xpose.msra.mxu0 0.0
    %5083 = vmatprep.subr.mxu0 0.0
    %5084 = vmatpush1.xpose.msra.mxu0 0.0
    %5085 = vmatprep.subr.mxu0 0.0
    %5086 = vmatpush1.xpose.msra.mxu0 0.0
    %5087 = vmatprep.subr.mxu0 0.0
    %5088 = vmatpush1.xpose.msra.mxu0 0.0
    %5089 = vmatprep.subr.mxu0 0.0
    %5090 = vmatpush1.xpose.msra.mxu0 0.0
    %5091 = vmatprep.subr.mxu0 0.0
    %5092 = vmatpush1.xpose.msra.mxu0 %v5059
    %5093 = vmatprep.subr.mxu0 0.0
    %5094 = vmatpush2.xpose.msra.mxu0 0.0
    %5095 = vmatprep.subr.mxu0 0.0
    %5096 = vmatpush2.xpose.msra.mxu0 0.0
    %5097 = vmatprep.subr.mxu0 0.0
    %5098 = vmatpush2.xpose.msra.mxu0 0.0
    %5099 = vmatprep.subr.mxu0 0.0
    %5100 = vmatpush2.xpose.msra.mxu0 0.0
    %5101 = vmatprep.subr.mxu0 0.0
    %5102 = vmatpush2.xpose.msra.mxu0 0.0
    %5103 = vmatprep.subr.mxu0 0.0
    %5104 = vmatpush2.xpose.msra.mxu0 0.0
    %5105 = vmatprep.subr.mxu0 0.0
    %5106 = vmatpush2.xpose.msra.mxu0 0.0
    %5107 = vmatprep.subr.mxu0 0.0
    %5108 = vmatpush2.xpose.msra.mxu0 0.0
    %5109 = vmatprep.subr.mxu0 0.0
    %5110 = vmatpush2.xpose.msra.mxu0 0.0
    %5111 = vmatprep.subr.mxu0 0.0
    %5112 = vmatpush2.xpose.msra.mxu0 0.0
    %5113 = vmatprep.subr.mxu0 0.0
    %5114 = vmatpush2.xpose.msra.mxu0 0.0
    %5115 = vmatprep.subr.mxu0 0.0
    %5116 = vmatpush2.xpose.msra.mxu0 0.0
    %5117 = vmatprep.subr.mxu0 0.0
    %5118 = vmatpush2.xpose.msra.mxu0 0.0
    %5119 = vmatprep.subr.mxu0 0.0
    %5120 = vmatpush2.xpose.msra.mxu0 0.0
    %5121 = vmatprep.subr.mxu0 0.0
    %5122 = vmatpush2.xpose.msra.mxu0 0.0
    %5123 = vmatprep.subr.mxu0 0.0
    %5124 = vmatpush2.xpose.msra.mxu0 0.0
    %5125 = vmatprep.mubr.f32.mxu0 0.0
    %5126 = vmatmul.mubr.f32.gmra.mxu0 %v5057
    %v5127 = vpop.f32.mrf.mxu0
    %v5128 = vadd.f32 0.0, %v5127
    %v5129 = vpop.f32.mrf.mxu0
    %5130 = vdwg.mxu0
    %5131 = vrot.lane.b32.xlu0 %v3812, 104
    %v5132 = vpop.permute.xlu0 %5131
    %5133 = vrot.lane.b32.xlu0 %v3812, 72
    %v5134 = vpop.permute.xlu0 %5133
    %v5135 = vsel %vm252, %v5132, 0
    %v5137 = vsel %vm252, %v5134, 0
    %5139 = vmatprep.subr.mxu0 0.0
    %5140 = vmatpush1.xpose.msra.mxu0 0.0
    %5141 = vmatprep.subr.mxu0 0.0
    %5142 = vmatpush1.xpose.msra.mxu0 0.0
    %5143 = vmatprep.subr.mxu0 0.0
    %5144 = vmatpush1.xpose.msra.mxu0 0.0
    %5145 = vmatprep.subr.mxu0 0.0
    %5146 = vmatpush1.xpose.msra.mxu0 0.0
    %5147 = vmatprep.subr.mxu0 0.0
    %5148 = vmatpush1.xpose.msra.mxu0 0.0
    %5149 = vmatprep.subr.mxu0 0.0
    %5150 = vmatpush1.xpose.msra.mxu0 0.0
    %5151 = vmatprep.subr.mxu0 0.0
    %5152 = vmatpush1.xpose.msra.mxu0 0.0
    %5153 = vmatprep.subr.mxu0 0.0
    %5154 = vmatpush1.xpose.msra.mxu0 0.0
    %5155 = vmatprep.subr.mxu0 0.0
    %5156 = vmatpush1.xpose.msra.mxu0 0.0
    %5157 = vmatprep.subr.mxu0 0.0
    %5158 = vmatpush1.xpose.msra.mxu0 0.0
    %5159 = vmatprep.subr.mxu0 0.0
    %5160 = vmatpush1.xpose.msra.mxu0 0.0
    %5161 = vmatprep.subr.mxu0 0.0
    %5162 = vmatpush1.xpose.msra.mxu0 0.0
    %5163 = vmatprep.subr.mxu0 0.0
    %5164 = vmatpush1.xpose.msra.mxu0 0.0
    %5165 = vmatprep.subr.mxu0 0.0
    %5166 = vmatpush1.xpose.msra.mxu0 0.0
    %5167 = vmatprep.subr.mxu0 0.0
    %5168 = vmatpush1.xpose.msra.mxu0 0.0
    %5169 = vmatprep.subr.mxu0 0.0
    %5170 = vmatpush1.xpose.msra.mxu0 %v5137
    %5171 = vmatprep.subr.mxu0 0.0
    %5172 = vmatpush2.xpose.msra.mxu0 0.0
    %5173 = vmatprep.subr.mxu0 0.0
    %5174 = vmatpush2.xpose.msra.mxu0 0.0
    %5175 = vmatprep.subr.mxu0 0.0
    %5176 = vmatpush2.xpose.msra.mxu0 0.0
    %5177 = vmatprep.subr.mxu0 0.0
    %5178 = vmatpush2.xpose.msra.mxu0 0.0
    %5179 = vmatprep.subr.mxu0 0.0
    %5180 = vmatpush2.xpose.msra.mxu0 0.0
    %5181 = vmatprep.subr.mxu0 0.0
    %5182 = vmatpush2.xpose.msra.mxu0 0.0
    %5183 = vmatprep.subr.mxu0 0.0
    %5184 = vmatpush2.xpose.msra.mxu0 0.0
    %5185 = vmatprep.subr.mxu0 0.0
    %5186 = vmatpush2.xpose.msra.mxu0 0.0
    %5187 = vmatprep.subr.mxu0 0.0
    %5188 = vmatpush2.xpose.msra.mxu0 0.0
    %5189 = vmatprep.subr.mxu0 0.0
    %5190 = vmatpush2.xpose.msra.mxu0 0.0
    %5191 = vmatprep.subr.mxu0 0.0
    %5192 = vmatpush2.xpose.msra.mxu0 0.0
    %5193 = vmatprep.subr.mxu0 0.0
    %5194 = vmatpush2.xpose.msra.mxu0 0.0
    %5195 = vmatprep.subr.mxu0 0.0
    %5196 = vmatpush2.xpose.msra.mxu0 0.0
    %5197 = vmatprep.subr.mxu0 0.0
    %5198 = vmatpush2.xpose.msra.mxu0 0.0
    %5199 = vmatprep.subr.mxu0 0.0
    %5200 = vmatpush2.xpose.msra.mxu0 0.0
    %5201 = vmatprep.subr.mxu0 0.0
    %5202 = vmatpush2.xpose.msra.mxu0 0.0
    %5203 = vmatprep.mubr.f32.mxu0 0.0
    %5204 = vmatmul.mubr.f32.gmra.mxu0 %v5135
    %v5205 = vpop.f32.mrf.mxu0
    %v5206 = vadd.f32 0.0, %v5205
    %v5207 = vpop.f32.mrf.mxu0
    %5208 = vdwg.mxu0
    %v5209 = vsel %vm252, %v5128, -inf
    %5210 = vmax.xlane.f32.xlu0 %v5209
    %v5211 = vpop.xlane.xlu0 %5210
    %v5212 = vsel %vm252, %v5206, -inf
    %5213 = vmax.xlane.f32.xlu0 %v5212
    %v5214 = vpop.xlane.xlu0 %5213
    %v5215 = vsub.f32 %v5128, %v5211
    %v5216 = vsub.f32 %v5206, %v5214
    %v5217 = vmul.f32 %v5215, 1.442695
    %v5218 = vpow.pop %v5217
    %v5219 = vmul.f32 %v5216, 1.442695
    %v5220 = vpow.pop %v5219
    %v5221 = vsel %vm252, %v5218, 0.0
    %5222 = vadd.xlane.f32.xlu0 %v5221
    %v5223 = vpop.xlane.xlu0 %5222
    %v5224 = vsel %vm252, %v5220, 0.0
    %5225 = vadd.xlane.f32.xlu0 %v5224
    %v5226 = vpop.xlane.xlu0 %5225
    %v5227 = vrcp.pop %v5223
    %v5228 = vrcp.pop %v5226
    %v5229 = vmul.f32 %v5218, %v5227
    %v5230 = vmul.f32 %v5220, %v5228
    %5231 = vrot.lane.b32.xlu0 %v3807, 40
    %v5232 = vpop.permute.xlu0 %5231
    %v5235 = vsel %vm252, %v5229, 0
    %5237 = vmatprep.subr.mxu0 0.0
    %5238 = vmatpush1.msra.mxu0 0.0
    %5239 = vmatprep.subr.mxu0 0.0
    %5240 = vmatpush1.msra.mxu0 0.0
    %5241 = vmatprep.subr.mxu0 0.0
    %5242 = vmatpush1.msra.mxu0 0.0
    %5243 = vmatprep.subr.mxu0 0.0
    %5244 = vmatpush1.msra.mxu0 0.0
    %5245 = vmatprep.subr.mxu0 0.0
    %5246 = vmatpush1.msra.mxu0 0.0
    %5247 = vmatprep.subr.mxu0 0.0
    %5248 = vmatpush1.msra.mxu0 0.0
    %5249 = vmatprep.subr.mxu0 0.0
    %5250 = vmatpush1.msra.mxu0 0.0
    %5251 = vmatprep.subr.mxu0 0.0
    %5252 = vmatpush1.msra.mxu0 0.0
    %5253 = vmatprep.subr.mxu0 0.0
    %5254 = vmatpush1.msra.mxu0 0.0
    %5255 = vmatprep.subr.mxu0 0.0
    %5256 = vmatpush1.msra.mxu0 0.0
    %5257 = vmatprep.subr.mxu0 0.0
    %5258 = vmatpush1.msra.mxu0 0.0
    %5259 = vmatprep.subr.mxu0 0.0
    %5260 = vmatpush1.msra.mxu0 0.0
    %5261 = vmatprep.subr.mxu0 0.0
    %5262 = vmatpush1.msra.mxu0 0.0
    %5263 = vmatprep.subr.mxu0 0.0
    %5264 = vmatpush1.msra.mxu0 0.0
    %5265 = vmatprep.subr.mxu0 0.0
    %5266 = vmatpush1.msra.mxu0 0.0
    %5267 = vmatprep.subr.mxu0 0.0
    %5268 = vmatpush1.msra.mxu0 %v5232
    %5269 = vmatprep.subr.mxu0 0.0
    %5270 = vmatpush2.msra.mxu0 0.0
    %5271 = vmatprep.subr.mxu0 0.0
    %5272 = vmatpush2.msra.mxu0 0.0
    %5273 = vmatprep.subr.mxu0 0.0
    %5274 = vmatpush2.msra.mxu0 0.0
    %5275 = vmatprep.subr.mxu0 0.0
    %5276 = vmatpush2.msra.mxu0 0.0
    %5277 = vmatprep.subr.mxu0 0.0
    %5278 = vmatpush2.msra.mxu0 0.0
    %5279 = vmatprep.subr.mxu0 0.0
    %5280 = vmatpush2.msra.mxu0 0.0
    %5281 = vmatprep.subr.mxu0 0.0
    %5282 = vmatpush2.msra.mxu0 0.0
    %5283 = vmatprep.subr.mxu0 0.0
    %5284 = vmatpush2.msra.mxu0 0.0
    %5285 = vmatprep.subr.mxu0 0.0
    %5286 = vmatpush2.msra.mxu0 0.0
    %5287 = vmatprep.subr.mxu0 0.0
    %5288 = vmatpush2.msra.mxu0 0.0
    %5289 = vmatprep.subr.mxu0 0.0
    %5290 = vmatpush2.msra.mxu0 0.0
    %5291 = vmatprep.subr.mxu0 0.0
    %5292 = vmatpush2.msra.mxu0 0.0
    %5293 = vmatprep.subr.mxu0 0.0
    %5294 = vmatpush2.msra.mxu0 0.0
    %5295 = vmatprep.subr.mxu0 0.0
    %5296 = vmatpush2.msra.mxu0 0.0
    %5297 = vmatprep.subr.mxu0 0.0
    %5298 = vmatpush2.msra.mxu0 0.0
    %5299 = vmatprep.subr.mxu0 0.0
    %5300 = vmatpush2.msra.mxu0 0.0
    %5301 = vmatprep.mubr.f32.mxu0 0.0
    %5302 = vmatmul.mubr.f32.gmra.mxu0 %v5235
    %v5303 = vpop.f32.mrf.mxu0
    %v5304 = vadd.f32 0.0, %v5303
    %v5305 = vpop.f32.mrf.mxu0
    %5306 = vdwg.mxu0
    %5307 = vrot.lane.b32.xlu0 %v3812, 40
    %v5308 = vpop.permute.xlu0 %5307
    %v5311 = vsel %vm252, %v5230, 0
    %5313 = vmatprep.subr.mxu0 0.0
    %5314 = vmatpush1.msra.mxu0 0.0
    %5315 = vmatprep.subr.mxu0 0.0
    %5316 = vmatpush1.msra.mxu0 0.0
    %5317 = vmatprep.subr.mxu0 0.0
    %5318 = vmatpush1.msra.mxu0 0.0
    %5319 = vmatprep.subr.mxu0 0.0
    %5320 = vmatpush1.msra.mxu0 0.0
    %5321 = vmatprep.subr.mxu0 0.0
    %5322 = vmatpush1.msra.mxu0 0.0
    %5323 = vmatprep.subr.mxu0 0.0
    %5324 = vmatpush1.msra.mxu0 0.0
    %5325 = vmatprep.subr.mxu0 0.0
    %5326 = vmatpush1.msra.mxu0 0.0
    %5327 = vmatprep.subr.mxu0 0.0
    %5328 = vmatpush1.msra.mxu0 0.0
    %5329 = vmatprep.subr.mxu0 0.0
    %5330 = vmatpush1.msra.mxu0 0.0
    %5331 = vmatprep.subr.mxu0 0.0
    %5332 = vmatpush1.msra.mxu0 0.0
    %5333 = vmatprep.subr.mxu0 0.0
    %5334 = vmatpush1.msra.mxu0 0.0
    %5335 = vmatprep.subr.mxu0 0.0
    %5336 = vmatpush1.msra.mxu0 0.0
    %5337 = vmatprep.subr.mxu0 0.0
    %5338 = vmatpush1.msra.mxu0 0.0
    %5339 = vmatprep.subr.mxu0 0.0
    %5340 = vmatpush1.msra.mxu0 0.0
    %5341 = vmatprep.subr.mxu0 0.0
    %5342 = vmatpush1.msra.mxu0 0.0
    %5343 = vmatprep.subr.mxu0 0.0
    %5344 = vmatpush1.msra.mxu0 %v5308
    %5345 = vmatprep.subr.mxu0 0.0
    %5346 = vmatpush2.msra.mxu0 0.0
    %5347 = vmatprep.subr.mxu0 0.0
    %5348 = vmatpush2.msra.mxu0 0.0
    %5349 = vmatprep.subr.mxu0 0.0
    %5350 = vmatpush2.msra.mxu0 0.0
    %5351 = vmatprep.subr.mxu0 0.0
    %5352 = vmatpush2.msra.mxu0 0.0
    %5353 = vmatprep.subr.mxu0 0.0
    %5354 = vmatpush2.msra.mxu0 0.0
    %5355 = vmatprep.subr.mxu0 0.0
    %5356 = vmatpush2.msra.mxu0 0.0
    %5357 = vmatprep.subr.mxu0 0.0
    %5358 = vmatpush2.msra.mxu0 0.0
    %5359 = vmatprep.subr.mxu0 0.0
    %5360 = vmatpush2.msra.mxu0 0.0
    %5361 = vmatprep.subr.mxu0 0.0
    %5362 = vmatpush2.msra.mxu0 0.0
    %5363 = vmatprep.subr.mxu0 0.0
    %5364 = vmatpush2.msra.mxu0 0.0
    %5365 = vmatprep.subr.mxu0 0.0
    %5366 = vmatpush2.msra.mxu0 0.0
    %5367 = vmatprep.subr.mxu0 0.0
    %5368 = vmatpush2.msra.mxu0 0.0
    %5369 = vmatprep.subr.mxu0 0.0
    %5370 = vmatpush2.msra.mxu0 0.0
    %5371 = vmatprep.subr.mxu0 0.0
    %5372 = vmatpush2.msra.mxu0 0.0
    %5373 = vmatprep.subr.mxu0 0.0
    %5374 = vmatpush2.msra.mxu0 0.0
    %5375 = vmatprep.subr.mxu0 0.0
    %5376 = vmatpush2.msra.mxu0 0.0
    %5377 = vmatprep.mubr.f32.mxu0 0.0
    %5378 = vmatmul.mubr.f32.gmra.mxu0 %v5311
    %v5379 = vpop.f32.mrf.mxu0
    %v5380 = vadd.f32 0.0, %v5379
    %v5381 = vpop.f32.mrf.mxu0
    %5382 = vdwg.mxu0
    %v5384 = vsel %vm252, %v5304, 0
    %v5387 = vsel %vm252, %v5380, 0
    %5389 = vmatprep.subr.mxu0 0.0
    %5390 = vmatpush1.msra.mxu0 0.0
    %5391 = vmatprep.subr.mxu0 0.0
    %5392 = vmatpush1.msra.mxu0 0.0
    %5393 = vmatprep.subr.mxu0 0.0
    %5394 = vmatpush1.msra.mxu0 0.0
    %5395 = vmatprep.subr.mxu0 0.0
    %5396 = vmatpush1.msra.mxu0 0.0
    %5397 = vmatprep.subr.mxu0 0.0
    %5398 = vmatpush1.msra.mxu0 0.0
    %5399 = vmatprep.subr.mxu0 0.0
    %5400 = vmatpush1.msra.mxu0 0.0
    %5401 = vmatprep.subr.mxu0 0.0
    %5402 = vmatpush1.msra.mxu0 0.0
    %5403 = vmatprep.subr.mxu0 0.0
    %5404 = vmatpush1.msra.mxu0 0.0
    %5405 = vmatprep.subr.mxu0 0.0
    %5406 = vmatpush1.msra.mxu0 0.0
    %5407 = vmatprep.subr.mxu0 0.0
    %5408 = vmatpush1.msra.mxu0 0.0
    %5409 = vmatprep.subr.mxu0 0.0
    %5410 = vmatpush1.msra.mxu0 0.0
    %5411 = vmatprep.subr.mxu0 0.0
    %5412 = vmatpush1.msra.mxu0 0.0
    %5413 = vmatprep.subr.mxu0 0.0
    %5414 = vmatpush1.msra.mxu0 0.0
    %5415 = vmatprep.subr.mxu0 0.0
    %5416 = vmatpush1.msra.mxu0 0.0
    %5417 = vmatprep.subr.mxu0 0.0
    %5418 = vmatpush1.msra.mxu0 0.0
    %5419 = vmatprep.subr.mxu0 0.0
    %5420 = vmatpush1.msra.mxu0 %v3819
    %5421 = vmatprep.subr.mxu0 0.0
    %5422 = vmatpush2.msra.mxu0 0.0
    %5423 = vmatprep.subr.mxu0 0.0
    %5424 = vmatpush2.msra.mxu0 0.0
    %5425 = vmatprep.subr.mxu0 0.0
    %5426 = vmatpush2.msra.mxu0 0.0
    %5427 = vmatprep.subr.mxu0 0.0
    %5428 = vmatpush2.msra.mxu0 0.0
    %5429 = vmatprep.subr.mxu0 0.0
    %5430 = vmatpush2.msra.mxu0 0.0
    %5431 = vmatprep.subr.mxu0 0.0
    %5432 = vmatpush2.msra.mxu0 0.0
    %5433 = vmatprep.subr.mxu0 0.0
    %5434 = vmatpush2.msra.mxu0 0.0
    %5435 = vmatprep.subr.mxu0 0.0
    %5436 = vmatpush2.msra.mxu0 0.0
    %5437 = vmatprep.subr.mxu0 0.0
    %5438 = vmatpush2.msra.mxu0 0.0
    %5439 = vmatprep.subr.mxu0 0.0
    %5440 = vmatpush2.msra.mxu0 0.0
    %5441 = vmatprep.subr.mxu0 0.0
    %5442 = vmatpush2.msra.mxu0 0.0
    %5443 = vmatprep.subr.mxu0 0.0
    %5444 = vmatpush2.msra.mxu0 0.0
    %5445 = vmatprep.subr.mxu0 0.0
    %5446 = vmatpush2.msra.mxu0 0.0
    %5447 = vmatprep.subr.mxu0 0.0
    %5448 = vmatpush2.msra.mxu0 0.0
    %5449 = vmatprep.subr.mxu0 0.0
    %5450 = vmatpush2.msra.mxu0 0.0
    %5451 = vmatprep.subr.mxu0 0.0
    %5452 = vmatpush2.msra.mxu0 0.0
    %5453 = vmatprep.mubr.f32.mxu0 0.0
    %5454 = vmatmul.mubr.f32.gmra.mxu0 %v5384
    %v5455 = vpop.f32.mrf.mxu0
    %v5456 = vadd.f32 0.0, %v5455
    %v5457 = vpop.f32.mrf.mxu0
    %5458 = vmatprep.mubr.f32.mxu0 0.0
    %5459 = vmatmul.mubr.f32.gmra.mxu0 %v5387
    %v5460 = vpop.f32.mrf.mxu0
    %v5461 = vadd.f32 0.0, %v5460
    %v5462 = vpop.f32.mrf.mxu0
    %5463 = vdwg.mxu0
    %v5464 = vadd.f32 %v5051, %v5456
    %v5465 = vadd.f32 %v5052, %v5461
    %v5466 = vadd.f32 %v3689, %v5464
    %v5467 = vadd.f32 %v3690, %v5465
    %v5468 = vlaneseq
    %v5469 = vshrl.u32 %v5468, 7
    %v5470 = vsub.s32 2, %v5469
    %v5471 = vrot.slane %v118, %v5470
    %v5472 = vadd.f32 %v5466, %v5471
    %v5473 = vadd.f32 %v5467, %v5471
    %v5474 = vsel %vm121, %v1902, 0.0
    %5475 = vadd.xlane.f32.xlu0 %v5474
    %v5476 = vpop.xlane.xlu0 %5475
    %v5477 = vsel %vm121, %v1903, 0.0
    %5478 = vadd.xlane.f32.xlu0 %v5477
    %v5479 = vpop.xlane.xlu0 %5478
    %v5480 = vadd.f32 %v5476, 0.0
    %v5481 = vadd.f32 %v5479, 0.0
    %v5482 = vmul.f32 %v1902, %v1902
    %v5483 = vmul.f32 %v1903, %v1903
    %v5484 = vsel %vm121, %v5482, 0.0
    %5485 = vadd.xlane.f32.xlu0 %v5484
    %v5486 = vpop.xlane.xlu0 %5485
    %v5487 = vsel %vm121, %v5483, 0.0
    %5488 = vadd.xlane.f32.xlu0 %v5487
    %v5489 = vpop.xlane.xlu0 %5488
    %v5490 = vadd.f32 %v5486, 0.0
    %v5491 = vadd.f32 %v5489, 0.0
    %v5492 = vsel %vm121, %v3687, 0.0
    %5493 = vadd.xlane.f32.xlu0 %v5492
    %v5494 = vpop.xlane.xlu0 %5493
    %v5495 = vsel %vm121, %v3688, 0.0
    %5496 = vadd.xlane.f32.xlu0 %v5495
    %v5497 = vpop.xlane.xlu0 %5496
    %v5498 = vadd.f32 %v5480, %v5494
    %v5499 = vadd.f32 %v5481, %v5497
    %v5500 = vmul.f32 %v3687, %v3687
    %v5501 = vmul.f32 %v3688, %v3688
    %v5502 = vsel %vm121, %v5500, 0.0
    %5503 = vadd.xlane.f32.xlu0 %v5502
    %v5504 = vpop.xlane.xlu0 %5503
    %v5505 = vsel %vm121, %v5501, 0.0
    %5506 = vadd.xlane.f32.xlu0 %v5505
    %v5507 = vpop.xlane.xlu0 %5506
    %v5508 = vadd.f32 %v5490, %v5504
    %v5509 = vadd.f32 %v5491, %v5507
    %v5510 = vsel %vm121, %v5472, 0.0
    %5511 = vadd.xlane.f32.xlu0 %v5510
    %v5512 = vpop.xlane.xlu0 %5511
    %v5513 = vsel %vm121, %v5473, 0.0
    %5514 = vadd.xlane.f32.xlu0 %v5513
    %v5515 = vpop.xlane.xlu0 %5514
    %v5516 = vadd.f32 %v5498, %v5512
    %v5517 = vadd.f32 %v5499, %v5515
    %v5518 = vmul.f32 %v5472, %v5472
    %v5519 = vmul.f32 %v5473, %v5473
    %v5520 = vsel %vm121, %v5518, 0.0
    %5521 = vadd.xlane.f32.xlu0 %v5520
    %v5522 = vpop.xlane.xlu0 %5521
    %v5523 = vsel %vm121, %v5519, 0.0
    %5524 = vadd.xlane.f32.xlu0 %v5523
    %v5525 = vpop.xlane.xlu0 %5524
    %v5526 = vadd.f32 %v5508, %v5522
    %v5527 = vadd.f32 %v5509, %v5525
    %v5528 = vmul.f32 %v5516, 0.010416667
    %v5529 = vmul.f32 %v5517, 0.010416667
    %v5530 = vmul.f32 %v5526, 0.010416667
    %v5531 = vmul.f32 %v5527, 0.010416667
    %v5532 = vmul.f32 %v5528, %v5528
    %v5533 = vmul.f32 %v5529, %v5529
    %v5534 = vsub.f32 %v5530, %v5532
    %v5535 = vsub.f32 %v5531, %v5533
    %v5536 = vmax.f32 %v5534, 0.0
    %v5537 = vmax.f32 %v5535, 0.0
    %v5538 = vadd.f32 %v5536, 1e-05
    %v5539 = vadd.f32 %v5537, 1e-05
    %v5540 = vrsqrt.pop %v5538
    %v5541 = vrsqrt.pop %v5539
    %v5542 = vld [vmem:[%s8] sm:$0x7]
    %v5543 = vld [vmem:[#allocation10] sm:$0x7]
    %v5544 = vld [vmem:[%s11] sm:$0x1]
    %v5545 = vsub.f32 %v1902, %v5528
    %v5546 = vsub.f32 %v1903, %v5529
    %v5547 = vmul.f32 %v5545, %v5540
    %v5548 = vmul.f32 %v5546, %v5541
    %v5549 = vlaneseq
    %v5550 = vshrl.u32 %v5549, 7
    %v5551 = vsub.s32 0, %v5550
    %v5552 = vrot.slane %v5542, %v5551
    %v5553 = vmul.f32 %v5547, %v5552
    %v5554 = vmul.f32 %v5548, %v5552
    %v5555 = vlaneseq
    %v5556 = vshrl.u32 %v5555, 7
    %v5557 = vsub.s32 0, %v5556
    %v5558 = vrot.slane %v5543, %v5557
    %v5559 = vadd.f32 %v5553, %v5558
    %v5560 = vadd.f32 %v5554, %v5558
    %v5561 = vld [vmem:[%s10] sm:$0xff]
    %v5562 = vld [vmem:[%s10 + $0x8] sm:$0xff]
    %v5563 = vld [vmem:[%s10 + $0x10] sm:$0xff]
    %v5564 = vld [vmem:[%s10 + $0x18] sm:$0xff]
    %v5565 = vsub.f32 %v3687, %v5528
    %v5566 = vsub.f32 %v3688, %v5529
    %v5567 = vmul.f32 %v5565, %v5540
    %v5568 = vmul.f32 %v5566, %v5541
    %v5569 = vlaneseq
    %v5570 = vshrl.u32 %v5569, 7
    %v5571 = vsub.s32 1, %v5570
    %v5572 = vrot.slane %v5542, %v5571
    %v5573 = vmul.f32 %v5567, %v5572
    %v5574 = vmul.f32 %v5568, %v5572
    %v5575 = vlaneseq
    %v5576 = vshrl.u32 %v5575, 7
    %v5577 = vsub.s32 1, %v5576
    %v5578 = vrot.slane %v5543, %v5577
    %v5579 = vadd.f32 %v5573, %v5578
    %v5580 = vadd.f32 %v5574, %v5578
    %s5581 = scalar_lea.vmem %s10, 32
    %v5582 = vld [vmem:[%s5581] sm:$0xff]
    %v5583 = vld [vmem:[%s5581 + $0x8] sm:$0xff]
    %v5584 = vld [vmem:[%s5581 + $0x10] sm:$0xff]
    %v5585 = vld [vmem:[%s5581 + $0x18] sm:$0xff]
    %v5587 = vsel %vm121, %v5579, 0
    %v5590 = vsel %vm121, %v5580, 0
    %5592 = vmatprep.subr.mxu0 0.0
    %5593 = vmatpush1.msra.mxu0 0.0
    %5594 = vmatprep.subr.mxu0 0.0
    %5595 = vmatpush1.msra.mxu0 0.0
    %5596 = vmatprep.subr.mxu0 0.0
    %5597 = vmatpush1.msra.mxu0 0.0
    %5598 = vmatprep.subr.mxu0 0.0
    %5599 = vmatpush1.msra.mxu0 0.0
    %5600 = vmatprep.subr.mxu0 0.0
    %5601 = vmatpush1.msra.mxu0 0.0
    %5602 = vmatprep.subr.mxu0 0.0
    %5603 = vmatpush1.msra.mxu0 0.0
    %5604 = vmatprep.subr.mxu0 0.0
    %5605 = vmatpush1.msra.mxu0 0.0
    %5606 = vmatprep.subr.mxu0 0.0
    %5607 = vmatpush1.msra.mxu0 0.0
    %5608 = vmatprep.subr.mxu0 0.0
    %5609 = vmatpush1.msra.mxu0 0.0
    %5610 = vmatprep.subr.mxu0 0.0
    %5611 = vmatpush1.msra.mxu0 0.0
    %5612 = vmatprep.subr.mxu0 0.0
    %5613 = vmatpush1.msra.mxu0 0.0
    %5614 = vmatprep.subr.mxu0 0.0
    %5615 = vmatpush1.msra.mxu0 0.0
    %5616 = vmatprep.subr.mxu0 0.0
    %5617 = vmatpush1.msra.mxu0 %v5585
    %5618 = vmatprep.subr.mxu0 0.0
    %5619 = vmatpush1.msra.mxu0 %v5584
    %5620 = vmatprep.subr.mxu0 0.0
    %5621 = vmatpush1.msra.mxu0 %v5583
    %5622 = vmatprep.subr.mxu0 0.0
    %5623 = vmatpush1.msra.mxu0 %v5582
    %5624 = vmatprep.subr.mxu0 0.0
    %5625 = vmatpush2.msra.mxu0 0.0
    %5626 = vmatprep.subr.mxu0 0.0
    %5627 = vmatpush2.msra.mxu0 0.0
    %5628 = vmatprep.subr.mxu0 0.0
    %5629 = vmatpush2.msra.mxu0 0.0
    %5630 = vmatprep.subr.mxu0 0.0
    %5631 = vmatpush2.msra.mxu0 0.0
    %5632 = vmatprep.subr.mxu0 0.0
    %5633 = vmatpush2.msra.mxu0 0.0
    %5634 = vmatprep.subr.mxu0 0.0
    %5635 = vmatpush2.msra.mxu0 0.0
    %5636 = vmatprep.subr.mxu0 0.0
    %5637 = vmatpush2.msra.mxu0 0.0
    %5638 = vmatprep.subr.mxu0 0.0
    %5639 = vmatpush2.msra.mxu0 0.0
    %5640 = vmatprep.subr.mxu0 0.0
    %5641 = vmatpush2.msra.mxu0 0.0
    %5642 = vmatprep.subr.mxu0 0.0
    %5643 = vmatpush2.msra.mxu0 0.0
    %5644 = vmatprep.subr.mxu0 0.0
    %5645 = vmatpush2.msra.mxu0 0.0
    %5646 = vmatprep.subr.mxu0 0.0
    %5647 = vmatpush2.msra.mxu0 0.0
    %5648 = vmatprep.subr.mxu0 0.0
    %5649 = vmatpush2.msra.mxu0 0.0
    %5650 = vmatprep.subr.mxu0 0.0
    %5651 = vmatpush2.msra.mxu0 0.0
    %5652 = vmatprep.subr.mxu0 0.0
    %5653 = vmatpush2.msra.mxu0 0.0
    %5654 = vmatprep.subr.mxu0 0.0
    %5655 = vmatpush2.msra.mxu0 0.0
    %5656 = vmatprep.mubr.f32.mxu0 0.0
    %5657 = vmatmul.mubr.f32.gmra.mxu0 %v5587
    %v5658 = vpop.f32.mrf.mxu0
    %v5659 = vadd.f32 0.0, %v5658
    %v5660 = vpop.f32.mrf.mxu0
    %5661 = vmatprep.mubr.f32.mxu0 0.0
    %5662 = vmatmul.mubr.f32.gmra.mxu0 %v5590
    %v5663 = vpop.f32.mrf.mxu0
    %v5664 = vadd.f32 0.0, %v5663
    %v5665 = vpop.f32.mrf.mxu0
    %5666 = vdwg.mxu0
    %v5668 = vsel %vm121, %v5559, 0
    %v5671 = vsel %vm121, %v5560, 0
    %5673 = vmatprep.subr.mxu0 0.0
    %5674 = vmatpush1.msra.mxu0 0.0
    %5675 = vmatprep.subr.mxu0 0.0
    %5676 = vmatpush1.msra.mxu0 0.0
    %5677 = vmatprep.subr.mxu0 0.0
    %5678 = vmatpush1.msra.mxu0 0.0
    %5679 = vmatprep.subr.mxu0 0.0
    %5680 = vmatpush1.msra.mxu0 0.0
    %5681 = vmatprep.subr.mxu0 0.0
    %5682 = vmatpush1.msra.mxu0 0.0
    %5683 = vmatprep.subr.mxu0 0.0
    %5684 = vmatpush1.msra.mxu0 0.0
    %5685 = vmatprep.subr.mxu0 0.0
    %5686 = vmatpush1.msra.mxu0 0.0
    %5687 = vmatprep.subr.mxu0 0.0
    %5688 = vmatpush1.msra.mxu0 0.0
    %5689 = vmatprep.subr.mxu0 0.0
    %5690 = vmatpush1.msra.mxu0 0.0
    %5691 = vmatprep.subr.mxu0 0.0
    %5692 = vmatpush1.msra.mxu0 0.0
    %5693 = vmatprep.subr.mxu0 0.0
    %5694 = vmatpush1.msra.mxu0 0.0
    %5695 = vmatprep.subr.mxu0 0.0
    %5696 = vmatpush1.msra.mxu0 0.0
    %5697 = vmatprep.subr.mxu0 0.0
    %5698 = vmatpush1.msra.mxu0 %v5564
    %5699 = vmatprep.subr.mxu0 0.0
    %5700 = vmatpush1.msra.mxu0 %v5563
    %5701 = vmatprep.subr.mxu0 0.0
    %5702 = vmatpush1.msra.mxu0 %v5562
    %5703 = vmatprep.subr.mxu0 0.0
    %5704 = vmatpush1.msra.mxu0 %v5561
    %5705 = vmatprep.subr.mxu0 0.0
    %5706 = vmatpush2.msra.mxu0 0.0
    %5707 = vmatprep.subr.mxu0 0.0
    %5708 = vmatpush2.msra.mxu0 0.0
    %5709 = vmatprep.subr.mxu0 0.0
    %5710 = vmatpush2.msra.mxu0 0.0
    %5711 = vmatprep.subr.mxu0 0.0
    %5712 = vmatpush2.msra.mxu0 0.0
    %5713 = vmatprep.subr.mxu0 0.0
    %5714 = vmatpush2.msra.mxu0 0.0
    %5715 = vmatprep.subr.mxu0 0.0
    %5716 = vmatpush2.msra.mxu0 0.0
    %5717 = vmatprep.subr.mxu0 0.0
    %5718 = vmatpush2.msra.mxu0 0.0
    %5719 = vmatprep.subr.mxu0 0.0
    %5720 = vmatpush2.msra.mxu0 0.0
    %5721 = vmatprep.subr.mxu0 0.0
    %5722 = vmatpush2.msra.mxu0 0.0
    %5723 = vmatprep.subr.mxu0 0.0
    %5724 = vmatpush2.msra.mxu0 0.0
    %5725 = vmatprep.subr.mxu0 0.0
    %5726 = vmatpush2.msra.mxu0 0.0
    %5727 = vmatprep.subr.mxu0 0.0
    %5728 = vmatpush2.msra.mxu0 0.0
    %5729 = vmatprep.subr.mxu0 0.0
    %5730 = vmatpush2.msra.mxu0 0.0
    %5731 = vmatprep.subr.mxu0 0.0
    %5732 = vmatpush2.msra.mxu0 0.0
    %5733 = vmatprep.subr.mxu0 0.0
    %5734 = vmatpush2.msra.mxu0 0.0
    %5735 = vmatprep.subr.mxu0 0.0
    %5736 = vmatpush2.msra.mxu0 0.0
    %5737 = vmatprep.mubr.f32.mxu0 0.0
    %5738 = vmatmul.mubr.f32.gmra.mxu0 %v5668
    %v5739 = vpop.f32.mrf.mxu0
    %v5740 = vadd.f32 %v5659, %v5739
    %v5741 = vpop.f32.mrf.mxu0
    %5742 = vmatprep.mubr.f32.mxu0 0.0
    %5743 = vmatmul.mubr.f32.gmra.mxu0 %v5671
    %v5744 = vpop.f32.mrf.mxu0
    %v5745 = vadd.f32 %v5664, %v5744
    %v5746 = vpop.f32.mrf.mxu0
    %5747 = vdwg.mxu0
    %v5748 = vsub.f32 %v5472, %v5528
    %v5749 = vsub.f32 %v5473, %v5529
    %v5750 = vmul.f32 %v5748, %v5540
    %v5751 = vmul.f32 %v5749, %v5541
    %v5752 = vlaneseq
    %v5753 = vshrl.u32 %v5752, 7
    %v5754 = vsub.s32 2, %v5753
    %v5755 = vrot.slane %v5542, %v5754
    %v5756 = vmul.f32 %v5750, %v5755
    %v5757 = vmul.f32 %v5751, %v5755
    %v5758 = vlaneseq
    %v5759 = vshrl.u32 %v5758, 7
    %v5760 = vsub.s32 2, %v5759
    %v5761 = vrot.slane %v5543, %v5760
    %v5762 = vadd.f32 %v5756, %v5761
    %v5763 = vadd.f32 %v5757, %v5761
    %s5764 = scalar_lea.vmem %s10, 64
    %v5765 = vld [vmem:[%s5764] sm:$0xff]
    %v5766 = vld [vmem:[%s5764 + $0x8] sm:$0xff]
    %v5767 = vld [vmem:[%s5764 + $0x10] sm:$0xff]
    %v5768 = vld [vmem:[%s5764 + $0x18] sm:$0xff]
    %v5770 = vsel %vm121, %v5762, 0
    %v5773 = vsel %vm121, %v5763, 0
    %5775 = vmatprep.subr.mxu0 0.0
    %5776 = vmatpush1.msra.mxu0 0.0
    %5777 = vmatprep.subr.mxu0 0.0
    %5778 = vmatpush1.msra.mxu0 0.0
    %5779 = vmatprep.subr.mxu0 0.0
    %5780 = vmatpush1.msra.mxu0 0.0
    %5781 = vmatprep.subr.mxu0 0.0
    %5782 = vmatpush1.msra.mxu0 0.0
    %5783 = vmatprep.subr.mxu0 0.0
    %5784 = vmatpush1.msra.mxu0 0.0
    %5785 = vmatprep.subr.mxu0 0.0
    %5786 = vmatpush1.msra.mxu0 0.0
    %5787 = vmatprep.subr.mxu0 0.0
    %5788 = vmatpush1.msra.mxu0 0.0
    %5789 = vmatprep.subr.mxu0 0.0
    %5790 = vmatpush1.msra.mxu0 0.0
    %5791 = vmatprep.subr.mxu0 0.0
    %5792 = vmatpush1.msra.mxu0 0.0
    %5793 = vmatprep.subr.mxu0 0.0
    %5794 = vmatpush1.msra.mxu0 0.0
    %5795 = vmatprep.subr.mxu0 0.0
    %5796 = vmatpush1.msra.mxu0 0.0
    %5797 = vmatprep.subr.mxu0 0.0
    %5798 = vmatpush1.msra.mxu0 0.0
    %5799 = vmatprep.subr.mxu0 0.0
    %5800 = vmatpush1.msra.mxu0 %v5768
    %5801 = vmatprep.subr.mxu0 0.0
    %5802 = vmatpush1.msra.mxu0 %v5767
    %5803 = vmatprep.subr.mxu0 0.0
    %5804 = vmatpush1.msra.mxu0 %v5766
    %5805 = vmatprep.subr.mxu0 0.0
    %5806 = vmatpush1.msra.mxu0 %v5765
    %5807 = vmatprep.subr.mxu0 0.0
    %5808 = vmatpush2.msra.mxu0 0.0
    %5809 = vmatprep.subr.mxu0 0.0
    %5810 = vmatpush2.msra.mxu0 0.0
    %5811 = vmatprep.subr.mxu0 0.0
    %5812 = vmatpush2.msra.mxu0 0.0
    %5813 = vmatprep.subr.mxu0 0.0
    %5814 = vmatpush2.msra.mxu0 0.0
    %5815 = vmatprep.subr.mxu0 0.0
    %5816 = vmatpush2.msra.mxu0 0.0
    %5817 = vmatprep.subr.mxu0 0.0
    %5818 = vmatpush2.msra.mxu0 0.0
    %5819 = vmatprep.subr.mxu0 0.0
    %5820 = vmatpush2.msra.mxu0 0.0
    %5821 = vmatprep.subr.mxu0 0.0
    %5822 = vmatpush2.msra.mxu0 0.0
    %5823 = vmatprep.subr.mxu0 0.0
    %5824 = vmatpush2.msra.mxu0 0.0
    %5825 = vmatprep.subr.mxu0 0.0
    %5826 = vmatpush2.msra.mxu0 0.0
    %5827 = vmatprep.subr.mxu0 0.0
    %5828 = vmatpush2.msra.mxu0 0.0
    %5829 = vmatprep.subr.mxu0 0.0
    %5830 = vmatpush2.msra.mxu0 0.0
    %5831 = vmatprep.subr.mxu0 0.0
    %5832 = vmatpush2.msra.mxu0 0.0
    %5833 = vmatprep.subr.mxu0 0.0
    %5834 = vmatpush2.msra.mxu0 0.0
    %5835 = vmatprep.subr.mxu0 0.0
    %5836 = vmatpush2.msra.mxu0 0.0
    %5837 = vmatprep.subr.mxu0 0.0
    %5838 = vmatpush2.msra.mxu0 0.0
    %5839 = vmatprep.mubr.f32.mxu0 0.0
    %5840 = vmatmul.mubr.f32.gmra.mxu0 %v5770
    %v5841 = vpop.f32.mrf.mxu0
    %v5842 = vadd.f32 0.0, %v5841
    %v5843 = vpop.f32.mrf.mxu0
    %5844 = vmatprep.mubr.f32.mxu0 0.0
    %5845 = vmatmul.mubr.f32.gmra.mxu0 %v5773
    %v5846 = vpop.f32.mrf.mxu0
    %v5847 = vadd.f32 0.0, %v5846
    %v5848 = vpop.f32.mrf.mxu0
    %5849 = vdwg.mxu0
    %v5850 = vadd.f32 %v5740, %v5842
    %v5851 = vadd.f32 %v5745, %v5847
    %v5853 = vlaneseq
    %v5854 = vshrl.u32 %v5853, 7
    %v5855 = vsub.s32 0, %v5854
    %v5856 = vrot.slane %v5544, %v5855
    %v5858 = vadd.f32 %v5850, %v5856
    %v5859 = vadd.f32 %v5851, %v5856
    %v5860 = vmul.f32 %v5858, 0.5
    %v5861 = vmul.f32 %v5859, 0.5
    %v5862 = vmul.f32 %v5858, 0.70710677
    %v5863 = vmul.f32 %v5859, 0.70710677
    %v5864 = verf.f32.pop %v5862
    %v5865 = verf.f32.pop %v5863
    %v5866 = vadd.f32 %v5864, 1.0
    %v5867 = vadd.f32 %v5865, 1.0
    %v5868 = vmul.f32 %v5860, %v5866
    %v5869 = vmul.f32 %v5861, %v5867
    %v5870 = vld [vmem:[%s13] sm:$0x7]
    %v5871 = vld [vmem:[%s12] sm:$0xff]
    %v5872 = vld [vmem:[%s12 + $0x8] sm:$0xff]
    %v5873 = vld [vmem:[%s12 + $0x10] sm:$0xff]
    %v5874 = vld [vmem:[%s12 + $0x18] sm:$0xff]
    %v5875 = vld [vmem:[%s12 + $0x20] sm:$0xff]
    %v5876 = vld [vmem:[%s12 + $0x28] sm:$0xff]
    %v5877 = vld [vmem:[%s12 + $0x30] sm:$0xff]
    %v5878 = vld [vmem:[%s12 + $0x38] sm:$0xff]
    %v5879 = vlaneseq
    %v5880 = vshrl.u32 %v5879, 7
    %v5881 = vsub.s32 0, %v5880
    %v5882 = vrot.slane %v5870, %v5881
    %vm5883 = vcmask 523264
    %v5885 = vsel %vm5883, %v5868, 0
    %v5888 = vsel %vm5883, %v5869, 0
    %5890 = vmatprep.subr.mxu0 0.0
    %5891 = vmatpush1.msra.mxu0 0.0
    %5892 = vmatprep.subr.mxu0 0.0
    %5893 = vmatpush1.msra.mxu0 0.0
    %5894 = vmatprep.subr.mxu0 0.0
    %5895 = vmatpush1.msra.mxu0 0.0
    %5896 = vmatprep.subr.mxu0 0.0
    %5897 = vmatpush1.msra.mxu0 0.0
    %5898 = vmatprep.subr.mxu0 0.0
    %5899 = vmatpush1.msra.mxu0 0.0
    %5900 = vmatprep.subr.mxu0 0.0
    %5901 = vmatpush1.msra.mxu0 0.0
    %5902 = vmatprep.subr.mxu0 0.0
    %5903 = vmatpush1.msra.mxu0 0.0
    %5904 = vmatprep.subr.mxu0 0.0
    %5905 = vmatpush1.msra.mxu0 0.0
    %5906 = vmatprep.subr.mxu0 0.0
    %5907 = vmatpush1.msra.mxu0 %v5878
    %5908 = vmatprep.subr.mxu0 0.0
    %5909 = vmatpush1.msra.mxu0 %v5877
    %5910 = vmatprep.subr.mxu0 0.0
    %5911 = vmatpush1.msra.mxu0 %v5876
    %5912 = vmatprep.subr.mxu0 0.0
    %5913 = vmatpush1.msra.mxu0 %v5875
    %5914 = vmatprep.subr.mxu0 0.0
    %5915 = vmatpush1.msra.mxu0 %v5874
    %5916 = vmatprep.subr.mxu0 0.0
    %5917 = vmatpush1.msra.mxu0 %v5873
    %5918 = vmatprep.subr.mxu0 0.0
    %5919 = vmatpush1.msra.mxu0 %v5872
    %5920 = vmatprep.subr.mxu0 0.0
    %5921 = vmatpush1.msra.mxu0 %v5871
    %5922 = vmatprep.subr.mxu0 0.0
    %5923 = vmatpush2.msra.mxu0 0.0
    %5924 = vmatprep.subr.mxu0 0.0
    %5925 = vmatpush2.msra.mxu0 0.0
    %5926 = vmatprep.subr.mxu0 0.0
    %5927 = vmatpush2.msra.mxu0 0.0
    %5928 = vmatprep.subr.mxu0 0.0
    %5929 = vmatpush2.msra.mxu0 0.0
    %5930 = vmatprep.subr.mxu0 0.0
    %5931 = vmatpush2.msra.mxu0 0.0
    %5932 = vmatprep.subr.mxu0 0.0
    %5933 = vmatpush2.msra.mxu0 0.0
    %5934 = vmatprep.subr.mxu0 0.0
    %5935 = vmatpush2.msra.mxu0 0.0
    %5936 = vmatprep.subr.mxu0 0.0
    %5937 = vmatpush2.msra.mxu0 0.0
    %5938 = vmatprep.subr.mxu0 0.0
    %5939 = vmatpush2.msra.mxu0 0.0
    %5940 = vmatprep.subr.mxu0 0.0
    %5941 = vmatpush2.msra.mxu0 0.0
    %5942 = vmatprep.subr.mxu0 0.0
    %5943 = vmatpush2.msra.mxu0 0.0
    %5944 = vmatprep.subr.mxu0 0.0
    %5945 = vmatpush2.msra.mxu0 0.0
    %5946 = vmatprep.subr.mxu0 0.0
    %5947 = vmatpush2.msra.mxu0 0.0
    %5948 = vmatprep.subr.mxu0 0.0
    %5949 = vmatpush2.msra.mxu0 0.0
    %5950 = vmatprep.subr.mxu0 0.0
    %5951 = vmatpush2.msra.mxu0 0.0
    %5952 = vmatprep.subr.mxu0 0.0
    %5953 = vmatpush2.msra.mxu0 0.0
    %5954 = vmatprep.mubr.f32.mxu0 0.0
    %5955 = vmatmul.mubr.f32.gmra.mxu0 %v5885
    %v5956 = vpop.f32.mrf.mxu0
    %v5957 = vadd.f32 %v5882, %v5956
    %v5958 = vpop.f32.mrf.mxu0
    %5959 = vmatprep.mubr.f32.mxu0 0.0
    %5960 = vmatmul.mubr.f32.gmra.mxu0 %v5888
    %v5961 = vpop.f32.mrf.mxu0
    %v5962 = vadd.f32 %v5882, %v5961
    %v5963 = vpop.f32.mrf.mxu0
    %5964 = vdwg.mxu0
    %v5965 = vadd.f32 %v1902, %v5957
    %v5966 = vadd.f32 %v1903, %v5962
    %5967 = vst.msk [vmem:[#allocation11] sm:$0xff] %vm121, %v5965
    %5968 = vst.msk [vmem:[#allocation11 + $0x8] sm:$0xff] %vm121, %v5966
    %s5969 = scalar_lea.vmem %s12, 64
    %v5970 = vld [vmem:[%s5969] sm:$0xff]
    %v5971 = vld [vmem:[%s5969 + $0x8] sm:$0xff]
    %v5972 = vld [vmem:[%s5969 + $0x10] sm:$0xff]
    %v5973 = vld [vmem:[%s5969 + $0x18] sm:$0xff]
    %v5974 = vld [vmem:[%s5969 + $0x20] sm:$0xff]
    %v5975 = vld [vmem:[%s5969 + $0x28] sm:$0xff]
    %v5976 = vld [vmem:[%s5969 + $0x30] sm:$0xff]
    %v5977 = vld [vmem:[%s5969 + $0x38] sm:$0xff]
    %v5978 = vlaneseq
    %v5979 = vshrl.u32 %v5978, 7
    %v5980 = vsub.s32 1, %v5979
    %v5981 = vrot.slane %v5870, %v5980
    %5982 = vmatprep.subr.mxu0 0.0
    %5983 = vmatpush1.msra.mxu0 0.0
    %5984 = vmatprep.subr.mxu0 0.0
    %5985 = vmatpush1.msra.mxu0 0.0
    %5986 = vmatprep.subr.mxu0 0.0
    %5987 = vmatpush1.msra.mxu0 0.0
    %5988 = vmatprep.subr.mxu0 0.0
    %5989 = vmatpush1.msra.mxu0 0.0
    %5990 = vmatprep.subr.mxu0 0.0
    %5991 = vmatpush1.msra.mxu0 0.0
    %5992 = vmatprep.subr.mxu0 0.0
    %5993 = vmatpush1.msra.mxu0 0.0
    %5994 = vmatprep.subr.mxu0 0.0
    %5995 = vmatpush1.msra.mxu0 0.0
    %5996 = vmatprep.subr.mxu0 0.0
    %5997 = vmatpush1.msra.mxu0 0.0
    %5998 = vmatprep.subr.mxu0 0.0
    %5999 = vmatpush1.msra.mxu0 %v5977
    %6000 = vmatprep.subr.mxu0 0.0
    %6001 = vmatpush1.msra.mxu0 %v5976
    %6002 = vmatprep.subr.mxu0 0.0
    %6003 = vmatpush1.msra.mxu0 %v5975
    %6004 = vmatprep.subr.mxu0 0.0
    %6005 = vmatpush1.msra.mxu0 %v5974
    %6006 = vmatprep.subr.mxu0 0.0
    %6007 = vmatpush1.msra.mxu0 %v5973
    %6008 = vmatprep.subr.mxu0 0.0
    %6009 = vmatpush1.msra.mxu0 %v5972
    %6010 = vmatprep.subr.mxu0 0.0
    %6011 = vmatpush1.msra.mxu0 %v5971
    %6012 = vmatprep.subr.mxu0 0.0
    %6013 = vmatpush1.msra.mxu0 %v5970
    %6014 = vmatprep.subr.mxu0 0.0
    %6015 = vmatpush2.msra.mxu0 0.0
    %6016 = vmatprep.subr.mxu0 0.0
    %6017 = vmatpush2.msra.mxu0 0.0
    %6018 = vmatprep.subr.mxu0 0.0
    %6019 = vmatpush2.msra.mxu0 0.0
    %6020 = vmatprep.subr.mxu0 0.0
    %6021 = vmatpush2.msra.mxu0 0.0
    %6022 = vmatprep.subr.mxu0 0.0
    %6023 = vmatpush2.msra.mxu0 0.0
    %6024 = vmatprep.subr.mxu0 0.0
    %6025 = vmatpush2.msra.mxu0 0.0
    %6026 = vmatprep.subr.mxu0 0.0
    %6027 = vmatpush2.msra.mxu0 0.0
    %6028 = vmatprep.subr.mxu0 0.0
    %6029 = vmatpush2.msra.mxu0 0.0
    %6030 = vmatprep.subr.mxu0 0.0
    %6031 = vmatpush2.msra.mxu0 0.0
    %6032 = vmatprep.subr.mxu0 0.0
    %6033 = vmatpush2.msra.mxu0 0.0
    %6034 = vmatprep.subr.mxu0 0.0
    %6035 = vmatpush2.msra.mxu0 0.0
    %6036 = vmatprep.subr.mxu0 0.0
    %6037 = vmatpush2.msra.mxu0 0.0
    %6038 = vmatprep.subr.mxu0 0.0
    %6039 = vmatpush2.msra.mxu0 0.0
    %6040 = vmatprep.subr.mxu0 0.0
    %6041 = vmatpush2.msra.mxu0 0.0
    %6042 = vmatprep.subr.mxu0 0.0
    %6043 = vmatpush2.msra.mxu0 0.0
    %6044 = vmatprep.subr.mxu0 0.0
    %6045 = vmatpush2.msra.mxu0 0.0
    %6046 = vmatprep.mubr.f32.mxu0 0.0
    %6047 = vmatmul.mubr.f32.gmra.mxu0 %v5885
    %v6048 = vpop.f32.mrf.mxu0
    %v6049 = vadd.f32 %v5981, %v6048
    %v6050 = vpop.f32.mrf.mxu0
    %6051 = vmatprep.mubr.f32.mxu0 0.0
    %6052 = vmatmul.mubr.f32.gmra.mxu0 %v5888
    %v6053 = vpop.f32.mrf.mxu0
    %v6054 = vadd.f32 %v5981, %v6053
    %v6055 = vpop.f32.mrf.mxu0
    %6056 = vdwg.mxu0
    %v6057 = vadd.f32 %v3687, %v6049
    %v6058 = vadd.f32 %v3688, %v6054
    %6059 = vst.msk [vmem:[#allocation12] sm:$0xff] %vm121, %v6057
    %6060 = vst.msk [vmem:[#allocation12 + $0x8] sm:$0xff] %vm121, %v6058
    %s6061 = scalar_lea.vmem %s12, 128
    %v6062 = vld [vmem:[%s6061] sm:$0xff]
    %v6063 = vld [vmem:[%s6061 + $0x8] sm:$0xff]
    %v6064 = vld [vmem:[%s6061 + $0x10] sm:$0xff]
    %v6065 = vld [vmem:[%s6061 + $0x18] sm:$0xff]
    %v6066 = vld [vmem:[%s6061 + $0x20] sm:$0xff]
    %v6067 = vld [vmem:[%s6061 + $0x28] sm:$0xff]
    %v6068 = vld [vmem:[%s6061 + $0x30] sm:$0xff]
    %v6069 = vld [vmem:[%s6061 + $0x38] sm:$0xff]
    %v6070 = vlaneseq
    %v6071 = vshrl.u32 %v6070, 7
    %v6072 = vsub.s32 2, %v6071
    %v6073 = vrot.slane %v5870, %v6072
    %6074 = vmatprep.subr.mxu0 0.0
    %6075 = vmatpush1.msra.mxu0 0.0
    %6076 = vmatprep.subr.mxu0 0.0
    %6077 = vmatpush1.msra.mxu0 0.0
    %6078 = vmatprep.subr.mxu0 0.0
    %6079 = vmatpush1.msra.mxu0 0.0
    %6080 = vmatprep.subr.mxu0 0.0
    %6081 = vmatpush1.msra.mxu0 0.0
    %6082 = vmatprep.subr.mxu0 0.0
    %6083 = vmatpush1.msra.mxu0 0.0
    %6084 = vmatprep.subr.mxu0 0.0
    %6085 = vmatpush1.msra.mxu0 0.0
    %6086 = vmatprep.subr.mxu0 0.0
    %6087 = vmatpush1.msra.mxu0 0.0
    %6088 = vmatprep.subr.mxu0 0.0
    %6089 = vmatpush1.msra.mxu0 0.0
    %6090 = vmatprep.subr.mxu0 0.0
    %6091 = vmatpush1.msra.mxu0 %v6069
    %6092 = vmatprep.subr.mxu0 0.0
    %6093 = vmatpush1.msra.mxu0 %v6068
    %6094 = vmatprep.subr.mxu0 0.0
    %6095 = vmatpush1.msra.mxu0 %v6067
    %6096 = vmatprep.subr.mxu0 0.0
    %6097 = vmatpush1.msra.mxu0 %v6066
    %6098 = vmatprep.subr.mxu0 0.0
    %6099 = vmatpush1.msra.mxu0 %v6065
    %6100 = vmatprep.subr.mxu0 0.0
    %6101 = vmatpush1.msra.mxu0 %v6064
    %6102 = vmatprep.subr.mxu0 0.0
    %6103 = vmatpush1.msra.mxu0 %v6063
    %6104 = vmatprep.subr.mxu0 0.0
    %6105 = vmatpush1.msra.mxu0 %v6062
    %6106 = vmatprep.subr.mxu0 0.0
    %6107 = vmatpush2.msra.mxu0 0.0
    %6108 = vmatprep.subr.mxu0 0.0
    %6109 = vmatpush2.msra.mxu0 0.0
    %6110 = vmatprep.subr.mxu0 0.0
    %6111 = vmatpush2.msra.mxu0 0.0
    %6112 = vmatprep.subr.mxu0 0.0
    %6113 = vmatpush2.msra.mxu0 0.0
    %6114 = vmatprep.subr.mxu0 0.0
    %6115 = vmatpush2.msra.mxu0 0.0
    %6116 = vmatprep.subr.mxu0 0.0
    %6117 = vmatpush2.msra.mxu0 0.0
    %6118 = vmatprep.subr.mxu0 0.0
    %6119 = vmatpush2.msra.mxu0 0.0
    %6120 = vmatprep.subr.mxu0 0.0
    %6121 = vmatpush2.msra.mxu0 0.0
    %6122 = vmatprep.subr.mxu0 0.0
    %6123 = vmatpush2.msra.mxu0 0.0
    %6124 = vmatprep.subr.mxu0 0.0
    %6125 = vmatpush2.msra.mxu0 0.0
    %6126 = vmatprep.subr.mxu0 0.0
    %6127 = vmatpush2.msra.mxu0 0.0
    %6128 = vmatprep.subr.mxu0 0.0
    %6129 = vmatpush2.msra.mxu0 0.0
    %6130 = vmatprep.subr.mxu0 0.0
    %6131 = vmatpush2.msra.mxu0 0.0
    %6132 = vmatprep.subr.mxu0 0.0
    %6133 = vmatpush2.msra.mxu0 0.0
    %6134 = vmatprep.subr.mxu0 0.0
    %6135 = vmatpush2.msra.mxu0 0.0
    %6136 = vmatprep.subr.mxu0 0.0
    %6137 = vmatpush2.msra.mxu0 0.0
    %6138 = vmatprep.mubr.f32.mxu0 0.0
    %6139 = vmatmul.mubr.f32.gmra.mxu0 %v5885
    %v6140 = vpop.f32.mrf.mxu0
    %v6141 = vadd.f32 %v6073, %v6140
    %v6142 = vpop.f32.mrf.mxu0
    %6143 = vmatprep.mubr.f32.mxu0 0.0
    %6144 = vmatmul.mubr.f32.gmra.mxu0 %v5888
    %v6145 = vpop.f32.mrf.mxu0
    %v6146 = vadd.f32 %v6073, %v6145
    %v6147 = vpop.f32.mrf.mxu0
    %6148 = vdwg.mxu0
    %v6149 = vadd.f32 %v5472, %v6141
    %v6150 = vadd.f32 %v5473, %v6146
    %6151 = vst.msk [vmem:[#allocation14] sm:$0xff] %vm121, %v6149
    %6152 = vst.msk [vmem:[#allocation14 + $0x8] sm:$0xff] %vm121, %v6150
    // Predicated region
    $region78: #{tpu_custom_call.1} parent=1 // pred_check
      _
    $region79: #{tpu_custom_call.1} parent=1 // pred_check_branch
      %6154 = sbr.rel (0) target = $region81
    $region80: #{tpu_custom_call.1} parent=1 // pred_region
      %s6156 = ssub.s32 256, 256
      %6157 = vsyncadd [#allocation4], %s6156
      %s6158 = sshll.u32 [#allocation11], 4
      %s6159 = int_to_ptr.vmem [resolvable:$true] %s6158
      %6164 = dma.vmem_to_hbm [thread:$0]  %s6159, 256, %s14, [#allocation4], 128, 128, 8
    $region81: #{tpu_custom_call.1} parent=1 // pred_fallthru
      _
    // Predicated region
    $region82: #{tpu_custom_call.1} parent=1 // pred_check
      _
    $region83: #{tpu_custom_call.1} parent=1 // pred_check_branch
      %6166 = sbr.rel (0) target = $region85
    $region84: #{tpu_custom_call.1} parent=1 // pred_region
      %s6168 = ssub.s32 256, 256
      %6169 = vsyncadd [#allocation13], %s6168
      %s6170 = sshll.u32 [#allocation12], 4
      %s6171 = int_to_ptr.vmem [resolvable:$true] %s6170
      %6176 = dma.vmem_to_hbm [thread:$0]  %s6171, 256, %s15, [#allocation13], 128, 128, 8
    $region85: #{tpu_custom_call.1} parent=1 // pred_fallthru
      _
    // Predicated region
    $region86: #{tpu_custom_call.1} parent=1 // pred_check
      _
    $region87: #{tpu_custom_call.1} parent=1 // pred_check_branch
      %6178 = sbr.rel (0) target = $region89
    $region88: #{tpu_custom_call.1} parent=1 // pred_region
      %s6180 = ssub.s32 256, 256
      %6181 = vsyncadd [#allocation13], %s6180
      %s6182 = sshll.u32 [#allocation14], 4
      %s6183 = int_to_ptr.vmem [resolvable:$true] %s6182
      %6188 = dma.vmem_to_hbm [thread:$0]  %s6183, 256, %s16, [#allocation13], 128, 128, 8
    $region89: #{tpu_custom_call.1} parent=1 // pred_fallthru
      _
    // Predicated region
    $region90: #{tpu_custom_call.1} parent=1 // pred_check
      _
    $region91: #{tpu_custom_call.1} parent=1 // pred_check_branch
      %6190 = sbr.rel (0) target = $region93
    $region92: #{tpu_custom_call.1} parent=1 // pred_region
      %6191 = dma.done [#allocation4], 256
    $region93: #{tpu_custom_call.1} parent=1 // pred_fallthru
      _
    // Predicated region
    $region94: #{tpu_custom_call.1} parent=1 // pred_check
      _
    $region95: #{tpu_custom_call.1} parent=1 // pred_check_branch
      %6193 = sbr.rel (0) target = $region97
    $region96: #{tpu_custom_call.1} parent=1 // pred_region
      %6194 = dma.done [#allocation13], 256
    $region97: #{tpu_custom_call.1} parent=1 // pred_fallthru
      _
    // Predicated region
    $region98: #{tpu_custom_call.1} parent=1 // pred_check
      _
    $region99: #{tpu_custom_call.1} parent=1 // pred_check_branch
      %6196 = sbr.rel (0) target = $region101
    $region100: #{tpu_custom_call.1} parent=1 // pred_region
      %6197 = dma.done [#allocation13], 256
    $region101: #{tpu_custom_call.1} parent=1 // pred_fallthru
      _
    %6198 = vsyncpa [#allocation3], 1
    %6199 = vsyncpa [#allocation6], 1
    %6200 = vsyncpa [#allocation9], 1
    %6201 = vsyncpa [#allocation4], 1
    %6202 = vsyncpa [#allocation13], 1

</llo_original>
